<compile_context>
chip_gen: v7x
topology: tpu7x:2x2x1
jax: 0.10.0
libtpu: 0.0.40
codegen_flags: <defaults>
</compile_context>

<pallas_src>
import functools

import jax
import jax.numpy as jnp
from jax.experimental import pallas as pl
from jax.experimental.pallas import tpu as pltpu

LANE = 128


def _round_up(n, m):
    return ((n + m - 1) // m) * m


def _flat_geometry(H, W):
    """Row geometry of the zero-padded, width-extended flat activation slabs."""
    wp = W + 2
    hp = H + 2
    ext_rows = H * wp                       # extended (padded-width) output rows
    shift1 = 1                              # front shift of the input slab
    ns1 = _round_up(max(shift1 + hp * wp, shift1 + 2 * wp + 1 + ext_rows), 8)
    shift2 = (-wp) % 8                      # make the scratch store sublane-aligned
    if shift2 == 0:
        shift2 = 8
    ns2 = _round_up(shift2 + 2 * wp + 1 + ext_rows, 8)
    return wp, ext_rows, shift1, ns1, shift2, ns2


# --------------------------------------------------------------------------
# Fused kernel: base conv -> adaptive convs (stacked) -> GAP -> fc + aux_fc
# --------------------------------------------------------------------------
def _fused_adaptive_net_kernel(
        x_ref, wb_ref, bb_ref, wa_ref, ba_ref, wh_ref, bh_ref, mask_ref,
        bmap_ref, feat_ref, heads_ref,
        s2_ref,
        *, wp, ext_rows, shift1, shift2, inv_hw):
    """One batch image per grid step; all intermediates stay in VMEM."""
    f32 = jnp.float32
    # Re-zero the padded conv-2 input scratch every step (the halo rows/cols
    # must be zero; scratch persists across grid steps / per-core on megacore).
    s2_ref[...] = jnp.zeros_like(s2_ref)

    mask = mask_ref[...]                                     # (ext_rows, 1) f32

    # ---- Conv 1: TaskAgnosticExtractor 3x3 'same' conv + bias + ReLU -------
    # out[g] = sum_{dy,dx} x_flat[g + shift1 + dy*Wp + dx - 1] @ Wb[dy,dx]
    cmid_p = bb_ref.shape[-1]
    acc1 = jnp.zeros((ext_rows, cmid_p), f32)
    for dy in range(3):
        for dx in range(3):
            off = shift1 + dy * wp + dx - 1
            lhs = x_ref[pl.ds(off, ext_rows), :].astype(jnp.bfloat16)
            acc1 = acc1 + jnp.dot(lhs, wb_ref[dy * 3 + dx],
                                  preferred_element_type=f32)
    base = jnp.maximum(acc1 + bb_ref[...], 0.0) * mask       # zero halo columns
    bmap_ref[...] = base                                      # lane-dense API slab

    # Scatter the base map into the padded flat layout of the second conv's
    # input; (shift2 + Wp) is a multiple of 8 so this store is sublane-aligned.
    s2_ref[pl.ds(shift2 + wp, ext_rows), :] = base

    # ---- Conv 2: all AdaptiveExtractors stacked (3x3 'same' + bias + ReLU) --
    ca = ba_ref.shape[-1]
    acc2 = jnp.zeros((ext_rows, ca), f32)
    for dy in range(3):
        for dx in range(3):
            off = shift2 + dy * wp + dx - 1
            lhs = s2_ref[pl.ds(off, ext_rows), :].astype(jnp.bfloat16)
            acc2 = acc2 + jnp.dot(lhs, wa_ref[dy * 3 + dx],
                                  preferred_element_type=f32)
    h = jnp.maximum(acc2 + ba_ref[...], 0.0) * mask           # (ext_rows, Ca)

    # ---- Global average pool (axis-0 reduce) + fused fc / aux_fc heads -----
    feats = jnp.sum(h, axis=0, keepdims=True) * inv_hw        # (1, Ca)
    feat_ref[...] = feats
    heads_ref[...] = (jnp.dot(feats, wh_ref[...],
                              preferred_element_type=f32) + bh_ref[...])


def _adaptive_net_pallas(x_flat, wb, bb, wa, ba, wh, bh, mask, *,
                         batch, H, W, vmem_limit_bytes):
    wp, ext_rows, shift1, ns1, shift2, ns2 = _flat_geometry(H, W)
    assert x_flat.shape[1] == ns1
    cin = x_flat.shape[2]
    cmid_p = wb.shape[-1]
    ca = wa.shape[-1]
    head_pad = wh.shape[-1]

    flops = (2 * batch * ext_rows * 9 * (cin * cmid_p + cmid_p * ca)
             + 2 * batch * ca * head_pad)
    bytes_accessed = (x_flat.size * x_flat.dtype.itemsize
                      + wb.size * wb.dtype.itemsize
                      + wa.size * wa.dtype.itemsize
                      + (bb.size + ba.size + wh.size + bh.size + mask.size) * 4
                      + batch * (ext_rows * cmid_p + ca + head_pad) * 4)

    kernel = functools.partial(
        _fused_adaptive_net_kernel, wp=wp, ext_rows=ext_rows,
        shift1=shift1, shift2=shift2, inv_hw=1.0 / float(H * W))

    grid_spec = pltpu.PrefetchScalarGridSpec(
        num_scalar_prefetch=0,
        grid=(batch,),
        in_specs=[
            pl.BlockSpec((None, ns1, cin), lambda b: (b, 0, 0)),      # x_flat
            pl.BlockSpec((9, cin, cmid_p), lambda b: (0, 0, 0)),      # base w
            pl.BlockSpec((1, cmid_p), lambda b: (0, 0)),              # base b
            pl.BlockSpec((9, cmid_p, ca), lambda b: (0, 0, 0)),       # adapt w
            pl.BlockSpec((1, ca), lambda b: (0, 0)),                  # adapt b
            pl.BlockSpec((ca, head_pad), lambda b: (0, 0)),           # heads w
            pl.BlockSpec((1, head_pad), lambda b: (0, 0)),            # heads b
            pl.BlockSpec((ext_rows, 1), lambda b: (0, 0)),            # col mask
        ],
        out_specs=(
            pl.BlockSpec((None, ext_rows, cmid_p), lambda b: (b, 0, 0)),
            pl.BlockSpec((None, 1, ca), lambda b: (b, 0, 0)),
            pl.BlockSpec((None, 1, head_pad), lambda b: (b, 0, 0)),
        ),
        scratch_shapes=[pltpu.VMEM((ns2, cmid_p), jnp.float32)],
    )
    return pl.pallas_call(
        kernel,
        out_shape=(
            jax.ShapeDtypeStruct((batch, ext_rows, cmid_p), jnp.float32),
            jax.ShapeDtypeStruct((batch, 1, ca), jnp.float32),
            jax.ShapeDtypeStruct((batch, 1, head_pad), jnp.float32),
        ),
        grid_spec=grid_spec,
        compiler_params=pltpu.CompilerParams(
            dimension_semantics=("parallel",),
            # Safe on v7x (64 MiB physical); re-sweep larger on v5e/v6e.
            vmem_limit_bytes=vmem_limit_bytes),
        cost_estimate=pl.CostEstimate(flops=flops, transcendentals=0,
                                      bytes_accessed=bytes_accessed),
    )(x_flat, wb, bb, wa, ba, wh, bh, mask)


# --------------------------------------------------------------------------
# Glue (layout prep only - no im2col) in plain JAX
# --------------------------------------------------------------------------
def _build_flat_padded(x_nhwc, shift, n_rows):
    """(B,H,W,C) -> (B, n_rows, C): zero-padded image, (Hp*Wp)-row flat layout
    starting at row `shift`; every other row is zero (halo)."""
    B, H, W, C = x_nhwc.shape
    hp, wp = H + 2, W + 2
    xp = jnp.pad(x_nhwc, ((0, 0), (1, 1), (1, 1), (0, 0)))
    flat = xp.reshape(B, hp * wp, C)
    return jnp.pad(flat, ((0, 0), (shift, n_rows - shift - hp * wp), (0, 0)))


def pack_params(raw, *, out_dim, nb_classes, aux_classes):
    """Hoisted out of the jitted forward: stack extractor weights, pad conv
    channels to full 128-lane width, pack fc + aux_fc into one lane-dense head."""
    n = len(raw["adaptive"])
    feature_dim = out_dim * n
    cin = raw["base_w"].shape[2]
    cmid = raw["base_w"].shape[3]
    cmid_p = _round_up(cmid, LANE)

    # Task-agnostic conv: HWIO (3,3,Cin,Cmid) -> (9, Cin, Cmid_p) bf16.
    wb = raw["base_w"].reshape(9, cin, cmid)
    wb = jnp.pad(wb, ((0, 0), (0, 0), (0, cmid_p - cmid)))
    bb = jnp.pad(raw["base_b"], (0, cmid_p - cmid))[None, :]

    # Adaptive extractors stacked along output channels: (9, Cmid_p, Ca) bf16.
    wa = jnp.concatenate([e["w"] for e in raw["adaptive"]], axis=-1)
    wa = wa.reshape(9, cmid, feature_dim)
    wa = jnp.pad(wa, ((0, 0), (0, cmid_p - cmid), (0, 0)))
    ba = jnp.concatenate([e["b"] for e in raw["adaptive"]], axis=0)[None, :]

    # fc + aux_fc packed into one lane-dense head weight:
    #   cols [0, nb)      = fc       (uses all features)
    #   cols [nb, nb+aux) = aux_fc   (nonzero only on the last out_dim rows)
    head_pad = _round_up(nb_classes + aux_classes, LANE)
    wh = jnp.zeros((feature_dim, head_pad), jnp.float32)
    wh = wh.at[:, :nb_classes].set(raw["fc_w"])
    wh = wh.at[feature_dim - out_dim:,
               nb_classes:nb_classes + aux_classes].set(raw["aux_w"])
    bh = jnp.zeros((1, head_pad), jnp.float32)
    bh = bh.at[0, :nb_classes].set(raw["fc_b"])
    bh = bh.at[0, nb_classes:nb_classes + aux_classes].set(raw["aux_b"])

    return {
        "base_w": wb.astype(jnp.bfloat16),
        "base_b": bb.astype(jnp.float32),
        "adapt_w": wa.astype(jnp.bfloat16),
        "adapt_b": ba.astype(jnp.float32),
        "heads_w": wh,
        "heads_b": bh,
    }


def adaptive_net_forward(params, x_nchw, *, nb_classes, aux_classes, cmid,
                         out_dim, vmem_limit_bytes=48 * 1024 * 1024):
    """Mirrors AdaptiveNet.forward()."""
    del out_dim  # aux slice is baked into the packed head weights
    x = jnp.transpose(x_nchw.astype(jnp.float32), (0, 2, 3, 1))   # NCHW -> NHWC
    B, H, W, _ = x.shape
    wp, ext_rows, shift1, ns1, _, _ = _flat_geometry(H, W)

    x_flat = _build_flat_padded(x, shift1, ns1)                    # (B, ns1, Cin)

    # Column-validity mask over the width-extended rows (1 for real pixels).
    col = jnp.arange(ext_rows, dtype=jnp.int32) % wp
    mask = ((col >= 1) & (col <= W)).astype(jnp.float32)[:, None]  # (ext_rows, 1)

    bmap_ext, feats, heads = _adaptive_net_pallas(
        x_flat, params["base_w"], params["base_b"],
        params["adapt_w"], params["adapt_b"],
        params["heads_w"], params["heads_b"], mask,
        batch=B, H=H, W=W, vmem_limit_bytes=vmem_limit_bytes)

    # base_features: drop halo columns / padded channels, back to NCHW.
    bmap = bmap_ext.reshape(B, H, wp, -1)[:, :, 1:W + 1, :cmid]
    base_features = jnp.transpose(bmap, (0, 3, 1, 2))

    features = feats.reshape(B, -1)
    heads = heads.reshape(B, -1)
    logits = heads[:, :nb_classes]
    aux_logits = heads[:, nb_classes:nb_classes + aux_classes]
    return {"logits": logits, "aux_logits": aux_logits,
            "features": features, "base_features": base_features}


# --------------------------------------------------------------------------
# Deterministic parameter construction + driver
# --------------------------------------------------------------------------
if __name__ == "__main__":
    B, Cin, H, W = 2, 4, 16, 16        # small NCHW input, as in PyTorch
    Cmid = 64                          # TaskAgnosticExtractor map channels
    out_dim = 64                       # per-AdaptiveExtractor feature dim
    n_extractors = 2                   # AdaptiveNet after two update_fc() calls
    task_sizes = [5, 5]
    nb_classes = sum(task_sizes)       # fc output
    aux_classes = task_sizes[-1] + 1   # aux_fc output = new_task_size + 1
    feature_dim = out_dim * n_extractors

    key = jax.random.PRNGKey(0)
    k_x, k_p = jax.random.split(key)
    x = jax.random.normal(k_x, (B, Cin, H, W), dtype=jnp.float32)

    keys = jax.random.split(k_p, 2 + 2 * n_extractors + 4)
    raw = {
        "base_w": 0.05 * jax.random.normal(keys[0], (3, 3, Cin, Cmid), jnp.float32),
        "base_b": 0.05 * jax.random.normal(keys[1], (Cmid,), jnp.float32),
        "adaptive": [
            {"w": 0.05 * jax.random.normal(keys[2 + 2 * i],
                                           (3, 3, Cmid, out_dim), jnp.float32),
             "b": 0.05 * jax.random.normal(keys[3 + 2 * i],
                                           (out_dim,), jnp.float32)}
            for i in range(n_extractors)],
        "fc_w": 0.05 * jax.random.normal(keys[2 + 2 * n_extractors],
                                         (feature_dim, nb_classes), jnp.float32),
        "fc_b": 0.05 * jax.random.normal(keys[3 + 2 * n_extractors],
                                         (nb_classes,), jnp.float32),
        "aux_w": 0.05 * jax.random.normal(keys[4 + 2 * n_extractors],
                                          (out_dim, aux_classes), jnp.float32),
        "aux_b": 0.05 * jax.random.normal(keys[5 + 2 * n_extractors],
                                          (aux_classes,), jnp.float32),
    }
    params = pack_params(raw, out_dim=out_dim,
                         nb_classes=nb_classes, aux_classes=aux_classes)

    fwd = jax.jit(functools.partial(
        adaptive_net_forward, nb_classes=nb_classes, aux_classes=aux_classes,
        cmid=Cmid, out_dim=out_dim))
    out = fwd(params, x)
    jax.block_until_ready(out)

    # Shape checks (AdaptiveNet output contract)
    assert out["base_features"].shape == (B, Cmid, H, W)
    assert out["features"].shape == (B, feature_dim)
    assert out["logits"].shape == (B, nb_classes)
    assert out["aux_logits"].shape == (B, aux_classes)

    # ---- Pure-JAX reference (same bf16 operand rounding as the kernel) ----
    def conv3x3(inp, w_hwio, bias):
        Bb, Hh, Ww, Ci = inp.shape
        Co = w_hwio.shape[-1]
        xp = jnp.pad(inp, ((0, 0), (1, 1), (1, 1), (0, 0)))
        acc = jnp.zeros((Bb, Hh, Ww, Co), jnp.float32)
        for dy in range(3):
            for dx in range(3):
                xs = xp[:, dy:dy + Hh, dx:dx + Ww, :].reshape(-1, Ci)
                acc = acc + (xs @ w_hwio[dy, dx]).reshape(Bb, Hh, Ww, Co)
        return acc + bias

    bf = lambda a: a.astype(jnp.bfloat16).astype(jnp.float32)
    x_nhwc = jnp.transpose(x, (0, 2, 3, 1))
    base_r = jnp.maximum(conv3x3(bf(x_nhwc), bf(raw["base_w"]),
                                 raw["base_b"]), 0.0)
    wa_r = bf(jnp.concatenate([e["w"] for e in raw["adaptive"]], axis=-1))
    ba_r = jnp.concatenate([e["b"] for e in raw["adaptive"]], axis=0)
    h_r = jnp.maximum(conv3x3(bf(base_r), wa_r, ba_r), 0.0)
    feats_r = h_r.mean(axis=(1, 2))
    logits_r = feats_r @ raw["fc_w"] + raw["fc_b"]
    aux_r = feats_r[:, -out_dim:] @ raw["aux_w"] + raw["aux_b"]

    assert jnp.allclose(out["base_features"],
                        jnp.transpose(base_r, (0, 3, 1, 2)),
                        rtol=1e-2, atol=2e-3)
    assert jnp.allclose(out["features"], feats_r, rtol=1e-2, atol=2e-3)
    assert jnp.allclose(out["logits"], logits_r, rtol=1e-2, atol=2e-3)
    assert jnp.allclose(out["aux_logits"], aux_r, rtol=1e-2, atol=2e-3)
    print("KERNEL_OK")
</pallas_src>

<mosaic_0001>
module attributes {stable_mosaic.version = 11 : i64} {
  func.func @_fused_adaptive_net_kernel(%arg0: i32, %arg1: memref<1x328x4xf32, #tpu.memory_space<vmem>>, %arg2: memref<9x4x128xbf16, #tpu.memory_space<vmem>>, %arg3: memref<1x128xf32, #tpu.memory_space<vmem>>, %arg4: memref<9x128x128xbf16, #tpu.memory_space<vmem>>, %arg5: memref<1x128xf32, #tpu.memory_space<vmem>>, %arg6: memref<128x128xf32, #tpu.memory_space<vmem>>, %arg7: memref<1x128xf32, #tpu.memory_space<vmem>>, %arg8: memref<288x1xf32, #tpu.memory_space<vmem>>, %arg9: memref<1x288x128xf32, #tpu.memory_space<vmem>>, %arg10: memref<1x1x128xf32, #tpu.memory_space<vmem>>, %arg11: memref<1x1x128xf32, #tpu.memory_space<vmem>>, %arg12: memref<336x128xf32, #tpu.memory_space<vmem>>) attributes {dimension_semantics = [#tpu.dimension_semantics<parallel>], iteration_bounds = array<i64: 2>, scalar_prefetch = 0 : i64, scratch_operands = 1 : i64, tpu.core_type = #tpu.core_type<tc>, window_params = [{transform_indices = @transform_0, window_bounds = array<i64: 1, 328, 4>}, {pipeline_mode = #tpu.pipeline_mode<synchronous>, transform_indices = @transform_1, window_bounds = array<i64: 9, 4, 128>}, {pipeline_mode = #tpu.pipeline_mode<synchronous>, transform_indices = @transform_2, window_bounds = array<i64: 1, 128>}, {pipeline_mode = #tpu.pipeline_mode<synchronous>, transform_indices = @transform_3, window_bounds = array<i64: 9, 128, 128>}, {pipeline_mode = #tpu.pipeline_mode<synchronous>, transform_indices = @transform_4, window_bounds = array<i64: 1, 128>}, {pipeline_mode = #tpu.pipeline_mode<synchronous>, transform_indices = @transform_5, window_bounds = array<i64: 128, 128>}, {pipeline_mode = #tpu.pipeline_mode<synchronous>, transform_indices = @transform_6, window_bounds = array<i64: 1, 128>}, {pipeline_mode = #tpu.pipeline_mode<synchronous>, transform_indices = @transform_7, window_bounds = array<i64: 288, 1>}, {transform_indices = @transform_8, window_bounds = array<i64: 1, 288, 128>}, {transform_indices = @transform_9, window_bounds = array<i64: 1, 1, 128>}, {transform_indices = @transform_10, window_bounds = array<i64: 1, 1, 128>}]} {
    %cst = arith.constant 0.000000e+00 : f32
    %0 = vector.broadcast %cst : f32 to vector<336x128xf32>
    %c0 = arith.constant 0 : index
    %c0_0 = arith.constant 0 : index
    %1 = vector.load %arg12[%c0, %c0_0] : memref<336x128xf32, #tpu.memory_space<vmem>>, vector<336x128xf32>
    tpu.vector_store %arg12[%c0, %c0_0], %0 {strides = array<i32>} : memref<336x128xf32, #tpu.memory_space<vmem>>, vector<336x128xf32>,
    %c0_1 = arith.constant 0 : index
    %c0_2 = arith.constant 0 : index
    %2 = vector.load %arg8[%c0_1, %c0_2] : memref<288x1xf32, #tpu.memory_space<vmem>>, vector<288x1xf32>
    %cst_3 = arith.constant 0.000000e+00 : f32
    %3 = vector.broadcast %cst_3 : f32 to vector<288x128xf32>
    %c0_4 = arith.constant 0 : index
    %c0_5 = arith.constant 0 : index
    %c0_6 = arith.constant 0 : index
    %4 = vector.load %arg1[%c0_4, %c0_5, %c0_6] : memref<1x328x4xf32, #tpu.memory_space<vmem>>, vector<1x288x4xf32>
    %5 = vector.shape_cast %4 : vector<1x288x4xf32> to vector<288x4xf32>
    %6 = arith.truncf %5 : vector<288x4xf32> to vector<288x4xbf16>
    %c0_7 = arith.constant 0 : index
    %c0_8 = arith.constant 0 : index
    %c0_9 = arith.constant 0 : index
    %7 = vector.load %arg2[%c0_7, %c0_8, %c0_9] : memref<9x4x128xbf16, #tpu.memory_space<vmem>>, vector<1x4x128xbf16>
    %8 = vector.shape_cast %7 : vector<1x4x128xbf16> to vector<4x128xbf16>
    %cst_10 = arith.constant dense<0.000000e+00> : vector<288x128xf32>
    %9 = tpu.matmul %6, %8, %cst_10 {dimension_numbers = #tpu.dot_dimension_numbers<[1], [0], [0], [1], [0, 0, 1, 1], [], []>} : vector<288x4xbf16>, vector<4x128xbf16>, vector<288x128xf32> -> vector<288x128xf32>
    %10 = arith.addf %3, %9 : vector<288x128xf32>
    %c0_11 = arith.constant 0 : index
    %c1 = arith.constant 1 : index
    %c0_12 = arith.constant 0 : index
    %11 = vector.load %arg1[%c0_11, %c1, %c0_12] : memref<1x328x4xf32, #tpu.memory_space<vmem>>, vector<1x288x4xf32>
    %12 = vector.shape_cast %11 : vector<1x288x4xf32> to vector<288x4xf32>
    %13 = arith.truncf %12 : vector<288x4xf32> to vector<288x4xbf16>
    %c1_13 = arith.constant 1 : index
    %c0_14 = arith.constant 0 : index
    %c0_15 = arith.constant 0 : index
    %14 = vector.load %arg2[%c1_13, %c0_14, %c0_15] : memref<9x4x128xbf16, #tpu.memory_space<vmem>>, vector<1x4x128xbf16>
    %15 = vector.shape_cast %14 : vector<1x4x128xbf16> to vector<4x128xbf16>
    %cst_16 = arith.constant dense<0.000000e+00> : vector<288x128xf32>
    %16 = tpu.matmul %13, %15, %cst_16 {dimension_numbers = #tpu.dot_dimension_numbers<[1], [0], [0], [1], [0, 0, 1, 1], [], []>} : vector<288x4xbf16>, vector<4x128xbf16>, vector<288x128xf32> -> vector<288x128xf32>
    %17 = arith.addf %10, %16 : vector<288x128xf32>
    %c0_17 = arith.constant 0 : index
    %c2 = arith.constant 2 : index
    %c0_18 = arith.constant 0 : index
    %18 = vector.load %arg1[%c0_17, %c2, %c0_18] : memref<1x328x4xf32, #tpu.memory_space<vmem>>, vector<1x288x4xf32>
    %19 = vector.shape_cast %18 : vector<1x288x4xf32> to vector<288x4xf32>
    %20 = arith.truncf %19 : vector<288x4xf32> to vector<288x4xbf16>
    %c2_19 = arith.constant 2 : index
    %c0_20 = arith.constant 0 : index
    %c0_21 = arith.constant 0 : index
    %21 = vector.load %arg2[%c2_19, %c0_20, %c0_21] : memref<9x4x128xbf16, #tpu.memory_space<vmem>>, vector<1x4x128xbf16>
    %22 = vector.shape_cast %21 : vector<1x4x128xbf16> to vector<4x128xbf16>
    %cst_22 = arith.constant dense<0.000000e+00> : vector<288x128xf32>
    %23 = tpu.matmul %20, %22, %cst_22 {dimension_numbers = #tpu.dot_dimension_numbers<[1], [0], [0], [1], [0, 0, 1, 1], [], []>} : vector<288x4xbf16>, vector<4x128xbf16>, vector<288x128xf32> -> vector<288x128xf32>
    %24 = arith.addf %17, %23 : vector<288x128xf32>
    %c0_23 = arith.constant 0 : index
    %c18 = arith.constant 18 : index
    %c0_24 = arith.constant 0 : index
    %25 = vector.load %arg1[%c0_23, %c18, %c0_24] : memref<1x328x4xf32, #tpu.memory_space<vmem>>, vector<1x288x4xf32>
    %26 = vector.shape_cast %25 : vector<1x288x4xf32> to vector<288x4xf32>
    %27 = arith.truncf %26 : vector<288x4xf32> to vector<288x4xbf16>
    %c3 = arith.constant 3 : index
    %c0_25 = arith.constant 0 : index
    %c0_26 = arith.constant 0 : index
    %28 = vector.load %arg2[%c3, %c0_25, %c0_26] : memref<9x4x128xbf16, #tpu.memory_space<vmem>>, vector<1x4x128xbf16>
    %29 = vector.shape_cast %28 : vector<1x4x128xbf16> to vector<4x128xbf16>
    %cst_27 = arith.constant dense<0.000000e+00> : vector<288x128xf32>
    %30 = tpu.matmul %27, %29, %cst_27 {dimension_numbers = #tpu.dot_dimension_numbers<[1], [0], [0], [1], [0, 0, 1, 1], [], []>} : vector<288x4xbf16>, vector<4x128xbf16>, vector<288x128xf32> -> vector<288x128xf32>
    %31 = arith.addf %24, %30 : vector<288x128xf32>
    %c0_28 = arith.constant 0 : index
    %c19 = arith.constant 19 : index
    %c0_29 = arith.constant 0 : index
    %32 = vector.load %arg1[%c0_28, %c19, %c0_29] : memref<1x328x4xf32, #tpu.memory_space<vmem>>, vector<1x288x4xf32>
    %33 = vector.shape_cast %32 : vector<1x288x4xf32> to vector<288x4xf32>
    %34 = arith.truncf %33 : vector<288x4xf32> to vector<288x4xbf16>
    %c4 = arith.constant 4 : index
    %c0_30 = arith.constant 0 : index
    %c0_31 = arith.constant 0 : index
    %35 = vector.load %arg2[%c4, %c0_30, %c0_31] : memref<9x4x128xbf16, #tpu.memory_space<vmem>>, vector<1x4x128xbf16>
    %36 = vector.shape_cast %35 : vector<1x4x128xbf16> to vector<4x128xbf16>
    %cst_32 = arith.constant dense<0.000000e+00> : vector<288x128xf32>
    %37 = tpu.matmul %34, %36, %cst_32 {dimension_numbers = #tpu.dot_dimension_numbers<[1], [0], [0], [1], [0, 0, 1, 1], [], []>} : vector<288x4xbf16>, vector<4x128xbf16>, vector<288x128xf32> -> vector<288x128xf32>
    %38 = arith.addf %31, %37 : vector<288x128xf32>
    %c0_33 = arith.constant 0 : index
    %c20 = arith.constant 20 : index
    %c0_34 = arith.constant 0 : index
    %39 = vector.load %arg1[%c0_33, %c20, %c0_34] : memref<1x328x4xf32, #tpu.memory_space<vmem>>, vector<1x288x4xf32>
    %40 = vector.shape_cast %39 : vector<1x288x4xf32> to vector<288x4xf32>
    %41 = arith.truncf %40 : vector<288x4xf32> to vector<288x4xbf16>
    %c5 = arith.constant 5 : index
    %c0_35 = arith.constant 0 : index
    %c0_36 = arith.constant 0 : index
    %42 = vector.load %arg2[%c5, %c0_35, %c0_36] : memref<9x4x128xbf16, #tpu.memory_space<vmem>>, vector<1x4x128xbf16>
    %43 = vector.shape_cast %42 : vector<1x4x128xbf16> to vector<4x128xbf16>
    %cst_37 = arith.constant dense<0.000000e+00> : vector<288x128xf32>
    %44 = tpu.matmul %41, %43, %cst_37 {dimension_numbers = #tpu.dot_dimension_numbers<[1], [0], [0], [1], [0, 0, 1, 1], [], []>} : vector<288x4xbf16>, vector<4x128xbf16>, vector<288x128xf32> -> vector<288x128xf32>
    %45 = arith.addf %38, %44 : vector<288x128xf32>
    %c0_38 = arith.constant 0 : index
    %c36 = arith.constant 36 : index
    %c0_39 = arith.constant 0 : index
    %46 = vector.load %arg1[%c0_38, %c36, %c0_39] : memref<1x328x4xf32, #tpu.memory_space<vmem>>, vector<1x288x4xf32>
    %47 = vector.shape_cast %46 : vector<1x288x4xf32> to vector<288x4xf32>
    %48 = arith.truncf %47 : vector<288x4xf32> to vector<288x4xbf16>
    %c6 = arith.constant 6 : index
    %c0_40 = arith.constant 0 : index
    %c0_41 = arith.constant 0 : index
    %49 = vector.load %arg2[%c6, %c0_40, %c0_41] : memref<9x4x128xbf16, #tpu.memory_space<vmem>>, vector<1x4x128xbf16>
    %50 = vector.shape_cast %49 : vector<1x4x128xbf16> to vector<4x128xbf16>
    %cst_42 = arith.constant dense<0.000000e+00> : vector<288x128xf32>
    %51 = tpu.matmul %48, %50, %cst_42 {dimension_numbers = #tpu.dot_dimension_numbers<[1], [0], [0], [1], [0, 0, 1, 1], [], []>} : vector<288x4xbf16>, vector<4x128xbf16>, vector<288x128xf32> -> vector<288x128xf32>
    %52 = arith.addf %45, %51 : vector<288x128xf32>
    %c0_43 = arith.constant 0 : index
    %c37 = arith.constant 37 : index
    %c0_44 = arith.constant 0 : index
    %53 = vector.load %arg1[%c0_43, %c37, %c0_44] : memref<1x328x4xf32, #tpu.memory_space<vmem>>, vector<1x288x4xf32>
    %54 = vector.shape_cast %53 : vector<1x288x4xf32> to vector<288x4xf32>
    %55 = arith.truncf %54 : vector<288x4xf32> to vector<288x4xbf16>
    %c7 = arith.constant 7 : index
    %c0_45 = arith.constant 0 : index
    %c0_46 = arith.constant 0 : index
    %56 = vector.load %arg2[%c7, %c0_45, %c0_46] : memref<9x4x128xbf16, #tpu.memory_space<vmem>>, vector<1x4x128xbf16>
    %57 = vector.shape_cast %56 : vector<1x4x128xbf16> to vector<4x128xbf16>
    %cst_47 = arith.constant dense<0.000000e+00> : vector<288x128xf32>
    %58 = tpu.matmul %55, %57, %cst_47 {dimension_numbers = #tpu.dot_dimension_numbers<[1], [0], [0], [1], [0, 0, 1, 1], [], []>} : vector<288x4xbf16>, vector<4x128xbf16>, vector<288x128xf32> -> vector<288x128xf32>
    %59 = arith.addf %52, %58 : vector<288x128xf32>
    %c0_48 = arith.constant 0 : index
    %c38 = arith.constant 38 : index
    %c0_49 = arith.constant 0 : index
    %60 = vector.load %arg1[%c0_48, %c38, %c0_49] : memref<1x328x4xf32, #tpu.memory_space<vmem>>, vector<1x288x4xf32>
    %61 = vector.shape_cast %60 : vector<1x288x4xf32> to vector<288x4xf32>
    %62 = arith.truncf %61 : vector<288x4xf32> to vector<288x4xbf16>
    %c8 = arith.constant 8 : index
    %c0_50 = arith.constant 0 : index
    %c0_51 = arith.constant 0 : index
    %63 = vector.load %arg2[%c8, %c0_50, %c0_51] : memref<9x4x128xbf16, #tpu.memory_space<vmem>>, vector<1x4x128xbf16>
    %64 = vector.shape_cast %63 : vector<1x4x128xbf16> to vector<4x128xbf16>
    %cst_52 = arith.constant dense<0.000000e+00> : vector<288x128xf32>
    %65 = tpu.matmul %62, %64, %cst_52 {dimension_numbers = #tpu.dot_dimension_numbers<[1], [0], [0], [1], [0, 0, 1, 1], [], []>} : vector<288x4xbf16>, vector<4x128xbf16>, vector<288x128xf32> -> vector<288x128xf32>
    %66 = arith.addf %59, %65 : vector<288x128xf32>
    %c0_53 = arith.constant 0 : index
    %c0_54 = arith.constant 0 : index
    %67 = vector.load %arg3[%c0_53, %c0_54] : memref<1x128xf32, #tpu.memory_space<vmem>>, vector<1x128xf32>
    %68 = vector.broadcast %67 : vector<1x128xf32> to vector<288x128xf32>
    %69 = arith.addf %66, %68 : vector<288x128xf32>
    %cst_55 = arith.constant 0.000000e+00 : f32
    %70 = vector.broadcast %cst_55 : f32 to vector<288x128xf32>
    %71 = arith.maximumf %69, %70 : vector<288x128xf32>
    %72 = vector.broadcast %2 : vector<288x1xf32> to vector<288x128xf32>
    %73 = arith.mulf %71, %72 : vector<288x128xf32>
    %c0_56 = arith.constant 0 : index
    %c0_57 = arith.constant 0 : index
    %c0_58 = arith.constant 0 : index
    %74 = vector.load %arg9[%c0_56, %c0_57, %c0_58] : memref<1x288x128xf32, #tpu.memory_space<vmem>>, vector<1x288x128xf32>
    %75 = vector.shape_cast %74 : vector<1x288x128xf32> to vector<288x128xf32>
    %76 = vector.shape_cast %73 : vector<288x128xf32> to vector<1x288x128xf32>
    tpu.vector_store %arg9[%c0_56, %c0_57, %c0_58], %76 {strides = array<i32>} : memref<1x288x128xf32, #tpu.memory_space<vmem>>, vector<1x288x128xf32>,
    %c24 = arith.constant 24 : index
    %c0_59 = arith.constant 0 : index
    %77 = vector.load %arg12[%c24, %c0_59] : memref<336x128xf32, #tpu.memory_space<vmem>>, vector<288x128xf32>
    tpu.vector_store %arg12[%c24, %c0_59], %73 {strides = array<i32>} : memref<336x128xf32, #tpu.memory_space<vmem>>, vector<288x128xf32>,
    %cst_60 = arith.constant 0.000000e+00 : f32
    %78 = vector.broadcast %cst_60 : f32 to vector<288x128xf32>
    %c5_61 = arith.constant 5 : index
    %c0_62 = arith.constant 0 : index
    %79 = vector.load %arg12[%c5_61, %c0_62] : memref<336x128xf32, #tpu.memory_space<vmem>>, vector<288x128xf32>
    %80 = arith.truncf %79 : vector<288x128xf32> to vector<288x128xbf16>
    %c0_63 = arith.constant 0 : index
    %c0_64 = arith.constant 0 : index
    %c0_65 = arith.constant 0 : index
    %81 = vector.load %arg4[%c0_63, %c0_64, %c0_65] : memref<9x128x128xbf16, #tpu.memory_space<vmem>>, vector<1x128x128xbf16>
    %82 = vector.shape_cast %81 : vector<1x128x128xbf16> to vector<128x128xbf16>
    %cst_66 = arith.constant dense<0.000000e+00> : vector<288x128xf32>
    %83 = tpu.matmul %80, %82, %cst_66 {dimension_numbers = #tpu.dot_dimension_numbers<[1], [0], [0], [1], [0, 0, 1, 1], [], []>} : vector<288x128xbf16>, vector<128x128xbf16>, vector<288x128xf32> -> vector<288x128xf32>
    %84 = arith.addf %78, %83 : vector<288x128xf32>
    %c6_67 = arith.constant 6 : index
    %c0_68 = arith.constant 0 : index
    %85 = vector.load %arg12[%c6_67, %c0_68] : memref<336x128xf32, #tpu.memory_space<vmem>>, vector<288x128xf32>
    %86 = arith.truncf %85 : vector<288x128xf32> to vector<288x128xbf16>
    %c1_69 = arith.constant 1 : index
    %c0_70 = arith.constant 0 : index
    %c0_71 = arith.constant 0 : index
    %87 = vector.load %arg4[%c1_69, %c0_70, %c0_71] : memref<9x128x128xbf16, #tpu.memory_space<vmem>>, vector<1x128x128xbf16>
    %88 = vector.shape_cast %87 : vector<1x128x128xbf16> to vector<128x128xbf16>
    %cst_72 = arith.constant dense<0.000000e+00> : vector<288x128xf32>
    %89 = tpu.matmul %86, %88, %cst_72 {dimension_numbers = #tpu.dot_dimension_numbers<[1], [0], [0], [1], [0, 0, 1, 1], [], []>} : vector<288x128xbf16>, vector<128x128xbf16>, vector<288x128xf32> -> vector<288x128xf32>
    %90 = arith.addf %84, %89 : vector<288x128xf32>
    %c7_73 = arith.constant 7 : index
    %c0_74 = arith.constant 0 : index
    %91 = vector.load %arg12[%c7_73, %c0_74] : memref<336x128xf32, #tpu.memory_space<vmem>>, vector<288x128xf32>
    %92 = arith.truncf %91 : vector<288x128xf32> to vector<288x128xbf16>
    %c2_75 = arith.constant 2 : index
    %c0_76 = arith.constant 0 : index
    %c0_77 = arith.constant 0 : index
    %93 = vector.load %arg4[%c2_75, %c0_76, %c0_77] : memref<9x128x128xbf16, #tpu.memory_space<vmem>>, vector<1x128x128xbf16>
    %94 = vector.shape_cast %93 : vector<1x128x128xbf16> to vector<128x128xbf16>
    %cst_78 = arith.constant dense<0.000000e+00> : vector<288x128xf32>
    %95 = tpu.matmul %92, %94, %cst_78 {dimension_numbers = #tpu.dot_dimension_numbers<[1], [0], [0], [1], [0, 0, 1, 1], [], []>} : vector<288x128xbf16>, vector<128x128xbf16>, vector<288x128xf32> -> vector<288x128xf32>
    %96 = arith.addf %90, %95 : vector<288x128xf32>
    %c23 = arith.constant 23 : index
    %c0_79 = arith.constant 0 : index
    %97 = vector.load %arg12[%c23, %c0_79] : memref<336x128xf32, #tpu.memory_space<vmem>>, vector<288x128xf32>
    %98 = arith.truncf %97 : vector<288x128xf32> to vector<288x128xbf16>
    %c3_80 = arith.constant 3 : index
    %c0_81 = arith.constant 0 : index
    %c0_82 = arith.constant 0 : index
    %99 = vector.load %arg4[%c3_80, %c0_81, %c0_82] : memref<9x128x128xbf16, #tpu.memory_space<vmem>>, vector<1x128x128xbf16>
    %100 = vector.shape_cast %99 : vector<1x128x128xbf16> to vector<128x128xbf16>
    %cst_83 = arith.constant dense<0.000000e+00> : vector<288x128xf32>
    %101 = tpu.matmul %98, %100, %cst_83 {dimension_numbers = #tpu.dot_dimension_numbers<[1], [0], [0], [1], [0, 0, 1, 1], [], []>} : vector<288x128xbf16>, vector<128x128xbf16>, vector<288x128xf32> -> vector<288x128xf32>
    %102 = arith.addf %96, %101 : vector<288x128xf32>
    %c24_84 = arith.constant 24 : index
    %c0_85 = arith.constant 0 : index
    %103 = vector.load %arg12[%c24_84, %c0_85] : memref<336x128xf32, #tpu.memory_space<vmem>>, vector<288x128xf32>
    %104 = arith.truncf %103 : vector<288x128xf32> to vector<288x128xbf16>
    %c4_86 = arith.constant 4 : index
    %c0_87 = arith.constant 0 : index
    %c0_88 = arith.constant 0 : index
    %105 = vector.load %arg4[%c4_86, %c0_87, %c0_88] : memref<9x128x128xbf16, #tpu.memory_space<vmem>>, vector<1x128x128xbf16>
    %106 = vector.shape_cast %105 : vector<1x128x128xbf16> to vector<128x128xbf16>
    %cst_89 = arith.constant dense<0.000000e+00> : vector<288x128xf32>
    %107 = tpu.matmul %104, %106, %cst_89 {dimension_numbers = #tpu.dot_dimension_numbers<[1], [0], [0], [1], [0, 0, 1, 1], [], []>} : vector<288x128xbf16>, vector<128x128xbf16>, vector<288x128xf32> -> vector<288x128xf32>
    %108 = arith.addf %102, %107 : vector<288x128xf32>
    %c25 = arith.constant 25 : index
    %c0_90 = arith.constant 0 : index
    %109 = vector.load %arg12[%c25, %c0_90] : memref<336x128xf32, #tpu.memory_space<vmem>>, vector<288x128xf32>
    %110 = arith.truncf %109 : vector<288x128xf32> to vector<288x128xbf16>
    %c5_91 = arith.constant 5 : index
    %c0_92 = arith.constant 0 : index
    %c0_93 = arith.constant 0 : index
    %111 = vector.load %arg4[%c5_91, %c0_92, %c0_93] : memref<9x128x128xbf16, #tpu.memory_space<vmem>>, vector<1x128x128xbf16>
    %112 = vector.shape_cast %111 : vector<1x128x128xbf16> to vector<128x128xbf16>
    %cst_94 = arith.constant dense<0.000000e+00> : vector<288x128xf32>
    %113 = tpu.matmul %110, %112, %cst_94 {dimension_numbers = #tpu.dot_dimension_numbers<[1], [0], [0], [1], [0, 0, 1, 1], [], []>} : vector<288x128xbf16>, vector<128x128xbf16>, vector<288x128xf32> -> vector<288x128xf32>
    %114 = arith.addf %108, %113 : vector<288x128xf32>
    %c41 = arith.constant 41 : index
    %c0_95 = arith.constant 0 : index
    %115 = vector.load %arg12[%c41, %c0_95] : memref<336x128xf32, #tpu.memory_space<vmem>>, vector<288x128xf32>
    %116 = arith.truncf %115 : vector<288x128xf32> to vector<288x128xbf16>
    %c6_96 = arith.constant 6 : index
    %c0_97 = arith.constant 0 : index
    %c0_98 = arith.constant 0 : index
    %117 = vector.load %arg4[%c6_96, %c0_97, %c0_98] : memref<9x128x128xbf16, #tpu.memory_space<vmem>>, vector<1x128x128xbf16>
    %118 = vector.shape_cast %117 : vector<1x128x128xbf16> to vector<128x128xbf16>
    %cst_99 = arith.constant dense<0.000000e+00> : vector<288x128xf32>
    %119 = tpu.matmul %116, %118, %cst_99 {dimension_numbers = #tpu.dot_dimension_numbers<[1], [0], [0], [1], [0, 0, 1, 1], [], []>} : vector<288x128xbf16>, vector<128x128xbf16>, vector<288x128xf32> -> vector<288x128xf32>
    %120 = arith.addf %114, %119 : vector<288x128xf32>
    %c42 = arith.constant 42 : index
    %c0_100 = arith.constant 0 : index
    %121 = vector.load %arg12[%c42, %c0_100] : memref<336x128xf32, #tpu.memory_space<vmem>>, vector<288x128xf32>
    %122 = arith.truncf %121 : vector<288x128xf32> to vector<288x128xbf16>
    %c7_101 = arith.constant 7 : index
    %c0_102 = arith.constant 0 : index
    %c0_103 = arith.constant 0 : index
    %123 = vector.load %arg4[%c7_101, %c0_102, %c0_103] : memref<9x128x128xbf16, #tpu.memory_space<vmem>>, vector<1x128x128xbf16>
    %124 = vector.shape_cast %123 : vector<1x128x128xbf16> to vector<128x128xbf16>
    %cst_104 = arith.constant dense<0.000000e+00> : vector<288x128xf32>
    %125 = tpu.matmul %122, %124, %cst_104 {dimension_numbers = #tpu.dot_dimension_numbers<[1], [0], [0], [1], [0, 0, 1, 1], [], []>} : vector<288x128xbf16>, vector<128x128xbf16>, vector<288x128xf32> -> vector<288x128xf32>
    %126 = arith.addf %120, %125 : vector<288x128xf32>
    %c43 = arith.constant 43 : index
    %c0_105 = arith.constant 0 : index
    %127 = vector.load %arg12[%c43, %c0_105] : memref<336x128xf32, #tpu.memory_space<vmem>>, vector<288x128xf32>
    %128 = arith.truncf %127 : vector<288x128xf32> to vector<288x128xbf16>
    %c8_106 = arith.constant 8 : index
    %c0_107 = arith.constant 0 : index
    %c0_108 = arith.constant 0 : index
    %129 = vector.load %arg4[%c8_106, %c0_107, %c0_108] : memref<9x128x128xbf16, #tpu.memory_space<vmem>>, vector<1x128x128xbf16>
    %130 = vector.shape_cast %129 : vector<1x128x128xbf16> to vector<128x128xbf16>
    %cst_109 = arith.constant dense<0.000000e+00> : vector<288x128xf32>
    %131 = tpu.matmul %128, %130, %cst_109 {dimension_numbers = #tpu.dot_dimension_numbers<[1], [0], [0], [1], [0, 0, 1, 1], [], []>} : vector<288x128xbf16>, vector<128x128xbf16>, vector<288x128xf32> -> vector<288x128xf32>
    %132 = arith.addf %126, %131 : vector<288x128xf32>
    %c0_110 = arith.constant 0 : index
    %c0_111 = arith.constant 0 : index
    %133 = vector.load %arg5[%c0_110, %c0_111] : memref<1x128xf32, #tpu.memory_space<vmem>>, vector<1x128xf32>
    %134 = vector.broadcast %133 : vector<1x128xf32> to vector<288x128xf32>
    %135 = arith.addf %132, %134 : vector<288x128xf32>
    %cst_112 = arith.constant 0.000000e+00 : f32
    %136 = vector.broadcast %cst_112 : f32 to vector<288x128xf32>
    %137 = arith.maximumf %135, %136 : vector<288x128xf32>
    %138 = vector.broadcast %2 : vector<288x1xf32> to vector<288x128xf32>
    %139 = arith.mulf %137, %138 : vector<288x128xf32>
    %cst_113 = arith.constant dense<0.000000e+00> : vector<128xf32>
    %140 = vector.multi_reduction <add>, %139, %cst_113 [0] : vector<288x128xf32> to vector<128xf32>
    %141 = vector.shape_cast %140 : vector<128xf32> to vector<1x128xf32>
    %cst_114 = arith.constant 3.906250e-03 : f32
    %142 = vector.broadcast %cst_114 : f32 to vector<1x128xf32>
    %143 = arith.mulf %141, %142 : vector<1x128xf32>
    %c0_115 = arith.constant 0 : index
    %c0_116 = arith.constant 0 : index
    %c0_117 = arith.constant 0 : index
    %144 = vector.load %arg10[%c0_115, %c0_116, %c0_117] : memref<1x1x128xf32, #tpu.memory_space<vmem>>, vector<1x1x128xf32>
    %145 = vector.shape_cast %144 : vector<1x1x128xf32> to vector<1x128xf32>
    %146 = vector.shape_cast %143 : vector<1x128xf32> to vector<1x1x128xf32>
    tpu.vector_store %arg10[%c0_115, %c0_116, %c0_117], %146 {strides = array<i32>} : memref<1x1x128xf32, #tpu.memory_space<vmem>>, vector<1x1x128xf32>,
    %c0_118 = arith.constant 0 : index
    %c0_119 = arith.constant 0 : index
    %147 = vector.load %arg6[%c0_118, %c0_119] : memref<128x128xf32, #tpu.memory_space<vmem>>, vector<128x128xf32>
    %cst_120 = arith.constant dense<0.000000e+00> : vector<1x128xf32>
    %148 = tpu.matmul %143, %147, %cst_120 {dimension_numbers = #tpu.dot_dimension_numbers<[1], [0], [0], [1], [0, 0, 1, 1], [], []>} : vector<1x128xf32>, vector<128x128xf32>, vector<1x128xf32> -> vector<1x128xf32>
    %c0_121 = arith.constant 0 : index
    %c0_122 = arith.constant 0 : index
    %149 = vector.load %arg7[%c0_121, %c0_122] : memref<1x128xf32, #tpu.memory_space<vmem>>, vector<1x128xf32>
    %150 = arith.addf %148, %149 : vector<1x128xf32>
    %c0_123 = arith.constant 0 : index
    %c0_124 = arith.constant 0 : index
    %c0_125 = arith.constant 0 : index
    %151 = vector.load %arg11[%c0_123, %c0_124, %c0_125] : memref<1x1x128xf32, #tpu.memory_space<vmem>>, vector<1x1x128xf32>
    %152 = vector.shape_cast %151 : vector<1x1x128xf32> to vector<1x128xf32>
    %153 = vector.shape_cast %150 : vector<1x128xf32> to vector<1x1x128xf32>
    tpu.vector_store %arg11[%c0_123, %c0_124, %c0_125], %153 {strides = array<i32>} : memref<1x1x128xf32, #tpu.memory_space<vmem>>, vector<1x1x128xf32>,
    return
  }
  func.func @transform_0(%arg0: i32) -> (i32, i32, i32) {
    %c0_i32 = arith.constant 0 : i32
    %c0_i32_0 = arith.constant 0 : i32
    %c0_i32_1 = arith.constant 0 : i32
    return %arg0, %c0_i32, %c0_i32_0 : i32, i32, i32
  }
  func.func @transform_1(%arg0: i32) -> (i32, i32, i32) {
    %c0_i32 = arith.constant 0 : i32
    %c0_i32_0 = arith.constant 0 : i32
    %c0_i32_1 = arith.constant 0 : i32
    %c0_i32_2 = arith.constant 0 : i32
    return %c0_i32, %c0_i32_0, %c0_i32_1 : i32, i32, i32
  }
  func.func @transform_2(%arg0: i32) -> (i32, i32) {
    %c0_i32 = arith.constant 0 : i32
    %c0_i32_0 = arith.constant 0 : i32
    %c0_i32_1 = arith.constant 0 : i32
    return %c0_i32, %c0_i32_0 : i32, i32
  }
  func.func @transform_3(%arg0: i32) -> (i32, i32, i32) {
    %c0_i32 = arith.constant 0 : i32
    %c0_i32_0 = arith.constant 0 : i32
    %c0_i32_1 = arith.constant 0 : i32
    %c0_i32_2 = arith.constant 0 : i32
    return %c0_i32, %c0_i32_0, %c0_i32_1 : i32, i32, i32
  }
  func.func @transform_4(%arg0: i32) -> (i32, i32) {
    %c0_i32 = arith.constant 0 : i32
    %c0_i32_0 = arith.constant 0 : i32
    %c0_i32_1 = arith.constant 0 : i32
    return %c0_i32, %c0_i32_0 : i32, i32
  }
  func.func @transform_5(%arg0: i32) -> (i32, i32) {
    %c0_i32 = arith.constant 0 : i32
    %c0_i32_0 = arith.constant 0 : i32
    %c0_i32_1 = arith.constant 0 : i32
    return %c0_i32, %c0_i32_0 : i32, i32
  }
  func.func @transform_6(%arg0: i32) -> (i32, i32) {
    %c0_i32 = arith.constant 0 : i32
    %c0_i32_0 = arith.constant 0 : i32
    %c0_i32_1 = arith.constant 0 : i32
    return %c0_i32, %c0_i32_0 : i32, i32
  }
  func.func @transform_7(%arg0: i32) -> (i32, i32) {
    %c0_i32 = arith.constant 0 : i32
    %c0_i32_0 = arith.constant 0 : i32
    %c0_i32_1 = arith.constant 0 : i32
    return %c0_i32, %c0_i32_0 : i32, i32
  }
  func.func @transform_8(%arg0: i32) -> (i32, i32, i32) {
    %c0_i32 = arith.constant 0 : i32
    %c0_i32_0 = arith.constant 0 : i32
    %c0_i32_1 = arith.constant 0 : i32
    return %arg0, %c0_i32, %c0_i32_0 : i32, i32, i32
  }
  func.func @transform_9(%arg0: i32) -> (i32, i32, i32) {
    %c0_i32 = arith.constant 0 : i32
    %c0_i32_0 = arith.constant 0 : i32
    %c0_i32_1 = arith.constant 0 : i32
    return %arg0, %c0_i32, %c0_i32_0 : i32, i32, i32
  }
  func.func @transform_10(%arg0: i32) -> (i32, i32, i32) {
    %c0_i32 = arith.constant 0 : i32
    %c0_i32_0 = arith.constant 0 : i32
    %c0_i32_1 = arith.constant 0 : i32
    return %arg0, %c0_i32, %c0_i32_0 : i32, i32, i32
  }
}

</mosaic_0001>

<llo_original>
// kernel: adaptive_net_forward.1
$region0: #{adaptive_net_forward.1}
  #allocation0 [shape = 'u32[]', space=smem, size = 0x4, offset = 0x4, fixed_abs, tag = 'smem constant byte address 0x4 - core index']
  #allocation1 [shape = 'u32[144,128]{1,0:T(1,128)}', space=vmem, size = 0x12000, scoped, tag = 'internal scratch']
  #allocation2 [shape = 'f32[336,128]{1,0:T(8,128)}', space=vmem, size = 0x2a000, scoped, tag = 'scratch operand']
  %s0 = inlined_call_operand.vmem [shape: f32[2,328,4], index: 0, kind: input, shape index: {}]
  %s1 = inlined_call_operand.vmem [shape: bf16[9,4,128], index: 1, kind: input, shape index: {}]
  %s2 = inlined_call_operand.vmem [shape: f32[1,128], index: 2, kind: input, shape index: {}]
  %s3 = inlined_call_operand.vmem [shape: bf16[9,128,128], index: 3, kind: input, shape index: {}]
  %s4 = inlined_call_operand.vmem [shape: f32[1,128], index: 4, kind: input, shape index: {}]
  %s5 = inlined_call_operand.vmem [shape: f32[128,128], index: 5, kind: input, shape index: {}]
  %s6 = inlined_call_operand.vmem [shape: f32[1,128], index: 6, kind: input, shape index: {}]
  %s7 = inlined_call_operand.vmem [shape: f32[288,1], index: 7, kind: input, shape index: {}]
  %s8 = inlined_call_operand.vmem [shape: f32[2,288,128], index: 8, kind: output, shape index: {0}]
  %s9 = inlined_call_operand.hbm [shape: f32[2,1,128], index: 9, kind: output, shape index: {1}]
  %s10 = inlined_call_operand.vmem [shape: f32[2,1,128], index: 10, kind: output, shape index: {2}]
  %11 = xla_tuple %s8, %s9, %s10
  %s12 = sld [smem:[#allocation0]]
  $region81: #{adaptive_net_forward.1} parent=0
    _
  %s14 = ssub.s32 1, %s12
  %s15 = scalar_select 0, %s14, %s12
  $region1: #{adaptive_net_forward.1} parent=0
    #allocation3 [shape = 'u8[1024]{0}', space=vmem, size = 0x400, scoped, tag = 'output window, operand 1']
    #allocation4 [shape = 's32[2]{0}', space=sflag, size = 0x8, scoped, tag = 'scoped memory for adaptive_net_forward.1']
    %16 = vsyncpa [#allocation4], 0
    %s17 = scalar_lea.sflag [#allocation4], 1
    %18 = vsyncpa %s17, 0
    loop: start=0, step=1, limit=4
    $region2: #{adaptive_net_forward.1} parent=1 // loop_pre_header
      _
    $region3: #{adaptive_net_forward.1} parent=1 // loop_header
      %s20 = sphi 0, %s24
      %p21 = scmp.ge.s32.totalorder %s20, 4
      %s30 = sphi 0, %s32
      %s33 = sphi 0, %s30
      %s34 = sphi 0, %s33
      %s50 = sphi 0, %s34
      %s54 = sphi 0, %s54
      %s56 = sphi 0, %s54
      %s57 = sphi 0, %s56
      %s71 = sphi 0, %s57
      %s75 = sphi 0, %s75
      %s77 = sphi 0, %s75
      %s78 = sphi 0, %s77
      %s92 = sphi 0, %s78
      %s96 = sphi 0, %s96
      %s98 = sphi 0, %s96
      %s99 = sphi 0, %s98
      %s113 = sphi 0, %s99
      %s117 = sphi 0, %s117
      %s119 = sphi 0, %s117
      %s120 = sphi 0, %s119
      %s134 = sphi 0, %s120
      %s138 = sphi 0, %s138
      %s140 = sphi 0, %s138
      %s141 = sphi 0, %s140
      %s155 = sphi 0, %s141
      %s159 = sphi 0, %s159
      %s161 = sphi 0, %s159
      %s162 = sphi 0, %s161
      %s176 = sphi 0, %s162
      %s180 = sphi 0, %s180
      %s182 = sphi 0, %s180
      %s183 = sphi 0, %s182
      %s197 = sphi 0, %s183
      %s203 = sphi 0, %s205
      %s206 = sphi 0, %s203
      %s207 = sphi 0, %s206
      %s223 = sphi 0, %s207
      %s229 = sphi 0, %s231
      %s232 = sphi 0, %s229
      %s233 = sphi 0, %s232
      %s249 = sphi 0, %s233
      %s255 = sphi 0, %s257
      %s258 = sphi 0, %s255
      %s259 = sphi 0, %s258
      %s275 = sphi 0, %s259
    $region4: #{adaptive_net_forward.1} parent=1 // loop_header_branch
      %23 = sbr.rel (%p21) target = $region8
    $region5: #{adaptive_net_forward.1} parent=1 // loop_body
      %s25 = ssub.s32 %s20, 1
      %s26 = ssub.s32 %s20, 2
      %s27 = sadd.s32 %s20, 1
      %s28 = ssub.s32 %s20, %s27
      %p29 = scmp.eq.s32.totalorder %s28, 0
      %s31 = sadd.s32 %s30, 1
      %s32 = scalar_select %p29, %s30, %s31
      %p35 = pneg %p29
      %p36 = scmp.eq.s32.totalorder %s20, 1
      %p37 = por %p35, %p36
      %p38 = scmp.ne.s32.totalorder %s30, %s33
      %p39 = scmp.eq.s32.totalorder %s20, 0
      %p40 = por %p38, %p39
      %p41 = scmp.ne.s32.totalorder %s30, %s33
      %p42 = scmp.eq.s32.totalorder %s25, 1
      %p43 = por %p41, %p42
      %p44 = scmp.ne.s32.totalorder %s33, %s34
      %p45 = scmp.eq.s32.totalorder %s25, 0
      %p46 = por %p44, %p45
      %p47 = scmp.ne.s32.totalorder %s33, %s34
      %p48 = scmp.eq.s32.totalorder %s26, 1
      %p49 = por %p47, %p48
      %p51 = scmp.ne.s32.totalorder %s34, %s50
      %p52 = scmp.eq.s32.totalorder %s26, 0
      %p53 = por %p51, %p52
      %s55 = sadd.s32 %s54, 1
      %p58 = scmp.eq.s32.totalorder %s20, 1
      %p59 = scmp.ne.s32.totalorder %s54, %s56
      %p60 = scmp.eq.s32.totalorder %s20, 0
      %p61 = por %p59, %p60
      %p62 = scmp.ne.s32.totalorder %s54, %s56
      %p63 = scmp.eq.s32.totalorder %s25, 1
      %p64 = por %p62, %p63
      %p65 = scmp.ne.s32.totalorder %s56, %s57
      %p66 = scmp.eq.s32.totalorder %s25, 0
      %p67 = por %p65, %p66
      %p68 = scmp.ne.s32.totalorder %s56, %s57
      %p69 = scmp.eq.s32.totalorder %s26, 1
      %p70 = por %p68, %p69
      %p72 = scmp.ne.s32.totalorder %s57, %s71
      %p73 = scmp.eq.s32.totalorder %s26, 0
      %p74 = por %p72, %p73
      %s76 = sadd.s32 %s75, 1
      %p79 = scmp.eq.s32.totalorder %s20, 1
      %p80 = scmp.ne.s32.totalorder %s75, %s77
      %p81 = scmp.eq.s32.totalorder %s20, 0
      %p82 = por %p80, %p81
      %p83 = scmp.ne.s32.totalorder %s75, %s77
      %p84 = scmp.eq.s32.totalorder %s25, 1
      %p85 = por %p83, %p84
      %p86 = scmp.ne.s32.totalorder %s77, %s78
      %p87 = scmp.eq.s32.totalorder %s25, 0
      %p88 = por %p86, %p87
      %p89 = scmp.ne.s32.totalorder %s77, %s78
      %p90 = scmp.eq.s32.totalorder %s26, 1
      %p91 = por %p89, %p90
      %p93 = scmp.ne.s32.totalorder %s78, %s92
      %p94 = scmp.eq.s32.totalorder %s26, 0
      %p95 = por %p93, %p94
      %s97 = sadd.s32 %s96, 1
      %p100 = scmp.eq.s32.totalorder %s20, 1
      %p101 = scmp.ne.s32.totalorder %s96, %s98
      %p102 = scmp.eq.s32.totalorder %s20, 0
      %p103 = por %p101, %p102
      %p104 = scmp.ne.s32.totalorder %s96, %s98
      %p105 = scmp.eq.s32.totalorder %s25, 1
      %p106 = por %p104, %p105
      %p107 = scmp.ne.s32.totalorder %s98, %s99
      %p108 = scmp.eq.s32.totalorder %s25, 0
      %p109 = por %p107, %p108
      %p110 = scmp.ne.s32.totalorder %s98, %s99
      %p111 = scmp.eq.s32.totalorder %s26, 1
      %p112 = por %p110, %p111
      %p114 = scmp.ne.s32.totalorder %s99, %s113
      %p115 = scmp.eq.s32.totalorder %s26, 0
      %p116 = por %p114, %p115
      %s118 = sadd.s32 %s117, 1
      %p121 = scmp.eq.s32.totalorder %s20, 1
      %p122 = scmp.ne.s32.totalorder %s117, %s119
      %p123 = scmp.eq.s32.totalorder %s20, 0
      %p124 = por %p122, %p123
      %p125 = scmp.ne.s32.totalorder %s117, %s119
      %p126 = scmp.eq.s32.totalorder %s25, 1
      %p127 = por %p125, %p126
      %p128 = scmp.ne.s32.totalorder %s119, %s120
      %p129 = scmp.eq.s32.totalorder %s25, 0
      %p130 = por %p128, %p129
      %p131 = scmp.ne.s32.totalorder %s119, %s120
      %p132 = scmp.eq.s32.totalorder %s26, 1
      %p133 = por %p131, %p132
      %p135 = scmp.ne.s32.totalorder %s120, %s134
      %p136 = scmp.eq.s32.totalorder %s26, 0
      %p137 = por %p135, %p136
      %s139 = sadd.s32 %s138, 1
      %p142 = scmp.eq.s32.totalorder %s20, 1
      %p143 = scmp.ne.s32.totalorder %s138, %s140
      %p144 = scmp.eq.s32.totalorder %s20, 0
      %p145 = por %p143, %p144
      %p146 = scmp.ne.s32.totalorder %s138, %s140
      %p147 = scmp.eq.s32.totalorder %s25, 1
      %p148 = por %p146, %p147
      %p149 = scmp.ne.s32.totalorder %s140, %s141
      %p150 = scmp.eq.s32.totalorder %s25, 0
      %p151 = por %p149, %p150
      %p152 = scmp.ne.s32.totalorder %s140, %s141
      %p153 = scmp.eq.s32.totalorder %s26, 1
      %p154 = por %p152, %p153
      %p156 = scmp.ne.s32.totalorder %s141, %s155
      %p157 = scmp.eq.s32.totalorder %s26, 0
      %p158 = por %p156, %p157
      %s160 = sadd.s32 %s159, 1
      %p163 = scmp.eq.s32.totalorder %s20, 1
      %p164 = scmp.ne.s32.totalorder %s159, %s161
      %p165 = scmp.eq.s32.totalorder %s20, 0
      %p166 = por %p164, %p165
      %p167 = scmp.ne.s32.totalorder %s159, %s161
      %p168 = scmp.eq.s32.totalorder %s25, 1
      %p169 = por %p167, %p168
      %p170 = scmp.ne.s32.totalorder %s161, %s162
      %p171 = scmp.eq.s32.totalorder %s25, 0
      %p172 = por %p170, %p171
      %p173 = scmp.ne.s32.totalorder %s161, %s162
      %p174 = scmp.eq.s32.totalorder %s26, 1
      %p175 = por %p173, %p174
      %p177 = scmp.ne.s32.totalorder %s162, %s176
      %p178 = scmp.eq.s32.totalorder %s26, 0
      %p179 = por %p177, %p178
      %s181 = sadd.s32 %s180, 1
      %p184 = scmp.eq.s32.totalorder %s20, 1
      %p185 = scmp.ne.s32.totalorder %s180, %s182
      %p186 = scmp.eq.s32.totalorder %s20, 0
      %p187 = por %p185, %p186
      %p188 = scmp.ne.s32.totalorder %s180, %s182
      %p189 = scmp.eq.s32.totalorder %s25, 1
      %p190 = por %p188, %p189
      %p191 = scmp.ne.s32.totalorder %s182, %s183
      %p192 = scmp.eq.s32.totalorder %s25, 0
      %p193 = por %p191, %p192
      %p194 = scmp.ne.s32.totalorder %s182, %s183
      %p195 = scmp.eq.s32.totalorder %s26, 1
      %p196 = por %p194, %p195
      %p198 = scmp.ne.s32.totalorder %s183, %s197
      %p199 = scmp.eq.s32.totalorder %s26, 0
      %p200 = por %p198, %p199
      %s201 = ssub.s32 %s20, %s27
      %p202 = scmp.eq.s32.totalorder %s201, 0
      %s204 = sadd.s32 %s203, 1
      %s205 = scalar_select %p202, %s203, %s204
      %p208 = pneg %p202
      %p209 = scmp.eq.s32.totalorder %s20, 1
      %p210 = por %p208, %p209
      %p211 = scmp.ne.s32.totalorder %s203, %s206
      %p212 = scmp.eq.s32.totalorder %s20, 0
      %p213 = por %p211, %p212
      %p214 = scmp.ne.s32.totalorder %s203, %s206
      %p215 = scmp.eq.s32.totalorder %s25, 1
      %p216 = por %p214, %p215
      %p217 = scmp.ne.s32.totalorder %s206, %s207
      %p218 = scmp.eq.s32.totalorder %s25, 0
      %p219 = por %p217, %p218
      %p220 = scmp.ne.s32.totalorder %s206, %s207
      %p221 = scmp.eq.s32.totalorder %s26, 1
      %p222 = por %p220, %p221
      %p224 = scmp.ne.s32.totalorder %s207, %s223
      %p225 = scmp.eq.s32.totalorder %s26, 0
      %p226 = por %p224, %p225
      %s227 = ssub.s32 %s20, %s27
      %p228 = scmp.eq.s32.totalorder %s227, 0
      %s230 = sadd.s32 %s229, 1
      %s231 = scalar_select %p228, %s229, %s230
      %p234 = pneg %p228
      %p235 = scmp.eq.s32.totalorder %s20, 1
      %p236 = por %p234, %p235
      %p237 = scmp.ne.s32.totalorder %s229, %s232
      %p238 = scmp.eq.s32.totalorder %s20, 0
      %p239 = por %p237, %p238
      %p240 = scmp.ne.s32.totalorder %s229, %s232
      %p241 = scmp.eq.s32.totalorder %s25, 1
      %p242 = por %p240, %p241
      %p243 = scmp.ne.s32.totalorder %s232, %s233
      %p244 = scmp.eq.s32.totalorder %s25, 0
      %p245 = por %p243, %p244
      %p246 = scmp.ne.s32.totalorder %s232, %s233
      %p247 = scmp.eq.s32.totalorder %s26, 1
      %p248 = por %p246, %p247
      %p250 = scmp.ne.s32.totalorder %s233, %s249
      %p251 = scmp.eq.s32.totalorder %s26, 0
      %p252 = por %p250, %p251
      %s253 = ssub.s32 %s20, %s27
      %p254 = scmp.eq.s32.totalorder %s253, 0
      %s256 = sadd.s32 %s255, 1
      %s257 = scalar_select %p254, %s255, %s256
      %p260 = pneg %p254
      %p261 = scmp.eq.s32.totalorder %s20, 1
      %p262 = por %p260, %p261
      %p263 = scmp.ne.s32.totalorder %s255, %s258
      %p264 = scmp.eq.s32.totalorder %s20, 0
      %p265 = por %p263, %p264
      %p266 = scmp.ne.s32.totalorder %s255, %s258
      %p267 = scmp.eq.s32.totalorder %s25, 1
      %p268 = por %p266, %p267
      %p269 = scmp.ne.s32.totalorder %s258, %s259
      %p270 = scmp.eq.s32.totalorder %s25, 0
      %p271 = por %p269, %p270
      %p272 = scmp.ne.s32.totalorder %s258, %s259
      %p273 = scmp.eq.s32.totalorder %s26, 1
      %p274 = por %p272, %p273
      %p276 = scmp.ne.s32.totalorder %s259, %s275
      %p277 = scmp.eq.s32.totalorder %s26, 0
      %p278 = por %p276, %p277
      %p279 = scmp.le.s32.totalorder 1, %s20
      %p280 = scmp.lt.s32.totalorder %s20, 3
      %p281 = pnand %p279, %p280
      %p282 = pneg %p281
      // Predicated region
      $region9: #{adaptive_net_forward.1} parent=5 // pred_check
        _
      $region10: #{adaptive_net_forward.1} parent=5 // pred_check_branch
        %284 = sbr.rel (%p281) target = $region12
      $region11: #{adaptive_net_forward.1} parent=5 // pred_region
        %s285 = ssub.s32 %s20, 1
        // Predicated region
        $region13: #{adaptive_net_forward.1} parent=11 // pred_check
          %p286 = pneg %p67
        $region14: #{adaptive_net_forward.1} parent=11 // pred_check_branch
          %288 = sbr.rel (%p286) target = $region16
        $region15: #{adaptive_net_forward.1} parent=11 // pred_region
          _
        $region16: #{adaptive_net_forward.1} parent=11 // pred_fallthru
          _
        // Predicated region
        $region17: #{adaptive_net_forward.1} parent=11 // pred_check
          %p289 = pneg %p88
        $region18: #{adaptive_net_forward.1} parent=11 // pred_check_branch
          %291 = sbr.rel (%p289) target = $region20
        $region19: #{adaptive_net_forward.1} parent=11 // pred_region
          _
        $region20: #{adaptive_net_forward.1} parent=11 // pred_fallthru
          _
        // Predicated region
        $region21: #{adaptive_net_forward.1} parent=11 // pred_check
          %p292 = pneg %p109
        $region22: #{adaptive_net_forward.1} parent=11 // pred_check_branch
          %294 = sbr.rel (%p292) target = $region24
        $region23: #{adaptive_net_forward.1} parent=11 // pred_region
          _
        $region24: #{adaptive_net_forward.1} parent=11 // pred_fallthru
          _
        // Predicated region
        $region25: #{adaptive_net_forward.1} parent=11 // pred_check
          %p295 = pneg %p130
        $region26: #{adaptive_net_forward.1} parent=11 // pred_check_branch
          %297 = sbr.rel (%p295) target = $region28
        $region27: #{adaptive_net_forward.1} parent=11 // pred_region
          _
        $region28: #{adaptive_net_forward.1} parent=11 // pred_fallthru
          _
        // Predicated region
        $region29: #{adaptive_net_forward.1} parent=11 // pred_check
          %p298 = pneg %p151
        $region30: #{adaptive_net_forward.1} parent=11 // pred_check_branch
          %300 = sbr.rel (%p298) target = $region32
        $region31: #{adaptive_net_forward.1} parent=11 // pred_region
          _
        $region32: #{adaptive_net_forward.1} parent=11 // pred_fallthru
          _
        // Predicated region
        $region33: #{adaptive_net_forward.1} parent=11 // pred_check
          %p301 = pneg %p172
        $region34: #{adaptive_net_forward.1} parent=11 // pred_check_branch
          %303 = sbr.rel (%p301) target = $region36
        $region35: #{adaptive_net_forward.1} parent=11 // pred_region
          _
        $region36: #{adaptive_net_forward.1} parent=11 // pred_fallthru
          _
        // Predicated region
        $region37: #{adaptive_net_forward.1} parent=11 // pred_check
          %p304 = pneg %p193
        $region38: #{adaptive_net_forward.1} parent=11 // pred_check_branch
          %306 = sbr.rel (%p304) target = $region40
        $region39: #{adaptive_net_forward.1} parent=11 // pred_region
          _
        $region40: #{adaptive_net_forward.1} parent=11 // pred_fallthru
          _
      $region12: #{adaptive_net_forward.1} parent=5 // pred_fallthru
        _
      %p307 = scmp.lt.s32.totalorder %s20, 2
      // Predicated region
      $region41: #{adaptive_net_forward.1} parent=5 // pred_check
        %p308 = pneg %p307
      $region42: #{adaptive_net_forward.1} parent=5 // pred_check_branch
        %310 = sbr.rel (%p308) target = $region44
      $region43: #{adaptive_net_forward.1} parent=5 // pred_region
        // Predicated region
        $region45: #{adaptive_net_forward.1} parent=43 // pred_check
          %p311 = pneg %p40
        $region46: #{adaptive_net_forward.1} parent=43 // pred_check_branch
          %313 = sbr.rel (%p311) target = $region48
        $region47: #{adaptive_net_forward.1} parent=43 // pred_region
          %p314 = scmp.lt.s32.totalorder %s20, 1
          %s315 = scalar_select %p314, %s20, 1
          %s316 = smul.addr %s315, 41
          %s317 = smul.addr %s316, 8
          %s318 = scalar_lea.vmem %s0, %s317
        $region48: #{adaptive_net_forward.1} parent=43 // pred_fallthru
          _
      $region44: #{adaptive_net_forward.1} parent=5 // pred_fallthru
        _
      %p319 = scmp.le.s32.totalorder 1, %s20
      %p320 = scmp.lt.s32.totalorder %s20, 3
      %p321 = pnand %p319, %p320
      %p322 = pneg %p321
      // Predicated region
      $region49: #{adaptive_net_forward.1} parent=5 // pred_check
        _
      $region50: #{adaptive_net_forward.1} parent=5 // pred_check_branch
        %324 = sbr.rel (%p321) target = $region52
      $region51: #{adaptive_net_forward.1} parent=5 // pred_region
        %s325 = ssub.s32 %s20, 1
        %p326 = scmp.lt.s32.totalorder %s25, 1
        %s327 = scalar_select %p326, %s25, 1
        %s328 = smul.addr %s327, 41
        %s329 = smul.addr %s328, 8
        %s330 = scalar_lea.vmem %s0, %s329
        %p331 = pneg %p46
        %p332 = pneg %p43
        %p333 = pneg %p67
        %p334 = pneg %p64
        %p335 = pneg %p88
        %p336 = pneg %p85
        %p337 = pneg %p109
        %p338 = pneg %p106
        %p339 = pneg %p130
        %p340 = pneg %p127
        %p341 = pneg %p151
        %p342 = pneg %p148
        %p343 = pneg %p172
        %p344 = pneg %p169
        %p345 = pneg %p193
        %p346 = pneg %p190
        %p347 = pneg %p219
        %p348 = pneg %p216
        %p349 = scmp.lt.s32.totalorder %s25, 1
        %s350 = scalar_select %p349, %s25, 1
        %s351 = smul.addr %s350, 36
        %s352 = smul.addr %s351, 8
        %s353 = scalar_lea.vmem %s8, %s352
        %p354 = pneg %p245
        %p355 = pneg %p242
        %s356 = sand.u32 %s232, 1
        %s357 = scalar_lea.sflag [#allocation4], %s356
        %s358 = sand.u32 %s232, 1
        %s359 = scalar_lea.vmem [#allocation3], %s358
        %p360 = pneg %p271
        %p361 = pneg %p268
        %p362 = scmp.lt.s32.totalorder %s25, 1
        %s363 = scalar_select %p362, %s25, 1
        %s364 = scalar_lea.vmem %s10, %s363
        %p365 = scmp.lt.s32.totalorder %s25, 1
        %s366 = scalar_select %p365, %s25, 1
        %s367 = smul.addr %s366, 41
        %s368 = smul.addr %s367, 8
        %s369 = scalar_lea.vmem %s0, %s368
        %p370 = scmp.lt.s32.totalorder %s25, 1
        %s371 = scalar_select %p370, %s25, 1
        %s372 = smul.addr %s371, 36
        %s373 = smul.addr %s372, 8
        %s374 = scalar_lea.vmem %s8, %s373
        %p375 = scmp.lt.s32.totalorder %s25, 1
        %s376 = scalar_select %p375, %s25, 1
        %s377 = scalar_lea.vmem %s10, %s376
        %379 = vst [vmem:[#allocation2] sm:$0xff] 0.0
        %380 = vst [vmem:[#allocation2 + $0x8] sm:$0xff] 0.0
        %381 = vst [vmem:[#allocation2 + $0x10] sm:$0xff] 0.0
        %382 = vst [vmem:[#allocation2 + $0x18] sm:$0xff] 0.0
        %383 = vst [vmem:[#allocation2 + $0x20] sm:$0xff] 0.0
        %384 = vst [vmem:[#allocation2 + $0x28] sm:$0xff] 0.0
        %385 = vst [vmem:[#allocation2 + $0x30] sm:$0xff] 0.0
        %386 = vst [vmem:[#allocation2 + $0x38] sm:$0xff] 0.0
        %387 = vst [vmem:[#allocation2 + $0x40] sm:$0xff] 0.0
        %388 = vst [vmem:[#allocation2 + $0x48] sm:$0xff] 0.0
        %389 = vst [vmem:[#allocation2 + $0x50] sm:$0xff] 0.0
        %390 = vst [vmem:[#allocation2 + $0x58] sm:$0xff] 0.0
        %391 = vst [vmem:[#allocation2 + $0x60] sm:$0xff] 0.0
        %392 = vst [vmem:[#allocation2 + $0x68] sm:$0xff] 0.0
        %393 = vst [vmem:[#allocation2 + $0x70] sm:$0xff] 0.0
        %394 = vst [vmem:[#allocation2 + $0x78] sm:$0xff] 0.0
        %395 = vst [vmem:[#allocation2 + $0x80] sm:$0xff] 0.0
        %396 = vst [vmem:[#allocation2 + $0x88] sm:$0xff] 0.0
        %397 = vst [vmem:[#allocation2 + $0x90] sm:$0xff] 0.0
        %398 = vst [vmem:[#allocation2 + $0x98] sm:$0xff] 0.0
        %399 = vst [vmem:[#allocation2 + $0xa0] sm:$0xff] 0.0
        %400 = vst [vmem:[#allocation2 + $0xa8] sm:$0xff] 0.0
        %401 = vst [vmem:[#allocation2 + $0xb0] sm:$0xff] 0.0
        %402 = vst [vmem:[#allocation2 + $0xb8] sm:$0xff] 0.0
        %403 = vst [vmem:[#allocation2 + $0xc0] sm:$0xff] 0.0
        %404 = vst [vmem:[#allocation2 + $0xc8] sm:$0xff] 0.0
        %405 = vst [vmem:[#allocation2 + $0xd0] sm:$0xff] 0.0
        %406 = vst [vmem:[#allocation2 + $0xd8] sm:$0xff] 0.0
        %407 = vst [vmem:[#allocation2 + $0xe0] sm:$0xff] 0.0
        %408 = vst [vmem:[#allocation2 + $0xe8] sm:$0xff] 0.0
        %409 = vst [vmem:[#allocation2 + $0xf0] sm:$0xff] 0.0
        %410 = vst [vmem:[#allocation2 + $0xf8] sm:$0xff] 0.0
        %411 = vst [vmem:[#allocation2 + $0x100] sm:$0xff] 0.0
        %412 = vst [vmem:[#allocation2 + $0x108] sm:$0xff] 0.0
        %413 = vst [vmem:[#allocation2 + $0x110] sm:$0xff] 0.0
        %414 = vst [vmem:[#allocation2 + $0x118] sm:$0xff] 0.0
        %415 = vst [vmem:[#allocation2 + $0x120] sm:$0xff] 0.0
        %416 = vst [vmem:[#allocation2 + $0x128] sm:$0xff] 0.0
        %417 = vst [vmem:[#allocation2 + $0x130] sm:$0xff] 0.0
        %418 = vst [vmem:[#allocation2 + $0x138] sm:$0xff] 0.0
        %419 = vst [vmem:[#allocation2 + $0x140] sm:$0xff] 0.0
        %420 = vst [vmem:[#allocation2 + $0x148] sm:$0xff] 0.0
        %v421 = vld [vmem:[%s7] sm:$0xff]
        %v422 = vld [vmem:[%s7 + $0x8] sm:$0xff]
        %v423 = vld [vmem:[%s7 + $0x10] sm:$0xff]
        %v424 = vld [vmem:[%s7 + $0x18] sm:$0xff]
        %v425 = vld [vmem:[%s7 + $0x20] sm:$0xff]
        %v426 = vld [vmem:[%s7 + $0x28] sm:$0xff]
        %v427 = vld [vmem:[%s7 + $0x30] sm:$0xff]
        %v428 = vld [vmem:[%s7 + $0x38] sm:$0xff]
        %v429 = vld [vmem:[%s7 + $0x40] sm:$0xff]
        %v430 = vld [vmem:[%s7 + $0x48] sm:$0xff]
        %v431 = vld [vmem:[%s7 + $0x50] sm:$0xff]
        %v432 = vld [vmem:[%s7 + $0x58] sm:$0xff]
        %v433 = vld [vmem:[%s7 + $0x60] sm:$0xff]
        %v434 = vld [vmem:[%s7 + $0x68] sm:$0xff]
        %v435 = vld [vmem:[%s7 + $0x70] sm:$0xff]
        %v436 = vld [vmem:[%s7 + $0x78] sm:$0xff]
        %v437 = vld [vmem:[%s7 + $0x80] sm:$0xff]
        %v438 = vld [vmem:[%s7 + $0x88] sm:$0xff]
        %v439 = vld [vmem:[%s7 + $0x90] sm:$0xff]
        %v440 = vld [vmem:[%s7 + $0x98] sm:$0xff]
        %v441 = vld [vmem:[%s7 + $0xa0] sm:$0xff]
        %v442 = vld [vmem:[%s7 + $0xa8] sm:$0xff]
        %v443 = vld [vmem:[%s7 + $0xb0] sm:$0xff]
        %v444 = vld [vmem:[%s7 + $0xb8] sm:$0xff]
        %v445 = vld [vmem:[%s7 + $0xc0] sm:$0xff]
        %v446 = vld [vmem:[%s7 + $0xc8] sm:$0xff]
        %v447 = vld [vmem:[%s7 + $0xd0] sm:$0xff]
        %v448 = vld [vmem:[%s7 + $0xd8] sm:$0xff]
        %v449 = vld [vmem:[%s7 + $0xe0] sm:$0xff]
        %v450 = vld [vmem:[%s7 + $0xe8] sm:$0xff]
        %v451 = vld [vmem:[%s7 + $0xf0] sm:$0xff]
        %v452 = vld [vmem:[%s7 + $0xf8] sm:$0xff]
        %v453 = vld [vmem:[%s7 + $0x100] sm:$0xff]
        %v454 = vld [vmem:[%s7 + $0x108] sm:$0xff]
        %v455 = vld [vmem:[%s7 + $0x110] sm:$0xff]
        %v456 = vld [vmem:[%s7 + $0x118] sm:$0xff]
        %v457 = vld [vmem:[%s369] sm:$0xff]
        %v458 = vld [vmem:[%s369 + $0x8] sm:$0xff]
        %v459 = vld [vmem:[%s369 + $0x10] sm:$0xff]
        %v460 = vld [vmem:[%s369 + $0x18] sm:$0xff]
        %v461 = vld [vmem:[%s369 + $0x20] sm:$0xff]
        %v462 = vld [vmem:[%s369 + $0x28] sm:$0xff]
        %v463 = vld [vmem:[%s369 + $0x30] sm:$0xff]
        %v464 = vld [vmem:[%s369 + $0x38] sm:$0xff]
        %v465 = vld [vmem:[%s369 + $0x40] sm:$0xff]
        %v466 = vld [vmem:[%s369 + $0x48] sm:$0xff]
        %v467 = vld [vmem:[%s369 + $0x50] sm:$0xff]
        %v468 = vld [vmem:[%s369 + $0x58] sm:$0xff]
        %v469 = vld [vmem:[%s369 + $0x60] sm:$0xff]
        %v470 = vld [vmem:[%s369 + $0x68] sm:$0xff]
        %v471 = vld [vmem:[%s369 + $0x70] sm:$0xff]
        %v472 = vld [vmem:[%s369 + $0x78] sm:$0xff]
        %v473 = vld [vmem:[%s369 + $0x80] sm:$0xff]
        %v474 = vld [vmem:[%s369 + $0x88] sm:$0xff]
        %v475 = vld [vmem:[%s369 + $0x90] sm:$0xff]
        %v476 = vld [vmem:[%s369 + $0x98] sm:$0xff]
        %v477 = vld [vmem:[%s369 + $0xa0] sm:$0xff]
        %v478 = vld [vmem:[%s369 + $0xa8] sm:$0xff]
        %v479 = vld [vmem:[%s369 + $0xb0] sm:$0xff]
        %v480 = vld [vmem:[%s369 + $0xb8] sm:$0xff]
        %v481 = vld [vmem:[%s369 + $0xc0] sm:$0xff]
        %v482 = vld [vmem:[%s369 + $0xc8] sm:$0xff]
        %v483 = vld [vmem:[%s369 + $0xd0] sm:$0xff]
        %v484 = vld [vmem:[%s369 + $0xd8] sm:$0xff]
        %v485 = vld [vmem:[%s369 + $0xe0] sm:$0xff]
        %v486 = vld [vmem:[%s369 + $0xe8] sm:$0xff]
        %v487 = vld [vmem:[%s369 + $0xf0] sm:$0xff]
        %v488 = vld [vmem:[%s369 + $0xf8] sm:$0xff]
        %v489 = vld [vmem:[%s369 + $0x100] sm:$0xff]
        %v490 = vld [vmem:[%s369 + $0x108] sm:$0xff]
        %v491 = vld [vmem:[%s369 + $0x110] sm:$0xff]
        %v492 = vld [vmem:[%s369 + $0x118] sm:$0xff]
        %v493 = vpack.c.bf16 %v458, %v457
        %v494 = vpack.c.bf16 %v460, %v459
        %v495 = vpack.c.bf16 %v462, %v461
        %v496 = vpack.c.bf16 %v464, %v463
        %v497 = vpack.c.bf16 %v466, %v465
        %v498 = vpack.c.bf16 %v468, %v467
        %v499 = vpack.c.bf16 %v470, %v469
        %v500 = vpack.c.bf16 %v472, %v471
        %v501 = vpack.c.bf16 %v474, %v473
        %v502 = vpack.c.bf16 %v476, %v475
        %v503 = vpack.c.bf16 %v478, %v477
        %v504 = vpack.c.bf16 %v480, %v479
        %v505 = vpack.c.bf16 %v482, %v481
        %v506 = vpack.c.bf16 %v484, %v483
        %v507 = vpack.c.bf16 %v486, %v485
        %v508 = vpack.c.bf16 %v488, %v487
        %v509 = vpack.c.bf16 %v490, %v489
        %v510 = vpack.c.bf16 %v492, %v491
        %v511 = vld [vmem:[%s1] sm:$0x3]
        %v512 = vld [vmem:[%s369 + $0x1] sm:$0xff]
        %v513 = vld [vmem:[%s369 + $0x9] sm:$0xff]
        %v514 = vld [vmem:[%s369 + $0x11] sm:$0xff]
        %v515 = vld [vmem:[%s369 + $0x19] sm:$0xff]
        %v516 = vld [vmem:[%s369 + $0x21] sm:$0xff]
        %v517 = vld [vmem:[%s369 + $0x29] sm:$0xff]
        %v518 = vld [vmem:[%s369 + $0x31] sm:$0xff]
        %v519 = vld [vmem:[%s369 + $0x39] sm:$0xff]
        %v520 = vld [vmem:[%s369 + $0x41] sm:$0xff]
        %v521 = vld [vmem:[%s369 + $0x49] sm:$0xff]
        %v522 = vld [vmem:[%s369 + $0x51] sm:$0xff]
        %v523 = vld [vmem:[%s369 + $0x59] sm:$0xff]
        %v524 = vld [vmem:[%s369 + $0x61] sm:$0xff]
        %v525 = vld [vmem:[%s369 + $0x69] sm:$0xff]
        %v526 = vld [vmem:[%s369 + $0x71] sm:$0xff]
        %v527 = vld [vmem:[%s369 + $0x79] sm:$0xff]
        %v528 = vld [vmem:[%s369 + $0x81] sm:$0xff]
        %v529 = vld [vmem:[%s369 + $0x89] sm:$0xff]
        %v530 = vld [vmem:[%s369 + $0x91] sm:$0xff]
        %v531 = vld [vmem:[%s369 + $0x99] sm:$0xff]
        %v532 = vld [vmem:[%s369 + $0xa1] sm:$0xff]
        %v533 = vld [vmem:[%s369 + $0xa9] sm:$0xff]
        %v534 = vld [vmem:[%s369 + $0xb1] sm:$0xff]
        %v535 = vld [vmem:[%s369 + $0xb9] sm:$0xff]
        %v536 = vld [vmem:[%s369 + $0xc1] sm:$0xff]
        %v537 = vld [vmem:[%s369 + $0xc9] sm:$0xff]
        %v538 = vld [vmem:[%s369 + $0xd1] sm:$0xff]
        %v539 = vld [vmem:[%s369 + $0xd9] sm:$0xff]
        %v540 = vld [vmem:[%s369 + $0xe1] sm:$0xff]
        %v541 = vld [vmem:[%s369 + $0xe9] sm:$0xff]
        %v542 = vld [vmem:[%s369 + $0xf1] sm:$0xff]
        %v543 = vld [vmem:[%s369 + $0xf9] sm:$0xff]
        %v544 = vld [vmem:[%s369 + $0x101] sm:$0xff]
        %v545 = vld [vmem:[%s369 + $0x109] sm:$0xff]
        %v546 = vld [vmem:[%s369 + $0x111] sm:$0xff]
        %v547 = vld [vmem:[%s369 + $0x119] sm:$0xff]
        %v548 = vpack.c.bf16 %v513, %v512
        %v549 = vpack.c.bf16 %v515, %v514
        %v550 = vpack.c.bf16 %v517, %v516
        %v551 = vpack.c.bf16 %v519, %v518
        %v552 = vpack.c.bf16 %v521, %v520
        %v553 = vpack.c.bf16 %v523, %v522
        %v554 = vpack.c.bf16 %v525, %v524
        %v555 = vpack.c.bf16 %v527, %v526
        %v556 = vpack.c.bf16 %v529, %v528
        %v557 = vpack.c.bf16 %v531, %v530
        %v558 = vpack.c.bf16 %v533, %v532
        %v559 = vpack.c.bf16 %v535, %v534
        %v560 = vpack.c.bf16 %v537, %v536
        %v561 = vpack.c.bf16 %v539, %v538
        %v562 = vpack.c.bf16 %v541, %v540
        %v563 = vpack.c.bf16 %v543, %v542
        %v564 = vpack.c.bf16 %v545, %v544
        %v565 = vpack.c.bf16 %v547, %v546
        %s566 = scalar_lea.vmem %s1, 2
        %v567 = vld [vmem:[%s566] sm:$0x3]
        %vm568 = vcmask 31744
        %v570 = vsel %vm568, %v548, 0
        %v573 = vsel %vm568, %v549, 0
        %v576 = vsel %vm568, %v550, 0
        %v579 = vsel %vm568, %v551, 0
        %v582 = vsel %vm568, %v552, 0
        %v585 = vsel %vm568, %v553, 0
        %v588 = vsel %vm568, %v554, 0
        %v591 = vsel %vm568, %v555, 0
        %v594 = vsel %vm568, %v556, 0
        %v597 = vsel %vm568, %v557, 0
        %v600 = vsel %vm568, %v558, 0
        %v603 = vsel %vm568, %v559, 0
        %v606 = vsel %vm568, %v560, 0
        %v609 = vsel %vm568, %v561, 0
        %v612 = vsel %vm568, %v562, 0
        %v615 = vsel %vm568, %v563, 0
        %v618 = vsel %vm568, %v564, 0
        %v621 = vsel %vm568, %v565, 0
        %vm623 = vcmask 1041408
        %v625 = vsel %vm623, %v567, 0
        %627 = vmatprep.subr.bf16.mxu0 0
        %628 = vmatpush1.bf16.msra.mxu0 %v625
        %629 = vmatprep.subr.bf16.mxu0 0
        %630 = vmatpush1.bf16.msra.mxu0 0
        %631 = vmatprep.subr.bf16.mxu0 0
        %632 = vmatpush1.bf16.msra.mxu0 0
        %633 = vmatprep.subr.bf16.mxu0 0
        %634 = vmatpush1.bf16.msra.mxu0 0
        %635 = vmatprep.subr.bf16.mxu0 0
        %636 = vmatpush1.bf16.msra.mxu0 0
        %637 = vmatprep.subr.bf16.mxu0 0
        %638 = vmatpush1.bf16.msra.mxu0 0
        %639 = vmatprep.subr.bf16.mxu0 0
        %640 = vmatpush1.bf16.msra.mxu0 0
        %641 = vmatprep.subr.bf16.mxu0 0
        %642 = vmatpush1.bf16.msra.mxu0 0
        %643 = vmatprep.subr.bf16.mxu0 0
        %644 = vmatpush1.bf16.msra.mxu0 0
        %645 = vmatprep.subr.bf16.mxu0 0
        %646 = vmatpush1.bf16.msra.mxu0 0
        %647 = vmatprep.subr.bf16.mxu0 0
        %648 = vmatpush1.bf16.msra.mxu0 0
        %649 = vmatprep.subr.bf16.mxu0 0
        %650 = vmatpush1.bf16.msra.mxu0 0
        %651 = vmatprep.subr.bf16.mxu0 0
        %652 = vmatpush1.bf16.msra.mxu0 0
        %653 = vmatprep.subr.bf16.mxu0 0
        %654 = vmatpush1.bf16.msra.mxu0 0
        %655 = vmatprep.subr.bf16.mxu0 0
        %656 = vmatpush1.bf16.msra.mxu0 0
        %657 = vmatprep.subr.bf16.mxu0 0
        %658 = vmatpush1.bf16.msra.mxu0 0
        %659 = vmatprep.mubr.bf16.mxu0 0
        %660 = vmatmul.mubr.bf16.gmra.mrb[0].mxu0 %v570
        %v661 = vpop.f32.mrb[0].mxu0
        %v662 = vadd.f32 0.0, %v661
        %v663 = vpop.f32.mrb[0].mxu0
        %v664 = vpop.f32.mrb[0].mxu0
        %v665 = vadd.f32 0.0, %v664
        %v666 = vpop.f32.mrb[0].mxu0
        %667 = vmatprep.mubr.bf16.mxu0 0
        %668 = vmatmul.mubr.bf16.gmra.mrb[0].mxu0 %v573
        %v669 = vpop.f32.mrb[0].mxu0
        %v670 = vadd.f32 0.0, %v669
        %v671 = vpop.f32.mrb[0].mxu0
        %v672 = vpop.f32.mrb[0].mxu0
        %v673 = vadd.f32 0.0, %v672
        %v674 = vpop.f32.mrb[0].mxu0
        %675 = vmatprep.mubr.bf16.mxu0 0
        %676 = vmatmul.mubr.bf16.gmra.mrb[0].mxu0 %v576
        %v677 = vpop.f32.mrb[0].mxu0
        %v678 = vadd.f32 0.0, %v677
        %v679 = vpop.f32.mrb[0].mxu0
        %v680 = vpop.f32.mrb[0].mxu0
        %v681 = vadd.f32 0.0, %v680
        %v682 = vpop.f32.mrb[0].mxu0
        %683 = vmatprep.mubr.bf16.mxu0 0
        %684 = vmatmul.mubr.bf16.gmra.mrb[0].mxu0 %v579
        %v685 = vpop.f32.mrb[0].mxu0
        %v686 = vadd.f32 0.0, %v685
        %v687 = vpop.f32.mrb[0].mxu0
        %v688 = vpop.f32.mrb[0].mxu0
        %v689 = vadd.f32 0.0, %v688
        %v690 = vpop.f32.mrb[0].mxu0
        %691 = vmatprep.mubr.bf16.mxu0 0
        %692 = vmatmul.mubr.bf16.gmra.mrb[0].mxu0 %v582
        %v693 = vpop.f32.mrb[0].mxu0
        %v694 = vadd.f32 0.0, %v693
        %v695 = vpop.f32.mrb[0].mxu0
        %v696 = vpop.f32.mrb[0].mxu0
        %v697 = vadd.f32 0.0, %v696
        %v698 = vpop.f32.mrb[0].mxu0
        %699 = vmatprep.mubr.bf16.mxu0 0
        %700 = vmatmul.mubr.bf16.gmra.mrb[0].mxu0 %v585
        %v701 = vpop.f32.mrb[0].mxu0
        %v702 = vadd.f32 0.0, %v701
        %v703 = vpop.f32.mrb[0].mxu0
        %v704 = vpop.f32.mrb[0].mxu0
        %v705 = vadd.f32 0.0, %v704
        %v706 = vpop.f32.mrb[0].mxu0
        %707 = vmatprep.mubr.bf16.mxu0 0
        %708 = vmatmul.mubr.bf16.gmra.mrb[0].mxu0 %v588
        %v709 = vpop.f32.mrb[0].mxu0
        %v710 = vadd.f32 0.0, %v709
        %v711 = vpop.f32.mrb[0].mxu0
        %v712 = vpop.f32.mrb[0].mxu0
        %v713 = vadd.f32 0.0, %v712
        %v714 = vpop.f32.mrb[0].mxu0
        %715 = vmatprep.mubr.bf16.mxu0 0
        %716 = vmatmul.mubr.bf16.gmra.mrb[0].mxu0 %v591
        %v717 = vpop.f32.mrb[0].mxu0
        %v718 = vadd.f32 0.0, %v717
        %v719 = vpop.f32.mrb[0].mxu0
        %v720 = vpop.f32.mrb[0].mxu0
        %v721 = vadd.f32 0.0, %v720
        %v722 = vpop.f32.mrb[0].mxu0
        %723 = vmatprep.mubr.bf16.mxu0 0
        %724 = vmatmul.mubr.bf16.gmra.mrb[0].mxu0 %v594
        %v725 = vpop.f32.mrb[0].mxu0
        %v726 = vadd.f32 0.0, %v725
        %v727 = vpop.f32.mrb[0].mxu0
        %v728 = vpop.f32.mrb[0].mxu0
        %v729 = vadd.f32 0.0, %v728
        %v730 = vpop.f32.mrb[0].mxu0
        %731 = vmatprep.mubr.bf16.mxu0 0
        %732 = vmatmul.mubr.bf16.gmra.mrb[0].mxu0 %v597
        %v733 = vpop.f32.mrb[0].mxu0
        %v734 = vadd.f32 0.0, %v733
        %v735 = vpop.f32.mrb[0].mxu0
        %v736 = vpop.f32.mrb[0].mxu0
        %v737 = vadd.f32 0.0, %v736
        %v738 = vpop.f32.mrb[0].mxu0
        %739 = vmatprep.mubr.bf16.mxu0 0
        %740 = vmatmul.mubr.bf16.gmra.mrb[0].mxu0 %v600
        %v741 = vpop.f32.mrb[0].mxu0
        %v742 = vadd.f32 0.0, %v741
        %v743 = vpop.f32.mrb[0].mxu0
        %v744 = vpop.f32.mrb[0].mxu0
        %v745 = vadd.f32 0.0, %v744
        %v746 = vpop.f32.mrb[0].mxu0
        %747 = vmatprep.mubr.bf16.mxu0 0
        %748 = vmatmul.mubr.bf16.gmra.mrb[0].mxu0 %v603
        %v749 = vpop.f32.mrb[0].mxu0
        %v750 = vadd.f32 0.0, %v749
        %v751 = vpop.f32.mrb[0].mxu0
        %v752 = vpop.f32.mrb[0].mxu0
        %v753 = vadd.f32 0.0, %v752
        %v754 = vpop.f32.mrb[0].mxu0
        %755 = vmatprep.mubr.bf16.mxu0 0
        %756 = vmatmul.mubr.bf16.gmra.mrb[0].mxu0 %v606
        %v757 = vpop.f32.mrb[0].mxu0
        %v758 = vadd.f32 0.0, %v757
        %v759 = vpop.f32.mrb[0].mxu0
        %v760 = vpop.f32.mrb[0].mxu0
        %v761 = vadd.f32 0.0, %v760
        %v762 = vpop.f32.mrb[0].mxu0
        %763 = vmatprep.mubr.bf16.mxu0 0
        %764 = vmatmul.mubr.bf16.gmra.mrb[0].mxu0 %v609
        %v765 = vpop.f32.mrb[0].mxu0
        %v766 = vadd.f32 0.0, %v765
        %v767 = vpop.f32.mrb[0].mxu0
        %v768 = vpop.f32.mrb[0].mxu0
        %v769 = vadd.f32 0.0, %v768
        %v770 = vpop.f32.mrb[0].mxu0
        %771 = vmatprep.mubr.bf16.mxu0 0
        %772 = vmatmul.mubr.bf16.gmra.mrb[0].mxu0 %v612
        %v773 = vpop.f32.mrb[0].mxu0
        %v774 = vadd.f32 0.0, %v773
        %v775 = vpop.f32.mrb[0].mxu0
        %v776 = vpop.f32.mrb[0].mxu0
        %v777 = vadd.f32 0.0, %v776
        %v778 = vpop.f32.mrb[0].mxu0
        %779 = vmatprep.mubr.bf16.mxu0 0
        %780 = vmatmul.mubr.bf16.gmra.mrb[0].mxu0 %v615
        %v781 = vpop.f32.mrb[0].mxu0
        %v782 = vadd.f32 0.0, %v781
        %v783 = vpop.f32.mrb[0].mxu0
        %v784 = vpop.f32.mrb[0].mxu0
        %v785 = vadd.f32 0.0, %v784
        %v786 = vpop.f32.mrb[0].mxu0
        %787 = vmatprep.mubr.bf16.mxu0 0
        %788 = vmatmul.mubr.bf16.gmra.mrb[0].mxu0 %v618
        %v789 = vpop.f32.mrb[0].mxu0
        %v790 = vadd.f32 0.0, %v789
        %v791 = vpop.f32.mrb[0].mxu0
        %v792 = vpop.f32.mrb[0].mxu0
        %v793 = vadd.f32 0.0, %v792
        %v794 = vpop.f32.mrb[0].mxu0
        %795 = vmatprep.mubr.bf16.mxu0 0
        %796 = vmatmul.mubr.bf16.gmra.mrb[0].mxu0 %v621
        %v797 = vpop.f32.mrb[0].mxu0
        %v798 = vadd.f32 0.0, %v797
        %v799 = vpop.f32.mrb[0].mxu0
        %v800 = vpop.f32.mrb[0].mxu0
        %v801 = vadd.f32 0.0, %v800
        %v802 = vpop.f32.mrb[0].mxu0
        %803 = vdwg.mxu0
        %v805 = vsel %vm568, %v493, 0
        %v808 = vsel %vm568, %v494, 0
        %v811 = vsel %vm568, %v495, 0
        %v814 = vsel %vm568, %v496, 0
        %v817 = vsel %vm568, %v497, 0
        %v820 = vsel %vm568, %v498, 0
        %v823 = vsel %vm568, %v499, 0
        %v826 = vsel %vm568, %v500, 0
        %v829 = vsel %vm568, %v501, 0
        %v832 = vsel %vm568, %v502, 0
        %v835 = vsel %vm568, %v503, 0
        %v838 = vsel %vm568, %v504, 0
        %v841 = vsel %vm568, %v505, 0
        %v844 = vsel %vm568, %v506, 0
        %v847 = vsel %vm568, %v507, 0
        %v850 = vsel %vm568, %v508, 0
        %v853 = vsel %vm568, %v509, 0
        %v856 = vsel %vm568, %v510, 0
        %v859 = vsel %vm623, %v511, 0
        %861 = vmatprep.subr.bf16.mxu0 0
        %862 = vmatpush1.bf16.msra.mxu0 %v859
        %863 = vmatprep.subr.bf16.mxu0 0
        %864 = vmatpush1.bf16.msra.mxu0 0
        %865 = vmatprep.subr.bf16.mxu0 0
        %866 = vmatpush1.bf16.msra.mxu0 0
        %867 = vmatprep.subr.bf16.mxu0 0
        %868 = vmatpush1.bf16.msra.mxu0 0
        %869 = vmatprep.subr.bf16.mxu0 0
        %870 = vmatpush1.bf16.msra.mxu0 0
        %871 = vmatprep.subr.bf16.mxu0 0
        %872 = vmatpush1.bf16.msra.mxu0 0
        %873 = vmatprep.subr.bf16.mxu0 0
        %874 = vmatpush1.bf16.msra.mxu0 0
        %875 = vmatprep.subr.bf16.mxu0 0
        %876 = vmatpush1.bf16.msra.mxu0 0
        %877 = vmatprep.subr.bf16.mxu0 0
        %878 = vmatpush1.bf16.msra.mxu0 0
        %879 = vmatprep.subr.bf16.mxu0 0
        %880 = vmatpush1.bf16.msra.mxu0 0
        %881 = vmatprep.subr.bf16.mxu0 0
        %882 = vmatpush1.bf16.msra.mxu0 0
        %883 = vmatprep.subr.bf16.mxu0 0
        %884 = vmatpush1.bf16.msra.mxu0 0
        %885 = vmatprep.subr.bf16.mxu0 0
        %886 = vmatpush1.bf16.msra.mxu0 0
        %887 = vmatprep.subr.bf16.mxu0 0
        %888 = vmatpush1.bf16.msra.mxu0 0
        %889 = vmatprep.subr.bf16.mxu0 0
        %890 = vmatpush1.bf16.msra.mxu0 0
        %891 = vmatprep.subr.bf16.mxu0 0
        %892 = vmatpush1.bf16.msra.mxu0 0
        %893 = vmatprep.mubr.bf16.mxu0 0
        %894 = vmatmul.mubr.bf16.gmra.mrb[0].mxu0 %v805
        %v895 = vpop.f32.mrb[0].mxu0
        %v896 = vadd.f32 %v662, %v895
        %v897 = vpop.f32.mrb[0].mxu0
        %v898 = vpop.f32.mrb[0].mxu0
        %v899 = vadd.f32 %v665, %v898
        %v900 = vpop.f32.mrb[0].mxu0
        %901 = vmatprep.mubr.bf16.mxu0 0
        %902 = vmatmul.mubr.bf16.gmra.mrb[0].mxu0 %v808
        %v903 = vpop.f32.mrb[0].mxu0
        %v904 = vadd.f32 %v670, %v903
        %v905 = vpop.f32.mrb[0].mxu0
        %v906 = vpop.f32.mrb[0].mxu0
        %v907 = vadd.f32 %v673, %v906
        %v908 = vpop.f32.mrb[0].mxu0
        %909 = vmatprep.mubr.bf16.mxu0 0
        %910 = vmatmul.mubr.bf16.gmra.mrb[0].mxu0 %v811
        %v911 = vpop.f32.mrb[0].mxu0
        %v912 = vadd.f32 %v678, %v911
        %v913 = vpop.f32.mrb[0].mxu0
        %v914 = vpop.f32.mrb[0].mxu0
        %v915 = vadd.f32 %v681, %v914
        %v916 = vpop.f32.mrb[0].mxu0
        %917 = vmatprep.mubr.bf16.mxu0 0
        %918 = vmatmul.mubr.bf16.gmra.mrb[0].mxu0 %v814
        %v919 = vpop.f32.mrb[0].mxu0
        %v920 = vadd.f32 %v686, %v919
        %v921 = vpop.f32.mrb[0].mxu0
        %v922 = vpop.f32.mrb[0].mxu0
        %v923 = vadd.f32 %v689, %v922
        %v924 = vpop.f32.mrb[0].mxu0
        %925 = vmatprep.mubr.bf16.mxu0 0
        %926 = vmatmul.mubr.bf16.gmra.mrb[0].mxu0 %v817
        %v927 = vpop.f32.mrb[0].mxu0
        %v928 = vadd.f32 %v694, %v927
        %v929 = vpop.f32.mrb[0].mxu0
        %v930 = vpop.f32.mrb[0].mxu0
        %v931 = vadd.f32 %v697, %v930
        %v932 = vpop.f32.mrb[0].mxu0
        %933 = vmatprep.mubr.bf16.mxu0 0
        %934 = vmatmul.mubr.bf16.gmra.mrb[0].mxu0 %v820
        %v935 = vpop.f32.mrb[0].mxu0
        %v936 = vadd.f32 %v702, %v935
        %v937 = vpop.f32.mrb[0].mxu0
        %v938 = vpop.f32.mrb[0].mxu0
        %v939 = vadd.f32 %v705, %v938
        %v940 = vpop.f32.mrb[0].mxu0
        %941 = vmatprep.mubr.bf16.mxu0 0
        %942 = vmatmul.mubr.bf16.gmra.mrb[0].mxu0 %v823
        %v943 = vpop.f32.mrb[0].mxu0
        %v944 = vadd.f32 %v710, %v943
        %v945 = vpop.f32.mrb[0].mxu0
        %v946 = vpop.f32.mrb[0].mxu0
        %v947 = vadd.f32 %v713, %v946
        %v948 = vpop.f32.mrb[0].mxu0
        %949 = vmatprep.mubr.bf16.mxu0 0
        %950 = vmatmul.mubr.bf16.gmra.mrb[0].mxu0 %v826
        %v951 = vpop.f32.mrb[0].mxu0
        %v952 = vadd.f32 %v718, %v951
        %v953 = vpop.f32.mrb[0].mxu0
        %v954 = vpop.f32.mrb[0].mxu0
        %v955 = vadd.f32 %v721, %v954
        %v956 = vpop.f32.mrb[0].mxu0
        %957 = vmatprep.mubr.bf16.mxu0 0
        %958 = vmatmul.mubr.bf16.gmra.mrb[0].mxu0 %v829
        %v959 = vpop.f32.mrb[0].mxu0
        %v960 = vadd.f32 %v726, %v959
        %v961 = vpop.f32.mrb[0].mxu0
        %v962 = vpop.f32.mrb[0].mxu0
        %v963 = vadd.f32 %v729, %v962
        %v964 = vpop.f32.mrb[0].mxu0
        %965 = vmatprep.mubr.bf16.mxu0 0
        %966 = vmatmul.mubr.bf16.gmra.mrb[0].mxu0 %v832
        %v967 = vpop.f32.mrb[0].mxu0
        %v968 = vadd.f32 %v734, %v967
        %v969 = vpop.f32.mrb[0].mxu0
        %v970 = vpop.f32.mrb[0].mxu0
        %v971 = vadd.f32 %v737, %v970
        %v972 = vpop.f32.mrb[0].mxu0
        %973 = vmatprep.mubr.bf16.mxu0 0
        %974 = vmatmul.mubr.bf16.gmra.mrb[0].mxu0 %v835
        %v975 = vpop.f32.mrb[0].mxu0
        %v976 = vadd.f32 %v742, %v975
        %v977 = vpop.f32.mrb[0].mxu0
        %v978 = vpop.f32.mrb[0].mxu0
        %v979 = vadd.f32 %v745, %v978
        %v980 = vpop.f32.mrb[0].mxu0
        %981 = vmatprep.mubr.bf16.mxu0 0
        %982 = vmatmul.mubr.bf16.gmra.mrb[0].mxu0 %v838
        %v983 = vpop.f32.mrb[0].mxu0
        %v984 = vadd.f32 %v750, %v983
        %v985 = vpop.f32.mrb[0].mxu0
        %v986 = vpop.f32.mrb[0].mxu0
        %v987 = vadd.f32 %v753, %v986
        %v988 = vpop.f32.mrb[0].mxu0
        %989 = vmatprep.mubr.bf16.mxu0 0
        %990 = vmatmul.mubr.bf16.gmra.mrb[0].mxu0 %v841
        %v991 = vpop.f32.mrb[0].mxu0
        %v992 = vadd.f32 %v758, %v991
        %v993 = vpop.f32.mrb[0].mxu0
        %v994 = vpop.f32.mrb[0].mxu0
        %v995 = vadd.f32 %v761, %v994
        %v996 = vpop.f32.mrb[0].mxu0
        %997 = vmatprep.mubr.bf16.mxu0 0
        %998 = vmatmul.mubr.bf16.gmra.mrb[0].mxu0 %v844
        %v999 = vpop.f32.mrb[0].mxu0
        %v1000 = vadd.f32 %v766, %v999
        %v1001 = vpop.f32.mrb[0].mxu0
        %v1002 = vpop.f32.mrb[0].mxu0
        %v1003 = vadd.f32 %v769, %v1002
        %v1004 = vpop.f32.mrb[0].mxu0
        %1005 = vmatprep.mubr.bf16.mxu0 0
        %1006 = vmatmul.mubr.bf16.gmra.mrb[0].mxu0 %v847
        %v1007 = vpop.f32.mrb[0].mxu0
        %v1008 = vadd.f32 %v774, %v1007
        %v1009 = vpop.f32.mrb[0].mxu0
        %v1010 = vpop.f32.mrb[0].mxu0
        %v1011 = vadd.f32 %v777, %v1010
        %v1012 = vpop.f32.mrb[0].mxu0
        %1013 = vmatprep.mubr.bf16.mxu0 0
        %1014 = vmatmul.mubr.bf16.gmra.mrb[0].mxu0 %v850
        %v1015 = vpop.f32.mrb[0].mxu0
        %v1016 = vadd.f32 %v782, %v1015
        %v1017 = vpop.f32.mrb[0].mxu0
        %v1018 = vpop.f32.mrb[0].mxu0
        %v1019 = vadd.f32 %v785, %v1018
        %v1020 = vpop.f32.mrb[0].mxu0
        %1021 = vmatprep.mubr.bf16.mxu0 0
        %1022 = vmatmul.mubr.bf16.gmra.mrb[0].mxu0 %v853
        %v1023 = vpop.f32.mrb[0].mxu0
        %v1024 = vadd.f32 %v790, %v1023
        %v1025 = vpop.f32.mrb[0].mxu0
        %v1026 = vpop.f32.mrb[0].mxu0
        %v1027 = vadd.f32 %v793, %v1026
        %v1028 = vpop.f32.mrb[0].mxu0
        %1029 = vmatprep.mubr.bf16.mxu0 0
        %1030 = vmatmul.mubr.bf16.gmra.mrb[0].mxu0 %v856
        %v1031 = vpop.f32.mrb[0].mxu0
        %v1032 = vadd.f32 %v798, %v1031
        %v1033 = vpop.f32.mrb[0].mxu0
        %v1034 = vpop.f32.mrb[0].mxu0
        %v1035 = vadd.f32 %v801, %v1034
        %v1036 = vpop.f32.mrb[0].mxu0
        %1037 = vdwg.mxu0
        %v1038 = vld [vmem:[%s369 + $0x2] sm:$0xff]
        %v1039 = vld [vmem:[%s369 + $0xa] sm:$0xff]
        %v1040 = vld [vmem:[%s369 + $0x12] sm:$0xff]
        %v1041 = vld [vmem:[%s369 + $0x1a] sm:$0xff]
        %v1042 = vld [vmem:[%s369 + $0x22] sm:$0xff]
        %v1043 = vld [vmem:[%s369 + $0x2a] sm:$0xff]
        %v1044 = vld [vmem:[%s369 + $0x32] sm:$0xff]
        %v1045 = vld [vmem:[%s369 + $0x3a] sm:$0xff]
        %v1046 = vld [vmem:[%s369 + $0x42] sm:$0xff]
        %v1047 = vld [vmem:[%s369 + $0x4a] sm:$0xff]
        %v1048 = vld [vmem:[%s369 + $0x52] sm:$0xff]
        %v1049 = vld [vmem:[%s369 + $0x5a] sm:$0xff]
        %v1050 = vld [vmem:[%s369 + $0x62] sm:$0xff]
        %v1051 = vld [vmem:[%s369 + $0x6a] sm:$0xff]
        %v1052 = vld [vmem:[%s369 + $0x72] sm:$0xff]
        %v1053 = vld [vmem:[%s369 + $0x7a] sm:$0xff]
        %v1054 = vld [vmem:[%s369 + $0x82] sm:$0xff]
        %v1055 = vld [vmem:[%s369 + $0x8a] sm:$0xff]
        %v1056 = vld [vmem:[%s369 + $0x92] sm:$0xff]
        %v1057 = vld [vmem:[%s369 + $0x9a] sm:$0xff]
        %v1058 = vld [vmem:[%s369 + $0xa2] sm:$0xff]
        %v1059 = vld [vmem:[%s369 + $0xaa] sm:$0xff]
        %v1060 = vld [vmem:[%s369 + $0xb2] sm:$0xff]
        %v1061 = vld [vmem:[%s369 + $0xba] sm:$0xff]
        %v1062 = vld [vmem:[%s369 + $0xc2] sm:$0xff]
        %v1063 = vld [vmem:[%s369 + $0xca] sm:$0xff]
        %v1064 = vld [vmem:[%s369 + $0xd2] sm:$0xff]
        %v1065 = vld [vmem:[%s369 + $0xda] sm:$0xff]
        %v1066 = vld [vmem:[%s369 + $0xe2] sm:$0xff]
        %v1067 = vld [vmem:[%s369 + $0xea] sm:$0xff]
        %v1068 = vld [vmem:[%s369 + $0xf2] sm:$0xff]
        %v1069 = vld [vmem:[%s369 + $0xfa] sm:$0xff]
        %v1070 = vld [vmem:[%s369 + $0x102] sm:$0xff]
        %v1071 = vld [vmem:[%s369 + $0x10a] sm:$0xff]
        %v1072 = vld [vmem:[%s369 + $0x112] sm:$0xff]
        %v1073 = vld [vmem:[%s369 + $0x11a] sm:$0xff]
        %v1074 = vpack.c.bf16 %v1039, %v1038
        %v1075 = vpack.c.bf16 %v1041, %v1040
        %v1076 = vpack.c.bf16 %v1043, %v1042
        %v1077 = vpack.c.bf16 %v1045, %v1044
        %v1078 = vpack.c.bf16 %v1047, %v1046
        %v1079 = vpack.c.bf16 %v1049, %v1048
        %v1080 = vpack.c.bf16 %v1051, %v1050
        %v1081 = vpack.c.bf16 %v1053, %v1052
        %v1082 = vpack.c.bf16 %v1055, %v1054
        %v1083 = vpack.c.bf16 %v1057, %v1056
        %v1084 = vpack.c.bf16 %v1059, %v1058
        %v1085 = vpack.c.bf16 %v1061, %v1060
        %v1086 = vpack.c.bf16 %v1063, %v1062
        %v1087 = vpack.c.bf16 %v1065, %v1064
        %v1088 = vpack.c.bf16 %v1067, %v1066
        %v1089 = vpack.c.bf16 %v1069, %v1068
        %v1090 = vpack.c.bf16 %v1071, %v1070
        %v1091 = vpack.c.bf16 %v1073, %v1072
        %s1092 = scalar_lea.vmem %s1, 4
        %v1093 = vld [vmem:[%s1092] sm:$0x3]
        %v1095 = vsel %vm568, %v1074, 0
        %v1098 = vsel %vm568, %v1075, 0
        %v1101 = vsel %vm568, %v1076, 0
        %v1104 = vsel %vm568, %v1077, 0
        %v1107 = vsel %vm568, %v1078, 0
        %v1110 = vsel %vm568, %v1079, 0
        %v1113 = vsel %vm568, %v1080, 0
        %v1116 = vsel %vm568, %v1081, 0
        %v1119 = vsel %vm568, %v1082, 0
        %v1122 = vsel %vm568, %v1083, 0
        %v1125 = vsel %vm568, %v1084, 0
        %v1128 = vsel %vm568, %v1085, 0
        %v1131 = vsel %vm568, %v1086, 0
        %v1134 = vsel %vm568, %v1087, 0
        %v1137 = vsel %vm568, %v1088, 0
        %v1140 = vsel %vm568, %v1089, 0
        %v1143 = vsel %vm568, %v1090, 0
        %v1146 = vsel %vm568, %v1091, 0
        %v1149 = vsel %vm623, %v1093, 0
        %1151 = vmatprep.subr.bf16.mxu0 0
        %1152 = vmatpush1.bf16.msra.mxu0 %v1149
        %1153 = vmatprep.subr.bf16.mxu0 0
        %1154 = vmatpush1.bf16.msra.mxu0 0
        %1155 = vmatprep.subr.bf16.mxu0 0
        %1156 = vmatpush1.bf16.msra.mxu0 0
        %1157 = vmatprep.subr.bf16.mxu0 0
        %1158 = vmatpush1.bf16.msra.mxu0 0
        %1159 = vmatprep.subr.bf16.mxu0 0
        %1160 = vmatpush1.bf16.msra.mxu0 0
        %1161 = vmatprep.subr.bf16.mxu0 0
        %1162 = vmatpush1.bf16.msra.mxu0 0
        %1163 = vmatprep.subr.bf16.mxu0 0
        %1164 = vmatpush1.bf16.msra.mxu0 0
        %1165 = vmatprep.subr.bf16.mxu0 0
        %1166 = vmatpush1.bf16.msra.mxu0 0
        %1167 = vmatprep.subr.bf16.mxu0 0
        %1168 = vmatpush1.bf16.msra.mxu0 0
        %1169 = vmatprep.subr.bf16.mxu0 0
        %1170 = vmatpush1.bf16.msra.mxu0 0
        %1171 = vmatprep.subr.bf16.mxu0 0
        %1172 = vmatpush1.bf16.msra.mxu0 0
        %1173 = vmatprep.subr.bf16.mxu0 0
        %1174 = vmatpush1.bf16.msra.mxu0 0
        %1175 = vmatprep.subr.bf16.mxu0 0
        %1176 = vmatpush1.bf16.msra.mxu0 0
        %1177 = vmatprep.subr.bf16.mxu0 0
        %1178 = vmatpush1.bf16.msra.mxu0 0
        %1179 = vmatprep.subr.bf16.mxu0 0
        %1180 = vmatpush1.bf16.msra.mxu0 0
        %1181 = vmatprep.subr.bf16.mxu0 0
        %1182 = vmatpush1.bf16.msra.mxu0 0
        %1183 = vmatprep.mubr.bf16.mxu0 0
        %1184 = vmatmul.mubr.bf16.gmra.mrb[0].mxu0 %v1095
        %v1185 = vpop.f32.mrb[0].mxu0
        %v1186 = vadd.f32 0.0, %v1185
        %v1187 = vpop.f32.mrb[0].mxu0
        %v1188 = vpop.f32.mrb[0].mxu0
        %v1189 = vadd.f32 0.0, %v1188
        %v1190 = vpop.f32.mrb[0].mxu0
        %1191 = vmatprep.mubr.bf16.mxu0 0
        %1192 = vmatmul.mubr.bf16.gmra.mrb[0].mxu0 %v1098
        %v1193 = vpop.f32.mrb[0].mxu0
        %v1194 = vadd.f32 0.0, %v1193
        %v1195 = vpop.f32.mrb[0].mxu0
        %v1196 = vpop.f32.mrb[0].mxu0
        %v1197 = vadd.f32 0.0, %v1196
        %v1198 = vpop.f32.mrb[0].mxu0
        %1199 = vmatprep.mubr.bf16.mxu0 0
        %1200 = vmatmul.mubr.bf16.gmra.mrb[0].mxu0 %v1101
        %v1201 = vpop.f32.mrb[0].mxu0
        %v1202 = vadd.f32 0.0, %v1201
        %v1203 = vpop.f32.mrb[0].mxu0
        %v1204 = vpop.f32.mrb[0].mxu0
        %v1205 = vadd.f32 0.0, %v1204
        %v1206 = vpop.f32.mrb[0].mxu0
        %1207 = vmatprep.mubr.bf16.mxu0 0
        %1208 = vmatmul.mubr.bf16.gmra.mrb[0].mxu0 %v1104
        %v1209 = vpop.f32.mrb[0].mxu0
        %v1210 = vadd.f32 0.0, %v1209
        %v1211 = vpop.f32.mrb[0].mxu0
        %v1212 = vpop.f32.mrb[0].mxu0
        %v1213 = vadd.f32 0.0, %v1212
        %v1214 = vpop.f32.mrb[0].mxu0
        %1215 = vmatprep.mubr.bf16.mxu0 0
        %1216 = vmatmul.mubr.bf16.gmra.mrb[0].mxu0 %v1107
        %v1217 = vpop.f32.mrb[0].mxu0
        %v1218 = vadd.f32 0.0, %v1217
        %v1219 = vpop.f32.mrb[0].mxu0
        %v1220 = vpop.f32.mrb[0].mxu0
        %v1221 = vadd.f32 0.0, %v1220
        %v1222 = vpop.f32.mrb[0].mxu0
        %1223 = vmatprep.mubr.bf16.mxu0 0
        %1224 = vmatmul.mubr.bf16.gmra.mrb[0].mxu0 %v1110
        %v1225 = vpop.f32.mrb[0].mxu0
        %v1226 = vadd.f32 0.0, %v1225
        %v1227 = vpop.f32.mrb[0].mxu0
        %v1228 = vpop.f32.mrb[0].mxu0
        %v1229 = vadd.f32 0.0, %v1228
        %v1230 = vpop.f32.mrb[0].mxu0
        %1231 = vmatprep.mubr.bf16.mxu0 0
        %1232 = vmatmul.mubr.bf16.gmra.mrb[0].mxu0 %v1113
        %v1233 = vpop.f32.mrb[0].mxu0
        %v1234 = vadd.f32 0.0, %v1233
        %v1235 = vpop.f32.mrb[0].mxu0
        %v1236 = vpop.f32.mrb[0].mxu0
        %v1237 = vadd.f32 0.0, %v1236
        %v1238 = vpop.f32.mrb[0].mxu0
        %1239 = vmatprep.mubr.bf16.mxu0 0
        %1240 = vmatmul.mubr.bf16.gmra.mrb[0].mxu0 %v1116
        %v1241 = vpop.f32.mrb[0].mxu0
        %v1242 = vadd.f32 0.0, %v1241
        %v1243 = vpop.f32.mrb[0].mxu0
        %v1244 = vpop.f32.mrb[0].mxu0
        %v1245 = vadd.f32 0.0, %v1244
        %v1246 = vpop.f32.mrb[0].mxu0
        %1247 = vmatprep.mubr.bf16.mxu0 0
        %1248 = vmatmul.mubr.bf16.gmra.mrb[0].mxu0 %v1119
        %v1249 = vpop.f32.mrb[0].mxu0
        %v1250 = vadd.f32 0.0, %v1249
        %v1251 = vpop.f32.mrb[0].mxu0
        %v1252 = vpop.f32.mrb[0].mxu0
        %v1253 = vadd.f32 0.0, %v1252
        %v1254 = vpop.f32.mrb[0].mxu0
        %1255 = vmatprep.mubr.bf16.mxu0 0
        %1256 = vmatmul.mubr.bf16.gmra.mrb[0].mxu0 %v1122
        %v1257 = vpop.f32.mrb[0].mxu0
        %v1258 = vadd.f32 0.0, %v1257
        %v1259 = vpop.f32.mrb[0].mxu0
        %v1260 = vpop.f32.mrb[0].mxu0
        %v1261 = vadd.f32 0.0, %v1260
        %v1262 = vpop.f32.mrb[0].mxu0
        %1263 = vmatprep.mubr.bf16.mxu0 0
        %1264 = vmatmul.mubr.bf16.gmra.mrb[0].mxu0 %v1125
        %v1265 = vpop.f32.mrb[0].mxu0
        %v1266 = vadd.f32 0.0, %v1265
        %v1267 = vpop.f32.mrb[0].mxu0
        %v1268 = vpop.f32.mrb[0].mxu0
        %v1269 = vadd.f32 0.0, %v1268
        %v1270 = vpop.f32.mrb[0].mxu0
        %1271 = vmatprep.mubr.bf16.mxu0 0
        %1272 = vmatmul.mubr.bf16.gmra.mrb[0].mxu0 %v1128
        %v1273 = vpop.f32.mrb[0].mxu0
        %v1274 = vadd.f32 0.0, %v1273
        %v1275 = vpop.f32.mrb[0].mxu0
        %v1276 = vpop.f32.mrb[0].mxu0
        %v1277 = vadd.f32 0.0, %v1276
        %v1278 = vpop.f32.mrb[0].mxu0
        %1279 = vmatprep.mubr.bf16.mxu0 0
        %1280 = vmatmul.mubr.bf16.gmra.mrb[0].mxu0 %v1131
        %v1281 = vpop.f32.mrb[0].mxu0
        %v1282 = vadd.f32 0.0, %v1281
        %v1283 = vpop.f32.mrb[0].mxu0
        %v1284 = vpop.f32.mrb[0].mxu0
        %v1285 = vadd.f32 0.0, %v1284
        %v1286 = vpop.f32.mrb[0].mxu0
        %1287 = vmatprep.mubr.bf16.mxu0 0
        %1288 = vmatmul.mubr.bf16.gmra.mrb[0].mxu0 %v1134
        %v1289 = vpop.f32.mrb[0].mxu0
        %v1290 = vadd.f32 0.0, %v1289
        %v1291 = vpop.f32.mrb[0].mxu0
        %v1292 = vpop.f32.mrb[0].mxu0
        %v1293 = vadd.f32 0.0, %v1292
        %v1294 = vpop.f32.mrb[0].mxu0
        %1295 = vmatprep.mubr.bf16.mxu0 0
        %1296 = vmatmul.mubr.bf16.gmra.mrb[0].mxu0 %v1137
        %v1297 = vpop.f32.mrb[0].mxu0
        %v1298 = vadd.f32 0.0, %v1297
        %v1299 = vpop.f32.mrb[0].mxu0
        %v1300 = vpop.f32.mrb[0].mxu0
        %v1301 = vadd.f32 0.0, %v1300
        %v1302 = vpop.f32.mrb[0].mxu0
        %1303 = vmatprep.mubr.bf16.mxu0 0
        %1304 = vmatmul.mubr.bf16.gmra.mrb[0].mxu0 %v1140
        %v1305 = vpop.f32.mrb[0].mxu0
        %v1306 = vadd.f32 0.0, %v1305
        %v1307 = vpop.f32.mrb[0].mxu0
        %v1308 = vpop.f32.mrb[0].mxu0
        %v1309 = vadd.f32 0.0, %v1308
        %v1310 = vpop.f32.mrb[0].mxu0
        %1311 = vmatprep.mubr.bf16.mxu0 0
        %1312 = vmatmul.mubr.bf16.gmra.mrb[0].mxu0 %v1143
        %v1313 = vpop.f32.mrb[0].mxu0
        %v1314 = vadd.f32 0.0, %v1313
        %v1315 = vpop.f32.mrb[0].mxu0
        %v1316 = vpop.f32.mrb[0].mxu0
        %v1317 = vadd.f32 0.0, %v1316
        %v1318 = vpop.f32.mrb[0].mxu0
        %1319 = vmatprep.mubr.bf16.mxu0 0
        %1320 = vmatmul.mubr.bf16.gmra.mrb[0].mxu0 %v1146
        %v1321 = vpop.f32.mrb[0].mxu0
        %v1322 = vadd.f32 0.0, %v1321
        %v1323 = vpop.f32.mrb[0].mxu0
        %v1324 = vpop.f32.mrb[0].mxu0
        %v1325 = vadd.f32 0.0, %v1324
        %v1326 = vpop.f32.mrb[0].mxu0
        %1327 = vdwg.mxu0
        %v1328 = vadd.f32 %v896, %v1186
        %v1329 = vadd.f32 %v899, %v1189
        %v1330 = vadd.f32 %v904, %v1194
        %v1331 = vadd.f32 %v907, %v1197
        %v1332 = vadd.f32 %v912, %v1202
        %v1333 = vadd.f32 %v915, %v1205
        %v1334 = vadd.f32 %v920, %v1210
        %v1335 = vadd.f32 %v923, %v1213
        %v1336 = vadd.f32 %v928, %v1218
        %v1337 = vadd.f32 %v931, %v1221
        %v1338 = vadd.f32 %v936, %v1226
        %v1339 = vadd.f32 %v939, %v1229
        %v1340 = vadd.f32 %v944, %v1234
        %v1341 = vadd.f32 %v947, %v1237
        %v1342 = vadd.f32 %v952, %v1242
        %v1343 = vadd.f32 %v955, %v1245
        %v1344 = vadd.f32 %v960, %v1250
        %v1345 = vadd.f32 %v963, %v1253
        %v1346 = vadd.f32 %v968, %v1258
        %v1347 = vadd.f32 %v971, %v1261
        %v1348 = vadd.f32 %v976, %v1266
        %v1349 = vadd.f32 %v979, %v1269
        %v1350 = vadd.f32 %v984, %v1274
        %v1351 = vadd.f32 %v987, %v1277
        %v1352 = vadd.f32 %v992, %v1282
        %v1353 = vadd.f32 %v995, %v1285
        %v1354 = vadd.f32 %v1000, %v1290
        %v1355 = vadd.f32 %v1003, %v1293
        %v1356 = vadd.f32 %v1008, %v1298
        %v1357 = vadd.f32 %v1011, %v1301
        %v1358 = vadd.f32 %v1016, %v1306
        %v1359 = vadd.f32 %v1019, %v1309
        %v1360 = vadd.f32 %v1024, %v1314
        %v1361 = vadd.f32 %v1027, %v1317
        %v1362 = vadd.f32 %v1032, %v1322
        %v1363 = vadd.f32 %v1035, %v1325
        %v1364 = vld [vmem:[%s369 + $0x12] sm:$0xff]
        %v1365 = vld [vmem:[%s369 + $0x1a] sm:$0xff]
        %v1366 = vld [vmem:[%s369 + $0x22] sm:$0xff]
        %v1367 = vld [vmem:[%s369 + $0x2a] sm:$0xff]
        %v1368 = vld [vmem:[%s369 + $0x32] sm:$0xff]
        %v1369 = vld [vmem:[%s369 + $0x3a] sm:$0xff]
        %v1370 = vld [vmem:[%s369 + $0x42] sm:$0xff]
        %v1371 = vld [vmem:[%s369 + $0x4a] sm:$0xff]
        %v1372 = vld [vmem:[%s369 + $0x52] sm:$0xff]
        %v1373 = vld [vmem:[%s369 + $0x5a] sm:$0xff]
        %v1374 = vld [vmem:[%s369 + $0x62] sm:$0xff]
        %v1375 = vld [vmem:[%s369 + $0x6a] sm:$0xff]
        %v1376 = vld [vmem:[%s369 + $0x72] sm:$0xff]
        %v1377 = vld [vmem:[%s369 + $0x7a] sm:$0xff]
        %v1378 = vld [vmem:[%s369 + $0x82] sm:$0xff]
        %v1379 = vld [vmem:[%s369 + $0x8a] sm:$0xff]
        %v1380 = vld [vmem:[%s369 + $0x92] sm:$0xff]
        %v1381 = vld [vmem:[%s369 + $0x9a] sm:$0xff]
        %v1382 = vld [vmem:[%s369 + $0xa2] sm:$0xff]
        %v1383 = vld [vmem:[%s369 + $0xaa] sm:$0xff]
        %v1384 = vld [vmem:[%s369 + $0xb2] sm:$0xff]
        %v1385 = vld [vmem:[%s369 + $0xba] sm:$0xff]
        %v1386 = vld [vmem:[%s369 + $0xc2] sm:$0xff]
        %v1387 = vld [vmem:[%s369 + $0xca] sm:$0xff]
        %v1388 = vld [vmem:[%s369 + $0xd2] sm:$0xff]
        %v1389 = vld [vmem:[%s369 + $0xda] sm:$0xff]
        %v1390 = vld [vmem:[%s369 + $0xe2] sm:$0xff]
        %v1391 = vld [vmem:[%s369 + $0xea] sm:$0xff]
        %v1392 = vld [vmem:[%s369 + $0xf2] sm:$0xff]
        %v1393 = vld [vmem:[%s369 + $0xfa] sm:$0xff]
        %v1394 = vld [vmem:[%s369 + $0x102] sm:$0xff]
        %v1395 = vld [vmem:[%s369 + $0x10a] sm:$0xff]
        %v1396 = vld [vmem:[%s369 + $0x112] sm:$0xff]
        %v1397 = vld [vmem:[%s369 + $0x11a] sm:$0xff]
        %v1398 = vld [vmem:[%s369 + $0x122] sm:$0xff]
        %v1399 = vld [vmem:[%s369 + $0x12a] sm:$0xff]
        %v1400 = vpack.c.bf16 %v1365, %v1364
        %v1401 = vpack.c.bf16 %v1367, %v1366
        %v1402 = vpack.c.bf16 %v1369, %v1368
        %v1403 = vpack.c.bf16 %v1371, %v1370
        %v1404 = vpack.c.bf16 %v1373, %v1372
        %v1405 = vpack.c.bf16 %v1375, %v1374
        %v1406 = vpack.c.bf16 %v1377, %v1376
        %v1407 = vpack.c.bf16 %v1379, %v1378
        %v1408 = vpack.c.bf16 %v1381, %v1380
        %v1409 = vpack.c.bf16 %v1383, %v1382
        %v1410 = vpack.c.bf16 %v1385, %v1384
        %v1411 = vpack.c.bf16 %v1387, %v1386
        %v1412 = vpack.c.bf16 %v1389, %v1388
        %v1413 = vpack.c.bf16 %v1391, %v1390
        %v1414 = vpack.c.bf16 %v1393, %v1392
        %v1415 = vpack.c.bf16 %v1395, %v1394
        %v1416 = vpack.c.bf16 %v1397, %v1396
        %v1417 = vpack.c.bf16 %v1399, %v1398
        %s1418 = scalar_lea.vmem %s1, 6
        %v1419 = vld [vmem:[%s1418] sm:$0x3]
        %v1421 = vsel %vm568, %v1400, 0
        %v1424 = vsel %vm568, %v1401, 0
        %v1427 = vsel %vm568, %v1402, 0
        %v1430 = vsel %vm568, %v1403, 0
        %v1433 = vsel %vm568, %v1404, 0
        %v1436 = vsel %vm568, %v1405, 0
        %v1439 = vsel %vm568, %v1406, 0
        %v1442 = vsel %vm568, %v1407, 0
        %v1445 = vsel %vm568, %v1408, 0
        %v1448 = vsel %vm568, %v1409, 0
        %v1451 = vsel %vm568, %v1410, 0
        %v1454 = vsel %vm568, %v1411, 0
        %v1457 = vsel %vm568, %v1412, 0
        %v1460 = vsel %vm568, %v1413, 0
        %v1463 = vsel %vm568, %v1414, 0
        %v1466 = vsel %vm568, %v1415, 0
        %v1469 = vsel %vm568, %v1416, 0
        %v1472 = vsel %vm568, %v1417, 0
        %v1475 = vsel %vm623, %v1419, 0
        %1477 = vmatprep.subr.bf16.mxu0 0
        %1478 = vmatpush1.bf16.msra.mxu0 %v1475
        %1479 = vmatprep.subr.bf16.mxu0 0
        %1480 = vmatpush1.bf16.msra.mxu0 0
        %1481 = vmatprep.subr.bf16.mxu0 0
        %1482 = vmatpush1.bf16.msra.mxu0 0
        %1483 = vmatprep.subr.bf16.mxu0 0
        %1484 = vmatpush1.bf16.msra.mxu0 0
        %1485 = vmatprep.subr.bf16.mxu0 0
        %1486 = vmatpush1.bf16.msra.mxu0 0
        %1487 = vmatprep.subr.bf16.mxu0 0
        %1488 = vmatpush1.bf16.msra.mxu0 0
        %1489 = vmatprep.subr.bf16.mxu0 0
        %1490 = vmatpush1.bf16.msra.mxu0 0
        %1491 = vmatprep.subr.bf16.mxu0 0
        %1492 = vmatpush1.bf16.msra.mxu0 0
        %1493 = vmatprep.subr.bf16.mxu0 0
        %1494 = vmatpush1.bf16.msra.mxu0 0
        %1495 = vmatprep.subr.bf16.mxu0 0
        %1496 = vmatpush1.bf16.msra.mxu0 0
        %1497 = vmatprep.subr.bf16.mxu0 0
        %1498 = vmatpush1.bf16.msra.mxu0 0
        %1499 = vmatprep.subr.bf16.mxu0 0
        %1500 = vmatpush1.bf16.msra.mxu0 0
        %1501 = vmatprep.subr.bf16.mxu0 0
        %1502 = vmatpush1.bf16.msra.mxu0 0
        %1503 = vmatprep.subr.bf16.mxu0 0
        %1504 = vmatpush1.bf16.msra.mxu0 0
        %1505 = vmatprep.subr.bf16.mxu0 0
        %1506 = vmatpush1.bf16.msra.mxu0 0
        %1507 = vmatprep.subr.bf16.mxu0 0
        %1508 = vmatpush1.bf16.msra.mxu0 0
        %1509 = vmatprep.mubr.bf16.mxu0 0
        %1510 = vmatmul.mubr.bf16.gmra.mrb[0].mxu0 %v1421
        %v1511 = vpop.f32.mrb[0].mxu0
        %v1512 = vadd.f32 0.0, %v1511
        %v1513 = vpop.f32.mrb[0].mxu0
        %v1514 = vpop.f32.mrb[0].mxu0
        %v1515 = vadd.f32 0.0, %v1514
        %v1516 = vpop.f32.mrb[0].mxu0
        %1517 = vmatprep.mubr.bf16.mxu0 0
        %1518 = vmatmul.mubr.bf16.gmra.mrb[0].mxu0 %v1424
        %v1519 = vpop.f32.mrb[0].mxu0
        %v1520 = vadd.f32 0.0, %v1519
        %v1521 = vpop.f32.mrb[0].mxu0
        %v1522 = vpop.f32.mrb[0].mxu0
        %v1523 = vadd.f32 0.0, %v1522
        %v1524 = vpop.f32.mrb[0].mxu0
        %1525 = vmatprep.mubr.bf16.mxu0 0
        %1526 = vmatmul.mubr.bf16.gmra.mrb[0].mxu0 %v1427
        %v1527 = vpop.f32.mrb[0].mxu0
        %v1528 = vadd.f32 0.0, %v1527
        %v1529 = vpop.f32.mrb[0].mxu0
        %v1530 = vpop.f32.mrb[0].mxu0
        %v1531 = vadd.f32 0.0, %v1530
        %v1532 = vpop.f32.mrb[0].mxu0
        %1533 = vmatprep.mubr.bf16.mxu0 0
        %1534 = vmatmul.mubr.bf16.gmra.mrb[0].mxu0 %v1430
        %v1535 = vpop.f32.mrb[0].mxu0
        %v1536 = vadd.f32 0.0, %v1535
        %v1537 = vpop.f32.mrb[0].mxu0
        %v1538 = vpop.f32.mrb[0].mxu0
        %v1539 = vadd.f32 0.0, %v1538
        %v1540 = vpop.f32.mrb[0].mxu0
        %1541 = vmatprep.mubr.bf16.mxu0 0
        %1542 = vmatmul.mubr.bf16.gmra.mrb[0].mxu0 %v1433
        %v1543 = vpop.f32.mrb[0].mxu0
        %v1544 = vadd.f32 0.0, %v1543
        %v1545 = vpop.f32.mrb[0].mxu0
        %v1546 = vpop.f32.mrb[0].mxu0
        %v1547 = vadd.f32 0.0, %v1546
        %v1548 = vpop.f32.mrb[0].mxu0
        %1549 = vmatprep.mubr.bf16.mxu0 0
        %1550 = vmatmul.mubr.bf16.gmra.mrb[0].mxu0 %v1436
        %v1551 = vpop.f32.mrb[0].mxu0
        %v1552 = vadd.f32 0.0, %v1551
        %v1553 = vpop.f32.mrb[0].mxu0
        %v1554 = vpop.f32.mrb[0].mxu0
        %v1555 = vadd.f32 0.0, %v1554
        %v1556 = vpop.f32.mrb[0].mxu0
        %1557 = vmatprep.mubr.bf16.mxu0 0
        %1558 = vmatmul.mubr.bf16.gmra.mrb[0].mxu0 %v1439
        %v1559 = vpop.f32.mrb[0].mxu0
        %v1560 = vadd.f32 0.0, %v1559
        %v1561 = vpop.f32.mrb[0].mxu0
        %v1562 = vpop.f32.mrb[0].mxu0
        %v1563 = vadd.f32 0.0, %v1562
        %v1564 = vpop.f32.mrb[0].mxu0
        %1565 = vmatprep.mubr.bf16.mxu0 0
        %1566 = vmatmul.mubr.bf16.gmra.mrb[0].mxu0 %v1442
        %v1567 = vpop.f32.mrb[0].mxu0
        %v1568 = vadd.f32 0.0, %v1567
        %v1569 = vpop.f32.mrb[0].mxu0
        %v1570 = vpop.f32.mrb[0].mxu0
        %v1571 = vadd.f32 0.0, %v1570
        %v1572 = vpop.f32.mrb[0].mxu0
        %1573 = vmatprep.mubr.bf16.mxu0 0
        %1574 = vmatmul.mubr.bf16.gmra.mrb[0].mxu0 %v1445
        %v1575 = vpop.f32.mrb[0].mxu0
        %v1576 = vadd.f32 0.0, %v1575
        %v1577 = vpop.f32.mrb[0].mxu0
        %v1578 = vpop.f32.mrb[0].mxu0
        %v1579 = vadd.f32 0.0, %v1578
        %v1580 = vpop.f32.mrb[0].mxu0
        %1581 = vmatprep.mubr.bf16.mxu0 0
        %1582 = vmatmul.mubr.bf16.gmra.mrb[0].mxu0 %v1448
        %v1583 = vpop.f32.mrb[0].mxu0
        %v1584 = vadd.f32 0.0, %v1583
        %v1585 = vpop.f32.mrb[0].mxu0
        %v1586 = vpop.f32.mrb[0].mxu0
        %v1587 = vadd.f32 0.0, %v1586
        %v1588 = vpop.f32.mrb[0].mxu0
        %1589 = vmatprep.mubr.bf16.mxu0 0
        %1590 = vmatmul.mubr.bf16.gmra.mrb[0].mxu0 %v1451
        %v1591 = vpop.f32.mrb[0].mxu0
        %v1592 = vadd.f32 0.0, %v1591
        %v1593 = vpop.f32.mrb[0].mxu0
        %v1594 = vpop.f32.mrb[0].mxu0
        %v1595 = vadd.f32 0.0, %v1594
        %v1596 = vpop.f32.mrb[0].mxu0
        %1597 = vmatprep.mubr.bf16.mxu0 0
        %1598 = vmatmul.mubr.bf16.gmra.mrb[0].mxu0 %v1454
        %v1599 = vpop.f32.mrb[0].mxu0
        %v1600 = vadd.f32 0.0, %v1599
        %v1601 = vpop.f32.mrb[0].mxu0
        %v1602 = vpop.f32.mrb[0].mxu0
        %v1603 = vadd.f32 0.0, %v1602
        %v1604 = vpop.f32.mrb[0].mxu0
        %1605 = vmatprep.mubr.bf16.mxu0 0
        %1606 = vmatmul.mubr.bf16.gmra.mrb[0].mxu0 %v1457
        %v1607 = vpop.f32.mrb[0].mxu0
        %v1608 = vadd.f32 0.0, %v1607
        %v1609 = vpop.f32.mrb[0].mxu0
        %v1610 = vpop.f32.mrb[0].mxu0
        %v1611 = vadd.f32 0.0, %v1610
        %v1612 = vpop.f32.mrb[0].mxu0
        %1613 = vmatprep.mubr.bf16.mxu0 0
        %1614 = vmatmul.mubr.bf16.gmra.mrb[0].mxu0 %v1460
        %v1615 = vpop.f32.mrb[0].mxu0
        %v1616 = vadd.f32 0.0, %v1615
        %v1617 = vpop.f32.mrb[0].mxu0
        %v1618 = vpop.f32.mrb[0].mxu0
        %v1619 = vadd.f32 0.0, %v1618
        %v1620 = vpop.f32.mrb[0].mxu0
        %1621 = vmatprep.mubr.bf16.mxu0 0
        %1622 = vmatmul.mubr.bf16.gmra.mrb[0].mxu0 %v1463
        %v1623 = vpop.f32.mrb[0].mxu0
        %v1624 = vadd.f32 0.0, %v1623
        %v1625 = vpop.f32.mrb[0].mxu0
        %v1626 = vpop.f32.mrb[0].mxu0
        %v1627 = vadd.f32 0.0, %v1626
        %v1628 = vpop.f32.mrb[0].mxu0
        %1629 = vmatprep.mubr.bf16.mxu0 0
        %1630 = vmatmul.mubr.bf16.gmra.mrb[0].mxu0 %v1466
        %v1631 = vpop.f32.mrb[0].mxu0
        %v1632 = vadd.f32 0.0, %v1631
        %v1633 = vpop.f32.mrb[0].mxu0
        %v1634 = vpop.f32.mrb[0].mxu0
        %v1635 = vadd.f32 0.0, %v1634
        %v1636 = vpop.f32.mrb[0].mxu0
        %1637 = vmatprep.mubr.bf16.mxu0 0
        %1638 = vmatmul.mubr.bf16.gmra.mrb[0].mxu0 %v1469
        %v1639 = vpop.f32.mrb[0].mxu0
        %v1640 = vadd.f32 0.0, %v1639
        %v1641 = vpop.f32.mrb[0].mxu0
        %v1642 = vpop.f32.mrb[0].mxu0
        %v1643 = vadd.f32 0.0, %v1642
        %v1644 = vpop.f32.mrb[0].mxu0
        %1645 = vmatprep.mubr.bf16.mxu0 0
        %1646 = vmatmul.mubr.bf16.gmra.mrb[0].mxu0 %v1472
        %v1647 = vpop.f32.mrb[0].mxu0
        %v1648 = vadd.f32 0.0, %v1647
        %v1649 = vpop.f32.mrb[0].mxu0
        %v1650 = vpop.f32.mrb[0].mxu0
        %v1651 = vadd.f32 0.0, %v1650
        %v1652 = vpop.f32.mrb[0].mxu0
        %1653 = vdwg.mxu0
        %v1654 = vadd.f32 %v1328, %v1512
        %v1655 = vadd.f32 %v1329, %v1515
        %v1656 = vadd.f32 %v1330, %v1520
        %v1657 = vadd.f32 %v1331, %v1523
        %v1658 = vadd.f32 %v1332, %v1528
        %v1659 = vadd.f32 %v1333, %v1531
        %v1660 = vadd.f32 %v1334, %v1536
        %v1661 = vadd.f32 %v1335, %v1539
        %v1662 = vadd.f32 %v1336, %v1544
        %v1663 = vadd.f32 %v1337, %v1547
        %v1664 = vadd.f32 %v1338, %v1552
        %v1665 = vadd.f32 %v1339, %v1555
        %v1666 = vadd.f32 %v1340, %v1560
        %v1667 = vadd.f32 %v1341, %v1563
        %v1668 = vadd.f32 %v1342, %v1568
        %v1669 = vadd.f32 %v1343, %v1571
        %v1670 = vadd.f32 %v1344, %v1576
        %v1671 = vadd.f32 %v1345, %v1579
        %v1672 = vadd.f32 %v1346, %v1584
        %v1673 = vadd.f32 %v1347, %v1587
        %v1674 = vadd.f32 %v1348, %v1592
        %v1675 = vadd.f32 %v1349, %v1595
        %v1676 = vadd.f32 %v1350, %v1600
        %v1677 = vadd.f32 %v1351, %v1603
        %v1678 = vadd.f32 %v1352, %v1608
        %v1679 = vadd.f32 %v1353, %v1611
        %v1680 = vadd.f32 %v1354, %v1616
        %v1681 = vadd.f32 %v1355, %v1619
        %v1682 = vadd.f32 %v1356, %v1624
        %v1683 = vadd.f32 %v1357, %v1627
        %v1684 = vadd.f32 %v1358, %v1632
        %v1685 = vadd.f32 %v1359, %v1635
        %v1686 = vadd.f32 %v1360, %v1640
        %v1687 = vadd.f32 %v1361, %v1643
        %v1688 = vadd.f32 %v1362, %v1648
        %v1689 = vadd.f32 %v1363, %v1651
        %v1690 = vld [vmem:[%s369 + $0x13] sm:$0xff]
        %v1691 = vld [vmem:[%s369 + $0x1b] sm:$0xff]
        %v1692 = vld [vmem:[%s369 + $0x23] sm:$0xff]
        %v1693 = vld [vmem:[%s369 + $0x2b] sm:$0xff]
        %v1694 = vld [vmem:[%s369 + $0x33] sm:$0xff]
        %v1695 = vld [vmem:[%s369 + $0x3b] sm:$0xff]
        %v1696 = vld [vmem:[%s369 + $0x43] sm:$0xff]
        %v1697 = vld [vmem:[%s369 + $0x4b] sm:$0xff]
        %v1698 = vld [vmem:[%s369 + $0x53] sm:$0xff]
        %v1699 = vld [vmem:[%s369 + $0x5b] sm:$0xff]
        %v1700 = vld [vmem:[%s369 + $0x63] sm:$0xff]
        %v1701 = vld [vmem:[%s369 + $0x6b] sm:$0xff]
        %v1702 = vld [vmem:[%s369 + $0x73] sm:$0xff]
        %v1703 = vld [vmem:[%s369 + $0x7b] sm:$0xff]
        %v1704 = vld [vmem:[%s369 + $0x83] sm:$0xff]
        %v1705 = vld [vmem:[%s369 + $0x8b] sm:$0xff]
        %v1706 = vld [vmem:[%s369 + $0x93] sm:$0xff]
        %v1707 = vld [vmem:[%s369 + $0x9b] sm:$0xff]
        %v1708 = vld [vmem:[%s369 + $0xa3] sm:$0xff]
        %v1709 = vld [vmem:[%s369 + $0xab] sm:$0xff]
        %v1710 = vld [vmem:[%s369 + $0xb3] sm:$0xff]
        %v1711 = vld [vmem:[%s369 + $0xbb] sm:$0xff]
        %v1712 = vld [vmem:[%s369 + $0xc3] sm:$0xff]
        %v1713 = vld [vmem:[%s369 + $0xcb] sm:$0xff]
        %v1714 = vld [vmem:[%s369 + $0xd3] sm:$0xff]
        %v1715 = vld [vmem:[%s369 + $0xdb] sm:$0xff]
        %v1716 = vld [vmem:[%s369 + $0xe3] sm:$0xff]
        %v1717 = vld [vmem:[%s369 + $0xeb] sm:$0xff]
        %v1718 = vld [vmem:[%s369 + $0xf3] sm:$0xff]
        %v1719 = vld [vmem:[%s369 + $0xfb] sm:$0xff]
        %v1720 = vld [vmem:[%s369 + $0x103] sm:$0xff]
        %v1721 = vld [vmem:[%s369 + $0x10b] sm:$0xff]
        %v1722 = vld [vmem:[%s369 + $0x113] sm:$0xff]
        %v1723 = vld [vmem:[%s369 + $0x11b] sm:$0xff]
        %v1724 = vld [vmem:[%s369 + $0x123] sm:$0xff]
        %v1725 = vld [vmem:[%s369 + $0x12b] sm:$0xff]
        %v1726 = vpack.c.bf16 %v1691, %v1690
        %v1727 = vpack.c.bf16 %v1693, %v1692
        %v1728 = vpack.c.bf16 %v1695, %v1694
        %v1729 = vpack.c.bf16 %v1697, %v1696
        %v1730 = vpack.c.bf16 %v1699, %v1698
        %v1731 = vpack.c.bf16 %v1701, %v1700
        %v1732 = vpack.c.bf16 %v1703, %v1702
        %v1733 = vpack.c.bf16 %v1705, %v1704
        %v1734 = vpack.c.bf16 %v1707, %v1706
        %v1735 = vpack.c.bf16 %v1709, %v1708
        %v1736 = vpack.c.bf16 %v1711, %v1710
        %v1737 = vpack.c.bf16 %v1713, %v1712
        %v1738 = vpack.c.bf16 %v1715, %v1714
        %v1739 = vpack.c.bf16 %v1717, %v1716
        %v1740 = vpack.c.bf16 %v1719, %v1718
        %v1741 = vpack.c.bf16 %v1721, %v1720
        %v1742 = vpack.c.bf16 %v1723, %v1722
        %v1743 = vpack.c.bf16 %v1725, %v1724
        %s1744 = scalar_lea.vmem %s1, 8
        %v1745 = vld [vmem:[%s1744] sm:$0x3]
        %v1747 = vsel %vm568, %v1726, 0
        %v1750 = vsel %vm568, %v1727, 0
        %v1753 = vsel %vm568, %v1728, 0
        %v1756 = vsel %vm568, %v1729, 0
        %v1759 = vsel %vm568, %v1730, 0
        %v1762 = vsel %vm568, %v1731, 0
        %v1765 = vsel %vm568, %v1732, 0
        %v1768 = vsel %vm568, %v1733, 0
        %v1771 = vsel %vm568, %v1734, 0
        %v1774 = vsel %vm568, %v1735, 0
        %v1777 = vsel %vm568, %v1736, 0
        %v1780 = vsel %vm568, %v1737, 0
        %v1783 = vsel %vm568, %v1738, 0
        %v1786 = vsel %vm568, %v1739, 0
        %v1789 = vsel %vm568, %v1740, 0
        %v1792 = vsel %vm568, %v1741, 0
        %v1795 = vsel %vm568, %v1742, 0
        %v1798 = vsel %vm568, %v1743, 0
        %v1801 = vsel %vm623, %v1745, 0
        %1803 = vmatprep.subr.bf16.mxu0 0
        %1804 = vmatpush1.bf16.msra.mxu0 %v1801
        %1805 = vmatprep.subr.bf16.mxu0 0
        %1806 = vmatpush1.bf16.msra.mxu0 0
        %1807 = vmatprep.subr.bf16.mxu0 0
        %1808 = vmatpush1.bf16.msra.mxu0 0
        %1809 = vmatprep.subr.bf16.mxu0 0
        %1810 = vmatpush1.bf16.msra.mxu0 0
        %1811 = vmatprep.subr.bf16.mxu0 0
        %1812 = vmatpush1.bf16.msra.mxu0 0
        %1813 = vmatprep.subr.bf16.mxu0 0
        %1814 = vmatpush1.bf16.msra.mxu0 0
        %1815 = vmatprep.subr.bf16.mxu0 0
        %1816 = vmatpush1.bf16.msra.mxu0 0
        %1817 = vmatprep.subr.bf16.mxu0 0
        %1818 = vmatpush1.bf16.msra.mxu0 0
        %1819 = vmatprep.subr.bf16.mxu0 0
        %1820 = vmatpush1.bf16.msra.mxu0 0
        %1821 = vmatprep.subr.bf16.mxu0 0
        %1822 = vmatpush1.bf16.msra.mxu0 0
        %1823 = vmatprep.subr.bf16.mxu0 0
        %1824 = vmatpush1.bf16.msra.mxu0 0
        %1825 = vmatprep.subr.bf16.mxu0 0
        %1826 = vmatpush1.bf16.msra.mxu0 0
        %1827 = vmatprep.subr.bf16.mxu0 0
        %1828 = vmatpush1.bf16.msra.mxu0 0
        %1829 = vmatprep.subr.bf16.mxu0 0
        %1830 = vmatpush1.bf16.msra.mxu0 0
        %1831 = vmatprep.subr.bf16.mxu0 0
        %1832 = vmatpush1.bf16.msra.mxu0 0
        %1833 = vmatprep.subr.bf16.mxu0 0
        %1834 = vmatpush1.bf16.msra.mxu0 0
        %1835 = vmatprep.mubr.bf16.mxu0 0
        %1836 = vmatmul.mubr.bf16.gmra.mrb[0].mxu0 %v1747
        %v1837 = vpop.f32.mrb[0].mxu0
        %v1838 = vadd.f32 0.0, %v1837
        %v1839 = vpop.f32.mrb[0].mxu0
        %v1840 = vpop.f32.mrb[0].mxu0
        %v1841 = vadd.f32 0.0, %v1840
        %v1842 = vpop.f32.mrb[0].mxu0
        %1843 = vmatprep.mubr.bf16.mxu0 0
        %1844 = vmatmul.mubr.bf16.gmra.mrb[0].mxu0 %v1750
        %v1845 = vpop.f32.mrb[0].mxu0
        %v1846 = vadd.f32 0.0, %v1845
        %v1847 = vpop.f32.mrb[0].mxu0
        %v1848 = vpop.f32.mrb[0].mxu0
        %v1849 = vadd.f32 0.0, %v1848
        %v1850 = vpop.f32.mrb[0].mxu0
        %1851 = vmatprep.mubr.bf16.mxu0 0
        %1852 = vmatmul.mubr.bf16.gmra.mrb[0].mxu0 %v1753
        %v1853 = vpop.f32.mrb[0].mxu0
        %v1854 = vadd.f32 0.0, %v1853
        %v1855 = vpop.f32.mrb[0].mxu0
        %v1856 = vpop.f32.mrb[0].mxu0
        %v1857 = vadd.f32 0.0, %v1856
        %v1858 = vpop.f32.mrb[0].mxu0
        %1859 = vmatprep.mubr.bf16.mxu0 0
        %1860 = vmatmul.mubr.bf16.gmra.mrb[0].mxu0 %v1756
        %v1861 = vpop.f32.mrb[0].mxu0
        %v1862 = vadd.f32 0.0, %v1861
        %v1863 = vpop.f32.mrb[0].mxu0
        %v1864 = vpop.f32.mrb[0].mxu0
        %v1865 = vadd.f32 0.0, %v1864
        %v1866 = vpop.f32.mrb[0].mxu0
        %1867 = vmatprep.mubr.bf16.mxu0 0
        %1868 = vmatmul.mubr.bf16.gmra.mrb[0].mxu0 %v1759
        %v1869 = vpop.f32.mrb[0].mxu0
        %v1870 = vadd.f32 0.0, %v1869
        %v1871 = vpop.f32.mrb[0].mxu0
        %v1872 = vpop.f32.mrb[0].mxu0
        %v1873 = vadd.f32 0.0, %v1872
        %v1874 = vpop.f32.mrb[0].mxu0
        %1875 = vmatprep.mubr.bf16.mxu0 0
        %1876 = vmatmul.mubr.bf16.gmra.mrb[0].mxu0 %v1762
        %v1877 = vpop.f32.mrb[0].mxu0
        %v1878 = vadd.f32 0.0, %v1877
        %v1879 = vpop.f32.mrb[0].mxu0
        %v1880 = vpop.f32.mrb[0].mxu0
        %v1881 = vadd.f32 0.0, %v1880
        %v1882 = vpop.f32.mrb[0].mxu0
        %1883 = vmatprep.mubr.bf16.mxu0 0
        %1884 = vmatmul.mubr.bf16.gmra.mrb[0].mxu0 %v1765
        %v1885 = vpop.f32.mrb[0].mxu0
        %v1886 = vadd.f32 0.0, %v1885
        %v1887 = vpop.f32.mrb[0].mxu0
        %v1888 = vpop.f32.mrb[0].mxu0
        %v1889 = vadd.f32 0.0, %v1888
        %v1890 = vpop.f32.mrb[0].mxu0
        %1891 = vmatprep.mubr.bf16.mxu0 0
        %1892 = vmatmul.mubr.bf16.gmra.mrb[0].mxu0 %v1768
        %v1893 = vpop.f32.mrb[0].mxu0
        %v1894 = vadd.f32 0.0, %v1893
        %v1895 = vpop.f32.mrb[0].mxu0
        %v1896 = vpop.f32.mrb[0].mxu0
        %v1897 = vadd.f32 0.0, %v1896
        %v1898 = vpop.f32.mrb[0].mxu0
        %1899 = vmatprep.mubr.bf16.mxu0 0
        %1900 = vmatmul.mubr.bf16.gmra.mrb[0].mxu0 %v1771
        %v1901 = vpop.f32.mrb[0].mxu0
        %v1902 = vadd.f32 0.0, %v1901
        %v1903 = vpop.f32.mrb[0].mxu0
        %v1904 = vpop.f32.mrb[0].mxu0
        %v1905 = vadd.f32 0.0, %v1904
        %v1906 = vpop.f32.mrb[0].mxu0
        %1907 = vmatprep.mubr.bf16.mxu0 0
        %1908 = vmatmul.mubr.bf16.gmra.mrb[0].mxu0 %v1774
        %v1909 = vpop.f32.mrb[0].mxu0
        %v1910 = vadd.f32 0.0, %v1909
        %v1911 = vpop.f32.mrb[0].mxu0
        %v1912 = vpop.f32.mrb[0].mxu0
        %v1913 = vadd.f32 0.0, %v1912
        %v1914 = vpop.f32.mrb[0].mxu0
        %1915 = vmatprep.mubr.bf16.mxu0 0
        %1916 = vmatmul.mubr.bf16.gmra.mrb[0].mxu0 %v1777
        %v1917 = vpop.f32.mrb[0].mxu0
        %v1918 = vadd.f32 0.0, %v1917
        %v1919 = vpop.f32.mrb[0].mxu0
        %v1920 = vpop.f32.mrb[0].mxu0
        %v1921 = vadd.f32 0.0, %v1920
        %v1922 = vpop.f32.mrb[0].mxu0
        %1923 = vmatprep.mubr.bf16.mxu0 0
        %1924 = vmatmul.mubr.bf16.gmra.mrb[0].mxu0 %v1780
        %v1925 = vpop.f32.mrb[0].mxu0
        %v1926 = vadd.f32 0.0, %v1925
        %v1927 = vpop.f32.mrb[0].mxu0
        %v1928 = vpop.f32.mrb[0].mxu0
        %v1929 = vadd.f32 0.0, %v1928
        %v1930 = vpop.f32.mrb[0].mxu0
        %1931 = vmatprep.mubr.bf16.mxu0 0
        %1932 = vmatmul.mubr.bf16.gmra.mrb[0].mxu0 %v1783
        %v1933 = vpop.f32.mrb[0].mxu0
        %v1934 = vadd.f32 0.0, %v1933
        %v1935 = vpop.f32.mrb[0].mxu0
        %v1936 = vpop.f32.mrb[0].mxu0
        %v1937 = vadd.f32 0.0, %v1936
        %v1938 = vpop.f32.mrb[0].mxu0
        %1939 = vmatprep.mubr.bf16.mxu0 0
        %1940 = vmatmul.mubr.bf16.gmra.mrb[0].mxu0 %v1786
        %v1941 = vpop.f32.mrb[0].mxu0
        %v1942 = vadd.f32 0.0, %v1941
        %v1943 = vpop.f32.mrb[0].mxu0
        %v1944 = vpop.f32.mrb[0].mxu0
        %v1945 = vadd.f32 0.0, %v1944
        %v1946 = vpop.f32.mrb[0].mxu0
        %1947 = vmatprep.mubr.bf16.mxu0 0
        %1948 = vmatmul.mubr.bf16.gmra.mrb[0].mxu0 %v1789
        %v1949 = vpop.f32.mrb[0].mxu0
        %v1950 = vadd.f32 0.0, %v1949
        %v1951 = vpop.f32.mrb[0].mxu0
        %v1952 = vpop.f32.mrb[0].mxu0
        %v1953 = vadd.f32 0.0, %v1952
        %v1954 = vpop.f32.mrb[0].mxu0
        %1955 = vmatprep.mubr.bf16.mxu0 0
        %1956 = vmatmul.mubr.bf16.gmra.mrb[0].mxu0 %v1792
        %v1957 = vpop.f32.mrb[0].mxu0
        %v1958 = vadd.f32 0.0, %v1957
        %v1959 = vpop.f32.mrb[0].mxu0
        %v1960 = vpop.f32.mrb[0].mxu0
        %v1961 = vadd.f32 0.0, %v1960
        %v1962 = vpop.f32.mrb[0].mxu0
        %1963 = vmatprep.mubr.bf16.mxu0 0
        %1964 = vmatmul.mubr.bf16.gmra.mrb[0].mxu0 %v1795
        %v1965 = vpop.f32.mrb[0].mxu0
        %v1966 = vadd.f32 0.0, %v1965
        %v1967 = vpop.f32.mrb[0].mxu0
        %v1968 = vpop.f32.mrb[0].mxu0
        %v1969 = vadd.f32 0.0, %v1968
        %v1970 = vpop.f32.mrb[0].mxu0
        %1971 = vmatprep.mubr.bf16.mxu0 0
        %1972 = vmatmul.mubr.bf16.gmra.mrb[0].mxu0 %v1798
        %v1973 = vpop.f32.mrb[0].mxu0
        %v1974 = vadd.f32 0.0, %v1973
        %v1975 = vpop.f32.mrb[0].mxu0
        %v1976 = vpop.f32.mrb[0].mxu0
        %v1977 = vadd.f32 0.0, %v1976
        %v1978 = vpop.f32.mrb[0].mxu0
        %1979 = vdwg.mxu0
        %v1980 = vadd.f32 %v1654, %v1838
        %v1981 = vadd.f32 %v1655, %v1841
        %v1982 = vadd.f32 %v1656, %v1846
        %v1983 = vadd.f32 %v1657, %v1849
        %v1984 = vadd.f32 %v1658, %v1854
        %v1985 = vadd.f32 %v1659, %v1857
        %v1986 = vadd.f32 %v1660, %v1862
        %v1987 = vadd.f32 %v1661, %v1865
        %v1988 = vadd.f32 %v1662, %v1870
        %v1989 = vadd.f32 %v1663, %v1873
        %v1990 = vadd.f32 %v1664, %v1878
        %v1991 = vadd.f32 %v1665, %v1881
        %v1992 = vadd.f32 %v1666, %v1886
        %v1993 = vadd.f32 %v1667, %v1889
        %v1994 = vadd.f32 %v1668, %v1894
        %v1995 = vadd.f32 %v1669, %v1897
        %v1996 = vadd.f32 %v1670, %v1902
        %v1997 = vadd.f32 %v1671, %v1905
        %v1998 = vadd.f32 %v1672, %v1910
        %v1999 = vadd.f32 %v1673, %v1913
        %v2000 = vadd.f32 %v1674, %v1918
        %v2001 = vadd.f32 %v1675, %v1921
        %v2002 = vadd.f32 %v1676, %v1926
        %v2003 = vadd.f32 %v1677, %v1929
        %v2004 = vadd.f32 %v1678, %v1934
        %v2005 = vadd.f32 %v1679, %v1937
        %v2006 = vadd.f32 %v1680, %v1942
        %v2007 = vadd.f32 %v1681, %v1945
        %v2008 = vadd.f32 %v1682, %v1950
        %v2009 = vadd.f32 %v1683, %v1953
        %v2010 = vadd.f32 %v1684, %v1958
        %v2011 = vadd.f32 %v1685, %v1961
        %v2012 = vadd.f32 %v1686, %v1966
        %v2013 = vadd.f32 %v1687, %v1969
        %v2014 = vadd.f32 %v1688, %v1974
        %v2015 = vadd.f32 %v1689, %v1977
        %v2016 = vld [vmem:[%s369 + $0x14] sm:$0xff]
        %v2017 = vld [vmem:[%s369 + $0x1c] sm:$0xff]
        %v2018 = vld [vmem:[%s369 + $0x24] sm:$0xff]
        %v2019 = vld [vmem:[%s369 + $0x2c] sm:$0xff]
        %v2020 = vld [vmem:[%s369 + $0x34] sm:$0xff]
        %v2021 = vld [vmem:[%s369 + $0x3c] sm:$0xff]
        %v2022 = vld [vmem:[%s369 + $0x44] sm:$0xff]
        %v2023 = vld [vmem:[%s369 + $0x4c] sm:$0xff]
        %v2024 = vld [vmem:[%s369 + $0x54] sm:$0xff]
        %v2025 = vld [vmem:[%s369 + $0x5c] sm:$0xff]
        %v2026 = vld [vmem:[%s369 + $0x64] sm:$0xff]
        %v2027 = vld [vmem:[%s369 + $0x6c] sm:$0xff]
        %v2028 = vld [vmem:[%s369 + $0x74] sm:$0xff]
        %v2029 = vld [vmem:[%s369 + $0x7c] sm:$0xff]
        %v2030 = vld [vmem:[%s369 + $0x84] sm:$0xff]
        %v2031 = vld [vmem:[%s369 + $0x8c] sm:$0xff]
        %v2032 = vld [vmem:[%s369 + $0x94] sm:$0xff]
        %v2033 = vld [vmem:[%s369 + $0x9c] sm:$0xff]
        %v2034 = vld [vmem:[%s369 + $0xa4] sm:$0xff]
        %v2035 = vld [vmem:[%s369 + $0xac] sm:$0xff]
        %v2036 = vld [vmem:[%s369 + $0xb4] sm:$0xff]
        %v2037 = vld [vmem:[%s369 + $0xbc] sm:$0xff]
        %v2038 = vld [vmem:[%s369 + $0xc4] sm:$0xff]
        %v2039 = vld [vmem:[%s369 + $0xcc] sm:$0xff]
        %v2040 = vld [vmem:[%s369 + $0xd4] sm:$0xff]
        %v2041 = vld [vmem:[%s369 + $0xdc] sm:$0xff]
        %v2042 = vld [vmem:[%s369 + $0xe4] sm:$0xff]
        %v2043 = vld [vmem:[%s369 + $0xec] sm:$0xff]
        %v2044 = vld [vmem:[%s369 + $0xf4] sm:$0xff]
        %v2045 = vld [vmem:[%s369 + $0xfc] sm:$0xff]
        %v2046 = vld [vmem:[%s369 + $0x104] sm:$0xff]
        %v2047 = vld [vmem:[%s369 + $0x10c] sm:$0xff]
        %v2048 = vld [vmem:[%s369 + $0x114] sm:$0xff]
        %v2049 = vld [vmem:[%s369 + $0x11c] sm:$0xff]
        %v2050 = vld [vmem:[%s369 + $0x124] sm:$0xff]
        %v2051 = vld [vmem:[%s369 + $0x12c] sm:$0xff]
        %v2052 = vpack.c.bf16 %v2017, %v2016
        %v2053 = vpack.c.bf16 %v2019, %v2018
        %v2054 = vpack.c.bf16 %v2021, %v2020
        %v2055 = vpack.c.bf16 %v2023, %v2022
        %v2056 = vpack.c.bf16 %v2025, %v2024
        %v2057 = vpack.c.bf16 %v2027, %v2026
        %v2058 = vpack.c.bf16 %v2029, %v2028
        %v2059 = vpack.c.bf16 %v2031, %v2030
        %v2060 = vpack.c.bf16 %v2033, %v2032
        %v2061 = vpack.c.bf16 %v2035, %v2034
        %v2062 = vpack.c.bf16 %v2037, %v2036
        %v2063 = vpack.c.bf16 %v2039, %v2038
        %v2064 = vpack.c.bf16 %v2041, %v2040
        %v2065 = vpack.c.bf16 %v2043, %v2042
        %v2066 = vpack.c.bf16 %v2045, %v2044
        %v2067 = vpack.c.bf16 %v2047, %v2046
        %v2068 = vpack.c.bf16 %v2049, %v2048
        %v2069 = vpack.c.bf16 %v2051, %v2050
        %s2070 = scalar_lea.vmem %s1, 10
        %v2071 = vld [vmem:[%s2070] sm:$0x3]
        %v2073 = vsel %vm568, %v2052, 0
        %v2076 = vsel %vm568, %v2053, 0
        %v2079 = vsel %vm568, %v2054, 0
        %v2082 = vsel %vm568, %v2055, 0
        %v2085 = vsel %vm568, %v2056, 0
        %v2088 = vsel %vm568, %v2057, 0
        %v2091 = vsel %vm568, %v2058, 0
        %v2094 = vsel %vm568, %v2059, 0
        %v2097 = vsel %vm568, %v2060, 0
        %v2100 = vsel %vm568, %v2061, 0
        %v2103 = vsel %vm568, %v2062, 0
        %v2106 = vsel %vm568, %v2063, 0
        %v2109 = vsel %vm568, %v2064, 0
        %v2112 = vsel %vm568, %v2065, 0
        %v2115 = vsel %vm568, %v2066, 0
        %v2118 = vsel %vm568, %v2067, 0
        %v2121 = vsel %vm568, %v2068, 0
        %v2124 = vsel %vm568, %v2069, 0
        %v2127 = vsel %vm623, %v2071, 0
        %2129 = vmatprep.subr.bf16.mxu0 0
        %2130 = vmatpush1.bf16.msra.mxu0 %v2127
        %2131 = vmatprep.subr.bf16.mxu0 0
        %2132 = vmatpush1.bf16.msra.mxu0 0
        %2133 = vmatprep.subr.bf16.mxu0 0
        %2134 = vmatpush1.bf16.msra.mxu0 0
        %2135 = vmatprep.subr.bf16.mxu0 0
        %2136 = vmatpush1.bf16.msra.mxu0 0
        %2137 = vmatprep.subr.bf16.mxu0 0
        %2138 = vmatpush1.bf16.msra.mxu0 0
        %2139 = vmatprep.subr.bf16.mxu0 0
        %2140 = vmatpush1.bf16.msra.mxu0 0
        %2141 = vmatprep.subr.bf16.mxu0 0
        %2142 = vmatpush1.bf16.msra.mxu0 0
        %2143 = vmatprep.subr.bf16.mxu0 0
        %2144 = vmatpush1.bf16.msra.mxu0 0
        %2145 = vmatprep.subr.bf16.mxu0 0
        %2146 = vmatpush1.bf16.msra.mxu0 0
        %2147 = vmatprep.subr.bf16.mxu0 0
        %2148 = vmatpush1.bf16.msra.mxu0 0
        %2149 = vmatprep.subr.bf16.mxu0 0
        %2150 = vmatpush1.bf16.msra.mxu0 0
        %2151 = vmatprep.subr.bf16.mxu0 0
        %2152 = vmatpush1.bf16.msra.mxu0 0
        %2153 = vmatprep.subr.bf16.mxu0 0
        %2154 = vmatpush1.bf16.msra.mxu0 0
        %2155 = vmatprep.subr.bf16.mxu0 0
        %2156 = vmatpush1.bf16.msra.mxu0 0
        %2157 = vmatprep.subr.bf16.mxu0 0
        %2158 = vmatpush1.bf16.msra.mxu0 0
        %2159 = vmatprep.subr.bf16.mxu0 0
        %2160 = vmatpush1.bf16.msra.mxu0 0
        %2161 = vmatprep.mubr.bf16.mxu0 0
        %2162 = vmatmul.mubr.bf16.gmra.mrb[0].mxu0 %v2073
        %v2163 = vpop.f32.mrb[0].mxu0
        %v2164 = vadd.f32 0.0, %v2163
        %v2165 = vpop.f32.mrb[0].mxu0
        %v2166 = vpop.f32.mrb[0].mxu0
        %v2167 = vadd.f32 0.0, %v2166
        %v2168 = vpop.f32.mrb[0].mxu0
        %2169 = vmatprep.mubr.bf16.mxu0 0
        %2170 = vmatmul.mubr.bf16.gmra.mrb[0].mxu0 %v2076
        %v2171 = vpop.f32.mrb[0].mxu0
        %v2172 = vadd.f32 0.0, %v2171
        %v2173 = vpop.f32.mrb[0].mxu0
        %v2174 = vpop.f32.mrb[0].mxu0
        %v2175 = vadd.f32 0.0, %v2174
        %v2176 = vpop.f32.mrb[0].mxu0
        %2177 = vmatprep.mubr.bf16.mxu0 0
        %2178 = vmatmul.mubr.bf16.gmra.mrb[0].mxu0 %v2079
        %v2179 = vpop.f32.mrb[0].mxu0
        %v2180 = vadd.f32 0.0, %v2179
        %v2181 = vpop.f32.mrb[0].mxu0
        %v2182 = vpop.f32.mrb[0].mxu0
        %v2183 = vadd.f32 0.0, %v2182
        %v2184 = vpop.f32.mrb[0].mxu0
        %2185 = vmatprep.mubr.bf16.mxu0 0
        %2186 = vmatmul.mubr.bf16.gmra.mrb[0].mxu0 %v2082
        %v2187 = vpop.f32.mrb[0].mxu0
        %v2188 = vadd.f32 0.0, %v2187
        %v2189 = vpop.f32.mrb[0].mxu0
        %v2190 = vpop.f32.mrb[0].mxu0
        %v2191 = vadd.f32 0.0, %v2190
        %v2192 = vpop.f32.mrb[0].mxu0
        %2193 = vmatprep.mubr.bf16.mxu0 0
        %2194 = vmatmul.mubr.bf16.gmra.mrb[0].mxu0 %v2085
        %v2195 = vpop.f32.mrb[0].mxu0
        %v2196 = vadd.f32 0.0, %v2195
        %v2197 = vpop.f32.mrb[0].mxu0
        %v2198 = vpop.f32.mrb[0].mxu0
        %v2199 = vadd.f32 0.0, %v2198
        %v2200 = vpop.f32.mrb[0].mxu0
        %2201 = vmatprep.mubr.bf16.mxu0 0
        %2202 = vmatmul.mubr.bf16.gmra.mrb[0].mxu0 %v2088
        %v2203 = vpop.f32.mrb[0].mxu0
        %v2204 = vadd.f32 0.0, %v2203
        %v2205 = vpop.f32.mrb[0].mxu0
        %v2206 = vpop.f32.mrb[0].mxu0
        %v2207 = vadd.f32 0.0, %v2206
        %v2208 = vpop.f32.mrb[0].mxu0
        %2209 = vmatprep.mubr.bf16.mxu0 0
        %2210 = vmatmul.mubr.bf16.gmra.mrb[0].mxu0 %v2091
        %v2211 = vpop.f32.mrb[0].mxu0
        %v2212 = vadd.f32 0.0, %v2211
        %v2213 = vpop.f32.mrb[0].mxu0
        %v2214 = vpop.f32.mrb[0].mxu0
        %v2215 = vadd.f32 0.0, %v2214
        %v2216 = vpop.f32.mrb[0].mxu0
        %2217 = vmatprep.mubr.bf16.mxu0 0
        %2218 = vmatmul.mubr.bf16.gmra.mrb[0].mxu0 %v2094
        %v2219 = vpop.f32.mrb[0].mxu0
        %v2220 = vadd.f32 0.0, %v2219
        %v2221 = vpop.f32.mrb[0].mxu0
        %v2222 = vpop.f32.mrb[0].mxu0
        %v2223 = vadd.f32 0.0, %v2222
        %v2224 = vpop.f32.mrb[0].mxu0
        %2225 = vmatprep.mubr.bf16.mxu0 0
        %2226 = vmatmul.mubr.bf16.gmra.mrb[0].mxu0 %v2097
        %v2227 = vpop.f32.mrb[0].mxu0
        %v2228 = vadd.f32 0.0, %v2227
        %v2229 = vpop.f32.mrb[0].mxu0
        %v2230 = vpop.f32.mrb[0].mxu0
        %v2231 = vadd.f32 0.0, %v2230
        %v2232 = vpop.f32.mrb[0].mxu0
        %2233 = vmatprep.mubr.bf16.mxu0 0
        %2234 = vmatmul.mubr.bf16.gmra.mrb[0].mxu0 %v2100
        %v2235 = vpop.f32.mrb[0].mxu0
        %v2236 = vadd.f32 0.0, %v2235
        %v2237 = vpop.f32.mrb[0].mxu0
        %v2238 = vpop.f32.mrb[0].mxu0
        %v2239 = vadd.f32 0.0, %v2238
        %v2240 = vpop.f32.mrb[0].mxu0
        %2241 = vmatprep.mubr.bf16.mxu0 0
        %2242 = vmatmul.mubr.bf16.gmra.mrb[0].mxu0 %v2103
        %v2243 = vpop.f32.mrb[0].mxu0
        %v2244 = vadd.f32 0.0, %v2243
        %v2245 = vpop.f32.mrb[0].mxu0
        %v2246 = vpop.f32.mrb[0].mxu0
        %v2247 = vadd.f32 0.0, %v2246
        %v2248 = vpop.f32.mrb[0].mxu0
        %2249 = vmatprep.mubr.bf16.mxu0 0
        %2250 = vmatmul.mubr.bf16.gmra.mrb[0].mxu0 %v2106
        %v2251 = vpop.f32.mrb[0].mxu0
        %v2252 = vadd.f32 0.0, %v2251
        %v2253 = vpop.f32.mrb[0].mxu0
        %v2254 = vpop.f32.mrb[0].mxu0
        %v2255 = vadd.f32 0.0, %v2254
        %v2256 = vpop.f32.mrb[0].mxu0
        %2257 = vmatprep.mubr.bf16.mxu0 0
        %2258 = vmatmul.mubr.bf16.gmra.mrb[0].mxu0 %v2109
        %v2259 = vpop.f32.mrb[0].mxu0
        %v2260 = vadd.f32 0.0, %v2259
        %v2261 = vpop.f32.mrb[0].mxu0
        %v2262 = vpop.f32.mrb[0].mxu0
        %v2263 = vadd.f32 0.0, %v2262
        %v2264 = vpop.f32.mrb[0].mxu0
        %2265 = vmatprep.mubr.bf16.mxu0 0
        %2266 = vmatmul.mubr.bf16.gmra.mrb[0].mxu0 %v2112
        %v2267 = vpop.f32.mrb[0].mxu0
        %v2268 = vadd.f32 0.0, %v2267
        %v2269 = vpop.f32.mrb[0].mxu0
        %v2270 = vpop.f32.mrb[0].mxu0
        %v2271 = vadd.f32 0.0, %v2270
        %v2272 = vpop.f32.mrb[0].mxu0
        %2273 = vmatprep.mubr.bf16.mxu0 0
        %2274 = vmatmul.mubr.bf16.gmra.mrb[0].mxu0 %v2115
        %v2275 = vpop.f32.mrb[0].mxu0
        %v2276 = vadd.f32 0.0, %v2275
        %v2277 = vpop.f32.mrb[0].mxu0
        %v2278 = vpop.f32.mrb[0].mxu0
        %v2279 = vadd.f32 0.0, %v2278
        %v2280 = vpop.f32.mrb[0].mxu0
        %2281 = vmatprep.mubr.bf16.mxu0 0
        %2282 = vmatmul.mubr.bf16.gmra.mrb[0].mxu0 %v2118
        %v2283 = vpop.f32.mrb[0].mxu0
        %v2284 = vadd.f32 0.0, %v2283
        %v2285 = vpop.f32.mrb[0].mxu0
        %v2286 = vpop.f32.mrb[0].mxu0
        %v2287 = vadd.f32 0.0, %v2286
        %v2288 = vpop.f32.mrb[0].mxu0
        %2289 = vmatprep.mubr.bf16.mxu0 0
        %2290 = vmatmul.mubr.bf16.gmra.mrb[0].mxu0 %v2121
        %v2291 = vpop.f32.mrb[0].mxu0
        %v2292 = vadd.f32 0.0, %v2291
        %v2293 = vpop.f32.mrb[0].mxu0
        %v2294 = vpop.f32.mrb[0].mxu0
        %v2295 = vadd.f32 0.0, %v2294
        %v2296 = vpop.f32.mrb[0].mxu0
        %2297 = vmatprep.mubr.bf16.mxu0 0
        %2298 = vmatmul.mubr.bf16.gmra.mrb[0].mxu0 %v2124
        %v2299 = vpop.f32.mrb[0].mxu0
        %v2300 = vadd.f32 0.0, %v2299
        %v2301 = vpop.f32.mrb[0].mxu0
        %v2302 = vpop.f32.mrb[0].mxu0
        %v2303 = vadd.f32 0.0, %v2302
        %v2304 = vpop.f32.mrb[0].mxu0
        %2305 = vdwg.mxu0
        %v2306 = vadd.f32 %v1980, %v2164
        %v2307 = vadd.f32 %v1981, %v2167
        %v2308 = vadd.f32 %v1982, %v2172
        %v2309 = vadd.f32 %v1983, %v2175
        %v2310 = vadd.f32 %v1984, %v2180
        %v2311 = vadd.f32 %v1985, %v2183
        %v2312 = vadd.f32 %v1986, %v2188
        %v2313 = vadd.f32 %v1987, %v2191
        %v2314 = vadd.f32 %v1988, %v2196
        %v2315 = vadd.f32 %v1989, %v2199
        %v2316 = vadd.f32 %v1990, %v2204
        %v2317 = vadd.f32 %v1991, %v2207
        %v2318 = vadd.f32 %v1992, %v2212
        %v2319 = vadd.f32 %v1993, %v2215
        %v2320 = vadd.f32 %v1994, %v2220
        %v2321 = vadd.f32 %v1995, %v2223
        %v2322 = vadd.f32 %v1996, %v2228
        %v2323 = vadd.f32 %v1997, %v2231
        %v2324 = vadd.f32 %v1998, %v2236
        %v2325 = vadd.f32 %v1999, %v2239
        %v2326 = vadd.f32 %v2000, %v2244
        %v2327 = vadd.f32 %v2001, %v2247
        %v2328 = vadd.f32 %v2002, %v2252
        %v2329 = vadd.f32 %v2003, %v2255
        %v2330 = vadd.f32 %v2004, %v2260
        %v2331 = vadd.f32 %v2005, %v2263
        %v2332 = vadd.f32 %v2006, %v2268
        %v2333 = vadd.f32 %v2007, %v2271
        %v2334 = vadd.f32 %v2008, %v2276
        %v2335 = vadd.f32 %v2009, %v2279
        %v2336 = vadd.f32 %v2010, %v2284
        %v2337 = vadd.f32 %v2011, %v2287
        %v2338 = vadd.f32 %v2012, %v2292
        %v2339 = vadd.f32 %v2013, %v2295
        %v2340 = vadd.f32 %v2014, %v2300
        %v2341 = vadd.f32 %v2015, %v2303
        %v2342 = vld [vmem:[%s369 + $0x24] sm:$0xff]
        %v2343 = vld [vmem:[%s369 + $0x2c] sm:$0xff]
        %v2344 = vld [vmem:[%s369 + $0x34] sm:$0xff]
        %v2345 = vld [vmem:[%s369 + $0x3c] sm:$0xff]
        %v2346 = vld [vmem:[%s369 + $0x44] sm:$0xff]
        %v2347 = vld [vmem:[%s369 + $0x4c] sm:$0xff]
        %v2348 = vld [vmem:[%s369 + $0x54] sm:$0xff]
        %v2349 = vld [vmem:[%s369 + $0x5c] sm:$0xff]
        %v2350 = vld [vmem:[%s369 + $0x64] sm:$0xff]
        %v2351 = vld [vmem:[%s369 + $0x6c] sm:$0xff]
        %v2352 = vld [vmem:[%s369 + $0x74] sm:$0xff]
        %v2353 = vld [vmem:[%s369 + $0x7c] sm:$0xff]
        %v2354 = vld [vmem:[%s369 + $0x84] sm:$0xff]
        %v2355 = vld [vmem:[%s369 + $0x8c] sm:$0xff]
        %v2356 = vld [vmem:[%s369 + $0x94] sm:$0xff]
        %v2357 = vld [vmem:[%s369 + $0x9c] sm:$0xff]
        %v2358 = vld [vmem:[%s369 + $0xa4] sm:$0xff]
        %v2359 = vld [vmem:[%s369 + $0xac] sm:$0xff]
        %v2360 = vld [vmem:[%s369 + $0xb4] sm:$0xff]
        %v2361 = vld [vmem:[%s369 + $0xbc] sm:$0xff]
        %v2362 = vld [vmem:[%s369 + $0xc4] sm:$0xff]
        %v2363 = vld [vmem:[%s369 + $0xcc] sm:$0xff]
        %v2364 = vld [vmem:[%s369 + $0xd4] sm:$0xff]
        %v2365 = vld [vmem:[%s369 + $0xdc] sm:$0xff]
        %v2366 = vld [vmem:[%s369 + $0xe4] sm:$0xff]
        %v2367 = vld [vmem:[%s369 + $0xec] sm:$0xff]
        %v2368 = vld [vmem:[%s369 + $0xf4] sm:$0xff]
        %v2369 = vld [vmem:[%s369 + $0xfc] sm:$0xff]
        %v2370 = vld [vmem:[%s369 + $0x104] sm:$0xff]
        %v2371 = vld [vmem:[%s369 + $0x10c] sm:$0xff]
        %v2372 = vld [vmem:[%s369 + $0x114] sm:$0xff]
        %v2373 = vld [vmem:[%s369 + $0x11c] sm:$0xff]
        %v2374 = vld [vmem:[%s369 + $0x124] sm:$0xff]
        %v2375 = vld [vmem:[%s369 + $0x12c] sm:$0xff]
        %v2376 = vld [vmem:[%s369 + $0x134] sm:$0xff]
        %v2377 = vld [vmem:[%s369 + $0x13c] sm:$0xff]
        %v2378 = vpack.c.bf16 %v2343, %v2342
        %v2379 = vpack.c.bf16 %v2345, %v2344
        %v2380 = vpack.c.bf16 %v2347, %v2346
        %v2381 = vpack.c.bf16 %v2349, %v2348
        %v2382 = vpack.c.bf16 %v2351, %v2350
        %v2383 = vpack.c.bf16 %v2353, %v2352
        %v2384 = vpack.c.bf16 %v2355, %v2354
        %v2385 = vpack.c.bf16 %v2357, %v2356
        %v2386 = vpack.c.bf16 %v2359, %v2358
        %v2387 = vpack.c.bf16 %v2361, %v2360
        %v2388 = vpack.c.bf16 %v2363, %v2362
        %v2389 = vpack.c.bf16 %v2365, %v2364
        %v2390 = vpack.c.bf16 %v2367, %v2366
        %v2391 = vpack.c.bf16 %v2369, %v2368
        %v2392 = vpack.c.bf16 %v2371, %v2370
        %v2393 = vpack.c.bf16 %v2373, %v2372
        %v2394 = vpack.c.bf16 %v2375, %v2374
        %v2395 = vpack.c.bf16 %v2377, %v2376
        %s2396 = scalar_lea.vmem %s1, 12
        %v2397 = vld [vmem:[%s2396] sm:$0x3]
        %v2399 = vsel %vm568, %v2378, 0
        %v2402 = vsel %vm568, %v2379, 0
        %v2405 = vsel %vm568, %v2380, 0
        %v2408 = vsel %vm568, %v2381, 0
        %v2411 = vsel %vm568, %v2382, 0
        %v2414 = vsel %vm568, %v2383, 0
        %v2417 = vsel %vm568, %v2384, 0
        %v2420 = vsel %vm568, %v2385, 0
        %v2423 = vsel %vm568, %v2386, 0
        %v2426 = vsel %vm568, %v2387, 0
        %v2429 = vsel %vm568, %v2388, 0
        %v2432 = vsel %vm568, %v2389, 0
        %v2435 = vsel %vm568, %v2390, 0
        %v2438 = vsel %vm568, %v2391, 0
        %v2441 = vsel %vm568, %v2392, 0
        %v2444 = vsel %vm568, %v2393, 0
        %v2447 = vsel %vm568, %v2394, 0
        %v2450 = vsel %vm568, %v2395, 0
        %v2453 = vsel %vm623, %v2397, 0
        %2455 = vmatprep.subr.bf16.mxu0 0
        %2456 = vmatpush1.bf16.msra.mxu0 %v2453
        %2457 = vmatprep.subr.bf16.mxu0 0
        %2458 = vmatpush1.bf16.msra.mxu0 0
        %2459 = vmatprep.subr.bf16.mxu0 0
        %2460 = vmatpush1.bf16.msra.mxu0 0
        %2461 = vmatprep.subr.bf16.mxu0 0
        %2462 = vmatpush1.bf16.msra.mxu0 0
        %2463 = vmatprep.subr.bf16.mxu0 0
        %2464 = vmatpush1.bf16.msra.mxu0 0
        %2465 = vmatprep.subr.bf16.mxu0 0
        %2466 = vmatpush1.bf16.msra.mxu0 0
        %2467 = vmatprep.subr.bf16.mxu0 0
        %2468 = vmatpush1.bf16.msra.mxu0 0
        %2469 = vmatprep.subr.bf16.mxu0 0
        %2470 = vmatpush1.bf16.msra.mxu0 0
        %2471 = vmatprep.subr.bf16.mxu0 0
        %2472 = vmatpush1.bf16.msra.mxu0 0
        %2473 = vmatprep.subr.bf16.mxu0 0
        %2474 = vmatpush1.bf16.msra.mxu0 0
        %2475 = vmatprep.subr.bf16.mxu0 0
        %2476 = vmatpush1.bf16.msra.mxu0 0
        %2477 = vmatprep.subr.bf16.mxu0 0
        %2478 = vmatpush1.bf16.msra.mxu0 0
        %2479 = vmatprep.subr.bf16.mxu0 0
        %2480 = vmatpush1.bf16.msra.mxu0 0
        %2481 = vmatprep.subr.bf16.mxu0 0
        %2482 = vmatpush1.bf16.msra.mxu0 0
        %2483 = vmatprep.subr.bf16.mxu0 0
        %2484 = vmatpush1.bf16.msra.mxu0 0
        %2485 = vmatprep.subr.bf16.mxu0 0
        %2486 = vmatpush1.bf16.msra.mxu0 0
        %2487 = vmatprep.mubr.bf16.mxu0 0
        %2488 = vmatmul.mubr.bf16.gmra.mrb[0].mxu0 %v2399
        %v2489 = vpop.f32.mrb[0].mxu0
        %v2490 = vadd.f32 0.0, %v2489
        %v2491 = vpop.f32.mrb[0].mxu0
        %v2492 = vpop.f32.mrb[0].mxu0
        %v2493 = vadd.f32 0.0, %v2492
        %v2494 = vpop.f32.mrb[0].mxu0
        %2495 = vmatprep.mubr.bf16.mxu0 0
        %2496 = vmatmul.mubr.bf16.gmra.mrb[0].mxu0 %v2402
        %v2497 = vpop.f32.mrb[0].mxu0
        %v2498 = vadd.f32 0.0, %v2497
        %v2499 = vpop.f32.mrb[0].mxu0
        %v2500 = vpop.f32.mrb[0].mxu0
        %v2501 = vadd.f32 0.0, %v2500
        %v2502 = vpop.f32.mrb[0].mxu0
        %2503 = vmatprep.mubr.bf16.mxu0 0
        %2504 = vmatmul.mubr.bf16.gmra.mrb[0].mxu0 %v2405
        %v2505 = vpop.f32.mrb[0].mxu0
        %v2506 = vadd.f32 0.0, %v2505
        %v2507 = vpop.f32.mrb[0].mxu0
        %v2508 = vpop.f32.mrb[0].mxu0
        %v2509 = vadd.f32 0.0, %v2508
        %v2510 = vpop.f32.mrb[0].mxu0
        %2511 = vmatprep.mubr.bf16.mxu0 0
        %2512 = vmatmul.mubr.bf16.gmra.mrb[0].mxu0 %v2408
        %v2513 = vpop.f32.mrb[0].mxu0
        %v2514 = vadd.f32 0.0, %v2513
        %v2515 = vpop.f32.mrb[0].mxu0
        %v2516 = vpop.f32.mrb[0].mxu0
        %v2517 = vadd.f32 0.0, %v2516
        %v2518 = vpop.f32.mrb[0].mxu0
        %2519 = vmatprep.mubr.bf16.mxu0 0
        %2520 = vmatmul.mubr.bf16.gmra.mrb[0].mxu0 %v2411
        %v2521 = vpop.f32.mrb[0].mxu0
        %v2522 = vadd.f32 0.0, %v2521
        %v2523 = vpop.f32.mrb[0].mxu0
        %v2524 = vpop.f32.mrb[0].mxu0
        %v2525 = vadd.f32 0.0, %v2524
        %v2526 = vpop.f32.mrb[0].mxu0
        %2527 = vmatprep.mubr.bf16.mxu0 0
        %2528 = vmatmul.mubr.bf16.gmra.mrb[0].mxu0 %v2414
        %v2529 = vpop.f32.mrb[0].mxu0
        %v2530 = vadd.f32 0.0, %v2529
        %v2531 = vpop.f32.mrb[0].mxu0
        %v2532 = vpop.f32.mrb[0].mxu0
        %v2533 = vadd.f32 0.0, %v2532
        %v2534 = vpop.f32.mrb[0].mxu0
        %2535 = vmatprep.mubr.bf16.mxu0 0
        %2536 = vmatmul.mubr.bf16.gmra.mrb[0].mxu0 %v2417
        %v2537 = vpop.f32.mrb[0].mxu0
        %v2538 = vadd.f32 0.0, %v2537
        %v2539 = vpop.f32.mrb[0].mxu0
        %v2540 = vpop.f32.mrb[0].mxu0
        %v2541 = vadd.f32 0.0, %v2540
        %v2542 = vpop.f32.mrb[0].mxu0
        %2543 = vmatprep.mubr.bf16.mxu0 0
        %2544 = vmatmul.mubr.bf16.gmra.mrb[0].mxu0 %v2420
        %v2545 = vpop.f32.mrb[0].mxu0
        %v2546 = vadd.f32 0.0, %v2545
        %v2547 = vpop.f32.mrb[0].mxu0
        %v2548 = vpop.f32.mrb[0].mxu0
        %v2549 = vadd.f32 0.0, %v2548
        %v2550 = vpop.f32.mrb[0].mxu0
        %2551 = vmatprep.mubr.bf16.mxu0 0
        %2552 = vmatmul.mubr.bf16.gmra.mrb[0].mxu0 %v2423
        %v2553 = vpop.f32.mrb[0].mxu0
        %v2554 = vadd.f32 0.0, %v2553
        %v2555 = vpop.f32.mrb[0].mxu0
        %v2556 = vpop.f32.mrb[0].mxu0
        %v2557 = vadd.f32 0.0, %v2556
        %v2558 = vpop.f32.mrb[0].mxu0
        %2559 = vmatprep.mubr.bf16.mxu0 0
        %2560 = vmatmul.mubr.bf16.gmra.mrb[0].mxu0 %v2426
        %v2561 = vpop.f32.mrb[0].mxu0
        %v2562 = vadd.f32 0.0, %v2561
        %v2563 = vpop.f32.mrb[0].mxu0
        %v2564 = vpop.f32.mrb[0].mxu0
        %v2565 = vadd.f32 0.0, %v2564
        %v2566 = vpop.f32.mrb[0].mxu0
        %2567 = vmatprep.mubr.bf16.mxu0 0
        %2568 = vmatmul.mubr.bf16.gmra.mrb[0].mxu0 %v2429
        %v2569 = vpop.f32.mrb[0].mxu0
        %v2570 = vadd.f32 0.0, %v2569
        %v2571 = vpop.f32.mrb[0].mxu0
        %v2572 = vpop.f32.mrb[0].mxu0
        %v2573 = vadd.f32 0.0, %v2572
        %v2574 = vpop.f32.mrb[0].mxu0
        %2575 = vmatprep.mubr.bf16.mxu0 0
        %2576 = vmatmul.mubr.bf16.gmra.mrb[0].mxu0 %v2432
        %v2577 = vpop.f32.mrb[0].mxu0
        %v2578 = vadd.f32 0.0, %v2577
        %v2579 = vpop.f32.mrb[0].mxu0
        %v2580 = vpop.f32.mrb[0].mxu0
        %v2581 = vadd.f32 0.0, %v2580
        %v2582 = vpop.f32.mrb[0].mxu0
        %2583 = vmatprep.mubr.bf16.mxu0 0
        %2584 = vmatmul.mubr.bf16.gmra.mrb[0].mxu0 %v2435
        %v2585 = vpop.f32.mrb[0].mxu0
        %v2586 = vadd.f32 0.0, %v2585
        %v2587 = vpop.f32.mrb[0].mxu0
        %v2588 = vpop.f32.mrb[0].mxu0
        %v2589 = vadd.f32 0.0, %v2588
        %v2590 = vpop.f32.mrb[0].mxu0
        %2591 = vmatprep.mubr.bf16.mxu0 0
        %2592 = vmatmul.mubr.bf16.gmra.mrb[0].mxu0 %v2438
        %v2593 = vpop.f32.mrb[0].mxu0
        %v2594 = vadd.f32 0.0, %v2593
        %v2595 = vpop.f32.mrb[0].mxu0
        %v2596 = vpop.f32.mrb[0].mxu0
        %v2597 = vadd.f32 0.0, %v2596
        %v2598 = vpop.f32.mrb[0].mxu0
        %2599 = vmatprep.mubr.bf16.mxu0 0
        %2600 = vmatmul.mubr.bf16.gmra.mrb[0].mxu0 %v2441
        %v2601 = vpop.f32.mrb[0].mxu0
        %v2602 = vadd.f32 0.0, %v2601
        %v2603 = vpop.f32.mrb[0].mxu0
        %v2604 = vpop.f32.mrb[0].mxu0
        %v2605 = vadd.f32 0.0, %v2604
        %v2606 = vpop.f32.mrb[0].mxu0
        %2607 = vmatprep.mubr.bf16.mxu0 0
        %2608 = vmatmul.mubr.bf16.gmra.mrb[0].mxu0 %v2444
        %v2609 = vpop.f32.mrb[0].mxu0
        %v2610 = vadd.f32 0.0, %v2609
        %v2611 = vpop.f32.mrb[0].mxu0
        %v2612 = vpop.f32.mrb[0].mxu0
        %v2613 = vadd.f32 0.0, %v2612
        %v2614 = vpop.f32.mrb[0].mxu0
        %2615 = vmatprep.mubr.bf16.mxu0 0
        %2616 = vmatmul.mubr.bf16.gmra.mrb[0].mxu0 %v2447
        %v2617 = vpop.f32.mrb[0].mxu0
        %v2618 = vadd.f32 0.0, %v2617
        %v2619 = vpop.f32.mrb[0].mxu0
        %v2620 = vpop.f32.mrb[0].mxu0
        %v2621 = vadd.f32 0.0, %v2620
        %v2622 = vpop.f32.mrb[0].mxu0
        %2623 = vmatprep.mubr.bf16.mxu0 0
        %2624 = vmatmul.mubr.bf16.gmra.mrb[0].mxu0 %v2450
        %v2625 = vpop.f32.mrb[0].mxu0
        %v2626 = vadd.f32 0.0, %v2625
        %v2627 = vpop.f32.mrb[0].mxu0
        %v2628 = vpop.f32.mrb[0].mxu0
        %v2629 = vadd.f32 0.0, %v2628
        %v2630 = vpop.f32.mrb[0].mxu0
        %2631 = vdwg.mxu0
        %v2632 = vadd.f32 %v2306, %v2490
        %v2633 = vadd.f32 %v2307, %v2493
        %v2634 = vadd.f32 %v2308, %v2498
        %v2635 = vadd.f32 %v2309, %v2501
        %v2636 = vadd.f32 %v2310, %v2506
        %v2637 = vadd.f32 %v2311, %v2509
        %v2638 = vadd.f32 %v2312, %v2514
        %v2639 = vadd.f32 %v2313, %v2517
        %v2640 = vadd.f32 %v2314, %v2522
        %v2641 = vadd.f32 %v2315, %v2525
        %v2642 = vadd.f32 %v2316, %v2530
        %v2643 = vadd.f32 %v2317, %v2533
        %v2644 = vadd.f32 %v2318, %v2538
        %v2645 = vadd.f32 %v2319, %v2541
        %v2646 = vadd.f32 %v2320, %v2546
        %v2647 = vadd.f32 %v2321, %v2549
        %v2648 = vadd.f32 %v2322, %v2554
        %v2649 = vadd.f32 %v2323, %v2557
        %v2650 = vadd.f32 %v2324, %v2562
        %v2651 = vadd.f32 %v2325, %v2565
        %v2652 = vadd.f32 %v2326, %v2570
        %v2653 = vadd.f32 %v2327, %v2573
        %v2654 = vadd.f32 %v2328, %v2578
        %v2655 = vadd.f32 %v2329, %v2581
        %v2656 = vadd.f32 %v2330, %v2586
        %v2657 = vadd.f32 %v2331, %v2589
        %v2658 = vadd.f32 %v2332, %v2594
        %v2659 = vadd.f32 %v2333, %v2597
        %v2660 = vadd.f32 %v2334, %v2602
        %v2661 = vadd.f32 %v2335, %v2605
        %v2662 = vadd.f32 %v2336, %v2610
        %v2663 = vadd.f32 %v2337, %v2613
        %v2664 = vadd.f32 %v2338, %v2618
        %v2665 = vadd.f32 %v2339, %v2621
        %v2666 = vadd.f32 %v2340, %v2626
        %v2667 = vadd.f32 %v2341, %v2629
        %v2668 = vld [vmem:[%s369 + $0x25] sm:$0xff]
        %v2669 = vld [vmem:[%s369 + $0x2d] sm:$0xff]
        %v2670 = vld [vmem:[%s369 + $0x35] sm:$0xff]
        %v2671 = vld [vmem:[%s369 + $0x3d] sm:$0xff]
        %v2672 = vld [vmem:[%s369 + $0x45] sm:$0xff]
        %v2673 = vld [vmem:[%s369 + $0x4d] sm:$0xff]
        %v2674 = vld [vmem:[%s369 + $0x55] sm:$0xff]
        %v2675 = vld [vmem:[%s369 + $0x5d] sm:$0xff]
        %v2676 = vld [vmem:[%s369 + $0x65] sm:$0xff]
        %v2677 = vld [vmem:[%s369 + $0x6d] sm:$0xff]
        %v2678 = vld [vmem:[%s369 + $0x75] sm:$0xff]
        %v2679 = vld [vmem:[%s369 + $0x7d] sm:$0xff]
        %v2680 = vld [vmem:[%s369 + $0x85] sm:$0xff]
        %v2681 = vld [vmem:[%s369 + $0x8d] sm:$0xff]
        %v2682 = vld [vmem:[%s369 + $0x95] sm:$0xff]
        %v2683 = vld [vmem:[%s369 + $0x9d] sm:$0xff]
        %v2684 = vld [vmem:[%s369 + $0xa5] sm:$0xff]
        %v2685 = vld [vmem:[%s369 + $0xad] sm:$0xff]
        %v2686 = vld [vmem:[%s369 + $0xb5] sm:$0xff]
        %v2687 = vld [vmem:[%s369 + $0xbd] sm:$0xff]
        %v2688 = vld [vmem:[%s369 + $0xc5] sm:$0xff]
        %v2689 = vld [vmem:[%s369 + $0xcd] sm:$0xff]
        %v2690 = vld [vmem:[%s369 + $0xd5] sm:$0xff]
        %v2691 = vld [vmem:[%s369 + $0xdd] sm:$0xff]
        %v2692 = vld [vmem:[%s369 + $0xe5] sm:$0xff]
        %v2693 = vld [vmem:[%s369 + $0xed] sm:$0xff]
        %v2694 = vld [vmem:[%s369 + $0xf5] sm:$0xff]
        %v2695 = vld [vmem:[%s369 + $0xfd] sm:$0xff]
        %v2696 = vld [vmem:[%s369 + $0x105] sm:$0xff]
        %v2697 = vld [vmem:[%s369 + $0x10d] sm:$0xff]
        %v2698 = vld [vmem:[%s369 + $0x115] sm:$0xff]
        %v2699 = vld [vmem:[%s369 + $0x11d] sm:$0xff]
        %v2700 = vld [vmem:[%s369 + $0x125] sm:$0xff]
        %v2701 = vld [vmem:[%s369 + $0x12d] sm:$0xff]
        %v2702 = vld [vmem:[%s369 + $0x135] sm:$0xff]
        %v2703 = vld [vmem:[%s369 + $0x13d] sm:$0xff]
        %v2704 = vpack.c.bf16 %v2669, %v2668
        %v2705 = vpack.c.bf16 %v2671, %v2670
        %v2706 = vpack.c.bf16 %v2673, %v2672
        %v2707 = vpack.c.bf16 %v2675, %v2674
        %v2708 = vpack.c.bf16 %v2677, %v2676
        %v2709 = vpack.c.bf16 %v2679, %v2678
        %v2710 = vpack.c.bf16 %v2681, %v2680
        %v2711 = vpack.c.bf16 %v2683, %v2682
        %v2712 = vpack.c.bf16 %v2685, %v2684
        %v2713 = vpack.c.bf16 %v2687, %v2686
        %v2714 = vpack.c.bf16 %v2689, %v2688
        %v2715 = vpack.c.bf16 %v2691, %v2690
        %v2716 = vpack.c.bf16 %v2693, %v2692
        %v2717 = vpack.c.bf16 %v2695, %v2694
        %v2718 = vpack.c.bf16 %v2697, %v2696
        %v2719 = vpack.c.bf16 %v2699, %v2698
        %v2720 = vpack.c.bf16 %v2701, %v2700
        %v2721 = vpack.c.bf16 %v2703, %v2702
        %s2722 = scalar_lea.vmem %s1, 14
        %v2723 = vld [vmem:[%s2722] sm:$0x3]
        %v2725 = vsel %vm568, %v2704, 0
        %v2728 = vsel %vm568, %v2705, 0
        %v2731 = vsel %vm568, %v2706, 0
        %v2734 = vsel %vm568, %v2707, 0
        %v2737 = vsel %vm568, %v2708, 0
        %v2740 = vsel %vm568, %v2709, 0
        %v2743 = vsel %vm568, %v2710, 0
        %v2746 = vsel %vm568, %v2711, 0
        %v2749 = vsel %vm568, %v2712, 0
        %v2752 = vsel %vm568, %v2713, 0
        %v2755 = vsel %vm568, %v2714, 0
        %v2758 = vsel %vm568, %v2715, 0
        %v2761 = vsel %vm568, %v2716, 0
        %v2764 = vsel %vm568, %v2717, 0
        %v2767 = vsel %vm568, %v2718, 0
        %v2770 = vsel %vm568, %v2719, 0
        %v2773 = vsel %vm568, %v2720, 0
        %v2776 = vsel %vm568, %v2721, 0
        %v2779 = vsel %vm623, %v2723, 0
        %2781 = vmatprep.subr.bf16.mxu0 0
        %2782 = vmatpush1.bf16.msra.mxu0 %v2779
        %2783 = vmatprep.subr.bf16.mxu0 0
        %2784 = vmatpush1.bf16.msra.mxu0 0
        %2785 = vmatprep.subr.bf16.mxu0 0
        %2786 = vmatpush1.bf16.msra.mxu0 0
        %2787 = vmatprep.subr.bf16.mxu0 0
        %2788 = vmatpush1.bf16.msra.mxu0 0
        %2789 = vmatprep.subr.bf16.mxu0 0
        %2790 = vmatpush1.bf16.msra.mxu0 0
        %2791 = vmatprep.subr.bf16.mxu0 0
        %2792 = vmatpush1.bf16.msra.mxu0 0
        %2793 = vmatprep.subr.bf16.mxu0 0
        %2794 = vmatpush1.bf16.msra.mxu0 0
        %2795 = vmatprep.subr.bf16.mxu0 0
        %2796 = vmatpush1.bf16.msra.mxu0 0
        %2797 = vmatprep.subr.bf16.mxu0 0
        %2798 = vmatpush1.bf16.msra.mxu0 0
        %2799 = vmatprep.subr.bf16.mxu0 0
        %2800 = vmatpush1.bf16.msra.mxu0 0
        %2801 = vmatprep.subr.bf16.mxu0 0
        %2802 = vmatpush1.bf16.msra.mxu0 0
        %2803 = vmatprep.subr.bf16.mxu0 0
        %2804 = vmatpush1.bf16.msra.mxu0 0
        %2805 = vmatprep.subr.bf16.mxu0 0
        %2806 = vmatpush1.bf16.msra.mxu0 0
        %2807 = vmatprep.subr.bf16.mxu0 0
        %2808 = vmatpush1.bf16.msra.mxu0 0
        %2809 = vmatprep.subr.bf16.mxu0 0
        %2810 = vmatpush1.bf16.msra.mxu0 0
        %2811 = vmatprep.subr.bf16.mxu0 0
        %2812 = vmatpush1.bf16.msra.mxu0 0
        %2813 = vmatprep.mubr.bf16.mxu0 0
        %2814 = vmatmul.mubr.bf16.gmra.mrb[0].mxu0 %v2725
        %v2815 = vpop.f32.mrb[0].mxu0
        %v2816 = vadd.f32 0.0, %v2815
        %v2817 = vpop.f32.mrb[0].mxu0
        %v2818 = vpop.f32.mrb[0].mxu0
        %v2819 = vadd.f32 0.0, %v2818
        %v2820 = vpop.f32.mrb[0].mxu0
        %2821 = vmatprep.mubr.bf16.mxu0 0
        %2822 = vmatmul.mubr.bf16.gmra.mrb[0].mxu0 %v2728
        %v2823 = vpop.f32.mrb[0].mxu0
        %v2824 = vadd.f32 0.0, %v2823
        %v2825 = vpop.f32.mrb[0].mxu0
        %v2826 = vpop.f32.mrb[0].mxu0
        %v2827 = vadd.f32 0.0, %v2826
        %v2828 = vpop.f32.mrb[0].mxu0
        %2829 = vmatprep.mubr.bf16.mxu0 0
        %2830 = vmatmul.mubr.bf16.gmra.mrb[0].mxu0 %v2731
        %v2831 = vpop.f32.mrb[0].mxu0
        %v2832 = vadd.f32 0.0, %v2831
        %v2833 = vpop.f32.mrb[0].mxu0
        %v2834 = vpop.f32.mrb[0].mxu0
        %v2835 = vadd.f32 0.0, %v2834
        %v2836 = vpop.f32.mrb[0].mxu0
        %2837 = vmatprep.mubr.bf16.mxu0 0
        %2838 = vmatmul.mubr.bf16.gmra.mrb[0].mxu0 %v2734
        %v2839 = vpop.f32.mrb[0].mxu0
        %v2840 = vadd.f32 0.0, %v2839
        %v2841 = vpop.f32.mrb[0].mxu0
        %v2842 = vpop.f32.mrb[0].mxu0
        %v2843 = vadd.f32 0.0, %v2842
        %v2844 = vpop.f32.mrb[0].mxu0
        %2845 = vmatprep.mubr.bf16.mxu0 0
        %2846 = vmatmul.mubr.bf16.gmra.mrb[0].mxu0 %v2737
        %v2847 = vpop.f32.mrb[0].mxu0
        %v2848 = vadd.f32 0.0, %v2847
        %v2849 = vpop.f32.mrb[0].mxu0
        %v2850 = vpop.f32.mrb[0].mxu0
        %v2851 = vadd.f32 0.0, %v2850
        %v2852 = vpop.f32.mrb[0].mxu0
        %2853 = vmatprep.mubr.bf16.mxu0 0
        %2854 = vmatmul.mubr.bf16.gmra.mrb[0].mxu0 %v2740
        %v2855 = vpop.f32.mrb[0].mxu0
        %v2856 = vadd.f32 0.0, %v2855
        %v2857 = vpop.f32.mrb[0].mxu0
        %v2858 = vpop.f32.mrb[0].mxu0
        %v2859 = vadd.f32 0.0, %v2858
        %v2860 = vpop.f32.mrb[0].mxu0
        %2861 = vmatprep.mubr.bf16.mxu0 0
        %2862 = vmatmul.mubr.bf16.gmra.mrb[0].mxu0 %v2743
        %v2863 = vpop.f32.mrb[0].mxu0
        %v2864 = vadd.f32 0.0, %v2863
        %v2865 = vpop.f32.mrb[0].mxu0
        %v2866 = vpop.f32.mrb[0].mxu0
        %v2867 = vadd.f32 0.0, %v2866
        %v2868 = vpop.f32.mrb[0].mxu0
        %2869 = vmatprep.mubr.bf16.mxu0 0
        %2870 = vmatmul.mubr.bf16.gmra.mrb[0].mxu0 %v2746
        %v2871 = vpop.f32.mrb[0].mxu0
        %v2872 = vadd.f32 0.0, %v2871
        %v2873 = vpop.f32.mrb[0].mxu0
        %v2874 = vpop.f32.mrb[0].mxu0
        %v2875 = vadd.f32 0.0, %v2874
        %v2876 = vpop.f32.mrb[0].mxu0
        %2877 = vmatprep.mubr.bf16.mxu0 0
        %2878 = vmatmul.mubr.bf16.gmra.mrb[0].mxu0 %v2749
        %v2879 = vpop.f32.mrb[0].mxu0
        %v2880 = vadd.f32 0.0, %v2879
        %v2881 = vpop.f32.mrb[0].mxu0
        %v2882 = vpop.f32.mrb[0].mxu0
        %v2883 = vadd.f32 0.0, %v2882
        %v2884 = vpop.f32.mrb[0].mxu0
        %2885 = vmatprep.mubr.bf16.mxu0 0
        %2886 = vmatmul.mubr.bf16.gmra.mrb[0].mxu0 %v2752
        %v2887 = vpop.f32.mrb[0].mxu0
        %v2888 = vadd.f32 0.0, %v2887
        %v2889 = vpop.f32.mrb[0].mxu0
        %v2890 = vpop.f32.mrb[0].mxu0
        %v2891 = vadd.f32 0.0, %v2890
        %v2892 = vpop.f32.mrb[0].mxu0
        %2893 = vmatprep.mubr.bf16.mxu0 0
        %2894 = vmatmul.mubr.bf16.gmra.mrb[0].mxu0 %v2755
        %v2895 = vpop.f32.mrb[0].mxu0
        %v2896 = vadd.f32 0.0, %v2895
        %v2897 = vpop.f32.mrb[0].mxu0
        %v2898 = vpop.f32.mrb[0].mxu0
        %v2899 = vadd.f32 0.0, %v2898
        %v2900 = vpop.f32.mrb[0].mxu0
        %2901 = vmatprep.mubr.bf16.mxu0 0
        %2902 = vmatmul.mubr.bf16.gmra.mrb[0].mxu0 %v2758
        %v2903 = vpop.f32.mrb[0].mxu0
        %v2904 = vadd.f32 0.0, %v2903
        %v2905 = vpop.f32.mrb[0].mxu0
        %v2906 = vpop.f32.mrb[0].mxu0
        %v2907 = vadd.f32 0.0, %v2906
        %v2908 = vpop.f32.mrb[0].mxu0
        %2909 = vmatprep.mubr.bf16.mxu0 0
        %2910 = vmatmul.mubr.bf16.gmra.mrb[0].mxu0 %v2761
        %v2911 = vpop.f32.mrb[0].mxu0
        %v2912 = vadd.f32 0.0, %v2911
        %v2913 = vpop.f32.mrb[0].mxu0
        %v2914 = vpop.f32.mrb[0].mxu0
        %v2915 = vadd.f32 0.0, %v2914
        %v2916 = vpop.f32.mrb[0].mxu0
        %2917 = vmatprep.mubr.bf16.mxu0 0
        %2918 = vmatmul.mubr.bf16.gmra.mrb[0].mxu0 %v2764
        %v2919 = vpop.f32.mrb[0].mxu0
        %v2920 = vadd.f32 0.0, %v2919
        %v2921 = vpop.f32.mrb[0].mxu0
        %v2922 = vpop.f32.mrb[0].mxu0
        %v2923 = vadd.f32 0.0, %v2922
        %v2924 = vpop.f32.mrb[0].mxu0
        %2925 = vmatprep.mubr.bf16.mxu0 0
        %2926 = vmatmul.mubr.bf16.gmra.mrb[0].mxu0 %v2767
        %v2927 = vpop.f32.mrb[0].mxu0
        %v2928 = vadd.f32 0.0, %v2927
        %v2929 = vpop.f32.mrb[0].mxu0
        %v2930 = vpop.f32.mrb[0].mxu0
        %v2931 = vadd.f32 0.0, %v2930
        %v2932 = vpop.f32.mrb[0].mxu0
        %2933 = vmatprep.mubr.bf16.mxu0 0
        %2934 = vmatmul.mubr.bf16.gmra.mrb[0].mxu0 %v2770
        %v2935 = vpop.f32.mrb[0].mxu0
        %v2936 = vadd.f32 0.0, %v2935
        %v2937 = vpop.f32.mrb[0].mxu0
        %v2938 = vpop.f32.mrb[0].mxu0
        %v2939 = vadd.f32 0.0, %v2938
        %v2940 = vpop.f32.mrb[0].mxu0
        %2941 = vmatprep.mubr.bf16.mxu0 0
        %2942 = vmatmul.mubr.bf16.gmra.mrb[0].mxu0 %v2773
        %v2943 = vpop.f32.mrb[0].mxu0
        %v2944 = vadd.f32 0.0, %v2943
        %v2945 = vpop.f32.mrb[0].mxu0
        %v2946 = vpop.f32.mrb[0].mxu0
        %v2947 = vadd.f32 0.0, %v2946
        %v2948 = vpop.f32.mrb[0].mxu0
        %2949 = vmatprep.mubr.bf16.mxu0 0
        %2950 = vmatmul.mubr.bf16.gmra.mrb[0].mxu0 %v2776
        %v2951 = vpop.f32.mrb[0].mxu0
        %v2952 = vadd.f32 0.0, %v2951
        %v2953 = vpop.f32.mrb[0].mxu0
        %v2954 = vpop.f32.mrb[0].mxu0
        %v2955 = vadd.f32 0.0, %v2954
        %v2956 = vpop.f32.mrb[0].mxu0
        %2957 = vdwg.mxu0
        %v2958 = vadd.f32 %v2632, %v2816
        %v2959 = vadd.f32 %v2633, %v2819
        %v2960 = vadd.f32 %v2634, %v2824
        %v2961 = vadd.f32 %v2635, %v2827
        %v2962 = vadd.f32 %v2636, %v2832
        %v2963 = vadd.f32 %v2637, %v2835
        %v2964 = vadd.f32 %v2638, %v2840
        %v2965 = vadd.f32 %v2639, %v2843
        %v2966 = vadd.f32 %v2640, %v2848
        %v2967 = vadd.f32 %v2641, %v2851
        %v2968 = vadd.f32 %v2642, %v2856
        %v2969 = vadd.f32 %v2643, %v2859
        %v2970 = vadd.f32 %v2644, %v2864
        %v2971 = vadd.f32 %v2645, %v2867
        %v2972 = vadd.f32 %v2646, %v2872
        %v2973 = vadd.f32 %v2647, %v2875
        %v2974 = vadd.f32 %v2648, %v2880
        %v2975 = vadd.f32 %v2649, %v2883
        %v2976 = vadd.f32 %v2650, %v2888
        %v2977 = vadd.f32 %v2651, %v2891
        %v2978 = vadd.f32 %v2652, %v2896
        %v2979 = vadd.f32 %v2653, %v2899
        %v2980 = vadd.f32 %v2654, %v2904
        %v2981 = vadd.f32 %v2655, %v2907
        %v2982 = vadd.f32 %v2656, %v2912
        %v2983 = vadd.f32 %v2657, %v2915
        %v2984 = vadd.f32 %v2658, %v2920
        %v2985 = vadd.f32 %v2659, %v2923
        %v2986 = vadd.f32 %v2660, %v2928
        %v2987 = vadd.f32 %v2661, %v2931
        %v2988 = vadd.f32 %v2662, %v2936
        %v2989 = vadd.f32 %v2663, %v2939
        %v2990 = vadd.f32 %v2664, %v2944
        %v2991 = vadd.f32 %v2665, %v2947
        %v2992 = vadd.f32 %v2666, %v2952
        %v2993 = vadd.f32 %v2667, %v2955
        %v2994 = vld [vmem:[%s369 + $0x26] sm:$0xff]
        %v2995 = vld [vmem:[%s369 + $0x2e] sm:$0xff]
        %v2996 = vld [vmem:[%s369 + $0x36] sm:$0xff]
        %v2997 = vld [vmem:[%s369 + $0x3e] sm:$0xff]
        %v2998 = vld [vmem:[%s369 + $0x46] sm:$0xff]
        %v2999 = vld [vmem:[%s369 + $0x4e] sm:$0xff]
        %v3000 = vld [vmem:[%s369 + $0x56] sm:$0xff]
        %v3001 = vld [vmem:[%s369 + $0x5e] sm:$0xff]
        %v3002 = vld [vmem:[%s369 + $0x66] sm:$0xff]
        %v3003 = vld [vmem:[%s369 + $0x6e] sm:$0xff]
        %v3004 = vld [vmem:[%s369 + $0x76] sm:$0xff]
        %v3005 = vld [vmem:[%s369 + $0x7e] sm:$0xff]
        %v3006 = vld [vmem:[%s369 + $0x86] sm:$0xff]
        %v3007 = vld [vmem:[%s369 + $0x8e] sm:$0xff]
        %v3008 = vld [vmem:[%s369 + $0x96] sm:$0xff]
        %v3009 = vld [vmem:[%s369 + $0x9e] sm:$0xff]
        %v3010 = vld [vmem:[%s369 + $0xa6] sm:$0xff]
        %v3011 = vld [vmem:[%s369 + $0xae] sm:$0xff]
        %v3012 = vld [vmem:[%s369 + $0xb6] sm:$0xff]
        %v3013 = vld [vmem:[%s369 + $0xbe] sm:$0xff]
        %v3014 = vld [vmem:[%s369 + $0xc6] sm:$0xff]
        %v3015 = vld [vmem:[%s369 + $0xce] sm:$0xff]
        %v3016 = vld [vmem:[%s369 + $0xd6] sm:$0xff]
        %v3017 = vld [vmem:[%s369 + $0xde] sm:$0xff]
        %v3018 = vld [vmem:[%s369 + $0xe6] sm:$0xff]
        %v3019 = vld [vmem:[%s369 + $0xee] sm:$0xff]
        %v3020 = vld [vmem:[%s369 + $0xf6] sm:$0xff]
        %v3021 = vld [vmem:[%s369 + $0xfe] sm:$0xff]
        %v3022 = vld [vmem:[%s369 + $0x106] sm:$0xff]
        %v3023 = vld [vmem:[%s369 + $0x10e] sm:$0xff]
        %v3024 = vld [vmem:[%s369 + $0x116] sm:$0xff]
        %v3025 = vld [vmem:[%s369 + $0x11e] sm:$0xff]
        %v3026 = vld [vmem:[%s369 + $0x126] sm:$0xff]
        %v3027 = vld [vmem:[%s369 + $0x12e] sm:$0xff]
        %v3028 = vld [vmem:[%s369 + $0x136] sm:$0xff]
        %v3029 = vld [vmem:[%s369 + $0x13e] sm:$0xff]
        %v3030 = vpack.c.bf16 %v2995, %v2994
        %v3031 = vpack.c.bf16 %v2997, %v2996
        %v3032 = vpack.c.bf16 %v2999, %v2998
        %v3033 = vpack.c.bf16 %v3001, %v3000
        %v3034 = vpack.c.bf16 %v3003, %v3002
        %v3035 = vpack.c.bf16 %v3005, %v3004
        %v3036 = vpack.c.bf16 %v3007, %v3006
        %v3037 = vpack.c.bf16 %v3009, %v3008
        %v3038 = vpack.c.bf16 %v3011, %v3010
        %v3039 = vpack.c.bf16 %v3013, %v3012
        %v3040 = vpack.c.bf16 %v3015, %v3014
        %v3041 = vpack.c.bf16 %v3017, %v3016
        %v3042 = vpack.c.bf16 %v3019, %v3018
        %v3043 = vpack.c.bf16 %v3021, %v3020
        %v3044 = vpack.c.bf16 %v3023, %v3022
        %v3045 = vpack.c.bf16 %v3025, %v3024
        %v3046 = vpack.c.bf16 %v3027, %v3026
        %v3047 = vpack.c.bf16 %v3029, %v3028
        %s3048 = scalar_lea.vmem %s1, 16
        %v3049 = vld [vmem:[%s3048] sm:$0x3]
        %v3051 = vsel %vm568, %v3030, 0
        %v3054 = vsel %vm568, %v3031, 0
        %v3057 = vsel %vm568, %v3032, 0
        %v3060 = vsel %vm568, %v3033, 0
        %v3063 = vsel %vm568, %v3034, 0
        %v3066 = vsel %vm568, %v3035, 0
        %v3069 = vsel %vm568, %v3036, 0
        %v3072 = vsel %vm568, %v3037, 0
        %v3075 = vsel %vm568, %v3038, 0
        %v3078 = vsel %vm568, %v3039, 0
        %v3081 = vsel %vm568, %v3040, 0
        %v3084 = vsel %vm568, %v3041, 0
        %v3087 = vsel %vm568, %v3042, 0
        %v3090 = vsel %vm568, %v3043, 0
        %v3093 = vsel %vm568, %v3044, 0
        %v3096 = vsel %vm568, %v3045, 0
        %v3099 = vsel %vm568, %v3046, 0
        %v3102 = vsel %vm568, %v3047, 0
        %v3105 = vsel %vm623, %v3049, 0
        %3107 = vmatprep.subr.bf16.mxu0 0
        %3108 = vmatpush1.bf16.msra.mxu0 %v3105
        %3109 = vmatprep.subr.bf16.mxu0 0
        %3110 = vmatpush1.bf16.msra.mxu0 0
        %3111 = vmatprep.subr.bf16.mxu0 0
        %3112 = vmatpush1.bf16.msra.mxu0 0
        %3113 = vmatprep.subr.bf16.mxu0 0
        %3114 = vmatpush1.bf16.msra.mxu0 0
        %3115 = vmatprep.subr.bf16.mxu0 0
        %3116 = vmatpush1.bf16.msra.mxu0 0
        %3117 = vmatprep.subr.bf16.mxu0 0
        %3118 = vmatpush1.bf16.msra.mxu0 0
        %3119 = vmatprep.subr.bf16.mxu0 0
        %3120 = vmatpush1.bf16.msra.mxu0 0
        %3121 = vmatprep.subr.bf16.mxu0 0
        %3122 = vmatpush1.bf16.msra.mxu0 0
        %3123 = vmatprep.subr.bf16.mxu0 0
        %3124 = vmatpush1.bf16.msra.mxu0 0
        %3125 = vmatprep.subr.bf16.mxu0 0
        %3126 = vmatpush1.bf16.msra.mxu0 0
        %3127 = vmatprep.subr.bf16.mxu0 0
        %3128 = vmatpush1.bf16.msra.mxu0 0
        %3129 = vmatprep.subr.bf16.mxu0 0
        %3130 = vmatpush1.bf16.msra.mxu0 0
        %3131 = vmatprep.subr.bf16.mxu0 0
        %3132 = vmatpush1.bf16.msra.mxu0 0
        %3133 = vmatprep.subr.bf16.mxu0 0
        %3134 = vmatpush1.bf16.msra.mxu0 0
        %3135 = vmatprep.subr.bf16.mxu0 0
        %3136 = vmatpush1.bf16.msra.mxu0 0
        %3137 = vmatprep.subr.bf16.mxu0 0
        %3138 = vmatpush1.bf16.msra.mxu0 0
        %3139 = vmatprep.mubr.bf16.mxu0 0
        %3140 = vmatmul.mubr.bf16.gmra.mrb[0].mxu0 %v3051
        %v3141 = vpop.f32.mrb[0].mxu0
        %v3142 = vadd.f32 0.0, %v3141
        %v3143 = vpop.f32.mrb[0].mxu0
        %v3144 = vpop.f32.mrb[0].mxu0
        %v3145 = vadd.f32 0.0, %v3144
        %v3146 = vpop.f32.mrb[0].mxu0
        %3147 = vmatprep.mubr.bf16.mxu0 0
        %3148 = vmatmul.mubr.bf16.gmra.mrb[0].mxu0 %v3054
        %v3149 = vpop.f32.mrb[0].mxu0
        %v3150 = vadd.f32 0.0, %v3149
        %v3151 = vpop.f32.mrb[0].mxu0
        %v3152 = vpop.f32.mrb[0].mxu0
        %v3153 = vadd.f32 0.0, %v3152
        %v3154 = vpop.f32.mrb[0].mxu0
        %3155 = vmatprep.mubr.bf16.mxu0 0
        %3156 = vmatmul.mubr.bf16.gmra.mrb[0].mxu0 %v3057
        %v3157 = vpop.f32.mrb[0].mxu0
        %v3158 = vadd.f32 0.0, %v3157
        %v3159 = vpop.f32.mrb[0].mxu0
        %v3160 = vpop.f32.mrb[0].mxu0
        %v3161 = vadd.f32 0.0, %v3160
        %v3162 = vpop.f32.mrb[0].mxu0
        %3163 = vmatprep.mubr.bf16.mxu0 0
        %3164 = vmatmul.mubr.bf16.gmra.mrb[0].mxu0 %v3060
        %v3165 = vpop.f32.mrb[0].mxu0
        %v3166 = vadd.f32 0.0, %v3165
        %v3167 = vpop.f32.mrb[0].mxu0
        %v3168 = vpop.f32.mrb[0].mxu0
        %v3169 = vadd.f32 0.0, %v3168
        %v3170 = vpop.f32.mrb[0].mxu0
        %3171 = vmatprep.mubr.bf16.mxu0 0
        %3172 = vmatmul.mubr.bf16.gmra.mrb[0].mxu0 %v3063
        %v3173 = vpop.f32.mrb[0].mxu0
        %v3174 = vadd.f32 0.0, %v3173
        %v3175 = vpop.f32.mrb[0].mxu0
        %v3176 = vpop.f32.mrb[0].mxu0
        %v3177 = vadd.f32 0.0, %v3176
        %v3178 = vpop.f32.mrb[0].mxu0
        %3179 = vmatprep.mubr.bf16.mxu0 0
        %3180 = vmatmul.mubr.bf16.gmra.mrb[0].mxu0 %v3066
        %v3181 = vpop.f32.mrb[0].mxu0
        %v3182 = vadd.f32 0.0, %v3181
        %v3183 = vpop.f32.mrb[0].mxu0
        %v3184 = vpop.f32.mrb[0].mxu0
        %v3185 = vadd.f32 0.0, %v3184
        %v3186 = vpop.f32.mrb[0].mxu0
        %3187 = vmatprep.mubr.bf16.mxu0 0
        %3188 = vmatmul.mubr.bf16.gmra.mrb[0].mxu0 %v3069
        %v3189 = vpop.f32.mrb[0].mxu0
        %v3190 = vadd.f32 0.0, %v3189
        %v3191 = vpop.f32.mrb[0].mxu0
        %v3192 = vpop.f32.mrb[0].mxu0
        %v3193 = vadd.f32 0.0, %v3192
        %v3194 = vpop.f32.mrb[0].mxu0
        %3195 = vmatprep.mubr.bf16.mxu0 0
        %3196 = vmatmul.mubr.bf16.gmra.mrb[0].mxu0 %v3072
        %v3197 = vpop.f32.mrb[0].mxu0
        %v3198 = vadd.f32 0.0, %v3197
        %v3199 = vpop.f32.mrb[0].mxu0
        %v3200 = vpop.f32.mrb[0].mxu0
        %v3201 = vadd.f32 0.0, %v3200
        %v3202 = vpop.f32.mrb[0].mxu0
        %3203 = vmatprep.mubr.bf16.mxu0 0
        %3204 = vmatmul.mubr.bf16.gmra.mrb[0].mxu0 %v3075
        %v3205 = vpop.f32.mrb[0].mxu0
        %v3206 = vadd.f32 0.0, %v3205
        %v3207 = vpop.f32.mrb[0].mxu0
        %v3208 = vpop.f32.mrb[0].mxu0
        %v3209 = vadd.f32 0.0, %v3208
        %v3210 = vpop.f32.mrb[0].mxu0
        %3211 = vmatprep.mubr.bf16.mxu0 0
        %3212 = vmatmul.mubr.bf16.gmra.mrb[0].mxu0 %v3078
        %v3213 = vpop.f32.mrb[0].mxu0
        %v3214 = vadd.f32 0.0, %v3213
        %v3215 = vpop.f32.mrb[0].mxu0
        %v3216 = vpop.f32.mrb[0].mxu0
        %v3217 = vadd.f32 0.0, %v3216
        %v3218 = vpop.f32.mrb[0].mxu0
        %3219 = vmatprep.mubr.bf16.mxu0 0
        %3220 = vmatmul.mubr.bf16.gmra.mrb[0].mxu0 %v3081
        %v3221 = vpop.f32.mrb[0].mxu0
        %v3222 = vadd.f32 0.0, %v3221
        %v3223 = vpop.f32.mrb[0].mxu0
        %v3224 = vpop.f32.mrb[0].mxu0
        %v3225 = vadd.f32 0.0, %v3224
        %v3226 = vpop.f32.mrb[0].mxu0
        %3227 = vmatprep.mubr.bf16.mxu0 0
        %3228 = vmatmul.mubr.bf16.gmra.mrb[0].mxu0 %v3084
        %v3229 = vpop.f32.mrb[0].mxu0
        %v3230 = vadd.f32 0.0, %v3229
        %v3231 = vpop.f32.mrb[0].mxu0
        %v3232 = vpop.f32.mrb[0].mxu0
        %v3233 = vadd.f32 0.0, %v3232
        %v3234 = vpop.f32.mrb[0].mxu0
        %3235 = vmatprep.mubr.bf16.mxu0 0
        %3236 = vmatmul.mubr.bf16.gmra.mrb[0].mxu0 %v3087
        %v3237 = vpop.f32.mrb[0].mxu0
        %v3238 = vadd.f32 0.0, %v3237
        %v3239 = vpop.f32.mrb[0].mxu0
        %v3240 = vpop.f32.mrb[0].mxu0
        %v3241 = vadd.f32 0.0, %v3240
        %v3242 = vpop.f32.mrb[0].mxu0
        %3243 = vmatprep.mubr.bf16.mxu0 0
        %3244 = vmatmul.mubr.bf16.gmra.mrb[0].mxu0 %v3090
        %v3245 = vpop.f32.mrb[0].mxu0
        %v3246 = vadd.f32 0.0, %v3245
        %v3247 = vpop.f32.mrb[0].mxu0
        %v3248 = vpop.f32.mrb[0].mxu0
        %v3249 = vadd.f32 0.0, %v3248
        %v3250 = vpop.f32.mrb[0].mxu0
        %3251 = vmatprep.mubr.bf16.mxu0 0
        %3252 = vmatmul.mubr.bf16.gmra.mrb[0].mxu0 %v3093
        %v3253 = vpop.f32.mrb[0].mxu0
        %v3254 = vadd.f32 0.0, %v3253
        %v3255 = vpop.f32.mrb[0].mxu0
        %v3256 = vpop.f32.mrb[0].mxu0
        %v3257 = vadd.f32 0.0, %v3256
        %v3258 = vpop.f32.mrb[0].mxu0
        %3259 = vmatprep.mubr.bf16.mxu0 0
        %3260 = vmatmul.mubr.bf16.gmra.mrb[0].mxu0 %v3096
        %v3261 = vpop.f32.mrb[0].mxu0
        %v3262 = vadd.f32 0.0, %v3261
        %v3263 = vpop.f32.mrb[0].mxu0
        %v3264 = vpop.f32.mrb[0].mxu0
        %v3265 = vadd.f32 0.0, %v3264
        %v3266 = vpop.f32.mrb[0].mxu0
        %3267 = vmatprep.mubr.bf16.mxu0 0
        %3268 = vmatmul.mubr.bf16.gmra.mrb[0].mxu0 %v3099
        %v3269 = vpop.f32.mrb[0].mxu0
        %v3270 = vadd.f32 0.0, %v3269
        %v3271 = vpop.f32.mrb[0].mxu0
        %v3272 = vpop.f32.mrb[0].mxu0
        %v3273 = vadd.f32 0.0, %v3272
        %v3274 = vpop.f32.mrb[0].mxu0
        %3275 = vmatprep.mubr.bf16.mxu0 0
        %3276 = vmatmul.mubr.bf16.gmra.mrb[0].mxu0 %v3102
        %v3277 = vpop.f32.mrb[0].mxu0
        %v3278 = vadd.f32 0.0, %v3277
        %v3279 = vpop.f32.mrb[0].mxu0
        %v3280 = vpop.f32.mrb[0].mxu0
        %v3281 = vadd.f32 0.0, %v3280
        %v3282 = vpop.f32.mrb[0].mxu0
        %3283 = vdwg.mxu0
        %v3284 = vadd.f32 %v2958, %v3142
        %v3285 = vadd.f32 %v2959, %v3145
        %v3286 = vadd.f32 %v2960, %v3150
        %v3287 = vadd.f32 %v2961, %v3153
        %v3288 = vadd.f32 %v2962, %v3158
        %v3289 = vadd.f32 %v2963, %v3161
        %v3290 = vadd.f32 %v2964, %v3166
        %v3291 = vadd.f32 %v2965, %v3169
        %v3292 = vadd.f32 %v2966, %v3174
        %v3293 = vadd.f32 %v2967, %v3177
        %v3294 = vadd.f32 %v2968, %v3182
        %v3295 = vadd.f32 %v2969, %v3185
        %v3296 = vadd.f32 %v2970, %v3190
        %v3297 = vadd.f32 %v2971, %v3193
        %v3298 = vadd.f32 %v2972, %v3198
        %v3299 = vadd.f32 %v2973, %v3201
        %v3300 = vadd.f32 %v2974, %v3206
        %v3301 = vadd.f32 %v2975, %v3209
        %v3302 = vadd.f32 %v2976, %v3214
        %v3303 = vadd.f32 %v2977, %v3217
        %v3304 = vadd.f32 %v2978, %v3222
        %v3305 = vadd.f32 %v2979, %v3225
        %v3306 = vadd.f32 %v2980, %v3230
        %v3307 = vadd.f32 %v2981, %v3233
        %v3308 = vadd.f32 %v2982, %v3238
        %v3309 = vadd.f32 %v2983, %v3241
        %v3310 = vadd.f32 %v2984, %v3246
        %v3311 = vadd.f32 %v2985, %v3249
        %v3312 = vadd.f32 %v2986, %v3254
        %v3313 = vadd.f32 %v2987, %v3257
        %v3314 = vadd.f32 %v2988, %v3262
        %v3315 = vadd.f32 %v2989, %v3265
        %v3316 = vadd.f32 %v2990, %v3270
        %v3317 = vadd.f32 %v2991, %v3273
        %v3318 = vadd.f32 %v2992, %v3278
        %v3319 = vadd.f32 %v2993, %v3281
        %v3320 = vld [vmem:[%s2] sm:$0x1]
        %v3322 = vlaneseq
        %v3323 = vshrl.u32 %v3322, 7
        %v3324 = vsub.s32 0, %v3323
        %v3325 = vrot.slane %v3320, %v3324
        %v3327 = vadd.f32 %v3284, %v3325
        %v3328 = vadd.f32 %v3285, %v3325
        %v3329 = vadd.f32 %v3286, %v3325
        %v3330 = vadd.f32 %v3287, %v3325
        %v3331 = vadd.f32 %v3288, %v3325
        %v3332 = vadd.f32 %v3289, %v3325
        %v3333 = vadd.f32 %v3290, %v3325
        %v3334 = vadd.f32 %v3291, %v3325
        %v3335 = vadd.f32 %v3292, %v3325
        %v3336 = vadd.f32 %v3293, %v3325
        %v3337 = vadd.f32 %v3294, %v3325
        %v3338 = vadd.f32 %v3295, %v3325
        %v3339 = vadd.f32 %v3296, %v3325
        %v3340 = vadd.f32 %v3297, %v3325
        %v3341 = vadd.f32 %v3298, %v3325
        %v3342 = vadd.f32 %v3299, %v3325
        %v3343 = vadd.f32 %v3300, %v3325
        %v3344 = vadd.f32 %v3301, %v3325
        %v3345 = vadd.f32 %v3302, %v3325
        %v3346 = vadd.f32 %v3303, %v3325
        %v3347 = vadd.f32 %v3304, %v3325
        %v3348 = vadd.f32 %v3305, %v3325
        %v3349 = vadd.f32 %v3306, %v3325
        %v3350 = vadd.f32 %v3307, %v3325
        %v3351 = vadd.f32 %v3308, %v3325
        %v3352 = vadd.f32 %v3309, %v3325
        %v3353 = vadd.f32 %v3310, %v3325
        %v3354 = vadd.f32 %v3311, %v3325
        %v3355 = vadd.f32 %v3312, %v3325
        %v3356 = vadd.f32 %v3313, %v3325
        %v3357 = vadd.f32 %v3314, %v3325
        %v3358 = vadd.f32 %v3315, %v3325
        %v3359 = vadd.f32 %v3316, %v3325
        %v3360 = vadd.f32 %v3317, %v3325
        %v3361 = vadd.f32 %v3318, %v3325
        %v3362 = vadd.f32 %v3319, %v3325
        %v3363 = vmax.f32 %v3327, 0.0
        %v3364 = vmax.f32 %v3328, 0.0
        %v3365 = vmax.f32 %v3329, 0.0
        %v3366 = vmax.f32 %v3330, 0.0
        %v3367 = vmax.f32 %v3331, 0.0
        %v3368 = vmax.f32 %v3332, 0.0
        %v3369 = vmax.f32 %v3333, 0.0
        %v3370 = vmax.f32 %v3334, 0.0
        %v3371 = vmax.f32 %v3335, 0.0
        %v3372 = vmax.f32 %v3336, 0.0
        %v3373 = vmax.f32 %v3337, 0.0
        %v3374 = vmax.f32 %v3338, 0.0
        %v3375 = vmax.f32 %v3339, 0.0
        %v3376 = vmax.f32 %v3340, 0.0
        %v3377 = vmax.f32 %v3341, 0.0
        %v3378 = vmax.f32 %v3342, 0.0
        %v3379 = vmax.f32 %v3343, 0.0
        %v3380 = vmax.f32 %v3344, 0.0
        %v3381 = vmax.f32 %v3345, 0.0
        %v3382 = vmax.f32 %v3346, 0.0
        %v3383 = vmax.f32 %v3347, 0.0
        %v3384 = vmax.f32 %v3348, 0.0
        %v3385 = vmax.f32 %v3349, 0.0
        %v3386 = vmax.f32 %v3350, 0.0
        %v3387 = vmax.f32 %v3351, 0.0
        %v3388 = vmax.f32 %v3352, 0.0
        %v3389 = vmax.f32 %v3353, 0.0
        %v3390 = vmax.f32 %v3354, 0.0
        %v3391 = vmax.f32 %v3355, 0.0
        %v3392 = vmax.f32 %v3356, 0.0
        %v3393 = vmax.f32 %v3357, 0.0
        %v3394 = vmax.f32 %v3358, 0.0
        %v3395 = vmax.f32 %v3359, 0.0
        %v3396 = vmax.f32 %v3360, 0.0
        %v3397 = vmax.f32 %v3361, 0.0
        %v3398 = vmax.f32 %v3362, 0.0
        %3400 = vset.pattern.permute.xlu0 0
        %3401 = vperm.xlu0 %3400, %v421
        %v3402 = vpop.permute.xlu0 %3401
        %3405 = vset.pattern.permute.xlu0 0
        %3406 = vperm.xlu0 %3405, %v422
        %v3407 = vpop.permute.xlu0 %3406
        %3410 = vset.pattern.permute.xlu0 0
        %3411 = vperm.xlu0 %3410, %v423
        %v3412 = vpop.permute.xlu0 %3411
        %3415 = vset.pattern.permute.xlu0 0
        %3416 = vperm.xlu0 %3415, %v424
        %v3417 = vpop.permute.xlu0 %3416
        %3420 = vset.pattern.permute.xlu0 0
        %3421 = vperm.xlu0 %3420, %v425
        %v3422 = vpop.permute.xlu0 %3421
        %3425 = vset.pattern.permute.xlu0 0
        %3426 = vperm.xlu0 %3425, %v426
        %v3427 = vpop.permute.xlu0 %3426
        %3430 = vset.pattern.permute.xlu0 0
        %3431 = vperm.xlu0 %3430, %v427
        %v3432 = vpop.permute.xlu0 %3431
        %3435 = vset.pattern.permute.xlu0 0
        %3436 = vperm.xlu0 %3435, %v428
        %v3437 = vpop.permute.xlu0 %3436
        %3440 = vset.pattern.permute.xlu0 0
        %3441 = vperm.xlu0 %3440, %v429
        %v3442 = vpop.permute.xlu0 %3441
        %3445 = vset.pattern.permute.xlu0 0
        %3446 = vperm.xlu0 %3445, %v430
        %v3447 = vpop.permute.xlu0 %3446
        %3450 = vset.pattern.permute.xlu0 0
        %3451 = vperm.xlu0 %3450, %v431
        %v3452 = vpop.permute.xlu0 %3451
        %3455 = vset.pattern.permute.xlu0 0
        %3456 = vperm.xlu0 %3455, %v432
        %v3457 = vpop.permute.xlu0 %3456
        %3460 = vset.pattern.permute.xlu0 0
        %3461 = vperm.xlu0 %3460, %v433
        %v3462 = vpop.permute.xlu0 %3461
        %3465 = vset.pattern.permute.xlu0 0
        %3466 = vperm.xlu0 %3465, %v434
        %v3467 = vpop.permute.xlu0 %3466
        %3470 = vset.pattern.permute.xlu0 0
        %3471 = vperm.xlu0 %3470, %v435
        %v3472 = vpop.permute.xlu0 %3471
        %3475 = vset.pattern.permute.xlu0 0
        %3476 = vperm.xlu0 %3475, %v436
        %v3477 = vpop.permute.xlu0 %3476
        %3480 = vset.pattern.permute.xlu0 0
        %3481 = vperm.xlu0 %3480, %v437
        %v3482 = vpop.permute.xlu0 %3481
        %3485 = vset.pattern.permute.xlu0 0
        %3486 = vperm.xlu0 %3485, %v438
        %v3487 = vpop.permute.xlu0 %3486
        %3490 = vset.pattern.permute.xlu0 0
        %3491 = vperm.xlu0 %3490, %v439
        %v3492 = vpop.permute.xlu0 %3491
        %3495 = vset.pattern.permute.xlu0 0
        %3496 = vperm.xlu0 %3495, %v440
        %v3497 = vpop.permute.xlu0 %3496
        %3500 = vset.pattern.permute.xlu0 0
        %3501 = vperm.xlu0 %3500, %v441
        %v3502 = vpop.permute.xlu0 %3501
        %3505 = vset.pattern.permute.xlu0 0
        %3506 = vperm.xlu0 %3505, %v442
        %v3507 = vpop.permute.xlu0 %3506
        %3510 = vset.pattern.permute.xlu0 0
        %3511 = vperm.xlu0 %3510, %v443
        %v3512 = vpop.permute.xlu0 %3511
        %3515 = vset.pattern.permute.xlu0 0
        %3516 = vperm.xlu0 %3515, %v444
        %v3517 = vpop.permute.xlu0 %3516
        %3520 = vset.pattern.permute.xlu0 0
        %3521 = vperm.xlu0 %3520, %v445
        %v3522 = vpop.permute.xlu0 %3521
        %3525 = vset.pattern.permute.xlu0 0
        %3526 = vperm.xlu0 %3525, %v446
        %v3527 = vpop.permute.xlu0 %3526
        %3530 = vset.pattern.permute.xlu0 0
        %3531 = vperm.xlu0 %3530, %v447
        %v3532 = vpop.permute.xlu0 %3531
        %3535 = vset.pattern.permute.xlu0 0
        %3536 = vperm.xlu0 %3535, %v448
        %v3537 = vpop.permute.xlu0 %3536
        %3540 = vset.pattern.permute.xlu0 0
        %3541 = vperm.xlu0 %3540, %v449
        %v3542 = vpop.permute.xlu0 %3541
        %3545 = vset.pattern.permute.xlu0 0
        %3546 = vperm.xlu0 %3545, %v450
        %v3547 = vpop.permute.xlu0 %3546
        %3550 = vset.pattern.permute.xlu0 0
        %3551 = vperm.xlu0 %3550, %v451
        %v3552 = vpop.permute.xlu0 %3551
        %3555 = vset.pattern.permute.xlu0 0
        %3556 = vperm.xlu0 %3555, %v452
        %v3557 = vpop.permute.xlu0 %3556
        %3560 = vset.pattern.permute.xlu0 0
        %3561 = vperm.xlu0 %3560, %v453
        %v3562 = vpop.permute.xlu0 %3561
        %3565 = vset.pattern.permute.xlu0 0
        %3566 = vperm.xlu0 %3565, %v454
        %v3567 = vpop.permute.xlu0 %3566
        %3570 = vset.pattern.permute.xlu0 0
        %3571 = vperm.xlu0 %3570, %v455
        %v3572 = vpop.permute.xlu0 %3571
        %3575 = vset.pattern.permute.xlu0 0
        %3576 = vperm.xlu0 %3575, %v456
        %v3577 = vpop.permute.xlu0 %3576
        %v3579 = vmul.f32 %v3363, %v3402
        %v3580 = vmul.f32 %v3364, %v3407
        %v3581 = vmul.f32 %v3365, %v3412
        %v3582 = vmul.f32 %v3366, %v3417
        %v3583 = vmul.f32 %v3367, %v3422
        %v3584 = vmul.f32 %v3368, %v3427
        %v3585 = vmul.f32 %v3369, %v3432
        %v3586 = vmul.f32 %v3370, %v3437
        %v3587 = vmul.f32 %v3371, %v3442
        %v3588 = vmul.f32 %v3372, %v3447
        %v3589 = vmul.f32 %v3373, %v3452
        %v3590 = vmul.f32 %v3374, %v3457
        %v3591 = vmul.f32 %v3375, %v3462
        %v3592 = vmul.f32 %v3376, %v3467
        %v3593 = vmul.f32 %v3377, %v3472
        %v3594 = vmul.f32 %v3378, %v3477
        %v3595 = vmul.f32 %v3379, %v3482
        %v3596 = vmul.f32 %v3380, %v3487
        %v3597 = vmul.f32 %v3381, %v3492
        %v3598 = vmul.f32 %v3382, %v3497
        %v3599 = vmul.f32 %v3383, %v3502
        %v3600 = vmul.f32 %v3384, %v3507
        %v3601 = vmul.f32 %v3385, %v3512
        %v3602 = vmul.f32 %v3386, %v3517
        %v3603 = vmul.f32 %v3387, %v3522
        %v3604 = vmul.f32 %v3388, %v3527
        %v3605 = vmul.f32 %v3389, %v3532
        %v3606 = vmul.f32 %v3390, %v3537
        %v3607 = vmul.f32 %v3391, %v3542
        %v3608 = vmul.f32 %v3392, %v3547
        %v3609 = vmul.f32 %v3393, %v3552
        %v3610 = vmul.f32 %v3394, %v3557
        %v3611 = vmul.f32 %v3395, %v3562
        %v3612 = vmul.f32 %v3396, %v3567
        %v3613 = vmul.f32 %v3397, %v3572
        %v3614 = vmul.f32 %v3398, %v3577
        %3615 = vst [vmem:[%s374] sm:$0xff] %v3579
        %3616 = vst [vmem:[%s374 + $0x8] sm:$0xff] %v3580
        %3617 = vst [vmem:[%s374 + $0x10] sm:$0xff] %v3581
        %3618 = vst [vmem:[%s374 + $0x18] sm:$0xff] %v3582
        %3619 = vst [vmem:[%s374 + $0x20] sm:$0xff] %v3583
        %3620 = vst [vmem:[%s374 + $0x28] sm:$0xff] %v3584
        %3621 = vst [vmem:[%s374 + $0x30] sm:$0xff] %v3585
        %3622 = vst [vmem:[%s374 + $0x38] sm:$0xff] %v3586
        %3623 = vst [vmem:[%s374 + $0x40] sm:$0xff] %v3587
        %3624 = vst [vmem:[%s374 + $0x48] sm:$0xff] %v3588
        %3625 = vst [vmem:[%s374 + $0x50] sm:$0xff] %v3589
        %3626 = vst [vmem:[%s374 + $0x58] sm:$0xff] %v3590
        %3627 = vst [vmem:[%s374 + $0x60] sm:$0xff] %v3591
        %3628 = vst [vmem:[%s374 + $0x68] sm:$0xff] %v3592
        %3629 = vst [vmem:[%s374 + $0x70] sm:$0xff] %v3593
        %3630 = vst [vmem:[%s374 + $0x78] sm:$0xff] %v3594
        %3631 = vst [vmem:[%s374 + $0x80] sm:$0xff] %v3595
        %3632 = vst [vmem:[%s374 + $0x88] sm:$0xff] %v3596
        %3633 = vst [vmem:[%s374 + $0x90] sm:$0xff] %v3597
        %3634 = vst [vmem:[%s374 + $0x98] sm:$0xff] %v3598
        %3635 = vst [vmem:[%s374 + $0xa0] sm:$0xff] %v3599
        %3636 = vst [vmem:[%s374 + $0xa8] sm:$0xff] %v3600
        %3637 = vst [vmem:[%s374 + $0xb0] sm:$0xff] %v3601
        %3638 = vst [vmem:[%s374 + $0xb8] sm:$0xff] %v3602
        %3639 = vst [vmem:[%s374 + $0xc0] sm:$0xff] %v3603
        %3640 = vst [vmem:[%s374 + $0xc8] sm:$0xff] %v3604
        %3641 = vst [vmem:[%s374 + $0xd0] sm:$0xff] %v3605
        %3642 = vst [vmem:[%s374 + $0xd8] sm:$0xff] %v3606
        %3643 = vst [vmem:[%s374 + $0xe0] sm:$0xff] %v3607
        %3644 = vst [vmem:[%s374 + $0xe8] sm:$0xff] %v3608
        %3645 = vst [vmem:[%s374 + $0xf0] sm:$0xff] %v3609
        %3646 = vst [vmem:[%s374 + $0xf8] sm:$0xff] %v3610
        %3647 = vst [vmem:[%s374 + $0x100] sm:$0xff] %v3611
        %3648 = vst [vmem:[%s374 + $0x108] sm:$0xff] %v3612
        %3649 = vst [vmem:[%s374 + $0x110] sm:$0xff] %v3613
        %3650 = vst [vmem:[%s374 + $0x118] sm:$0xff] %v3614
        %3651 = vst [vmem:[#allocation2 + $0x18] sm:$0xff] %v3579
        %3652 = vst [vmem:[#allocation2 + $0x20] sm:$0xff] %v3580
        %3653 = vst [vmem:[#allocation2 + $0x28] sm:$0xff] %v3581
        %3654 = vst [vmem:[#allocation2 + $0x30] sm:$0xff] %v3582
        %3655 = vst [vmem:[#allocation2 + $0x38] sm:$0xff] %v3583
        %3656 = vst [vmem:[#allocation2 + $0x40] sm:$0xff] %v3584
        %3657 = vst [vmem:[#allocation2 + $0x48] sm:$0xff] %v3585
        %3658 = vst [vmem:[#allocation2 + $0x50] sm:$0xff] %v3586
        %3659 = vst [vmem:[#allocation2 + $0x58] sm:$0xff] %v3587
        %3660 = vst [vmem:[#allocation2 + $0x60] sm:$0xff] %v3588
        %3661 = vst [vmem:[#allocation2 + $0x68] sm:$0xff] %v3589
        %3662 = vst [vmem:[#allocation2 + $0x70] sm:$0xff] %v3590
        %3663 = vst [vmem:[#allocation2 + $0x78] sm:$0xff] %v3591
        %3664 = vst [vmem:[#allocation2 + $0x80] sm:$0xff] %v3592
        %3665 = vst [vmem:[#allocation2 + $0x88] sm:$0xff] %v3593
        %3666 = vst [vmem:[#allocation2 + $0x90] sm:$0xff] %v3594
        %3667 = vst [vmem:[#allocation2 + $0x98] sm:$0xff] %v3595
        %3668 = vst [vmem:[#allocation2 + $0xa0] sm:$0xff] %v3596
        %3669 = vst [vmem:[#allocation2 + $0xa8] sm:$0xff] %v3597
        %3670 = vst [vmem:[#allocation2 + $0xb0] sm:$0xff] %v3598
        %3671 = vst [vmem:[#allocation2 + $0xb8] sm:$0xff] %v3599
        %3672 = vst [vmem:[#allocation2 + $0xc0] sm:$0xff] %v3600
        %3673 = vst [vmem:[#allocation2 + $0xc8] sm:$0xff] %v3601
        %3674 = vst [vmem:[#allocation2 + $0xd0] sm:$0xff] %v3602
        %3675 = vst [vmem:[#allocation2 + $0xd8] sm:$0xff] %v3603
        %3676 = vst [vmem:[#allocation2 + $0xe0] sm:$0xff] %v3604
        %3677 = vst [vmem:[#allocation2 + $0xe8] sm:$0xff] %v3605
        %3678 = vst [vmem:[#allocation2 + $0xf0] sm:$0xff] %v3606
        %3679 = vst [vmem:[#allocation2 + $0xf8] sm:$0xff] %v3607
        %3680 = vst [vmem:[#allocation2 + $0x100] sm:$0xff] %v3608
        %3681 = vst [vmem:[#allocation2 + $0x108] sm:$0xff] %v3609
        %3682 = vst [vmem:[#allocation2 + $0x110] sm:$0xff] %v3610
        %3683 = vst [vmem:[#allocation2 + $0x118] sm:$0xff] %v3611
        %3684 = vst [vmem:[#allocation2 + $0x120] sm:$0xff] %v3612
        %3685 = vst [vmem:[#allocation2 + $0x128] sm:$0xff] %v3613
        %3686 = vst [vmem:[#allocation2 + $0x130] sm:$0xff] %v3614
        %v3687 = vld [vmem:[#allocation2 + $0x5] sm:$0xff]
        %v3688 = vld [vmem:[#allocation2 + $0xd] sm:$0xff]
        %v3689 = vld [vmem:[#allocation2 + $0x15] sm:$0xff]
        %v3690 = vld [vmem:[#allocation2 + $0x1d] sm:$0xff]
        %v3691 = vld [vmem:[#allocation2 + $0x25] sm:$0xff]
        %v3692 = vld [vmem:[#allocation2 + $0x2d] sm:$0xff]
        %v3693 = vld [vmem:[#allocation2 + $0x35] sm:$0xff]
        %v3694 = vld [vmem:[#allocation2 + $0x3d] sm:$0xff]
        %v3695 = vld [vmem:[#allocation2 + $0x45] sm:$0xff]
        %v3696 = vld [vmem:[#allocation2 + $0x4d] sm:$0xff]
        %v3697 = vld [vmem:[#allocation2 + $0x55] sm:$0xff]
        %v3698 = vld [vmem:[#allocation2 + $0x5d] sm:$0xff]
        %v3699 = vld [vmem:[#allocation2 + $0x65] sm:$0xff]
        %v3700 = vld [vmem:[#allocation2 + $0x6d] sm:$0xff]
        %v3701 = vld [vmem:[#allocation2 + $0x75] sm:$0xff]
        %v3702 = vld [vmem:[#allocation2 + $0x7d] sm:$0xff]
        %v3703 = vld [vmem:[#allocation2 + $0x85] sm:$0xff]
        %v3704 = vld [vmem:[#allocation2 + $0x8d] sm:$0xff]
        %v3705 = vld [vmem:[#allocation2 + $0x95] sm:$0xff]
        %v3706 = vld [vmem:[#allocation2 + $0x9d] sm:$0xff]
        %v3707 = vld [vmem:[#allocation2 + $0xa5] sm:$0xff]
        %v3708 = vld [vmem:[#allocation2 + $0xad] sm:$0xff]
        %v3709 = vld [vmem:[#allocation2 + $0xb5] sm:$0xff]
        %v3710 = vld [vmem:[#allocation2 + $0xbd] sm:$0xff]
        %v3711 = vld [vmem:[#allocation2 + $0xc5] sm:$0xff]
        %v3712 = vld [vmem:[#allocation2 + $0xcd] sm:$0xff]
        %v3713 = vld [vmem:[#allocation2 + $0xd5] sm:$0xff]
        %v3714 = vld [vmem:[#allocation2 + $0xdd] sm:$0xff]
        %v3715 = vld [vmem:[#allocation2 + $0xe5] sm:$0xff]
        %v3716 = vld [vmem:[#allocation2 + $0xed] sm:$0xff]
        %v3717 = vld [vmem:[#allocation2 + $0xf5] sm:$0xff]
        %v3718 = vld [vmem:[#allocation2 + $0xfd] sm:$0xff]
        %v3719 = vld [vmem:[#allocation2 + $0x105] sm:$0xff]
        %v3720 = vld [vmem:[#allocation2 + $0x10d] sm:$0xff]
        %v3721 = vld [vmem:[#allocation2 + $0x115] sm:$0xff]
        %v3722 = vld [vmem:[#allocation2 + $0x11d] sm:$0xff]
        %v3723 = vpack.c.bf16 %v3688, %v3687
        %v3724 = vpack.c.bf16 %v3690, %v3689
        %v3725 = vpack.c.bf16 %v3692, %v3691
        %v3726 = vpack.c.bf16 %v3694, %v3693
        %v3727 = vpack.c.bf16 %v3696, %v3695
        %v3728 = vpack.c.bf16 %v3698, %v3697
        %v3729 = vpack.c.bf16 %v3700, %v3699
        %v3730 = vpack.c.bf16 %v3702, %v3701
        %v3731 = vpack.c.bf16 %v3704, %v3703
        %v3732 = vpack.c.bf16 %v3706, %v3705
        %v3733 = vpack.c.bf16 %v3708, %v3707
        %v3734 = vpack.c.bf16 %v3710, %v3709
        %v3735 = vpack.c.bf16 %v3712, %v3711
        %v3736 = vpack.c.bf16 %v3714, %v3713
        %v3737 = vpack.c.bf16 %v3716, %v3715
        %v3738 = vpack.c.bf16 %v3718, %v3717
        %v3739 = vpack.c.bf16 %v3720, %v3719
        %v3740 = vpack.c.bf16 %v3722, %v3721
        %v3741 = vld [vmem:[%s3] sm:$0xf]
        %v3742 = vld [vmem:[%s3 + $0x4] sm:$0xf]
        %v3743 = vld [vmem:[%s3 + $0x8] sm:$0xf]
        %v3744 = vld [vmem:[%s3 + $0xc] sm:$0xf]
        %v3745 = vld [vmem:[%s3 + $0x10] sm:$0xf]
        %v3746 = vld [vmem:[%s3 + $0x14] sm:$0xf]
        %v3747 = vld [vmem:[%s3 + $0x18] sm:$0xf]
        %v3748 = vld [vmem:[%s3 + $0x1c] sm:$0xf]
        %v3749 = vld [vmem:[%s3 + $0x20] sm:$0xf]
        %v3750 = vld [vmem:[%s3 + $0x24] sm:$0xf]
        %v3751 = vld [vmem:[%s3 + $0x28] sm:$0xf]
        %v3752 = vld [vmem:[%s3 + $0x2c] sm:$0xf]
        %v3753 = vld [vmem:[%s3 + $0x30] sm:$0xf]
        %v3754 = vld [vmem:[%s3 + $0x34] sm:$0xf]
        %v3755 = vld [vmem:[%s3 + $0x38] sm:$0xf]
        %v3756 = vld [vmem:[%s3 + $0x3c] sm:$0xf]
        %v3757 = vld [vmem:[#allocation2 + $0x6] sm:$0xff]
        %v3758 = vld [vmem:[#allocation2 + $0xe] sm:$0xff]
        %v3759 = vld [vmem:[#allocation2 + $0x16] sm:$0xff]
        %v3760 = vld [vmem:[#allocation2 + $0x1e] sm:$0xff]
        %v3761 = vld [vmem:[#allocation2 + $0x26] sm:$0xff]
        %v3762 = vld [vmem:[#allocation2 + $0x2e] sm:$0xff]
        %v3763 = vld [vmem:[#allocation2 + $0x36] sm:$0xff]
        %v3764 = vld [vmem:[#allocation2 + $0x3e] sm:$0xff]
        %v3765 = vld [vmem:[#allocation2 + $0x46] sm:$0xff]
        %v3766 = vld [vmem:[#allocation2 + $0x4e] sm:$0xff]
        %v3767 = vld [vmem:[#allocation2 + $0x56] sm:$0xff]
        %v3768 = vld [vmem:[#allocation2 + $0x5e] sm:$0xff]
        %v3769 = vld [vmem:[#allocation2 + $0x66] sm:$0xff]
        %v3770 = vld [vmem:[#allocation2 + $0x6e] sm:$0xff]
        %v3771 = vld [vmem:[#allocation2 + $0x76] sm:$0xff]
        %v3772 = vld [vmem:[#allocation2 + $0x7e] sm:$0xff]
        %v3773 = vld [vmem:[#allocation2 + $0x86] sm:$0xff]
        %v3774 = vld [vmem:[#allocation2 + $0x8e] sm:$0xff]
        %v3775 = vld [vmem:[#allocation2 + $0x96] sm:$0xff]
        %v3776 = vld [vmem:[#allocation2 + $0x9e] sm:$0xff]
        %v3777 = vld [vmem:[#allocation2 + $0xa6] sm:$0xff]
        %v3778 = vld [vmem:[#allocation2 + $0xae] sm:$0xff]
        %v3779 = vld [vmem:[#allocation2 + $0xb6] sm:$0xff]
        %v3780 = vld [vmem:[#allocation2 + $0xbe] sm:$0xff]
        %v3781 = vld [vmem:[#allocation2 + $0xc6] sm:$0xff]
        %v3782 = vld [vmem:[#allocation2 + $0xce] sm:$0xff]
        %v3783 = vld [vmem:[#allocation2 + $0xd6] sm:$0xff]
        %v3784 = vld [vmem:[#allocation2 + $0xde] sm:$0xff]
        %v3785 = vld [vmem:[#allocation2 + $0xe6] sm:$0xff]
        %v3786 = vld [vmem:[#allocation2 + $0xee] sm:$0xff]
        %v3787 = vld [vmem:[#allocation2 + $0xf6] sm:$0xff]
        %v3788 = vld [vmem:[#allocation2 + $0xfe] sm:$0xff]
        %v3789 = vld [vmem:[#allocation2 + $0x106] sm:$0xff]
        %v3790 = vld [vmem:[#allocation2 + $0x10e] sm:$0xff]
        %v3791 = vld [vmem:[#allocation2 + $0x116] sm:$0xff]
        %v3792 = vld [vmem:[#allocation2 + $0x11e] sm:$0xff]
        %v3793 = vpack.c.bf16 %v3758, %v3757
        %v3794 = vpack.c.bf16 %v3760, %v3759
        %v3795 = vpack.c.bf16 %v3762, %v3761
        %v3796 = vpack.c.bf16 %v3764, %v3763
        %v3797 = vpack.c.bf16 %v3766, %v3765
        %v3798 = vpack.c.bf16 %v3768, %v3767
        %v3799 = vpack.c.bf16 %v3770, %v3769
        %v3800 = vpack.c.bf16 %v3772, %v3771
        %v3801 = vpack.c.bf16 %v3774, %v3773
        %v3802 = vpack.c.bf16 %v3776, %v3775
        %v3803 = vpack.c.bf16 %v3778, %v3777
        %v3804 = vpack.c.bf16 %v3780, %v3779
        %v3805 = vpack.c.bf16 %v3782, %v3781
        %v3806 = vpack.c.bf16 %v3784, %v3783
        %v3807 = vpack.c.bf16 %v3786, %v3785
        %v3808 = vpack.c.bf16 %v3788, %v3787
        %v3809 = vpack.c.bf16 %v3790, %v3789
        %v3810 = vpack.c.bf16 %v3792, %v3791
        %s3811 = scalar_lea.vmem %s3, 64
        %v3812 = vld [vmem:[%s3811] sm:$0xf]
        %v3813 = vld [vmem:[%s3811 + $0x4] sm:$0xf]
        %v3814 = vld [vmem:[%s3811 + $0x8] sm:$0xf]
        %v3815 = vld [vmem:[%s3811 + $0xc] sm:$0xf]
        %v3816 = vld [vmem:[%s3811 + $0x10] sm:$0xf]
        %v3817 = vld [vmem:[%s3811 + $0x14] sm:$0xf]
        %v3818 = vld [vmem:[%s3811 + $0x18] sm:$0xf]
        %v3819 = vld [vmem:[%s3811 + $0x1c] sm:$0xf]
        %v3820 = vld [vmem:[%s3811 + $0x20] sm:$0xf]
        %v3821 = vld [vmem:[%s3811 + $0x24] sm:$0xf]
        %v3822 = vld [vmem:[%s3811 + $0x28] sm:$0xf]
        %v3823 = vld [vmem:[%s3811 + $0x2c] sm:$0xf]
        %v3824 = vld [vmem:[%s3811 + $0x30] sm:$0xf]
        %v3825 = vld [vmem:[%s3811 + $0x34] sm:$0xf]
        %v3826 = vld [vmem:[%s3811 + $0x38] sm:$0xf]
        %v3827 = vld [vmem:[%s3811 + $0x3c] sm:$0xf]
        %v3844 = vunpack.c.l.b16 %v3812
        %v3845 = vunpack.c.l.b16 %v3813
        %v3846 = vunpack.c.l.b16 %v3814
        %v3847 = vunpack.c.l.b16 %v3815
        %v3848 = vunpack.c.l.b16 %v3816
        %v3849 = vunpack.c.l.b16 %v3817
        %v3850 = vunpack.c.l.b16 %v3818
        %v3851 = vunpack.c.l.b16 %v3819
        %v3852 = vunpack.c.l.b16 %v3820
        %v3853 = vunpack.c.l.b16 %v3821
        %v3854 = vunpack.c.l.b16 %v3822
        %v3855 = vunpack.c.l.b16 %v3823
        %v3856 = vunpack.c.l.b16 %v3824
        %v3857 = vunpack.c.l.b16 %v3825
        %v3858 = vunpack.c.l.b16 %v3826
        %v3859 = vunpack.c.l.b16 %v3827
        %v3860 = vpack.c.b16 %v3845, %v3844
        %v3861 = vpack.c.b16 %v3847, %v3846
        %v3862 = vpack.c.b16 %v3849, %v3848
        %v3863 = vpack.c.b16 %v3851, %v3850
        %v3864 = vpack.c.b16 %v3853, %v3852
        %v3865 = vpack.c.b16 %v3855, %v3854
        %v3866 = vpack.c.b16 %v3857, %v3856
        %v3867 = vpack.c.b16 %v3859, %v3858
        %3876 = vmatprep.subr.bf16.mxu0 0
        %3877 = vmatpush1.bf16.msra.mxu0 %v3860
        %3878 = vmatprep.subr.bf16.mxu0 0
        %3879 = vmatpush1.bf16.msra.mxu0 %v3861
        %3880 = vmatprep.subr.bf16.mxu0 0
        %3881 = vmatpush1.bf16.msra.mxu0 %v3862
        %3882 = vmatprep.subr.bf16.mxu0 0
        %3883 = vmatpush1.bf16.msra.mxu0 %v3863
        %3884 = vmatprep.subr.bf16.mxu0 0
        %3885 = vmatpush1.bf16.msra.mxu0 %v3864
        %3886 = vmatprep.subr.bf16.mxu0 0
        %3887 = vmatpush1.bf16.msra.mxu0 %v3865
        %3888 = vmatprep.subr.bf16.mxu0 0
        %3889 = vmatpush1.bf16.msra.mxu0 %v3866
        %3890 = vmatprep.subr.bf16.mxu0 0
        %3891 = vmatpush1.bf16.msra.mxu0 %v3867
        %3892 = vmatprep.subr.bf16.mxu0 0
        %3893 = vmatpush1.bf16.msra.mxu0 0
        %3894 = vmatprep.subr.bf16.mxu0 0
        %3895 = vmatpush1.bf16.msra.mxu0 0
        %3896 = vmatprep.subr.bf16.mxu0 0
        %3897 = vmatpush1.bf16.msra.mxu0 0
        %3898 = vmatprep.subr.bf16.mxu0 0
        %3899 = vmatpush1.bf16.msra.mxu0 0
        %3900 = vmatprep.subr.bf16.mxu0 0
        %3901 = vmatpush1.bf16.msra.mxu0 0
        %3902 = vmatprep.subr.bf16.mxu0 0
        %3903 = vmatpush1.bf16.msra.mxu0 0
        %3904 = vmatprep.subr.bf16.mxu0 0
        %3905 = vmatpush1.bf16.msra.mxu0 0
        %3906 = vmatprep.subr.bf16.mxu0 0
        %3907 = vmatpush1.bf16.msra.mxu0 0
        %3908 = vmatprep.mubr.bf16.mxu0 0
        %3909 = vmatmul.mubr.bf16.gmra.mrb[0].mxu0 %v3793
        %v3910 = vpop.f32.mrb[0].mxu0
        %v3911 = vadd.f32 0.0, %v3910
        %v3912 = vpop.f32.mrb[0].mxu0
        %v3913 = vpop.f32.mrb[0].mxu0
        %v3914 = vadd.f32 0.0, %v3913
        %v3915 = vpop.f32.mrb[0].mxu0
        %3916 = vmatprep.mubr.bf16.mxu0 0
        %3917 = vmatmul.mubr.bf16.gmra.mrb[0].mxu0 %v3794
        %v3918 = vpop.f32.mrb[0].mxu0
        %v3919 = vadd.f32 0.0, %v3918
        %v3920 = vpop.f32.mrb[0].mxu0
        %v3921 = vpop.f32.mrb[0].mxu0
        %v3922 = vadd.f32 0.0, %v3921
        %v3923 = vpop.f32.mrb[0].mxu0
        %3924 = vmatprep.mubr.bf16.mxu0 0
        %3925 = vmatmul.mubr.bf16.gmra.mrb[0].mxu0 %v3795
        %v3926 = vpop.f32.mrb[0].mxu0
        %v3927 = vadd.f32 0.0, %v3926
        %v3928 = vpop.f32.mrb[0].mxu0
        %v3929 = vpop.f32.mrb[0].mxu0
        %v3930 = vadd.f32 0.0, %v3929
        %v3931 = vpop.f32.mrb[0].mxu0
        %3932 = vmatprep.mubr.bf16.mxu0 0
        %3933 = vmatmul.mubr.bf16.gmra.mrb[0].mxu0 %v3796
        %v3934 = vpop.f32.mrb[0].mxu0
        %v3935 = vadd.f32 0.0, %v3934
        %v3936 = vpop.f32.mrb[0].mxu0
        %v3937 = vpop.f32.mrb[0].mxu0
        %v3938 = vadd.f32 0.0, %v3937
        %v3939 = vpop.f32.mrb[0].mxu0
        %3940 = vmatprep.mubr.bf16.mxu0 0
        %3941 = vmatmul.mubr.bf16.gmra.mrb[0].mxu0 %v3797
        %v3942 = vpop.f32.mrb[0].mxu0
        %v3943 = vadd.f32 0.0, %v3942
        %v3944 = vpop.f32.mrb[0].mxu0
        %v3945 = vpop.f32.mrb[0].mxu0
        %v3946 = vadd.f32 0.0, %v3945
        %v3947 = vpop.f32.mrb[0].mxu0
        %3948 = vmatprep.mubr.bf16.mxu0 0
        %3949 = vmatmul.mubr.bf16.gmra.mrb[0].mxu0 %v3798
        %v3950 = vpop.f32.mrb[0].mxu0
        %v3951 = vadd.f32 0.0, %v3950
        %v3952 = vpop.f32.mrb[0].mxu0
        %v3953 = vpop.f32.mrb[0].mxu0
        %v3954 = vadd.f32 0.0, %v3953
        %v3955 = vpop.f32.mrb[0].mxu0
        %3956 = vmatprep.mubr.bf16.mxu0 0
        %3957 = vmatmul.mubr.bf16.gmra.mrb[0].mxu0 %v3799
        %v3958 = vpop.f32.mrb[0].mxu0
        %v3959 = vadd.f32 0.0, %v3958
        %v3960 = vpop.f32.mrb[0].mxu0
        %v3961 = vpop.f32.mrb[0].mxu0
        %v3962 = vadd.f32 0.0, %v3961
        %v3963 = vpop.f32.mrb[0].mxu0
        %3964 = vmatprep.mubr.bf16.mxu0 0
        %3965 = vmatmul.mubr.bf16.gmra.mrb[0].mxu0 %v3800
        %v3966 = vpop.f32.mrb[0].mxu0
        %v3967 = vadd.f32 0.0, %v3966
        %v3968 = vpop.f32.mrb[0].mxu0
        %v3969 = vpop.f32.mrb[0].mxu0
        %v3970 = vadd.f32 0.0, %v3969
        %v3971 = vpop.f32.mrb[0].mxu0
        %3972 = vmatprep.mubr.bf16.mxu0 0
        %3973 = vmatmul.mubr.bf16.gmra.mrb[0].mxu0 %v3801
        %v3974 = vpop.f32.mrb[0].mxu0
        %v3975 = vadd.f32 0.0, %v3974
        %v3976 = vpop.f32.mrb[0].mxu0
        %v3977 = vpop.f32.mrb[0].mxu0
        %v3978 = vadd.f32 0.0, %v3977
        %v3979 = vpop.f32.mrb[0].mxu0
        %3980 = vmatprep.mubr.bf16.mxu0 0
        %3981 = vmatmul.mubr.bf16.gmra.mrb[0].mxu0 %v3802
        %v3982 = vpop.f32.mrb[0].mxu0
        %v3983 = vadd.f32 0.0, %v3982
        %v3984 = vpop.f32.mrb[0].mxu0
        %v3985 = vpop.f32.mrb[0].mxu0
        %v3986 = vadd.f32 0.0, %v3985
        %v3987 = vpop.f32.mrb[0].mxu0
        %3988 = vmatprep.mubr.bf16.mxu0 0
        %3989 = vmatmul.mubr.bf16.gmra.mrb[0].mxu0 %v3803
        %v3990 = vpop.f32.mrb[0].mxu0
        %v3991 = vadd.f32 0.0, %v3990
        %v3992 = vpop.f32.mrb[0].mxu0
        %v3993 = vpop.f32.mrb[0].mxu0
        %v3994 = vadd.f32 0.0, %v3993
        %v3995 = vpop.f32.mrb[0].mxu0
        %3996 = vmatprep.mubr.bf16.mxu0 0
        %3997 = vmatmul.mubr.bf16.gmra.mrb[0].mxu0 %v3804
        %v3998 = vpop.f32.mrb[0].mxu0
        %v3999 = vadd.f32 0.0, %v3998
        %v4000 = vpop.f32.mrb[0].mxu0
        %v4001 = vpop.f32.mrb[0].mxu0
        %v4002 = vadd.f32 0.0, %v4001
        %v4003 = vpop.f32.mrb[0].mxu0
        %4004 = vmatprep.mubr.bf16.mxu0 0
        %4005 = vmatmul.mubr.bf16.gmra.mrb[0].mxu0 %v3805
        %v4006 = vpop.f32.mrb[0].mxu0
        %v4007 = vadd.f32 0.0, %v4006
        %v4008 = vpop.f32.mrb[0].mxu0
        %v4009 = vpop.f32.mrb[0].mxu0
        %v4010 = vadd.f32 0.0, %v4009
        %v4011 = vpop.f32.mrb[0].mxu0
        %4012 = vmatprep.mubr.bf16.mxu0 0
        %4013 = vmatmul.mubr.bf16.gmra.mrb[0].mxu0 %v3806
        %v4014 = vpop.f32.mrb[0].mxu0
        %v4015 = vadd.f32 0.0, %v4014
        %v4016 = vpop.f32.mrb[0].mxu0
        %v4017 = vpop.f32.mrb[0].mxu0
        %v4018 = vadd.f32 0.0, %v4017
        %v4019 = vpop.f32.mrb[0].mxu0
        %4020 = vmatprep.mubr.bf16.mxu0 0
        %4021 = vmatmul.mubr.bf16.gmra.mrb[0].mxu0 %v3807
        %v4022 = vpop.f32.mrb[0].mxu0
        %v4023 = vadd.f32 0.0, %v4022
        %v4024 = vpop.f32.mrb[0].mxu0
        %v4025 = vpop.f32.mrb[0].mxu0
        %v4026 = vadd.f32 0.0, %v4025
        %v4027 = vpop.f32.mrb[0].mxu0
        %4028 = vmatprep.mubr.bf16.mxu0 0
        %4029 = vmatmul.mubr.bf16.gmra.mrb[0].mxu0 %v3808
        %v4030 = vpop.f32.mrb[0].mxu0
        %v4031 = vadd.f32 0.0, %v4030
        %v4032 = vpop.f32.mrb[0].mxu0
        %v4033 = vpop.f32.mrb[0].mxu0
        %v4034 = vadd.f32 0.0, %v4033
        %v4035 = vpop.f32.mrb[0].mxu0
        %4036 = vmatprep.mubr.bf16.mxu0 0
        %4037 = vmatmul.mubr.bf16.gmra.mrb[0].mxu0 %v3809
        %v4038 = vpop.f32.mrb[0].mxu0
        %v4039 = vadd.f32 0.0, %v4038
        %v4040 = vpop.f32.mrb[0].mxu0
        %v4041 = vpop.f32.mrb[0].mxu0
        %v4042 = vadd.f32 0.0, %v4041
        %v4043 = vpop.f32.mrb[0].mxu0
        %4044 = vmatprep.mubr.bf16.mxu0 0
        %4045 = vmatmul.mubr.bf16.gmra.mrb[0].mxu0 %v3810
        %v4046 = vpop.f32.mrb[0].mxu0
        %v4047 = vadd.f32 0.0, %v4046
        %v4048 = vpop.f32.mrb[0].mxu0
        %v4049 = vpop.f32.mrb[0].mxu0
        %v4050 = vadd.f32 0.0, %v4049
        %v4051 = vpop.f32.mrb[0].mxu0
        %4052 = vdwg.mxu0
        %v4069 = vunpack.c.l.b16 %v3741
        %v4070 = vunpack.c.l.b16 %v3742
        %v4071 = vunpack.c.l.b16 %v3743
        %v4072 = vunpack.c.l.b16 %v3744
        %v4073 = vunpack.c.l.b16 %v3745
        %v4074 = vunpack.c.l.b16 %v3746
        %v4075 = vunpack.c.l.b16 %v3747
        %v4076 = vunpack.c.l.b16 %v3748
        %v4077 = vunpack.c.l.b16 %v3749
        %v4078 = vunpack.c.l.b16 %v3750
        %v4079 = vunpack.c.l.b16 %v3751
        %v4080 = vunpack.c.l.b16 %v3752
        %v4081 = vunpack.c.l.b16 %v3753
        %v4082 = vunpack.c.l.b16 %v3754
        %v4083 = vunpack.c.l.b16 %v3755
        %v4084 = vunpack.c.l.b16 %v3756
        %v4085 = vpack.c.b16 %v4070, %v4069
        %v4086 = vpack.c.b16 %v4072, %v4071
        %v4087 = vpack.c.b16 %v4074, %v4073
        %v4088 = vpack.c.b16 %v4076, %v4075
        %v4089 = vpack.c.b16 %v4078, %v4077
        %v4090 = vpack.c.b16 %v4080, %v4079
        %v4091 = vpack.c.b16 %v4082, %v4081
        %v4092 = vpack.c.b16 %v4084, %v4083
        %4101 = vmatprep.subr.bf16.mxu0 0
        %4102 = vmatpush1.bf16.msra.mxu0 %v4085
        %4103 = vmatprep.subr.bf16.mxu0 0
        %4104 = vmatpush1.bf16.msra.mxu0 %v4086
        %4105 = vmatprep.subr.bf16.mxu0 0
        %4106 = vmatpush1.bf16.msra.mxu0 %v4087
        %4107 = vmatprep.subr.bf16.mxu0 0
        %4108 = vmatpush1.bf16.msra.mxu0 %v4088
        %4109 = vmatprep.subr.bf16.mxu0 0
        %4110 = vmatpush1.bf16.msra.mxu0 %v4089
        %4111 = vmatprep.subr.bf16.mxu0 0
        %4112 = vmatpush1.bf16.msra.mxu0 %v4090
        %4113 = vmatprep.subr.bf16.mxu0 0
        %4114 = vmatpush1.bf16.msra.mxu0 %v4091
        %4115 = vmatprep.subr.bf16.mxu0 0
        %4116 = vmatpush1.bf16.msra.mxu0 %v4092
        %4117 = vmatprep.subr.bf16.mxu0 0
        %4118 = vmatpush1.bf16.msra.mxu0 0
        %4119 = vmatprep.subr.bf16.mxu0 0
        %4120 = vmatpush1.bf16.msra.mxu0 0
        %4121 = vmatprep.subr.bf16.mxu0 0
        %4122 = vmatpush1.bf16.msra.mxu0 0
        %4123 = vmatprep.subr.bf16.mxu0 0
        %4124 = vmatpush1.bf16.msra.mxu0 0
        %4125 = vmatprep.subr.bf16.mxu0 0
        %4126 = vmatpush1.bf16.msra.mxu0 0
        %4127 = vmatprep.subr.bf16.mxu0 0
        %4128 = vmatpush1.bf16.msra.mxu0 0
        %4129 = vmatprep.subr.bf16.mxu0 0
        %4130 = vmatpush1.bf16.msra.mxu0 0
        %4131 = vmatprep.subr.bf16.mxu0 0
        %4132 = vmatpush1.bf16.msra.mxu0 0
        %4133 = vmatprep.mubr.bf16.mxu0 0
        %4134 = vmatmul.mubr.bf16.gmra.mrb[0].mxu0 %v3723
        %v4135 = vpop.f32.mrb[0].mxu0
        %v4136 = vadd.f32 %v3911, %v4135
        %v4137 = vpop.f32.mrb[0].mxu0
        %v4138 = vpop.f32.mrb[0].mxu0
        %v4139 = vadd.f32 %v3914, %v4138
        %v4140 = vpop.f32.mrb[0].mxu0
        %4141 = vmatprep.mubr.bf16.mxu0 0
        %4142 = vmatmul.mubr.bf16.gmra.mrb[0].mxu0 %v3724
        %v4143 = vpop.f32.mrb[0].mxu0
        %v4144 = vadd.f32 %v3919, %v4143
        %v4145 = vpop.f32.mrb[0].mxu0
        %v4146 = vpop.f32.mrb[0].mxu0
        %v4147 = vadd.f32 %v3922, %v4146
        %v4148 = vpop.f32.mrb[0].mxu0
        %4149 = vmatprep.mubr.bf16.mxu0 0
        %4150 = vmatmul.mubr.bf16.gmra.mrb[0].mxu0 %v3725
        %v4151 = vpop.f32.mrb[0].mxu0
        %v4152 = vadd.f32 %v3927, %v4151
        %v4153 = vpop.f32.mrb[0].mxu0
        %v4154 = vpop.f32.mrb[0].mxu0
        %v4155 = vadd.f32 %v3930, %v4154
        %v4156 = vpop.f32.mrb[0].mxu0
        %4157 = vmatprep.mubr.bf16.mxu0 0
        %4158 = vmatmul.mubr.bf16.gmra.mrb[0].mxu0 %v3726
        %v4159 = vpop.f32.mrb[0].mxu0
        %v4160 = vadd.f32 %v3935, %v4159
        %v4161 = vpop.f32.mrb[0].mxu0
        %v4162 = vpop.f32.mrb[0].mxu0
        %v4163 = vadd.f32 %v3938, %v4162
        %v4164 = vpop.f32.mrb[0].mxu0
        %4165 = vmatprep.mubr.bf16.mxu0 0
        %4166 = vmatmul.mubr.bf16.gmra.mrb[0].mxu0 %v3727
        %v4167 = vpop.f32.mrb[0].mxu0
        %v4168 = vadd.f32 %v3943, %v4167
        %v4169 = vpop.f32.mrb[0].mxu0
        %v4170 = vpop.f32.mrb[0].mxu0
        %v4171 = vadd.f32 %v3946, %v4170
        %v4172 = vpop.f32.mrb[0].mxu0
        %4173 = vmatprep.mubr.bf16.mxu0 0
        %4174 = vmatmul.mubr.bf16.gmra.mrb[0].mxu0 %v3728
        %v4175 = vpop.f32.mrb[0].mxu0
        %v4176 = vadd.f32 %v3951, %v4175
        %v4177 = vpop.f32.mrb[0].mxu0
        %v4178 = vpop.f32.mrb[0].mxu0
        %v4179 = vadd.f32 %v3954, %v4178
        %v4180 = vpop.f32.mrb[0].mxu0
        %4181 = vmatprep.mubr.bf16.mxu0 0
        %4182 = vmatmul.mubr.bf16.gmra.mrb[0].mxu0 %v3729
        %v4183 = vpop.f32.mrb[0].mxu0
        %v4184 = vadd.f32 %v3959, %v4183
        %v4185 = vpop.f32.mrb[0].mxu0
        %v4186 = vpop.f32.mrb[0].mxu0
        %v4187 = vadd.f32 %v3962, %v4186
        %v4188 = vpop.f32.mrb[0].mxu0
        %4189 = vmatprep.mubr.bf16.mxu0 0
        %4190 = vmatmul.mubr.bf16.gmra.mrb[0].mxu0 %v3730
        %v4191 = vpop.f32.mrb[0].mxu0
        %v4192 = vadd.f32 %v3967, %v4191
        %v4193 = vpop.f32.mrb[0].mxu0
        %v4194 = vpop.f32.mrb[0].mxu0
        %v4195 = vadd.f32 %v3970, %v4194
        %v4196 = vpop.f32.mrb[0].mxu0
        %4197 = vmatprep.mubr.bf16.mxu0 0
        %4198 = vmatmul.mubr.bf16.gmra.mrb[0].mxu0 %v3731
        %v4199 = vpop.f32.mrb[0].mxu0
        %v4200 = vadd.f32 %v3975, %v4199
        %v4201 = vpop.f32.mrb[0].mxu0
        %v4202 = vpop.f32.mrb[0].mxu0
        %v4203 = vadd.f32 %v3978, %v4202
        %v4204 = vpop.f32.mrb[0].mxu0
        %4205 = vmatprep.mubr.bf16.mxu0 0
        %4206 = vmatmul.mubr.bf16.gmra.mrb[0].mxu0 %v3732
        %v4207 = vpop.f32.mrb[0].mxu0
        %v4208 = vadd.f32 %v3983, %v4207
        %v4209 = vpop.f32.mrb[0].mxu0
        %v4210 = vpop.f32.mrb[0].mxu0
        %v4211 = vadd.f32 %v3986, %v4210
        %v4212 = vpop.f32.mrb[0].mxu0
        %4213 = vmatprep.mubr.bf16.mxu0 0
        %4214 = vmatmul.mubr.bf16.gmra.mrb[0].mxu0 %v3733
        %v4215 = vpop.f32.mrb[0].mxu0
        %v4216 = vadd.f32 %v3991, %v4215
        %v4217 = vpop.f32.mrb[0].mxu0
        %v4218 = vpop.f32.mrb[0].mxu0
        %v4219 = vadd.f32 %v3994, %v4218
        %v4220 = vpop.f32.mrb[0].mxu0
        %4221 = vmatprep.mubr.bf16.mxu0 0
        %4222 = vmatmul.mubr.bf16.gmra.mrb[0].mxu0 %v3734
        %v4223 = vpop.f32.mrb[0].mxu0
        %v4224 = vadd.f32 %v3999, %v4223
        %v4225 = vpop.f32.mrb[0].mxu0
        %v4226 = vpop.f32.mrb[0].mxu0
        %v4227 = vadd.f32 %v4002, %v4226
        %v4228 = vpop.f32.mrb[0].mxu0
        %4229 = vmatprep.mubr.bf16.mxu0 0
        %4230 = vmatmul.mubr.bf16.gmra.mrb[0].mxu0 %v3735
        %v4231 = vpop.f32.mrb[0].mxu0
        %v4232 = vadd.f32 %v4007, %v4231
        %v4233 = vpop.f32.mrb[0].mxu0
        %v4234 = vpop.f32.mrb[0].mxu0
        %v4235 = vadd.f32 %v4010, %v4234
        %v4236 = vpop.f32.mrb[0].mxu0
        %4237 = vmatprep.mubr.bf16.mxu0 0
        %4238 = vmatmul.mubr.bf16.gmra.mrb[0].mxu0 %v3736
        %v4239 = vpop.f32.mrb[0].mxu0
        %v4240 = vadd.f32 %v4015, %v4239
        %v4241 = vpop.f32.mrb[0].mxu0
        %v4242 = vpop.f32.mrb[0].mxu0
        %v4243 = vadd.f32 %v4018, %v4242
        %v4244 = vpop.f32.mrb[0].mxu0
        %4245 = vmatprep.mubr.bf16.mxu0 0
        %4246 = vmatmul.mubr.bf16.gmra.mrb[0].mxu0 %v3737
        %v4247 = vpop.f32.mrb[0].mxu0
        %v4248 = vadd.f32 %v4023, %v4247
        %v4249 = vpop.f32.mrb[0].mxu0
        %v4250 = vpop.f32.mrb[0].mxu0
        %v4251 = vadd.f32 %v4026, %v4250
        %v4252 = vpop.f32.mrb[0].mxu0
        %4253 = vmatprep.mubr.bf16.mxu0 0
        %4254 = vmatmul.mubr.bf16.gmra.mrb[0].mxu0 %v3738
        %v4255 = vpop.f32.mrb[0].mxu0
        %v4256 = vadd.f32 %v4031, %v4255
        %v4257 = vpop.f32.mrb[0].mxu0
        %v4258 = vpop.f32.mrb[0].mxu0
        %v4259 = vadd.f32 %v4034, %v4258
        %v4260 = vpop.f32.mrb[0].mxu0
        %4261 = vmatprep.mubr.bf16.mxu0 0
        %4262 = vmatmul.mubr.bf16.gmra.mrb[0].mxu0 %v3739
        %v4263 = vpop.f32.mrb[0].mxu0
        %v4264 = vadd.f32 %v4039, %v4263
        %v4265 = vpop.f32.mrb[0].mxu0
        %v4266 = vpop.f32.mrb[0].mxu0
        %v4267 = vadd.f32 %v4042, %v4266
        %v4268 = vpop.f32.mrb[0].mxu0
        %4269 = vmatprep.mubr.bf16.mxu0 0
        %4270 = vmatmul.mubr.bf16.gmra.mrb[0].mxu0 %v3740
        %v4271 = vpop.f32.mrb[0].mxu0
        %v4272 = vadd.f32 %v4047, %v4271
        %v4273 = vpop.f32.mrb[0].mxu0
        %v4274 = vpop.f32.mrb[0].mxu0
        %v4275 = vadd.f32 %v4050, %v4274
        %v4276 = vpop.f32.mrb[0].mxu0
        %4277 = vdwg.mxu0
        %v4278 = vld [vmem:[#allocation2 + $0x7] sm:$0xff]
        %v4279 = vld [vmem:[#allocation2 + $0xf] sm:$0xff]
        %v4280 = vld [vmem:[#allocation2 + $0x17] sm:$0xff]
        %v4281 = vld [vmem:[#allocation2 + $0x1f] sm:$0xff]
        %v4282 = vld [vmem:[#allocation2 + $0x27] sm:$0xff]
        %v4283 = vld [vmem:[#allocation2 + $0x2f] sm:$0xff]
        %v4284 = vld [vmem:[#allocation2 + $0x37] sm:$0xff]
        %v4285 = vld [vmem:[#allocation2 + $0x3f] sm:$0xff]
        %v4286 = vld [vmem:[#allocation2 + $0x47] sm:$0xff]
        %v4287 = vld [vmem:[#allocation2 + $0x4f] sm:$0xff]
        %v4288 = vld [vmem:[#allocation2 + $0x57] sm:$0xff]
        %v4289 = vld [vmem:[#allocation2 + $0x5f] sm:$0xff]
        %v4290 = vld [vmem:[#allocation2 + $0x67] sm:$0xff]
        %v4291 = vld [vmem:[#allocation2 + $0x6f] sm:$0xff]
        %v4292 = vld [vmem:[#allocation2 + $0x77] sm:$0xff]
        %v4293 = vld [vmem:[#allocation2 + $0x7f] sm:$0xff]
        %v4294 = vld [vmem:[#allocation2 + $0x87] sm:$0xff]
        %v4295 = vld [vmem:[#allocation2 + $0x8f] sm:$0xff]
        %v4296 = vld [vmem:[#allocation2 + $0x97] sm:$0xff]
        %v4297 = vld [vmem:[#allocation2 + $0x9f] sm:$0xff]
        %v4298 = vld [vmem:[#allocation2 + $0xa7] sm:$0xff]
        %v4299 = vld [vmem:[#allocation2 + $0xaf] sm:$0xff]
        %v4300 = vld [vmem:[#allocation2 + $0xb7] sm:$0xff]
        %v4301 = vld [vmem:[#allocation2 + $0xbf] sm:$0xff]
        %v4302 = vld [vmem:[#allocation2 + $0xc7] sm:$0xff]
        %v4303 = vld [vmem:[#allocation2 + $0xcf] sm:$0xff]
        %v4304 = vld [vmem:[#allocation2 + $0xd7] sm:$0xff]
        %v4305 = vld [vmem:[#allocation2 + $0xdf] sm:$0xff]
        %v4306 = vld [vmem:[#allocation2 + $0xe7] sm:$0xff]
        %v4307 = vld [vmem:[#allocation2 + $0xef] sm:$0xff]
        %v4308 = vld [vmem:[#allocation2 + $0xf7] sm:$0xff]
        %v4309 = vld [vmem:[#allocation2 + $0xff] sm:$0xff]
        %v4310 = vld [vmem:[#allocation2 + $0x107] sm:$0xff]
        %v4311 = vld [vmem:[#allocation2 + $0x10f] sm:$0xff]
        %v4312 = vld [vmem:[#allocation2 + $0x117] sm:$0xff]
        %v4313 = vld [vmem:[#allocation2 + $0x11f] sm:$0xff]
        %v4314 = vpack.c.bf16 %v4279, %v4278
        %v4315 = vpack.c.bf16 %v4281, %v4280
        %v4316 = vpack.c.bf16 %v4283, %v4282
        %v4317 = vpack.c.bf16 %v4285, %v4284
        %v4318 = vpack.c.bf16 %v4287, %v4286
        %v4319 = vpack.c.bf16 %v4289, %v4288
        %v4320 = vpack.c.bf16 %v4291, %v4290
        %v4321 = vpack.c.bf16 %v4293, %v4292
        %v4322 = vpack.c.bf16 %v4295, %v4294
        %v4323 = vpack.c.bf16 %v4297, %v4296
        %v4324 = vpack.c.bf16 %v4299, %v4298
        %v4325 = vpack.c.bf16 %v4301, %v4300
        %v4326 = vpack.c.bf16 %v4303, %v4302
        %v4327 = vpack.c.bf16 %v4305, %v4304
        %v4328 = vpack.c.bf16 %v4307, %v4306
        %v4329 = vpack.c.bf16 %v4309, %v4308
        %v4330 = vpack.c.bf16 %v4311, %v4310
        %v4331 = vpack.c.bf16 %v4313, %v4312
        %s4332 = scalar_lea.vmem %s3, 128
        %v4333 = vld [vmem:[%s4332] sm:$0xf]
        %v4334 = vld [vmem:[%s4332 + $0x4] sm:$0xf]
        %v4335 = vld [vmem:[%s4332 + $0x8] sm:$0xf]
        %v4336 = vld [vmem:[%s4332 + $0xc] sm:$0xf]
        %v4337 = vld [vmem:[%s4332 + $0x10] sm:$0xf]
        %v4338 = vld [vmem:[%s4332 + $0x14] sm:$0xf]
        %v4339 = vld [vmem:[%s4332 + $0x18] sm:$0xf]
        %v4340 = vld [vmem:[%s4332 + $0x1c] sm:$0xf]
        %v4341 = vld [vmem:[%s4332 + $0x20] sm:$0xf]
        %v4342 = vld [vmem:[%s4332 + $0x24] sm:$0xf]
        %v4343 = vld [vmem:[%s4332 + $0x28] sm:$0xf]
        %v4344 = vld [vmem:[%s4332 + $0x2c] sm:$0xf]
        %v4345 = vld [vmem:[%s4332 + $0x30] sm:$0xf]
        %v4346 = vld [vmem:[%s4332 + $0x34] sm:$0xf]
        %v4347 = vld [vmem:[%s4332 + $0x38] sm:$0xf]
        %v4348 = vld [vmem:[%s4332 + $0x3c] sm:$0xf]
        %v4365 = vunpack.c.l.b16 %v4333
        %v4366 = vunpack.c.l.b16 %v4334
        %v4367 = vunpack.c.l.b16 %v4335
        %v4368 = vunpack.c.l.b16 %v4336
        %v4369 = vunpack.c.l.b16 %v4337
        %v4370 = vunpack.c.l.b16 %v4338
        %v4371 = vunpack.c.l.b16 %v4339
        %v4372 = vunpack.c.l.b16 %v4340
        %v4373 = vunpack.c.l.b16 %v4341
        %v4374 = vunpack.c.l.b16 %v4342
        %v4375 = vunpack.c.l.b16 %v4343
        %v4376 = vunpack.c.l.b16 %v4344
        %v4377 = vunpack.c.l.b16 %v4345
        %v4378 = vunpack.c.l.b16 %v4346
        %v4379 = vunpack.c.l.b16 %v4347
        %v4380 = vunpack.c.l.b16 %v4348
        %v4381 = vpack.c.b16 %v4366, %v4365
        %v4382 = vpack.c.b16 %v4368, %v4367
        %v4383 = vpack.c.b16 %v4370, %v4369
        %v4384 = vpack.c.b16 %v4372, %v4371
        %v4385 = vpack.c.b16 %v4374, %v4373
        %v4386 = vpack.c.b16 %v4376, %v4375
        %v4387 = vpack.c.b16 %v4378, %v4377
        %v4388 = vpack.c.b16 %v4380, %v4379
        %4397 = vmatprep.subr.bf16.mxu0 0
        %4398 = vmatpush1.bf16.msra.mxu0 %v4381
        %4399 = vmatprep.subr.bf16.mxu0 0
        %4400 = vmatpush1.bf16.msra.mxu0 %v4382
        %4401 = vmatprep.subr.bf16.mxu0 0
        %4402 = vmatpush1.bf16.msra.mxu0 %v4383
        %4403 = vmatprep.subr.bf16.mxu0 0
        %4404 = vmatpush1.bf16.msra.mxu0 %v4384
        %4405 = vmatprep.subr.bf16.mxu0 0
        %4406 = vmatpush1.bf16.msra.mxu0 %v4385
        %4407 = vmatprep.subr.bf16.mxu0 0
        %4408 = vmatpush1.bf16.msra.mxu0 %v4386
        %4409 = vmatprep.subr.bf16.mxu0 0
        %4410 = vmatpush1.bf16.msra.mxu0 %v4387
        %4411 = vmatprep.subr.bf16.mxu0 0
        %4412 = vmatpush1.bf16.msra.mxu0 %v4388
        %4413 = vmatprep.subr.bf16.mxu0 0
        %4414 = vmatpush1.bf16.msra.mxu0 0
        %4415 = vmatprep.subr.bf16.mxu0 0
        %4416 = vmatpush1.bf16.msra.mxu0 0
        %4417 = vmatprep.subr.bf16.mxu0 0
        %4418 = vmatpush1.bf16.msra.mxu0 0
        %4419 = vmatprep.subr.bf16.mxu0 0
        %4420 = vmatpush1.bf16.msra.mxu0 0
        %4421 = vmatprep.subr.bf16.mxu0 0
        %4422 = vmatpush1.bf16.msra.mxu0 0
        %4423 = vmatprep.subr.bf16.mxu0 0
        %4424 = vmatpush1.bf16.msra.mxu0 0
        %4425 = vmatprep.subr.bf16.mxu0 0
        %4426 = vmatpush1.bf16.msra.mxu0 0
        %4427 = vmatprep.subr.bf16.mxu0 0
        %4428 = vmatpush1.bf16.msra.mxu0 0
        %4429 = vmatprep.mubr.bf16.mxu0 0
        %4430 = vmatmul.mubr.bf16.gmra.mrb[0].mxu0 %v4314
        %v4431 = vpop.f32.mrb[0].mxu0
        %v4432 = vadd.f32 0.0, %v4431
        %v4433 = vpop.f32.mrb[0].mxu0
        %v4434 = vpop.f32.mrb[0].mxu0
        %v4435 = vadd.f32 0.0, %v4434
        %v4436 = vpop.f32.mrb[0].mxu0
        %4437 = vmatprep.mubr.bf16.mxu0 0
        %4438 = vmatmul.mubr.bf16.gmra.mrb[0].mxu0 %v4315
        %v4439 = vpop.f32.mrb[0].mxu0
        %v4440 = vadd.f32 0.0, %v4439
        %v4441 = vpop.f32.mrb[0].mxu0
        %v4442 = vpop.f32.mrb[0].mxu0
        %v4443 = vadd.f32 0.0, %v4442
        %v4444 = vpop.f32.mrb[0].mxu0
        %4445 = vmatprep.mubr.bf16.mxu0 0
        %4446 = vmatmul.mubr.bf16.gmra.mrb[0].mxu0 %v4316
        %v4447 = vpop.f32.mrb[0].mxu0
        %v4448 = vadd.f32 0.0, %v4447
        %v4449 = vpop.f32.mrb[0].mxu0
        %v4450 = vpop.f32.mrb[0].mxu0
        %v4451 = vadd.f32 0.0, %v4450
        %v4452 = vpop.f32.mrb[0].mxu0
        %4453 = vmatprep.mubr.bf16.mxu0 0
        %4454 = vmatmul.mubr.bf16.gmra.mrb[0].mxu0 %v4317
        %v4455 = vpop.f32.mrb[0].mxu0
        %v4456 = vadd.f32 0.0, %v4455
        %v4457 = vpop.f32.mrb[0].mxu0
        %v4458 = vpop.f32.mrb[0].mxu0
        %v4459 = vadd.f32 0.0, %v4458
        %v4460 = vpop.f32.mrb[0].mxu0
        %4461 = vmatprep.mubr.bf16.mxu0 0
        %4462 = vmatmul.mubr.bf16.gmra.mrb[0].mxu0 %v4318
        %v4463 = vpop.f32.mrb[0].mxu0
        %v4464 = vadd.f32 0.0, %v4463
        %v4465 = vpop.f32.mrb[0].mxu0
        %v4466 = vpop.f32.mrb[0].mxu0
        %v4467 = vadd.f32 0.0, %v4466
        %v4468 = vpop.f32.mrb[0].mxu0
        %4469 = vmatprep.mubr.bf16.mxu0 0
        %4470 = vmatmul.mubr.bf16.gmra.mrb[0].mxu0 %v4319
        %v4471 = vpop.f32.mrb[0].mxu0
        %v4472 = vadd.f32 0.0, %v4471
        %v4473 = vpop.f32.mrb[0].mxu0
        %v4474 = vpop.f32.mrb[0].mxu0
        %v4475 = vadd.f32 0.0, %v4474
        %v4476 = vpop.f32.mrb[0].mxu0
        %4477 = vmatprep.mubr.bf16.mxu0 0
        %4478 = vmatmul.mubr.bf16.gmra.mrb[0].mxu0 %v4320
        %v4479 = vpop.f32.mrb[0].mxu0
        %v4480 = vadd.f32 0.0, %v4479
        %v4481 = vpop.f32.mrb[0].mxu0
        %v4482 = vpop.f32.mrb[0].mxu0
        %v4483 = vadd.f32 0.0, %v4482
        %v4484 = vpop.f32.mrb[0].mxu0
        %4485 = vmatprep.mubr.bf16.mxu0 0
        %4486 = vmatmul.mubr.bf16.gmra.mrb[0].mxu0 %v4321
        %v4487 = vpop.f32.mrb[0].mxu0
        %v4488 = vadd.f32 0.0, %v4487
        %v4489 = vpop.f32.mrb[0].mxu0
        %v4490 = vpop.f32.mrb[0].mxu0
        %v4491 = vadd.f32 0.0, %v4490
        %v4492 = vpop.f32.mrb[0].mxu0
        %4493 = vmatprep.mubr.bf16.mxu0 0
        %4494 = vmatmul.mubr.bf16.gmra.mrb[0].mxu0 %v4322
        %v4495 = vpop.f32.mrb[0].mxu0
        %v4496 = vadd.f32 0.0, %v4495
        %v4497 = vpop.f32.mrb[0].mxu0
        %v4498 = vpop.f32.mrb[0].mxu0
        %v4499 = vadd.f32 0.0, %v4498
        %v4500 = vpop.f32.mrb[0].mxu0
        %4501 = vmatprep.mubr.bf16.mxu0 0
        %4502 = vmatmul.mubr.bf16.gmra.mrb[0].mxu0 %v4323
        %v4503 = vpop.f32.mrb[0].mxu0
        %v4504 = vadd.f32 0.0, %v4503
        %v4505 = vpop.f32.mrb[0].mxu0
        %v4506 = vpop.f32.mrb[0].mxu0
        %v4507 = vadd.f32 0.0, %v4506
        %v4508 = vpop.f32.mrb[0].mxu0
        %4509 = vmatprep.mubr.bf16.mxu0 0
        %4510 = vmatmul.mubr.bf16.gmra.mrb[0].mxu0 %v4324
        %v4511 = vpop.f32.mrb[0].mxu0
        %v4512 = vadd.f32 0.0, %v4511
        %v4513 = vpop.f32.mrb[0].mxu0
        %v4514 = vpop.f32.mrb[0].mxu0
        %v4515 = vadd.f32 0.0, %v4514
        %v4516 = vpop.f32.mrb[0].mxu0
        %4517 = vmatprep.mubr.bf16.mxu0 0
        %4518 = vmatmul.mubr.bf16.gmra.mrb[0].mxu0 %v4325
        %v4519 = vpop.f32.mrb[0].mxu0
        %v4520 = vadd.f32 0.0, %v4519
        %v4521 = vpop.f32.mrb[0].mxu0
        %v4522 = vpop.f32.mrb[0].mxu0
        %v4523 = vadd.f32 0.0, %v4522
        %v4524 = vpop.f32.mrb[0].mxu0
        %4525 = vmatprep.mubr.bf16.mxu0 0
        %4526 = vmatmul.mubr.bf16.gmra.mrb[0].mxu0 %v4326
        %v4527 = vpop.f32.mrb[0].mxu0
        %v4528 = vadd.f32 0.0, %v4527
        %v4529 = vpop.f32.mrb[0].mxu0
        %v4530 = vpop.f32.mrb[0].mxu0
        %v4531 = vadd.f32 0.0, %v4530
        %v4532 = vpop.f32.mrb[0].mxu0
        %4533 = vmatprep.mubr.bf16.mxu0 0
        %4534 = vmatmul.mubr.bf16.gmra.mrb[0].mxu0 %v4327
        %v4535 = vpop.f32.mrb[0].mxu0
        %v4536 = vadd.f32 0.0, %v4535
        %v4537 = vpop.f32.mrb[0].mxu0
        %v4538 = vpop.f32.mrb[0].mxu0
        %v4539 = vadd.f32 0.0, %v4538
        %v4540 = vpop.f32.mrb[0].mxu0
        %4541 = vmatprep.mubr.bf16.mxu0 0
        %4542 = vmatmul.mubr.bf16.gmra.mrb[0].mxu0 %v4328
        %v4543 = vpop.f32.mrb[0].mxu0
        %v4544 = vadd.f32 0.0, %v4543
        %v4545 = vpop.f32.mrb[0].mxu0
        %v4546 = vpop.f32.mrb[0].mxu0
        %v4547 = vadd.f32 0.0, %v4546
        %v4548 = vpop.f32.mrb[0].mxu0
        %4549 = vmatprep.mubr.bf16.mxu0 0
        %4550 = vmatmul.mubr.bf16.gmra.mrb[0].mxu0 %v4329
        %v4551 = vpop.f32.mrb[0].mxu0
        %v4552 = vadd.f32 0.0, %v4551
        %v4553 = vpop.f32.mrb[0].mxu0
        %v4554 = vpop.f32.mrb[0].mxu0
        %v4555 = vadd.f32 0.0, %v4554
        %v4556 = vpop.f32.mrb[0].mxu0
        %4557 = vmatprep.mubr.bf16.mxu0 0
        %4558 = vmatmul.mubr.bf16.gmra.mrb[0].mxu0 %v4330
        %v4559 = vpop.f32.mrb[0].mxu0
        %v4560 = vadd.f32 0.0, %v4559
        %v4561 = vpop.f32.mrb[0].mxu0
        %v4562 = vpop.f32.mrb[0].mxu0
        %v4563 = vadd.f32 0.0, %v4562
        %v4564 = vpop.f32.mrb[0].mxu0
        %4565 = vmatprep.mubr.bf16.mxu0 0
        %4566 = vmatmul.mubr.bf16.gmra.mrb[0].mxu0 %v4331
        %v4567 = vpop.f32.mrb[0].mxu0
        %v4568 = vadd.f32 0.0, %v4567
        %v4569 = vpop.f32.mrb[0].mxu0
        %v4570 = vpop.f32.mrb[0].mxu0
        %v4571 = vadd.f32 0.0, %v4570
        %v4572 = vpop.f32.mrb[0].mxu0
        %4573 = vdwg.mxu0
        %v4574 = vadd.f32 %v4136, %v4432
        %v4575 = vadd.f32 %v4139, %v4435
        %v4576 = vadd.f32 %v4144, %v4440
        %v4577 = vadd.f32 %v4147, %v4443
        %v4578 = vadd.f32 %v4152, %v4448
        %v4579 = vadd.f32 %v4155, %v4451
        %v4580 = vadd.f32 %v4160, %v4456
        %v4581 = vadd.f32 %v4163, %v4459
        %v4582 = vadd.f32 %v4168, %v4464
        %v4583 = vadd.f32 %v4171, %v4467
        %v4584 = vadd.f32 %v4176, %v4472
        %v4585 = vadd.f32 %v4179, %v4475
        %v4586 = vadd.f32 %v4184, %v4480
        %v4587 = vadd.f32 %v4187, %v4483
        %v4588 = vadd.f32 %v4192, %v4488
        %v4589 = vadd.f32 %v4195, %v4491
        %v4590 = vadd.f32 %v4200, %v4496
        %v4591 = vadd.f32 %v4203, %v4499
        %v4592 = vadd.f32 %v4208, %v4504
        %v4593 = vadd.f32 %v4211, %v4507
        %v4594 = vadd.f32 %v4216, %v4512
        %v4595 = vadd.f32 %v4219, %v4515
        %v4596 = vadd.f32 %v4224, %v4520
        %v4597 = vadd.f32 %v4227, %v4523
        %v4598 = vadd.f32 %v4232, %v4528
        %v4599 = vadd.f32 %v4235, %v4531
        %v4600 = vadd.f32 %v4240, %v4536
        %v4601 = vadd.f32 %v4243, %v4539
        %v4602 = vadd.f32 %v4248, %v4544
        %v4603 = vadd.f32 %v4251, %v4547
        %v4604 = vadd.f32 %v4256, %v4552
        %v4605 = vadd.f32 %v4259, %v4555
        %v4606 = vadd.f32 %v4264, %v4560
        %v4607 = vadd.f32 %v4267, %v4563
        %v4608 = vadd.f32 %v4272, %v4568
        %v4609 = vadd.f32 %v4275, %v4571
        %v4610 = vld [vmem:[#allocation2 + $0x17] sm:$0xff]
        %v4611 = vld [vmem:[#allocation2 + $0x1f] sm:$0xff]
        %v4612 = vld [vmem:[#allocation2 + $0x27] sm:$0xff]
        %v4613 = vld [vmem:[#allocation2 + $0x2f] sm:$0xff]
        %v4614 = vld [vmem:[#allocation2 + $0x37] sm:$0xff]
        %v4615 = vld [vmem:[#allocation2 + $0x3f] sm:$0xff]
        %v4616 = vld [vmem:[#allocation2 + $0x47] sm:$0xff]
        %v4617 = vld [vmem:[#allocation2 + $0x4f] sm:$0xff]
        %v4618 = vld [vmem:[#allocation2 + $0x57] sm:$0xff]
        %v4619 = vld [vmem:[#allocation2 + $0x5f] sm:$0xff]
        %v4620 = vld [vmem:[#allocation2 + $0x67] sm:$0xff]
        %v4621 = vld [vmem:[#allocation2 + $0x6f] sm:$0xff]
        %v4622 = vld [vmem:[#allocation2 + $0x77] sm:$0xff]
        %v4623 = vld [vmem:[#allocation2 + $0x7f] sm:$0xff]
        %v4624 = vld [vmem:[#allocation2 + $0x87] sm:$0xff]
        %v4625 = vld [vmem:[#allocation2 + $0x8f] sm:$0xff]
        %v4626 = vld [vmem:[#allocation2 + $0x97] sm:$0xff]
        %v4627 = vld [vmem:[#allocation2 + $0x9f] sm:$0xff]
        %v4628 = vld [vmem:[#allocation2 + $0xa7] sm:$0xff]
        %v4629 = vld [vmem:[#allocation2 + $0xaf] sm:$0xff]
        %v4630 = vld [vmem:[#allocation2 + $0xb7] sm:$0xff]
        %v4631 = vld [vmem:[#allocation2 + $0xbf] sm:$0xff]
        %v4632 = vld [vmem:[#allocation2 + $0xc7] sm:$0xff]
        %v4633 = vld [vmem:[#allocation2 + $0xcf] sm:$0xff]
        %v4634 = vld [vmem:[#allocation2 + $0xd7] sm:$0xff]
        %v4635 = vld [vmem:[#allocation2 + $0xdf] sm:$0xff]
        %v4636 = vld [vmem:[#allocation2 + $0xe7] sm:$0xff]
        %v4637 = vld [vmem:[#allocation2 + $0xef] sm:$0xff]
        %v4638 = vld [vmem:[#allocation2 + $0xf7] sm:$0xff]
        %v4639 = vld [vmem:[#allocation2 + $0xff] sm:$0xff]
        %v4640 = vld [vmem:[#allocation2 + $0x107] sm:$0xff]
        %v4641 = vld [vmem:[#allocation2 + $0x10f] sm:$0xff]
        %v4642 = vld [vmem:[#allocation2 + $0x117] sm:$0xff]
        %v4643 = vld [vmem:[#allocation2 + $0x11f] sm:$0xff]
        %v4644 = vld [vmem:[#allocation2 + $0x127] sm:$0xff]
        %v4645 = vld [vmem:[#allocation2 + $0x12f] sm:$0xff]
        %v4646 = vpack.c.bf16 %v4611, %v4610
        %v4647 = vpack.c.bf16 %v4613, %v4612
        %v4648 = vpack.c.bf16 %v4615, %v4614
        %v4649 = vpack.c.bf16 %v4617, %v4616
        %v4650 = vpack.c.bf16 %v4619, %v4618
        %v4651 = vpack.c.bf16 %v4621, %v4620
        %v4652 = vpack.c.bf16 %v4623, %v4622
        %v4653 = vpack.c.bf16 %v4625, %v4624
        %v4654 = vpack.c.bf16 %v4627, %v4626
        %v4655 = vpack.c.bf16 %v4629, %v4628
        %v4656 = vpack.c.bf16 %v4631, %v4630
        %v4657 = vpack.c.bf16 %v4633, %v4632
        %v4658 = vpack.c.bf16 %v4635, %v4634
        %v4659 = vpack.c.bf16 %v4637, %v4636
        %v4660 = vpack.c.bf16 %v4639, %v4638
        %v4661 = vpack.c.bf16 %v4641, %v4640
        %v4662 = vpack.c.bf16 %v4643, %v4642
        %v4663 = vpack.c.bf16 %v4645, %v4644
        %s4664 = scalar_lea.vmem %s3, 192
        %v4665 = vld [vmem:[%s4664] sm:$0xf]
        %v4666 = vld [vmem:[%s4664 + $0x4] sm:$0xf]
        %v4667 = vld [vmem:[%s4664 + $0x8] sm:$0xf]
        %v4668 = vld [vmem:[%s4664 + $0xc] sm:$0xf]
        %v4669 = vld [vmem:[%s4664 + $0x10] sm:$0xf]
        %v4670 = vld [vmem:[%s4664 + $0x14] sm:$0xf]
        %v4671 = vld [vmem:[%s4664 + $0x18] sm:$0xf]
        %v4672 = vld [vmem:[%s4664 + $0x1c] sm:$0xf]
        %v4673 = vld [vmem:[%s4664 + $0x20] sm:$0xf]
        %v4674 = vld [vmem:[%s4664 + $0x24] sm:$0xf]
        %v4675 = vld [vmem:[%s4664 + $0x28] sm:$0xf]
        %v4676 = vld [vmem:[%s4664 + $0x2c] sm:$0xf]
        %v4677 = vld [vmem:[%s4664 + $0x30] sm:$0xf]
        %v4678 = vld [vmem:[%s4664 + $0x34] sm:$0xf]
        %v4679 = vld [vmem:[%s4664 + $0x38] sm:$0xf]
        %v4680 = vld [vmem:[%s4664 + $0x3c] sm:$0xf]
        %v4697 = vunpack.c.l.b16 %v4665
        %v4698 = vunpack.c.l.b16 %v4666
        %v4699 = vunpack.c.l.b16 %v4667
        %v4700 = vunpack.c.l.b16 %v4668
        %v4701 = vunpack.c.l.b16 %v4669
        %v4702 = vunpack.c.l.b16 %v4670
        %v4703 = vunpack.c.l.b16 %v4671
        %v4704 = vunpack.c.l.b16 %v4672
        %v4705 = vunpack.c.l.b16 %v4673
        %v4706 = vunpack.c.l.b16 %v4674
        %v4707 = vunpack.c.l.b16 %v4675
        %v4708 = vunpack.c.l.b16 %v4676
        %v4709 = vunpack.c.l.b16 %v4677
        %v4710 = vunpack.c.l.b16 %v4678
        %v4711 = vunpack.c.l.b16 %v4679
        %v4712 = vunpack.c.l.b16 %v4680
        %v4713 = vpack.c.b16 %v4698, %v4697
        %v4714 = vpack.c.b16 %v4700, %v4699
        %v4715 = vpack.c.b16 %v4702, %v4701
        %v4716 = vpack.c.b16 %v4704, %v4703
        %v4717 = vpack.c.b16 %v4706, %v4705
        %v4718 = vpack.c.b16 %v4708, %v4707
        %v4719 = vpack.c.b16 %v4710, %v4709
        %v4720 = vpack.c.b16 %v4712, %v4711
        %4729 = vmatprep.subr.bf16.mxu0 0
        %4730 = vmatpush1.bf16.msra.mxu0 %v4713
        %4731 = vmatprep.subr.bf16.mxu0 0
        %4732 = vmatpush1.bf16.msra.mxu0 %v4714
        %4733 = vmatprep.subr.bf16.mxu0 0
        %4734 = vmatpush1.bf16.msra.mxu0 %v4715
        %4735 = vmatprep.subr.bf16.mxu0 0
        %4736 = vmatpush1.bf16.msra.mxu0 %v4716
        %4737 = vmatprep.subr.bf16.mxu0 0
        %4738 = vmatpush1.bf16.msra.mxu0 %v4717
        %4739 = vmatprep.subr.bf16.mxu0 0
        %4740 = vmatpush1.bf16.msra.mxu0 %v4718
        %4741 = vmatprep.subr.bf16.mxu0 0
        %4742 = vmatpush1.bf16.msra.mxu0 %v4719
        %4743 = vmatprep.subr.bf16.mxu0 0
        %4744 = vmatpush1.bf16.msra.mxu0 %v4720
        %4745 = vmatprep.subr.bf16.mxu0 0
        %4746 = vmatpush1.bf16.msra.mxu0 0
        %4747 = vmatprep.subr.bf16.mxu0 0
        %4748 = vmatpush1.bf16.msra.mxu0 0
        %4749 = vmatprep.subr.bf16.mxu0 0
        %4750 = vmatpush1.bf16.msra.mxu0 0
        %4751 = vmatprep.subr.bf16.mxu0 0
        %4752 = vmatpush1.bf16.msra.mxu0 0
        %4753 = vmatprep.subr.bf16.mxu0 0
        %4754 = vmatpush1.bf16.msra.mxu0 0
        %4755 = vmatprep.subr.bf16.mxu0 0
        %4756 = vmatpush1.bf16.msra.mxu0 0
        %4757 = vmatprep.subr.bf16.mxu0 0
        %4758 = vmatpush1.bf16.msra.mxu0 0
        %4759 = vmatprep.subr.bf16.mxu0 0
        %4760 = vmatpush1.bf16.msra.mxu0 0
        %4761 = vmatprep.mubr.bf16.mxu0 0
        %4762 = vmatmul.mubr.bf16.gmra.mrb[0].mxu0 %v4646
        %v4763 = vpop.f32.mrb[0].mxu0
        %v4764 = vadd.f32 0.0, %v4763
        %v4765 = vpop.f32.mrb[0].mxu0
        %v4766 = vpop.f32.mrb[0].mxu0
        %v4767 = vadd.f32 0.0, %v4766
        %v4768 = vpop.f32.mrb[0].mxu0
        %4769 = vmatprep.mubr.bf16.mxu0 0
        %4770 = vmatmul.mubr.bf16.gmra.mrb[0].mxu0 %v4647
        %v4771 = vpop.f32.mrb[0].mxu0
        %v4772 = vadd.f32 0.0, %v4771
        %v4773 = vpop.f32.mrb[0].mxu0
        %v4774 = vpop.f32.mrb[0].mxu0
        %v4775 = vadd.f32 0.0, %v4774
        %v4776 = vpop.f32.mrb[0].mxu0
        %4777 = vmatprep.mubr.bf16.mxu0 0
        %4778 = vmatmul.mubr.bf16.gmra.mrb[0].mxu0 %v4648
        %v4779 = vpop.f32.mrb[0].mxu0
        %v4780 = vadd.f32 0.0, %v4779
        %v4781 = vpop.f32.mrb[0].mxu0
        %v4782 = vpop.f32.mrb[0].mxu0
        %v4783 = vadd.f32 0.0, %v4782
        %v4784 = vpop.f32.mrb[0].mxu0
        %4785 = vmatprep.mubr.bf16.mxu0 0
        %4786 = vmatmul.mubr.bf16.gmra.mrb[0].mxu0 %v4649
        %v4787 = vpop.f32.mrb[0].mxu0
        %v4788 = vadd.f32 0.0, %v4787
        %v4789 = vpop.f32.mrb[0].mxu0
        %v4790 = vpop.f32.mrb[0].mxu0
        %v4791 = vadd.f32 0.0, %v4790
        %v4792 = vpop.f32.mrb[0].mxu0
        %4793 = vmatprep.mubr.bf16.mxu0 0
        %4794 = vmatmul.mubr.bf16.gmra.mrb[0].mxu0 %v4650
        %v4795 = vpop.f32.mrb[0].mxu0
        %v4796 = vadd.f32 0.0, %v4795
        %v4797 = vpop.f32.mrb[0].mxu0
        %v4798 = vpop.f32.mrb[0].mxu0
        %v4799 = vadd.f32 0.0, %v4798
        %v4800 = vpop.f32.mrb[0].mxu0
        %4801 = vmatprep.mubr.bf16.mxu0 0
        %4802 = vmatmul.mubr.bf16.gmra.mrb[0].mxu0 %v4651
        %v4803 = vpop.f32.mrb[0].mxu0
        %v4804 = vadd.f32 0.0, %v4803
        %v4805 = vpop.f32.mrb[0].mxu0
        %v4806 = vpop.f32.mrb[0].mxu0
        %v4807 = vadd.f32 0.0, %v4806
        %v4808 = vpop.f32.mrb[0].mxu0
        %4809 = vmatprep.mubr.bf16.mxu0 0
        %4810 = vmatmul.mubr.bf16.gmra.mrb[0].mxu0 %v4652
        %v4811 = vpop.f32.mrb[0].mxu0
        %v4812 = vadd.f32 0.0, %v4811
        %v4813 = vpop.f32.mrb[0].mxu0
        %v4814 = vpop.f32.mrb[0].mxu0
        %v4815 = vadd.f32 0.0, %v4814
        %v4816 = vpop.f32.mrb[0].mxu0
        %4817 = vmatprep.mubr.bf16.mxu0 0
        %4818 = vmatmul.mubr.bf16.gmra.mrb[0].mxu0 %v4653
        %v4819 = vpop.f32.mrb[0].mxu0
        %v4820 = vadd.f32 0.0, %v4819
        %v4821 = vpop.f32.mrb[0].mxu0
        %v4822 = vpop.f32.mrb[0].mxu0
        %v4823 = vadd.f32 0.0, %v4822
        %v4824 = vpop.f32.mrb[0].mxu0
        %4825 = vmatprep.mubr.bf16.mxu0 0
        %4826 = vmatmul.mubr.bf16.gmra.mrb[0].mxu0 %v4654
        %v4827 = vpop.f32.mrb[0].mxu0
        %v4828 = vadd.f32 0.0, %v4827
        %v4829 = vpop.f32.mrb[0].mxu0
        %v4830 = vpop.f32.mrb[0].mxu0
        %v4831 = vadd.f32 0.0, %v4830
        %v4832 = vpop.f32.mrb[0].mxu0
        %4833 = vmatprep.mubr.bf16.mxu0 0
        %4834 = vmatmul.mubr.bf16.gmra.mrb[0].mxu0 %v4655
        %v4835 = vpop.f32.mrb[0].mxu0
        %v4836 = vadd.f32 0.0, %v4835
        %v4837 = vpop.f32.mrb[0].mxu0
        %v4838 = vpop.f32.mrb[0].mxu0
        %v4839 = vadd.f32 0.0, %v4838
        %v4840 = vpop.f32.mrb[0].mxu0
        %4841 = vmatprep.mubr.bf16.mxu0 0
        %4842 = vmatmul.mubr.bf16.gmra.mrb[0].mxu0 %v4656
        %v4843 = vpop.f32.mrb[0].mxu0
        %v4844 = vadd.f32 0.0, %v4843
        %v4845 = vpop.f32.mrb[0].mxu0
        %v4846 = vpop.f32.mrb[0].mxu0
        %v4847 = vadd.f32 0.0, %v4846
        %v4848 = vpop.f32.mrb[0].mxu0
        %4849 = vmatprep.mubr.bf16.mxu0 0
        %4850 = vmatmul.mubr.bf16.gmra.mrb[0].mxu0 %v4657
        %v4851 = vpop.f32.mrb[0].mxu0
        %v4852 = vadd.f32 0.0, %v4851
        %v4853 = vpop.f32.mrb[0].mxu0
        %v4854 = vpop.f32.mrb[0].mxu0
        %v4855 = vadd.f32 0.0, %v4854
        %v4856 = vpop.f32.mrb[0].mxu0
        %4857 = vmatprep.mubr.bf16.mxu0 0
        %4858 = vmatmul.mubr.bf16.gmra.mrb[0].mxu0 %v4658
        %v4859 = vpop.f32.mrb[0].mxu0
        %v4860 = vadd.f32 0.0, %v4859
        %v4861 = vpop.f32.mrb[0].mxu0
        %v4862 = vpop.f32.mrb[0].mxu0
        %v4863 = vadd.f32 0.0, %v4862
        %v4864 = vpop.f32.mrb[0].mxu0
        %4865 = vmatprep.mubr.bf16.mxu0 0
        %4866 = vmatmul.mubr.bf16.gmra.mrb[0].mxu0 %v4659
        %v4867 = vpop.f32.mrb[0].mxu0
        %v4868 = vadd.f32 0.0, %v4867
        %v4869 = vpop.f32.mrb[0].mxu0
        %v4870 = vpop.f32.mrb[0].mxu0
        %v4871 = vadd.f32 0.0, %v4870
        %v4872 = vpop.f32.mrb[0].mxu0
        %4873 = vmatprep.mubr.bf16.mxu0 0
        %4874 = vmatmul.mubr.bf16.gmra.mrb[0].mxu0 %v4660
        %v4875 = vpop.f32.mrb[0].mxu0
        %v4876 = vadd.f32 0.0, %v4875
        %v4877 = vpop.f32.mrb[0].mxu0
        %v4878 = vpop.f32.mrb[0].mxu0
        %v4879 = vadd.f32 0.0, %v4878
        %v4880 = vpop.f32.mrb[0].mxu0
        %4881 = vmatprep.mubr.bf16.mxu0 0
        %4882 = vmatmul.mubr.bf16.gmra.mrb[0].mxu0 %v4661
        %v4883 = vpop.f32.mrb[0].mxu0
        %v4884 = vadd.f32 0.0, %v4883
        %v4885 = vpop.f32.mrb[0].mxu0
        %v4886 = vpop.f32.mrb[0].mxu0
        %v4887 = vadd.f32 0.0, %v4886
        %v4888 = vpop.f32.mrb[0].mxu0
        %4889 = vmatprep.mubr.bf16.mxu0 0
        %4890 = vmatmul.mubr.bf16.gmra.mrb[0].mxu0 %v4662
        %v4891 = vpop.f32.mrb[0].mxu0
        %v4892 = vadd.f32 0.0, %v4891
        %v4893 = vpop.f32.mrb[0].mxu0
        %v4894 = vpop.f32.mrb[0].mxu0
        %v4895 = vadd.f32 0.0, %v4894
        %v4896 = vpop.f32.mrb[0].mxu0
        %4897 = vmatprep.mubr.bf16.mxu0 0
        %4898 = vmatmul.mubr.bf16.gmra.mrb[0].mxu0 %v4663
        %v4899 = vpop.f32.mrb[0].mxu0
        %v4900 = vadd.f32 0.0, %v4899
        %v4901 = vpop.f32.mrb[0].mxu0
        %v4902 = vpop.f32.mrb[0].mxu0
        %v4903 = vadd.f32 0.0, %v4902
        %v4904 = vpop.f32.mrb[0].mxu0
        %4905 = vdwg.mxu0
        %v4906 = vadd.f32 %v4574, %v4764
        %v4907 = vadd.f32 %v4575, %v4767
        %v4908 = vadd.f32 %v4576, %v4772
        %v4909 = vadd.f32 %v4577, %v4775
        %v4910 = vadd.f32 %v4578, %v4780
        %v4911 = vadd.f32 %v4579, %v4783
        %v4912 = vadd.f32 %v4580, %v4788
        %v4913 = vadd.f32 %v4581, %v4791
        %v4914 = vadd.f32 %v4582, %v4796
        %v4915 = vadd.f32 %v4583, %v4799
        %v4916 = vadd.f32 %v4584, %v4804
        %v4917 = vadd.f32 %v4585, %v4807
        %v4918 = vadd.f32 %v4586, %v4812
        %v4919 = vadd.f32 %v4587, %v4815
        %v4920 = vadd.f32 %v4588, %v4820
        %v4921 = vadd.f32 %v4589, %v4823
        %v4922 = vadd.f32 %v4590, %v4828
        %v4923 = vadd.f32 %v4591, %v4831
        %v4924 = vadd.f32 %v4592, %v4836
        %v4925 = vadd.f32 %v4593, %v4839
        %v4926 = vadd.f32 %v4594, %v4844
        %v4927 = vadd.f32 %v4595, %v4847
        %v4928 = vadd.f32 %v4596, %v4852
        %v4929 = vadd.f32 %v4597, %v4855
        %v4930 = vadd.f32 %v4598, %v4860
        %v4931 = vadd.f32 %v4599, %v4863
        %v4932 = vadd.f32 %v4600, %v4868
        %v4933 = vadd.f32 %v4601, %v4871
        %v4934 = vadd.f32 %v4602, %v4876
        %v4935 = vadd.f32 %v4603, %v4879
        %v4936 = vadd.f32 %v4604, %v4884
        %v4937 = vadd.f32 %v4605, %v4887
        %v4938 = vadd.f32 %v4606, %v4892
        %v4939 = vadd.f32 %v4607, %v4895
        %v4940 = vadd.f32 %v4608, %v4900
        %v4941 = vadd.f32 %v4609, %v4903
        %v4942 = vld [vmem:[#allocation2 + $0x18] sm:$0xff]
        %v4943 = vld [vmem:[#allocation2 + $0x20] sm:$0xff]
        %v4944 = vld [vmem:[#allocation2 + $0x28] sm:$0xff]
        %v4945 = vld [vmem:[#allocation2 + $0x30] sm:$0xff]
        %v4946 = vld [vmem:[#allocation2 + $0x38] sm:$0xff]
        %v4947 = vld [vmem:[#allocation2 + $0x40] sm:$0xff]
        %v4948 = vld [vmem:[#allocation2 + $0x48] sm:$0xff]
        %v4949 = vld [vmem:[#allocation2 + $0x50] sm:$0xff]
        %v4950 = vld [vmem:[#allocation2 + $0x58] sm:$0xff]
        %v4951 = vld [vmem:[#allocation2 + $0x60] sm:$0xff]
        %v4952 = vld [vmem:[#allocation2 + $0x68] sm:$0xff]
        %v4953 = vld [vmem:[#allocation2 + $0x70] sm:$0xff]
        %v4954 = vld [vmem:[#allocation2 + $0x78] sm:$0xff]
        %v4955 = vld [vmem:[#allocation2 + $0x80] sm:$0xff]
        %v4956 = vld [vmem:[#allocation2 + $0x88] sm:$0xff]
        %v4957 = vld [vmem:[#allocation2 + $0x90] sm:$0xff]
        %v4958 = vld [vmem:[#allocation2 + $0x98] sm:$0xff]
        %v4959 = vld [vmem:[#allocation2 + $0xa0] sm:$0xff]
        %v4960 = vld [vmem:[#allocation2 + $0xa8] sm:$0xff]
        %v4961 = vld [vmem:[#allocation2 + $0xb0] sm:$0xff]
        %v4962 = vld [vmem:[#allocation2 + $0xb8] sm:$0xff]
        %v4963 = vld [vmem:[#allocation2 + $0xc0] sm:$0xff]
        %v4964 = vld [vmem:[#allocation2 + $0xc8] sm:$0xff]
        %v4965 = vld [vmem:[#allocation2 + $0xd0] sm:$0xff]
        %v4966 = vld [vmem:[#allocation2 + $0xd8] sm:$0xff]
        %v4967 = vld [vmem:[#allocation2 + $0xe0] sm:$0xff]
        %v4968 = vld [vmem:[#allocation2 + $0xe8] sm:$0xff]
        %v4969 = vld [vmem:[#allocation2 + $0xf0] sm:$0xff]
        %v4970 = vld [vmem:[#allocation2 + $0xf8] sm:$0xff]
        %v4971 = vld [vmem:[#allocation2 + $0x100] sm:$0xff]
        %v4972 = vld [vmem:[#allocation2 + $0x108] sm:$0xff]
        %v4973 = vld [vmem:[#allocation2 + $0x110] sm:$0xff]
        %v4974 = vld [vmem:[#allocation2 + $0x118] sm:$0xff]
        %v4975 = vld [vmem:[#allocation2 + $0x120] sm:$0xff]
        %v4976 = vld [vmem:[#allocation2 + $0x128] sm:$0xff]
        %v4977 = vld [vmem:[#allocation2 + $0x130] sm:$0xff]
        %v4978 = vpack.c.bf16 %v4943, %v4942
        %v4979 = vpack.c.bf16 %v4945, %v4944
        %v4980 = vpack.c.bf16 %v4947, %v4946
        %v4981 = vpack.c.bf16 %v4949, %v4948
        %v4982 = vpack.c.bf16 %v4951, %v4950
        %v4983 = vpack.c.bf16 %v4953, %v4952
        %v4984 = vpack.c.bf16 %v4955, %v4954
        %v4985 = vpack.c.bf16 %v4957, %v4956
        %v4986 = vpack.c.bf16 %v4959, %v4958
        %v4987 = vpack.c.bf16 %v4961, %v4960
        %v4988 = vpack.c.bf16 %v4963, %v4962
        %v4989 = vpack.c.bf16 %v4965, %v4964
        %v4990 = vpack.c.bf16 %v4967, %v4966
        %v4991 = vpack.c.bf16 %v4969, %v4968
        %v4992 = vpack.c.bf16 %v4971, %v4970
        %v4993 = vpack.c.bf16 %v4973, %v4972
        %v4994 = vpack.c.bf16 %v4975, %v4974
        %v4995 = vpack.c.bf16 %v4977, %v4976
        %s4996 = scalar_lea.vmem %s3, 256
        %v4997 = vld [vmem:[%s4996] sm:$0xf]
        %v4998 = vld [vmem:[%s4996 + $0x4] sm:$0xf]
        %v4999 = vld [vmem:[%s4996 + $0x8] sm:$0xf]
        %v5000 = vld [vmem:[%s4996 + $0xc] sm:$0xf]
        %v5001 = vld [vmem:[%s4996 + $0x10] sm:$0xf]
        %v5002 = vld [vmem:[%s4996 + $0x14] sm:$0xf]
        %v5003 = vld [vmem:[%s4996 + $0x18] sm:$0xf]
        %v5004 = vld [vmem:[%s4996 + $0x1c] sm:$0xf]
        %v5005 = vld [vmem:[%s4996 + $0x20] sm:$0xf]
        %v5006 = vld [vmem:[%s4996 + $0x24] sm:$0xf]
        %v5007 = vld [vmem:[%s4996 + $0x28] sm:$0xf]
        %v5008 = vld [vmem:[%s4996 + $0x2c] sm:$0xf]
        %v5009 = vld [vmem:[%s4996 + $0x30] sm:$0xf]
        %v5010 = vld [vmem:[%s4996 + $0x34] sm:$0xf]
        %v5011 = vld [vmem:[%s4996 + $0x38] sm:$0xf]
        %v5012 = vld [vmem:[%s4996 + $0x3c] sm:$0xf]
        %v5029 = vunpack.c.l.b16 %v4997
        %v5030 = vunpack.c.l.b16 %v4998
        %v5031 = vunpack.c.l.b16 %v4999
        %v5032 = vunpack.c.l.b16 %v5000
        %v5033 = vunpack.c.l.b16 %v5001
        %v5034 = vunpack.c.l.b16 %v5002
        %v5035 = vunpack.c.l.b16 %v5003
        %v5036 = vunpack.c.l.b16 %v5004
        %v5037 = vunpack.c.l.b16 %v5005
        %v5038 = vunpack.c.l.b16 %v5006
        %v5039 = vunpack.c.l.b16 %v5007
        %v5040 = vunpack.c.l.b16 %v5008
        %v5041 = vunpack.c.l.b16 %v5009
        %v5042 = vunpack.c.l.b16 %v5010
        %v5043 = vunpack.c.l.b16 %v5011
        %v5044 = vunpack.c.l.b16 %v5012
        %v5045 = vpack.c.b16 %v5030, %v5029
        %v5046 = vpack.c.b16 %v5032, %v5031
        %v5047 = vpack.c.b16 %v5034, %v5033
        %v5048 = vpack.c.b16 %v5036, %v5035
        %v5049 = vpack.c.b16 %v5038, %v5037
        %v5050 = vpack.c.b16 %v5040, %v5039
        %v5051 = vpack.c.b16 %v5042, %v5041
        %v5052 = vpack.c.b16 %v5044, %v5043
        %5061 = vmatprep.subr.bf16.mxu0 0
        %5062 = vmatpush1.bf16.msra.mxu0 %v5045
        %5063 = vmatprep.subr.bf16.mxu0 0
        %5064 = vmatpush1.bf16.msra.mxu0 %v5046
        %5065 = vmatprep.subr.bf16.mxu0 0
        %5066 = vmatpush1.bf16.msra.mxu0 %v5047
        %5067 = vmatprep.subr.bf16.mxu0 0
        %5068 = vmatpush1.bf16.msra.mxu0 %v5048
        %5069 = vmatprep.subr.bf16.mxu0 0
        %5070 = vmatpush1.bf16.msra.mxu0 %v5049
        %5071 = vmatprep.subr.bf16.mxu0 0
        %5072 = vmatpush1.bf16.msra.mxu0 %v5050
        %5073 = vmatprep.subr.bf16.mxu0 0
        %5074 = vmatpush1.bf16.msra.mxu0 %v5051
        %5075 = vmatprep.subr.bf16.mxu0 0
        %5076 = vmatpush1.bf16.msra.mxu0 %v5052
        %5077 = vmatprep.subr.bf16.mxu0 0
        %5078 = vmatpush1.bf16.msra.mxu0 0
        %5079 = vmatprep.subr.bf16.mxu0 0
        %5080 = vmatpush1.bf16.msra.mxu0 0
        %5081 = vmatprep.subr.bf16.mxu0 0
        %5082 = vmatpush1.bf16.msra.mxu0 0
        %5083 = vmatprep.subr.bf16.mxu0 0
        %5084 = vmatpush1.bf16.msra.mxu0 0
        %5085 = vmatprep.subr.bf16.mxu0 0
        %5086 = vmatpush1.bf16.msra.mxu0 0
        %5087 = vmatprep.subr.bf16.mxu0 0
        %5088 = vmatpush1.bf16.msra.mxu0 0
        %5089 = vmatprep.subr.bf16.mxu0 0
        %5090 = vmatpush1.bf16.msra.mxu0 0
        %5091 = vmatprep.subr.bf16.mxu0 0
        %5092 = vmatpush1.bf16.msra.mxu0 0
        %5093 = vmatprep.mubr.bf16.mxu0 0
        %5094 = vmatmul.mubr.bf16.gmra.mrb[0].mxu0 %v4978
        %v5095 = vpop.f32.mrb[0].mxu0
        %v5096 = vadd.f32 0.0, %v5095
        %v5097 = vpop.f32.mrb[0].mxu0
        %v5098 = vpop.f32.mrb[0].mxu0
        %v5099 = vadd.f32 0.0, %v5098
        %v5100 = vpop.f32.mrb[0].mxu0
        %5101 = vmatprep.mubr.bf16.mxu0 0
        %5102 = vmatmul.mubr.bf16.gmra.mrb[0].mxu0 %v4979
        %v5103 = vpop.f32.mrb[0].mxu0
        %v5104 = vadd.f32 0.0, %v5103
        %v5105 = vpop.f32.mrb[0].mxu0
        %v5106 = vpop.f32.mrb[0].mxu0
        %v5107 = vadd.f32 0.0, %v5106
        %v5108 = vpop.f32.mrb[0].mxu0
        %5109 = vmatprep.mubr.bf16.mxu0 0
        %5110 = vmatmul.mubr.bf16.gmra.mrb[0].mxu0 %v4980
        %v5111 = vpop.f32.mrb[0].mxu0
        %v5112 = vadd.f32 0.0, %v5111
        %v5113 = vpop.f32.mrb[0].mxu0
        %v5114 = vpop.f32.mrb[0].mxu0
        %v5115 = vadd.f32 0.0, %v5114
        %v5116 = vpop.f32.mrb[0].mxu0
        %5117 = vmatprep.mubr.bf16.mxu0 0
        %5118 = vmatmul.mubr.bf16.gmra.mrb[0].mxu0 %v4981
        %v5119 = vpop.f32.mrb[0].mxu0
        %v5120 = vadd.f32 0.0, %v5119
        %v5121 = vpop.f32.mrb[0].mxu0
        %v5122 = vpop.f32.mrb[0].mxu0
        %v5123 = vadd.f32 0.0, %v5122
        %v5124 = vpop.f32.mrb[0].mxu0
        %5125 = vmatprep.mubr.bf16.mxu0 0
        %5126 = vmatmul.mubr.bf16.gmra.mrb[0].mxu0 %v4982
        %v5127 = vpop.f32.mrb[0].mxu0
        %v5128 = vadd.f32 0.0, %v5127
        %v5129 = vpop.f32.mrb[0].mxu0
        %v5130 = vpop.f32.mrb[0].mxu0
        %v5131 = vadd.f32 0.0, %v5130
        %v5132 = vpop.f32.mrb[0].mxu0
        %5133 = vmatprep.mubr.bf16.mxu0 0
        %5134 = vmatmul.mubr.bf16.gmra.mrb[0].mxu0 %v4983
        %v5135 = vpop.f32.mrb[0].mxu0
        %v5136 = vadd.f32 0.0, %v5135
        %v5137 = vpop.f32.mrb[0].mxu0
        %v5138 = vpop.f32.mrb[0].mxu0
        %v5139 = vadd.f32 0.0, %v5138
        %v5140 = vpop.f32.mrb[0].mxu0
        %5141 = vmatprep.mubr.bf16.mxu0 0
        %5142 = vmatmul.mubr.bf16.gmra.mrb[0].mxu0 %v4984
        %v5143 = vpop.f32.mrb[0].mxu0
        %v5144 = vadd.f32 0.0, %v5143
        %v5145 = vpop.f32.mrb[0].mxu0
        %v5146 = vpop.f32.mrb[0].mxu0
        %v5147 = vadd.f32 0.0, %v5146
        %v5148 = vpop.f32.mrb[0].mxu0
        %5149 = vmatprep.mubr.bf16.mxu0 0
        %5150 = vmatmul.mubr.bf16.gmra.mrb[0].mxu0 %v4985
        %v5151 = vpop.f32.mrb[0].mxu0
        %v5152 = vadd.f32 0.0, %v5151
        %v5153 = vpop.f32.mrb[0].mxu0
        %v5154 = vpop.f32.mrb[0].mxu0
        %v5155 = vadd.f32 0.0, %v5154
        %v5156 = vpop.f32.mrb[0].mxu0
        %5157 = vmatprep.mubr.bf16.mxu0 0
        %5158 = vmatmul.mubr.bf16.gmra.mrb[0].mxu0 %v4986
        %v5159 = vpop.f32.mrb[0].mxu0
        %v5160 = vadd.f32 0.0, %v5159
        %v5161 = vpop.f32.mrb[0].mxu0
        %v5162 = vpop.f32.mrb[0].mxu0
        %v5163 = vadd.f32 0.0, %v5162
        %v5164 = vpop.f32.mrb[0].mxu0
        %5165 = vmatprep.mubr.bf16.mxu0 0
        %5166 = vmatmul.mubr.bf16.gmra.mrb[0].mxu0 %v4987
        %v5167 = vpop.f32.mrb[0].mxu0
        %v5168 = vadd.f32 0.0, %v5167
        %v5169 = vpop.f32.mrb[0].mxu0
        %v5170 = vpop.f32.mrb[0].mxu0
        %v5171 = vadd.f32 0.0, %v5170
        %v5172 = vpop.f32.mrb[0].mxu0
        %5173 = vmatprep.mubr.bf16.mxu0 0
        %5174 = vmatmul.mubr.bf16.gmra.mrb[0].mxu0 %v4988
        %v5175 = vpop.f32.mrb[0].mxu0
        %v5176 = vadd.f32 0.0, %v5175
        %v5177 = vpop.f32.mrb[0].mxu0
        %v5178 = vpop.f32.mrb[0].mxu0
        %v5179 = vadd.f32 0.0, %v5178
        %v5180 = vpop.f32.mrb[0].mxu0
        %5181 = vmatprep.mubr.bf16.mxu0 0
        %5182 = vmatmul.mubr.bf16.gmra.mrb[0].mxu0 %v4989
        %v5183 = vpop.f32.mrb[0].mxu0
        %v5184 = vadd.f32 0.0, %v5183
        %v5185 = vpop.f32.mrb[0].mxu0
        %v5186 = vpop.f32.mrb[0].mxu0
        %v5187 = vadd.f32 0.0, %v5186
        %v5188 = vpop.f32.mrb[0].mxu0
        %5189 = vmatprep.mubr.bf16.mxu0 0
        %5190 = vmatmul.mubr.bf16.gmra.mrb[0].mxu0 %v4990
        %v5191 = vpop.f32.mrb[0].mxu0
        %v5192 = vadd.f32 0.0, %v5191
        %v5193 = vpop.f32.mrb[0].mxu0
        %v5194 = vpop.f32.mrb[0].mxu0
        %v5195 = vadd.f32 0.0, %v5194
        %v5196 = vpop.f32.mrb[0].mxu0
        %5197 = vmatprep.mubr.bf16.mxu0 0
        %5198 = vmatmul.mubr.bf16.gmra.mrb[0].mxu0 %v4991
        %v5199 = vpop.f32.mrb[0].mxu0
        %v5200 = vadd.f32 0.0, %v5199
        %v5201 = vpop.f32.mrb[0].mxu0
        %v5202 = vpop.f32.mrb[0].mxu0
        %v5203 = vadd.f32 0.0, %v5202
        %v5204 = vpop.f32.mrb[0].mxu0
        %5205 = vmatprep.mubr.bf16.mxu0 0
        %5206 = vmatmul.mubr.bf16.gmra.mrb[0].mxu0 %v4992
        %v5207 = vpop.f32.mrb[0].mxu0
        %v5208 = vadd.f32 0.0, %v5207
        %v5209 = vpop.f32.mrb[0].mxu0
        %v5210 = vpop.f32.mrb[0].mxu0
        %v5211 = vadd.f32 0.0, %v5210
        %v5212 = vpop.f32.mrb[0].mxu0
        %5213 = vmatprep.mubr.bf16.mxu0 0
        %5214 = vmatmul.mubr.bf16.gmra.mrb[0].mxu0 %v4993
        %v5215 = vpop.f32.mrb[0].mxu0
        %v5216 = vadd.f32 0.0, %v5215
        %v5217 = vpop.f32.mrb[0].mxu0
        %v5218 = vpop.f32.mrb[0].mxu0
        %v5219 = vadd.f32 0.0, %v5218
        %v5220 = vpop.f32.mrb[0].mxu0
        %5221 = vmatprep.mubr.bf16.mxu0 0
        %5222 = vmatmul.mubr.bf16.gmra.mrb[0].mxu0 %v4994
        %v5223 = vpop.f32.mrb[0].mxu0
        %v5224 = vadd.f32 0.0, %v5223
        %v5225 = vpop.f32.mrb[0].mxu0
        %v5226 = vpop.f32.mrb[0].mxu0
        %v5227 = vadd.f32 0.0, %v5226
        %v5228 = vpop.f32.mrb[0].mxu0
        %5229 = vmatprep.mubr.bf16.mxu0 0
        %5230 = vmatmul.mubr.bf16.gmra.mrb[0].mxu0 %v4995
        %v5231 = vpop.f32.mrb[0].mxu0
        %v5232 = vadd.f32 0.0, %v5231
        %v5233 = vpop.f32.mrb[0].mxu0
        %v5234 = vpop.f32.mrb[0].mxu0
        %v5235 = vadd.f32 0.0, %v5234
        %v5236 = vpop.f32.mrb[0].mxu0
        %5237 = vdwg.mxu0
        %v5238 = vadd.f32 %v4906, %v5096
        %v5239 = vadd.f32 %v4907, %v5099
        %v5240 = vadd.f32 %v4908, %v5104
        %v5241 = vadd.f32 %v4909, %v5107
        %v5242 = vadd.f32 %v4910, %v5112
        %v5243 = vadd.f32 %v4911, %v5115
        %v5244 = vadd.f32 %v4912, %v5120
        %v5245 = vadd.f32 %v4913, %v5123
        %v5246 = vadd.f32 %v4914, %v5128
        %v5247 = vadd.f32 %v4915, %v5131
        %v5248 = vadd.f32 %v4916, %v5136
        %v5249 = vadd.f32 %v4917, %v5139
        %v5250 = vadd.f32 %v4918, %v5144
        %v5251 = vadd.f32 %v4919, %v5147
        %v5252 = vadd.f32 %v4920, %v5152
        %v5253 = vadd.f32 %v4921, %v5155
        %v5254 = vadd.f32 %v4922, %v5160
        %v5255 = vadd.f32 %v4923, %v5163
        %v5256 = vadd.f32 %v4924, %v5168
        %v5257 = vadd.f32 %v4925, %v5171
        %v5258 = vadd.f32 %v4926, %v5176
        %v5259 = vadd.f32 %v4927, %v5179
        %v5260 = vadd.f32 %v4928, %v5184
        %v5261 = vadd.f32 %v4929, %v5187
        %v5262 = vadd.f32 %v4930, %v5192
        %v5263 = vadd.f32 %v4931, %v5195
        %v5264 = vadd.f32 %v4932, %v5200
        %v5265 = vadd.f32 %v4933, %v5203
        %v5266 = vadd.f32 %v4934, %v5208
        %v5267 = vadd.f32 %v4935, %v5211
        %v5268 = vadd.f32 %v4936, %v5216
        %v5269 = vadd.f32 %v4937, %v5219
        %v5270 = vadd.f32 %v4938, %v5224
        %v5271 = vadd.f32 %v4939, %v5227
        %v5272 = vadd.f32 %v4940, %v5232
        %v5273 = vadd.f32 %v4941, %v5235
        %v5274 = vld [vmem:[#allocation2 + $0x19] sm:$0xff]
        %v5275 = vld [vmem:[#allocation2 + $0x21] sm:$0xff]
        %v5276 = vld [vmem:[#allocation2 + $0x29] sm:$0xff]
        %v5277 = vld [vmem:[#allocation2 + $0x31] sm:$0xff]
        %v5278 = vld [vmem:[#allocation2 + $0x39] sm:$0xff]
        %v5279 = vld [vmem:[#allocation2 + $0x41] sm:$0xff]
        %v5280 = vld [vmem:[#allocation2 + $0x49] sm:$0xff]
        %v5281 = vld [vmem:[#allocation2 + $0x51] sm:$0xff]
        %v5282 = vld [vmem:[#allocation2 + $0x59] sm:$0xff]
        %v5283 = vld [vmem:[#allocation2 + $0x61] sm:$0xff]
        %v5284 = vld [vmem:[#allocation2 + $0x69] sm:$0xff]
        %v5285 = vld [vmem:[#allocation2 + $0x71] sm:$0xff]
        %v5286 = vld [vmem:[#allocation2 + $0x79] sm:$0xff]
        %v5287 = vld [vmem:[#allocation2 + $0x81] sm:$0xff]
        %v5288 = vld [vmem:[#allocation2 + $0x89] sm:$0xff]
        %v5289 = vld [vmem:[#allocation2 + $0x91] sm:$0xff]
        %v5290 = vld [vmem:[#allocation2 + $0x99] sm:$0xff]
        %v5291 = vld [vmem:[#allocation2 + $0xa1] sm:$0xff]
        %v5292 = vld [vmem:[#allocation2 + $0xa9] sm:$0xff]
        %v5293 = vld [vmem:[#allocation2 + $0xb1] sm:$0xff]
        %v5294 = vld [vmem:[#allocation2 + $0xb9] sm:$0xff]
        %v5295 = vld [vmem:[#allocation2 + $0xc1] sm:$0xff]
        %v5296 = vld [vmem:[#allocation2 + $0xc9] sm:$0xff]
        %v5297 = vld [vmem:[#allocation2 + $0xd1] sm:$0xff]
        %v5298 = vld [vmem:[#allocation2 + $0xd9] sm:$0xff]
        %v5299 = vld [vmem:[#allocation2 + $0xe1] sm:$0xff]
        %v5300 = vld [vmem:[#allocation2 + $0xe9] sm:$0xff]
        %v5301 = vld [vmem:[#allocation2 + $0xf1] sm:$0xff]
        %v5302 = vld [vmem:[#allocation2 + $0xf9] sm:$0xff]
        %v5303 = vld [vmem:[#allocation2 + $0x101] sm:$0xff]
        %v5304 = vld [vmem:[#allocation2 + $0x109] sm:$0xff]
        %v5305 = vld [vmem:[#allocation2 + $0x111] sm:$0xff]
        %v5306 = vld [vmem:[#allocation2 + $0x119] sm:$0xff]
        %v5307 = vld [vmem:[#allocation2 + $0x121] sm:$0xff]
        %v5308 = vld [vmem:[#allocation2 + $0x129] sm:$0xff]
        %v5309 = vld [vmem:[#allocation2 + $0x131] sm:$0xff]
        %v5310 = vpack.c.bf16 %v5275, %v5274
        %v5311 = vpack.c.bf16 %v5277, %v5276
        %v5312 = vpack.c.bf16 %v5279, %v5278
        %v5313 = vpack.c.bf16 %v5281, %v5280
        %v5314 = vpack.c.bf16 %v5283, %v5282
        %v5315 = vpack.c.bf16 %v5285, %v5284
        %v5316 = vpack.c.bf16 %v5287, %v5286
        %v5317 = vpack.c.bf16 %v5289, %v5288
        %v5318 = vpack.c.bf16 %v5291, %v5290
        %v5319 = vpack.c.bf16 %v5293, %v5292
        %v5320 = vpack.c.bf16 %v5295, %v5294
        %v5321 = vpack.c.bf16 %v5297, %v5296
        %v5322 = vpack.c.bf16 %v5299, %v5298
        %v5323 = vpack.c.bf16 %v5301, %v5300
        %v5324 = vpack.c.bf16 %v5303, %v5302
        %v5325 = vpack.c.bf16 %v5305, %v5304
        %v5326 = vpack.c.bf16 %v5307, %v5306
        %v5327 = vpack.c.bf16 %v5309, %v5308
        %s5328 = scalar_lea.vmem %s3, 320
        %v5329 = vld [vmem:[%s5328] sm:$0xf]
        %v5330 = vld [vmem:[%s5328 + $0x4] sm:$0xf]
        %v5331 = vld [vmem:[%s5328 + $0x8] sm:$0xf]
        %v5332 = vld [vmem:[%s5328 + $0xc] sm:$0xf]
        %v5333 = vld [vmem:[%s5328 + $0x10] sm:$0xf]
        %v5334 = vld [vmem:[%s5328 + $0x14] sm:$0xf]
        %v5335 = vld [vmem:[%s5328 + $0x18] sm:$0xf]
        %v5336 = vld [vmem:[%s5328 + $0x1c] sm:$0xf]
        %v5337 = vld [vmem:[%s5328 + $0x20] sm:$0xf]
        %v5338 = vld [vmem:[%s5328 + $0x24] sm:$0xf]
        %v5339 = vld [vmem:[%s5328 + $0x28] sm:$0xf]
        %v5340 = vld [vmem:[%s5328 + $0x2c] sm:$0xf]
        %v5341 = vld [vmem:[%s5328 + $0x30] sm:$0xf]
        %v5342 = vld [vmem:[%s5328 + $0x34] sm:$0xf]
        %v5343 = vld [vmem:[%s5328 + $0x38] sm:$0xf]
        %v5344 = vld [vmem:[%s5328 + $0x3c] sm:$0xf]
        %v5361 = vunpack.c.l.b16 %v5329
        %v5362 = vunpack.c.l.b16 %v5330
        %v5363 = vunpack.c.l.b16 %v5331
        %v5364 = vunpack.c.l.b16 %v5332
        %v5365 = vunpack.c.l.b16 %v5333
        %v5366 = vunpack.c.l.b16 %v5334
        %v5367 = vunpack.c.l.b16 %v5335
        %v5368 = vunpack.c.l.b16 %v5336
        %v5369 = vunpack.c.l.b16 %v5337
        %v5370 = vunpack.c.l.b16 %v5338
        %v5371 = vunpack.c.l.b16 %v5339
        %v5372 = vunpack.c.l.b16 %v5340
        %v5373 = vunpack.c.l.b16 %v5341
        %v5374 = vunpack.c.l.b16 %v5342
        %v5375 = vunpack.c.l.b16 %v5343
        %v5376 = vunpack.c.l.b16 %v5344
        %v5377 = vpack.c.b16 %v5362, %v5361
        %v5378 = vpack.c.b16 %v5364, %v5363
        %v5379 = vpack.c.b16 %v5366, %v5365
        %v5380 = vpack.c.b16 %v5368, %v5367
        %v5381 = vpack.c.b16 %v5370, %v5369
        %v5382 = vpack.c.b16 %v5372, %v5371
        %v5383 = vpack.c.b16 %v5374, %v5373
        %v5384 = vpack.c.b16 %v5376, %v5375
        %5393 = vmatprep.subr.bf16.mxu0 0
        %5394 = vmatpush1.bf16.msra.mxu0 %v5377
        %5395 = vmatprep.subr.bf16.mxu0 0
        %5396 = vmatpush1.bf16.msra.mxu0 %v5378
        %5397 = vmatprep.subr.bf16.mxu0 0
        %5398 = vmatpush1.bf16.msra.mxu0 %v5379
        %5399 = vmatprep.subr.bf16.mxu0 0
        %5400 = vmatpush1.bf16.msra.mxu0 %v5380
        %5401 = vmatprep.subr.bf16.mxu0 0
        %5402 = vmatpush1.bf16.msra.mxu0 %v5381
        %5403 = vmatprep.subr.bf16.mxu0 0
        %5404 = vmatpush1.bf16.msra.mxu0 %v5382
        %5405 = vmatprep.subr.bf16.mxu0 0
        %5406 = vmatpush1.bf16.msra.mxu0 %v5383
        %5407 = vmatprep.subr.bf16.mxu0 0
        %5408 = vmatpush1.bf16.msra.mxu0 %v5384
        %5409 = vmatprep.subr.bf16.mxu0 0
        %5410 = vmatpush1.bf16.msra.mxu0 0
        %5411 = vmatprep.subr.bf16.mxu0 0
        %5412 = vmatpush1.bf16.msra.mxu0 0
        %5413 = vmatprep.subr.bf16.mxu0 0
        %5414 = vmatpush1.bf16.msra.mxu0 0
        %5415 = vmatprep.subr.bf16.mxu0 0
        %5416 = vmatpush1.bf16.msra.mxu0 0
        %5417 = vmatprep.subr.bf16.mxu0 0
        %5418 = vmatpush1.bf16.msra.mxu0 0
        %5419 = vmatprep.subr.bf16.mxu0 0
        %5420 = vmatpush1.bf16.msra.mxu0 0
        %5421 = vmatprep.subr.bf16.mxu0 0
        %5422 = vmatpush1.bf16.msra.mxu0 0
        %5423 = vmatprep.subr.bf16.mxu0 0
        %5424 = vmatpush1.bf16.msra.mxu0 0
        %5425 = vmatprep.mubr.bf16.mxu0 0
        %5426 = vmatmul.mubr.bf16.gmra.mrb[0].mxu0 %v5310
        %v5427 = vpop.f32.mrb[0].mxu0
        %v5428 = vadd.f32 0.0, %v5427
        %v5429 = vpop.f32.mrb[0].mxu0
        %v5430 = vpop.f32.mrb[0].mxu0
        %v5431 = vadd.f32 0.0, %v5430
        %v5432 = vpop.f32.mrb[0].mxu0
        %5433 = vmatprep.mubr.bf16.mxu0 0
        %5434 = vmatmul.mubr.bf16.gmra.mrb[0].mxu0 %v5311
        %v5435 = vpop.f32.mrb[0].mxu0
        %v5436 = vadd.f32 0.0, %v5435
        %v5437 = vpop.f32.mrb[0].mxu0
        %v5438 = vpop.f32.mrb[0].mxu0
        %v5439 = vadd.f32 0.0, %v5438
        %v5440 = vpop.f32.mrb[0].mxu0
        %5441 = vmatprep.mubr.bf16.mxu0 0
        %5442 = vmatmul.mubr.bf16.gmra.mrb[0].mxu0 %v5312
        %v5443 = vpop.f32.mrb[0].mxu0
        %v5444 = vadd.f32 0.0, %v5443
        %v5445 = vpop.f32.mrb[0].mxu0
        %v5446 = vpop.f32.mrb[0].mxu0
        %v5447 = vadd.f32 0.0, %v5446
        %v5448 = vpop.f32.mrb[0].mxu0
        %5449 = vmatprep.mubr.bf16.mxu0 0
        %5450 = vmatmul.mubr.bf16.gmra.mrb[0].mxu0 %v5313
        %v5451 = vpop.f32.mrb[0].mxu0
        %v5452 = vadd.f32 0.0, %v5451
        %v5453 = vpop.f32.mrb[0].mxu0
        %v5454 = vpop.f32.mrb[0].mxu0
        %v5455 = vadd.f32 0.0, %v5454
        %v5456 = vpop.f32.mrb[0].mxu0
        %5457 = vmatprep.mubr.bf16.mxu0 0
        %5458 = vmatmul.mubr.bf16.gmra.mrb[0].mxu0 %v5314
        %v5459 = vpop.f32.mrb[0].mxu0
        %v5460 = vadd.f32 0.0, %v5459
        %v5461 = vpop.f32.mrb[0].mxu0
        %v5462 = vpop.f32.mrb[0].mxu0
        %v5463 = vadd.f32 0.0, %v5462
        %v5464 = vpop.f32.mrb[0].mxu0
        %5465 = vmatprep.mubr.bf16.mxu0 0
        %5466 = vmatmul.mubr.bf16.gmra.mrb[0].mxu0 %v5315
        %v5467 = vpop.f32.mrb[0].mxu0
        %v5468 = vadd.f32 0.0, %v5467
        %v5469 = vpop.f32.mrb[0].mxu0
        %v5470 = vpop.f32.mrb[0].mxu0
        %v5471 = vadd.f32 0.0, %v5470
        %v5472 = vpop.f32.mrb[0].mxu0
        %5473 = vmatprep.mubr.bf16.mxu0 0
        %5474 = vmatmul.mubr.bf16.gmra.mrb[0].mxu0 %v5316
        %v5475 = vpop.f32.mrb[0].mxu0
        %v5476 = vadd.f32 0.0, %v5475
        %v5477 = vpop.f32.mrb[0].mxu0
        %v5478 = vpop.f32.mrb[0].mxu0
        %v5479 = vadd.f32 0.0, %v5478
        %v5480 = vpop.f32.mrb[0].mxu0
        %5481 = vmatprep.mubr.bf16.mxu0 0
        %5482 = vmatmul.mubr.bf16.gmra.mrb[0].mxu0 %v5317
        %v5483 = vpop.f32.mrb[0].mxu0
        %v5484 = vadd.f32 0.0, %v5483
        %v5485 = vpop.f32.mrb[0].mxu0
        %v5486 = vpop.f32.mrb[0].mxu0
        %v5487 = vadd.f32 0.0, %v5486
        %v5488 = vpop.f32.mrb[0].mxu0
        %5489 = vmatprep.mubr.bf16.mxu0 0
        %5490 = vmatmul.mubr.bf16.gmra.mrb[0].mxu0 %v5318
        %v5491 = vpop.f32.mrb[0].mxu0
        %v5492 = vadd.f32 0.0, %v5491
        %v5493 = vpop.f32.mrb[0].mxu0
        %v5494 = vpop.f32.mrb[0].mxu0
        %v5495 = vadd.f32 0.0, %v5494
        %v5496 = vpop.f32.mrb[0].mxu0
        %5497 = vmatprep.mubr.bf16.mxu0 0
        %5498 = vmatmul.mubr.bf16.gmra.mrb[0].mxu0 %v5319
        %v5499 = vpop.f32.mrb[0].mxu0
        %v5500 = vadd.f32 0.0, %v5499
        %v5501 = vpop.f32.mrb[0].mxu0
        %v5502 = vpop.f32.mrb[0].mxu0
        %v5503 = vadd.f32 0.0, %v5502
        %v5504 = vpop.f32.mrb[0].mxu0
        %5505 = vmatprep.mubr.bf16.mxu0 0
        %5506 = vmatmul.mubr.bf16.gmra.mrb[0].mxu0 %v5320
        %v5507 = vpop.f32.mrb[0].mxu0
        %v5508 = vadd.f32 0.0, %v5507
        %v5509 = vpop.f32.mrb[0].mxu0
        %v5510 = vpop.f32.mrb[0].mxu0
        %v5511 = vadd.f32 0.0, %v5510
        %v5512 = vpop.f32.mrb[0].mxu0
        %5513 = vmatprep.mubr.bf16.mxu0 0
        %5514 = vmatmul.mubr.bf16.gmra.mrb[0].mxu0 %v5321
        %v5515 = vpop.f32.mrb[0].mxu0
        %v5516 = vadd.f32 0.0, %v5515
        %v5517 = vpop.f32.mrb[0].mxu0
        %v5518 = vpop.f32.mrb[0].mxu0
        %v5519 = vadd.f32 0.0, %v5518
        %v5520 = vpop.f32.mrb[0].mxu0
        %5521 = vmatprep.mubr.bf16.mxu0 0
        %5522 = vmatmul.mubr.bf16.gmra.mrb[0].mxu0 %v5322
        %v5523 = vpop.f32.mrb[0].mxu0
        %v5524 = vadd.f32 0.0, %v5523
        %v5525 = vpop.f32.mrb[0].mxu0
        %v5526 = vpop.f32.mrb[0].mxu0
        %v5527 = vadd.f32 0.0, %v5526
        %v5528 = vpop.f32.mrb[0].mxu0
        %5529 = vmatprep.mubr.bf16.mxu0 0
        %5530 = vmatmul.mubr.bf16.gmra.mrb[0].mxu0 %v5323
        %v5531 = vpop.f32.mrb[0].mxu0
        %v5532 = vadd.f32 0.0, %v5531
        %v5533 = vpop.f32.mrb[0].mxu0
        %v5534 = vpop.f32.mrb[0].mxu0
        %v5535 = vadd.f32 0.0, %v5534
        %v5536 = vpop.f32.mrb[0].mxu0
        %5537 = vmatprep.mubr.bf16.mxu0 0
        %5538 = vmatmul.mubr.bf16.gmra.mrb[0].mxu0 %v5324
        %v5539 = vpop.f32.mrb[0].mxu0
        %v5540 = vadd.f32 0.0, %v5539
        %v5541 = vpop.f32.mrb[0].mxu0
        %v5542 = vpop.f32.mrb[0].mxu0
        %v5543 = vadd.f32 0.0, %v5542
        %v5544 = vpop.f32.mrb[0].mxu0
        %5545 = vmatprep.mubr.bf16.mxu0 0
        %5546 = vmatmul.mubr.bf16.gmra.mrb[0].mxu0 %v5325
        %v5547 = vpop.f32.mrb[0].mxu0
        %v5548 = vadd.f32 0.0, %v5547
        %v5549 = vpop.f32.mrb[0].mxu0
        %v5550 = vpop.f32.mrb[0].mxu0
        %v5551 = vadd.f32 0.0, %v5550
        %v5552 = vpop.f32.mrb[0].mxu0
        %5553 = vmatprep.mubr.bf16.mxu0 0
        %5554 = vmatmul.mubr.bf16.gmra.mrb[0].mxu0 %v5326
        %v5555 = vpop.f32.mrb[0].mxu0
        %v5556 = vadd.f32 0.0, %v5555
        %v5557 = vpop.f32.mrb[0].mxu0
        %v5558 = vpop.f32.mrb[0].mxu0
        %v5559 = vadd.f32 0.0, %v5558
        %v5560 = vpop.f32.mrb[0].mxu0
        %5561 = vmatprep.mubr.bf16.mxu0 0
        %5562 = vmatmul.mubr.bf16.gmra.mrb[0].mxu0 %v5327
        %v5563 = vpop.f32.mrb[0].mxu0
        %v5564 = vadd.f32 0.0, %v5563
        %v5565 = vpop.f32.mrb[0].mxu0
        %v5566 = vpop.f32.mrb[0].mxu0
        %v5567 = vadd.f32 0.0, %v5566
        %v5568 = vpop.f32.mrb[0].mxu0
        %5569 = vdwg.mxu0
        %v5570 = vadd.f32 %v5238, %v5428
        %v5571 = vadd.f32 %v5239, %v5431
        %v5572 = vadd.f32 %v5240, %v5436
        %v5573 = vadd.f32 %v5241, %v5439
        %v5574 = vadd.f32 %v5242, %v5444
        %v5575 = vadd.f32 %v5243, %v5447
        %v5576 = vadd.f32 %v5244, %v5452
        %v5577 = vadd.f32 %v5245, %v5455
        %v5578 = vadd.f32 %v5246, %v5460
        %v5579 = vadd.f32 %v5247, %v5463
        %v5580 = vadd.f32 %v5248, %v5468
        %v5581 = vadd.f32 %v5249, %v5471
        %v5582 = vadd.f32 %v5250, %v5476
        %v5583 = vadd.f32 %v5251, %v5479
        %v5584 = vadd.f32 %v5252, %v5484
        %v5585 = vadd.f32 %v5253, %v5487
        %v5586 = vadd.f32 %v5254, %v5492
        %v5587 = vadd.f32 %v5255, %v5495
        %v5588 = vadd.f32 %v5256, %v5500
        %v5589 = vadd.f32 %v5257, %v5503
        %v5590 = vadd.f32 %v5258, %v5508
        %v5591 = vadd.f32 %v5259, %v5511
        %v5592 = vadd.f32 %v5260, %v5516
        %v5593 = vadd.f32 %v5261, %v5519
        %v5594 = vadd.f32 %v5262, %v5524
        %v5595 = vadd.f32 %v5263, %v5527
        %v5596 = vadd.f32 %v5264, %v5532
        %v5597 = vadd.f32 %v5265, %v5535
        %v5598 = vadd.f32 %v5266, %v5540
        %v5599 = vadd.f32 %v5267, %v5543
        %v5600 = vadd.f32 %v5268, %v5548
        %v5601 = vadd.f32 %v5269, %v5551
        %v5602 = vadd.f32 %v5270, %v5556
        %v5603 = vadd.f32 %v5271, %v5559
        %v5604 = vadd.f32 %v5272, %v5564
        %v5605 = vadd.f32 %v5273, %v5567
        %v5606 = vld [vmem:[#allocation2 + $0x29] sm:$0xff]
        %v5607 = vld [vmem:[#allocation2 + $0x31] sm:$0xff]
        %v5608 = vld [vmem:[#allocation2 + $0x39] sm:$0xff]
        %v5609 = vld [vmem:[#allocation2 + $0x41] sm:$0xff]
        %v5610 = vld [vmem:[#allocation2 + $0x49] sm:$0xff]
        %v5611 = vld [vmem:[#allocation2 + $0x51] sm:$0xff]
        %v5612 = vld [vmem:[#allocation2 + $0x59] sm:$0xff]
        %v5613 = vld [vmem:[#allocation2 + $0x61] sm:$0xff]
        %v5614 = vld [vmem:[#allocation2 + $0x69] sm:$0xff]
        %v5615 = vld [vmem:[#allocation2 + $0x71] sm:$0xff]
        %v5616 = vld [vmem:[#allocation2 + $0x79] sm:$0xff]
        %v5617 = vld [vmem:[#allocation2 + $0x81] sm:$0xff]
        %v5618 = vld [vmem:[#allocation2 + $0x89] sm:$0xff]
        %v5619 = vld [vmem:[#allocation2 + $0x91] sm:$0xff]
        %v5620 = vld [vmem:[#allocation2 + $0x99] sm:$0xff]
        %v5621 = vld [vmem:[#allocation2 + $0xa1] sm:$0xff]
        %v5622 = vld [vmem:[#allocation2 + $0xa9] sm:$0xff]
        %v5623 = vld [vmem:[#allocation2 + $0xb1] sm:$0xff]
        %v5624 = vld [vmem:[#allocation2 + $0xb9] sm:$0xff]
        %v5625 = vld [vmem:[#allocation2 + $0xc1] sm:$0xff]
        %v5626 = vld [vmem:[#allocation2 + $0xc9] sm:$0xff]
        %v5627 = vld [vmem:[#allocation2 + $0xd1] sm:$0xff]
        %v5628 = vld [vmem:[#allocation2 + $0xd9] sm:$0xff]
        %v5629 = vld [vmem:[#allocation2 + $0xe1] sm:$0xff]
        %v5630 = vld [vmem:[#allocation2 + $0xe9] sm:$0xff]
        %v5631 = vld [vmem:[#allocation2 + $0xf1] sm:$0xff]
        %v5632 = vld [vmem:[#allocation2 + $0xf9] sm:$0xff]
        %v5633 = vld [vmem:[#allocation2 + $0x101] sm:$0xff]
        %v5634 = vld [vmem:[#allocation2 + $0x109] sm:$0xff]
        %v5635 = vld [vmem:[#allocation2 + $0x111] sm:$0xff]
        %v5636 = vld [vmem:[#allocation2 + $0x119] sm:$0xff]
        %v5637 = vld [vmem:[#allocation2 + $0x121] sm:$0xff]
        %v5638 = vld [vmem:[#allocation2 + $0x129] sm:$0xff]
        %v5639 = vld [vmem:[#allocation2 + $0x131] sm:$0xff]
        %v5640 = vld [vmem:[#allocation2 + $0x139] sm:$0xff]
        %v5641 = vld [vmem:[#allocation2 + $0x141] sm:$0xff]
        %v5642 = vpack.c.bf16 %v5607, %v5606
        %v5643 = vpack.c.bf16 %v5609, %v5608
        %v5644 = vpack.c.bf16 %v5611, %v5610
        %v5645 = vpack.c.bf16 %v5613, %v5612
        %v5646 = vpack.c.bf16 %v5615, %v5614
        %v5647 = vpack.c.bf16 %v5617, %v5616
        %v5648 = vpack.c.bf16 %v5619, %v5618
        %v5649 = vpack.c.bf16 %v5621, %v5620
        %v5650 = vpack.c.bf16 %v5623, %v5622
        %v5651 = vpack.c.bf16 %v5625, %v5624
        %v5652 = vpack.c.bf16 %v5627, %v5626
        %v5653 = vpack.c.bf16 %v5629, %v5628
        %v5654 = vpack.c.bf16 %v5631, %v5630
        %v5655 = vpack.c.bf16 %v5633, %v5632
        %v5656 = vpack.c.bf16 %v5635, %v5634
        %v5657 = vpack.c.bf16 %v5637, %v5636
        %v5658 = vpack.c.bf16 %v5639, %v5638
        %v5659 = vpack.c.bf16 %v5641, %v5640
        %s5660 = scalar_lea.vmem %s3, 384
        %v5661 = vld [vmem:[%s5660] sm:$0xf]
        %v5662 = vld [vmem:[%s5660 + $0x4] sm:$0xf]
        %v5663 = vld [vmem:[%s5660 + $0x8] sm:$0xf]
        %v5664 = vld [vmem:[%s5660 + $0xc] sm:$0xf]
        %v5665 = vld [vmem:[%s5660 + $0x10] sm:$0xf]
        %v5666 = vld [vmem:[%s5660 + $0x14] sm:$0xf]
        %v5667 = vld [vmem:[%s5660 + $0x18] sm:$0xf]
        %v5668 = vld [vmem:[%s5660 + $0x1c] sm:$0xf]
        %v5669 = vld [vmem:[%s5660 + $0x20] sm:$0xf]
        %v5670 = vld [vmem:[%s5660 + $0x24] sm:$0xf]
        %v5671 = vld [vmem:[%s5660 + $0x28] sm:$0xf]
        %v5672 = vld [vmem:[%s5660 + $0x2c] sm:$0xf]
        %v5673 = vld [vmem:[%s5660 + $0x30] sm:$0xf]
        %v5674 = vld [vmem:[%s5660 + $0x34] sm:$0xf]
        %v5675 = vld [vmem:[%s5660 + $0x38] sm:$0xf]
        %v5676 = vld [vmem:[%s5660 + $0x3c] sm:$0xf]
        %v5693 = vunpack.c.l.b16 %v5661
        %v5694 = vunpack.c.l.b16 %v5662
        %v5695 = vunpack.c.l.b16 %v5663
        %v5696 = vunpack.c.l.b16 %v5664
        %v5697 = vunpack.c.l.b16 %v5665
        %v5698 = vunpack.c.l.b16 %v5666
        %v5699 = vunpack.c.l.b16 %v5667
        %v5700 = vunpack.c.l.b16 %v5668
        %v5701 = vunpack.c.l.b16 %v5669
        %v5702 = vunpack.c.l.b16 %v5670
        %v5703 = vunpack.c.l.b16 %v5671
        %v5704 = vunpack.c.l.b16 %v5672
        %v5705 = vunpack.c.l.b16 %v5673
        %v5706 = vunpack.c.l.b16 %v5674
        %v5707 = vunpack.c.l.b16 %v5675
        %v5708 = vunpack.c.l.b16 %v5676
        %v5709 = vpack.c.b16 %v5694, %v5693
        %v5710 = vpack.c.b16 %v5696, %v5695
        %v5711 = vpack.c.b16 %v5698, %v5697
        %v5712 = vpack.c.b16 %v5700, %v5699
        %v5713 = vpack.c.b16 %v5702, %v5701
        %v5714 = vpack.c.b16 %v5704, %v5703
        %v5715 = vpack.c.b16 %v5706, %v5705
        %v5716 = vpack.c.b16 %v5708, %v5707
        %5725 = vmatprep.subr.bf16.mxu0 0
        %5726 = vmatpush1.bf16.msra.mxu0 %v5709
        %5727 = vmatprep.subr.bf16.mxu0 0
        %5728 = vmatpush1.bf16.msra.mxu0 %v5710
        %5729 = vmatprep.subr.bf16.mxu0 0
        %5730 = vmatpush1.bf16.msra.mxu0 %v5711
        %5731 = vmatprep.subr.bf16.mxu0 0
        %5732 = vmatpush1.bf16.msra.mxu0 %v5712
        %5733 = vmatprep.subr.bf16.mxu0 0
        %5734 = vmatpush1.bf16.msra.mxu0 %v5713
        %5735 = vmatprep.subr.bf16.mxu0 0
        %5736 = vmatpush1.bf16.msra.mxu0 %v5714
        %5737 = vmatprep.subr.bf16.mxu0 0
        %5738 = vmatpush1.bf16.msra.mxu0 %v5715
        %5739 = vmatprep.subr.bf16.mxu0 0
        %5740 = vmatpush1.bf16.msra.mxu0 %v5716
        %5741 = vmatprep.subr.bf16.mxu0 0
        %5742 = vmatpush1.bf16.msra.mxu0 0
        %5743 = vmatprep.subr.bf16.mxu0 0
        %5744 = vmatpush1.bf16.msra.mxu0 0
        %5745 = vmatprep.subr.bf16.mxu0 0
        %5746 = vmatpush1.bf16.msra.mxu0 0
        %5747 = vmatprep.subr.bf16.mxu0 0
        %5748 = vmatpush1.bf16.msra.mxu0 0
        %5749 = vmatprep.subr.bf16.mxu0 0
        %5750 = vmatpush1.bf16.msra.mxu0 0
        %5751 = vmatprep.subr.bf16.mxu0 0
        %5752 = vmatpush1.bf16.msra.mxu0 0
        %5753 = vmatprep.subr.bf16.mxu0 0
        %5754 = vmatpush1.bf16.msra.mxu0 0
        %5755 = vmatprep.subr.bf16.mxu0 0
        %5756 = vmatpush1.bf16.msra.mxu0 0
        %5757 = vmatprep.mubr.bf16.mxu0 0
        %5758 = vmatmul.mubr.bf16.gmra.mrb[0].mxu0 %v5642
        %v5759 = vpop.f32.mrb[0].mxu0
        %v5760 = vadd.f32 0.0, %v5759
        %v5761 = vpop.f32.mrb[0].mxu0
        %v5762 = vpop.f32.mrb[0].mxu0
        %v5763 = vadd.f32 0.0, %v5762
        %v5764 = vpop.f32.mrb[0].mxu0
        %5765 = vmatprep.mubr.bf16.mxu0 0
        %5766 = vmatmul.mubr.bf16.gmra.mrb[0].mxu0 %v5643
        %v5767 = vpop.f32.mrb[0].mxu0
        %v5768 = vadd.f32 0.0, %v5767
        %v5769 = vpop.f32.mrb[0].mxu0
        %v5770 = vpop.f32.mrb[0].mxu0
        %v5771 = vadd.f32 0.0, %v5770
        %v5772 = vpop.f32.mrb[0].mxu0
        %5773 = vmatprep.mubr.bf16.mxu0 0
        %5774 = vmatmul.mubr.bf16.gmra.mrb[0].mxu0 %v5644
        %v5775 = vpop.f32.mrb[0].mxu0
        %v5776 = vadd.f32 0.0, %v5775
        %v5777 = vpop.f32.mrb[0].mxu0
        %v5778 = vpop.f32.mrb[0].mxu0
        %v5779 = vadd.f32 0.0, %v5778
        %v5780 = vpop.f32.mrb[0].mxu0
        %5781 = vmatprep.mubr.bf16.mxu0 0
        %5782 = vmatmul.mubr.bf16.gmra.mrb[0].mxu0 %v5645
        %v5783 = vpop.f32.mrb[0].mxu0
        %v5784 = vadd.f32 0.0, %v5783
        %v5785 = vpop.f32.mrb[0].mxu0
        %v5786 = vpop.f32.mrb[0].mxu0
        %v5787 = vadd.f32 0.0, %v5786
        %v5788 = vpop.f32.mrb[0].mxu0
        %5789 = vmatprep.mubr.bf16.mxu0 0
        %5790 = vmatmul.mubr.bf16.gmra.mrb[0].mxu0 %v5646
        %v5791 = vpop.f32.mrb[0].mxu0
        %v5792 = vadd.f32 0.0, %v5791
        %v5793 = vpop.f32.mrb[0].mxu0
        %v5794 = vpop.f32.mrb[0].mxu0
        %v5795 = vadd.f32 0.0, %v5794
        %v5796 = vpop.f32.mrb[0].mxu0
        %5797 = vmatprep.mubr.bf16.mxu0 0
        %5798 = vmatmul.mubr.bf16.gmra.mrb[0].mxu0 %v5647
        %v5799 = vpop.f32.mrb[0].mxu0
        %v5800 = vadd.f32 0.0, %v5799
        %v5801 = vpop.f32.mrb[0].mxu0
        %v5802 = vpop.f32.mrb[0].mxu0
        %v5803 = vadd.f32 0.0, %v5802
        %v5804 = vpop.f32.mrb[0].mxu0
        %5805 = vmatprep.mubr.bf16.mxu0 0
        %5806 = vmatmul.mubr.bf16.gmra.mrb[0].mxu0 %v5648
        %v5807 = vpop.f32.mrb[0].mxu0
        %v5808 = vadd.f32 0.0, %v5807
        %v5809 = vpop.f32.mrb[0].mxu0
        %v5810 = vpop.f32.mrb[0].mxu0
        %v5811 = vadd.f32 0.0, %v5810
        %v5812 = vpop.f32.mrb[0].mxu0
        %5813 = vmatprep.mubr.bf16.mxu0 0
        %5814 = vmatmul.mubr.bf16.gmra.mrb[0].mxu0 %v5649
        %v5815 = vpop.f32.mrb[0].mxu0
        %v5816 = vadd.f32 0.0, %v5815
        %v5817 = vpop.f32.mrb[0].mxu0
        %v5818 = vpop.f32.mrb[0].mxu0
        %v5819 = vadd.f32 0.0, %v5818
        %v5820 = vpop.f32.mrb[0].mxu0
        %5821 = vmatprep.mubr.bf16.mxu0 0
        %5822 = vmatmul.mubr.bf16.gmra.mrb[0].mxu0 %v5650
        %v5823 = vpop.f32.mrb[0].mxu0
        %v5824 = vadd.f32 0.0, %v5823
        %v5825 = vpop.f32.mrb[0].mxu0
        %v5826 = vpop.f32.mrb[0].mxu0
        %v5827 = vadd.f32 0.0, %v5826
        %v5828 = vpop.f32.mrb[0].mxu0
        %5829 = vmatprep.mubr.bf16.mxu0 0
        %5830 = vmatmul.mubr.bf16.gmra.mrb[0].mxu0 %v5651
        %v5831 = vpop.f32.mrb[0].mxu0
        %v5832 = vadd.f32 0.0, %v5831
        %v5833 = vpop.f32.mrb[0].mxu0
        %v5834 = vpop.f32.mrb[0].mxu0
        %v5835 = vadd.f32 0.0, %v5834
        %v5836 = vpop.f32.mrb[0].mxu0
        %5837 = vmatprep.mubr.bf16.mxu0 0
        %5838 = vmatmul.mubr.bf16.gmra.mrb[0].mxu0 %v5652
        %v5839 = vpop.f32.mrb[0].mxu0
        %v5840 = vadd.f32 0.0, %v5839
        %v5841 = vpop.f32.mrb[0].mxu0
        %v5842 = vpop.f32.mrb[0].mxu0
        %v5843 = vadd.f32 0.0, %v5842
        %v5844 = vpop.f32.mrb[0].mxu0
        %5845 = vmatprep.mubr.bf16.mxu0 0
        %5846 = vmatmul.mubr.bf16.gmra.mrb[0].mxu0 %v5653
        %v5847 = vpop.f32.mrb[0].mxu0
        %v5848 = vadd.f32 0.0, %v5847
        %v5849 = vpop.f32.mrb[0].mxu0
        %v5850 = vpop.f32.mrb[0].mxu0
        %v5851 = vadd.f32 0.0, %v5850
        %v5852 = vpop.f32.mrb[0].mxu0
        %5853 = vmatprep.mubr.bf16.mxu0 0
        %5854 = vmatmul.mubr.bf16.gmra.mrb[0].mxu0 %v5654
        %v5855 = vpop.f32.mrb[0].mxu0
        %v5856 = vadd.f32 0.0, %v5855
        %v5857 = vpop.f32.mrb[0].mxu0
        %v5858 = vpop.f32.mrb[0].mxu0
        %v5859 = vadd.f32 0.0, %v5858
        %v5860 = vpop.f32.mrb[0].mxu0
        %5861 = vmatprep.mubr.bf16.mxu0 0
        %5862 = vmatmul.mubr.bf16.gmra.mrb[0].mxu0 %v5655
        %v5863 = vpop.f32.mrb[0].mxu0
        %v5864 = vadd.f32 0.0, %v5863
        %v5865 = vpop.f32.mrb[0].mxu0
        %v5866 = vpop.f32.mrb[0].mxu0
        %v5867 = vadd.f32 0.0, %v5866
        %v5868 = vpop.f32.mrb[0].mxu0
        %5869 = vmatprep.mubr.bf16.mxu0 0
        %5870 = vmatmul.mubr.bf16.gmra.mrb[0].mxu0 %v5656
        %v5871 = vpop.f32.mrb[0].mxu0
        %v5872 = vadd.f32 0.0, %v5871
        %v5873 = vpop.f32.mrb[0].mxu0
        %v5874 = vpop.f32.mrb[0].mxu0
        %v5875 = vadd.f32 0.0, %v5874
        %v5876 = vpop.f32.mrb[0].mxu0
        %5877 = vmatprep.mubr.bf16.mxu0 0
        %5878 = vmatmul.mubr.bf16.gmra.mrb[0].mxu0 %v5657
        %v5879 = vpop.f32.mrb[0].mxu0
        %v5880 = vadd.f32 0.0, %v5879
        %v5881 = vpop.f32.mrb[0].mxu0
        %v5882 = vpop.f32.mrb[0].mxu0
        %v5883 = vadd.f32 0.0, %v5882
        %v5884 = vpop.f32.mrb[0].mxu0
        %5885 = vmatprep.mubr.bf16.mxu0 0
        %5886 = vmatmul.mubr.bf16.gmra.mrb[0].mxu0 %v5658
        %v5887 = vpop.f32.mrb[0].mxu0
        %v5888 = vadd.f32 0.0, %v5887
        %v5889 = vpop.f32.mrb[0].mxu0
        %v5890 = vpop.f32.mrb[0].mxu0
        %v5891 = vadd.f32 0.0, %v5890
        %v5892 = vpop.f32.mrb[0].mxu0
        %5893 = vmatprep.mubr.bf16.mxu0 0
        %5894 = vmatmul.mubr.bf16.gmra.mrb[0].mxu0 %v5659
        %v5895 = vpop.f32.mrb[0].mxu0
        %v5896 = vadd.f32 0.0, %v5895
        %v5897 = vpop.f32.mrb[0].mxu0
        %v5898 = vpop.f32.mrb[0].mxu0
        %v5899 = vadd.f32 0.0, %v5898
        %v5900 = vpop.f32.mrb[0].mxu0
        %5901 = vdwg.mxu0
        %v5902 = vadd.f32 %v5570, %v5760
        %v5903 = vadd.f32 %v5571, %v5763
        %v5904 = vadd.f32 %v5572, %v5768
        %v5905 = vadd.f32 %v5573, %v5771
        %v5906 = vadd.f32 %v5574, %v5776
        %v5907 = vadd.f32 %v5575, %v5779
        %v5908 = vadd.f32 %v5576, %v5784
        %v5909 = vadd.f32 %v5577, %v5787
        %v5910 = vadd.f32 %v5578, %v5792
        %v5911 = vadd.f32 %v5579, %v5795
        %v5912 = vadd.f32 %v5580, %v5800
        %v5913 = vadd.f32 %v5581, %v5803
        %v5914 = vadd.f32 %v5582, %v5808
        %v5915 = vadd.f32 %v5583, %v5811
        %v5916 = vadd.f32 %v5584, %v5816
        %v5917 = vadd.f32 %v5585, %v5819
        %v5918 = vadd.f32 %v5586, %v5824
        %v5919 = vadd.f32 %v5587, %v5827
        %v5920 = vadd.f32 %v5588, %v5832
        %v5921 = vadd.f32 %v5589, %v5835
        %v5922 = vadd.f32 %v5590, %v5840
        %v5923 = vadd.f32 %v5591, %v5843
        %v5924 = vadd.f32 %v5592, %v5848
        %v5925 = vadd.f32 %v5593, %v5851
        %v5926 = vadd.f32 %v5594, %v5856
        %v5927 = vadd.f32 %v5595, %v5859
        %v5928 = vadd.f32 %v5596, %v5864
        %v5929 = vadd.f32 %v5597, %v5867
        %v5930 = vadd.f32 %v5598, %v5872
        %v5931 = vadd.f32 %v5599, %v5875
        %v5932 = vadd.f32 %v5600, %v5880
        %v5933 = vadd.f32 %v5601, %v5883
        %v5934 = vadd.f32 %v5602, %v5888
        %v5935 = vadd.f32 %v5603, %v5891
        %v5936 = vadd.f32 %v5604, %v5896
        %v5937 = vadd.f32 %v5605, %v5899
        %v5938 = vld [vmem:[#allocation2 + $0x2a] sm:$0xff]
        %v5939 = vld [vmem:[#allocation2 + $0x32] sm:$0xff]
        %v5940 = vld [vmem:[#allocation2 + $0x3a] sm:$0xff]
        %v5941 = vld [vmem:[#allocation2 + $0x42] sm:$0xff]
        %v5942 = vld [vmem:[#allocation2 + $0x4a] sm:$0xff]
        %v5943 = vld [vmem:[#allocation2 + $0x52] sm:$0xff]
        %v5944 = vld [vmem:[#allocation2 + $0x5a] sm:$0xff]
        %v5945 = vld [vmem:[#allocation2 + $0x62] sm:$0xff]
        %v5946 = vld [vmem:[#allocation2 + $0x6a] sm:$0xff]
        %v5947 = vld [vmem:[#allocation2 + $0x72] sm:$0xff]
        %v5948 = vld [vmem:[#allocation2 + $0x7a] sm:$0xff]
        %v5949 = vld [vmem:[#allocation2 + $0x82] sm:$0xff]
        %v5950 = vld [vmem:[#allocation2 + $0x8a] sm:$0xff]
        %v5951 = vld [vmem:[#allocation2 + $0x92] sm:$0xff]
        %v5952 = vld [vmem:[#allocation2 + $0x9a] sm:$0xff]
        %v5953 = vld [vmem:[#allocation2 + $0xa2] sm:$0xff]
        %v5954 = vld [vmem:[#allocation2 + $0xaa] sm:$0xff]
        %v5955 = vld [vmem:[#allocation2 + $0xb2] sm:$0xff]
        %v5956 = vld [vmem:[#allocation2 + $0xba] sm:$0xff]
        %v5957 = vld [vmem:[#allocation2 + $0xc2] sm:$0xff]
        %v5958 = vld [vmem:[#allocation2 + $0xca] sm:$0xff]
        %v5959 = vld [vmem:[#allocation2 + $0xd2] sm:$0xff]
        %v5960 = vld [vmem:[#allocation2 + $0xda] sm:$0xff]
        %v5961 = vld [vmem:[#allocation2 + $0xe2] sm:$0xff]
        %v5962 = vld [vmem:[#allocation2 + $0xea] sm:$0xff]
        %v5963 = vld [vmem:[#allocation2 + $0xf2] sm:$0xff]
        %v5964 = vld [vmem:[#allocation2 + $0xfa] sm:$0xff]
        %v5965 = vld [vmem:[#allocation2 + $0x102] sm:$0xff]
        %v5966 = vld [vmem:[#allocation2 + $0x10a] sm:$0xff]
        %v5967 = vld [vmem:[#allocation2 + $0x112] sm:$0xff]
        %v5968 = vld [vmem:[#allocation2 + $0x11a] sm:$0xff]
        %v5969 = vld [vmem:[#allocation2 + $0x122] sm:$0xff]
        %v5970 = vld [vmem:[#allocation2 + $0x12a] sm:$0xff]
        %v5971 = vld [vmem:[#allocation2 + $0x132] sm:$0xff]
        %v5972 = vld [vmem:[#allocation2 + $0x13a] sm:$0xff]
        %v5973 = vld [vmem:[#allocation2 + $0x142] sm:$0xff]
        %v5974 = vpack.c.bf16 %v5939, %v5938
        %v5975 = vpack.c.bf16 %v5941, %v5940
        %v5976 = vpack.c.bf16 %v5943, %v5942
        %v5977 = vpack.c.bf16 %v5945, %v5944
        %v5978 = vpack.c.bf16 %v5947, %v5946
        %v5979 = vpack.c.bf16 %v5949, %v5948
        %v5980 = vpack.c.bf16 %v5951, %v5950
        %v5981 = vpack.c.bf16 %v5953, %v5952
        %v5982 = vpack.c.bf16 %v5955, %v5954
        %v5983 = vpack.c.bf16 %v5957, %v5956
        %v5984 = vpack.c.bf16 %v5959, %v5958
        %v5985 = vpack.c.bf16 %v5961, %v5960
        %v5986 = vpack.c.bf16 %v5963, %v5962
        %v5987 = vpack.c.bf16 %v5965, %v5964
        %v5988 = vpack.c.bf16 %v5967, %v5966
        %v5989 = vpack.c.bf16 %v5969, %v5968
        %v5990 = vpack.c.bf16 %v5971, %v5970
        %v5991 = vpack.c.bf16 %v5973, %v5972
        %s5992 = scalar_lea.vmem %s3, 448
        %v5993 = vld [vmem:[%s5992] sm:$0xf]
        %v5994 = vld [vmem:[%s5992 + $0x4] sm:$0xf]
        %v5995 = vld [vmem:[%s5992 + $0x8] sm:$0xf]
        %v5996 = vld [vmem:[%s5992 + $0xc] sm:$0xf]
        %v5997 = vld [vmem:[%s5992 + $0x10] sm:$0xf]
        %v5998 = vld [vmem:[%s5992 + $0x14] sm:$0xf]
        %v5999 = vld [vmem:[%s5992 + $0x18] sm:$0xf]
        %v6000 = vld [vmem:[%s5992 + $0x1c] sm:$0xf]
        %v6001 = vld [vmem:[%s5992 + $0x20] sm:$0xf]
        %v6002 = vld [vmem:[%s5992 + $0x24] sm:$0xf]
        %v6003 = vld [vmem:[%s5992 + $0x28] sm:$0xf]
        %v6004 = vld [vmem:[%s5992 + $0x2c] sm:$0xf]
        %v6005 = vld [vmem:[%s5992 + $0x30] sm:$0xf]
        %v6006 = vld [vmem:[%s5992 + $0x34] sm:$0xf]
        %v6007 = vld [vmem:[%s5992 + $0x38] sm:$0xf]
        %v6008 = vld [vmem:[%s5992 + $0x3c] sm:$0xf]
        %v6025 = vunpack.c.l.b16 %v5993
        %v6026 = vunpack.c.l.b16 %v5994
        %v6027 = vunpack.c.l.b16 %v5995
        %v6028 = vunpack.c.l.b16 %v5996
        %v6029 = vunpack.c.l.b16 %v5997
        %v6030 = vunpack.c.l.b16 %v5998
        %v6031 = vunpack.c.l.b16 %v5999
        %v6032 = vunpack.c.l.b16 %v6000
        %v6033 = vunpack.c.l.b16 %v6001
        %v6034 = vunpack.c.l.b16 %v6002
        %v6035 = vunpack.c.l.b16 %v6003
        %v6036 = vunpack.c.l.b16 %v6004
        %v6037 = vunpack.c.l.b16 %v6005
        %v6038 = vunpack.c.l.b16 %v6006
        %v6039 = vunpack.c.l.b16 %v6007
        %v6040 = vunpack.c.l.b16 %v6008
        %v6041 = vpack.c.b16 %v6026, %v6025
        %v6042 = vpack.c.b16 %v6028, %v6027
        %v6043 = vpack.c.b16 %v6030, %v6029
        %v6044 = vpack.c.b16 %v6032, %v6031
        %v6045 = vpack.c.b16 %v6034, %v6033
        %v6046 = vpack.c.b16 %v6036, %v6035
        %v6047 = vpack.c.b16 %v6038, %v6037
        %v6048 = vpack.c.b16 %v6040, %v6039
        %6057 = vmatprep.subr.bf16.mxu0 0
        %6058 = vmatpush1.bf16.msra.mxu0 %v6041
        %6059 = vmatprep.subr.bf16.mxu0 0
        %6060 = vmatpush1.bf16.msra.mxu0 %v6042
        %6061 = vmatprep.subr.bf16.mxu0 0
        %6062 = vmatpush1.bf16.msra.mxu0 %v6043
        %6063 = vmatprep.subr.bf16.mxu0 0
        %6064 = vmatpush1.bf16.msra.mxu0 %v6044
        %6065 = vmatprep.subr.bf16.mxu0 0
        %6066 = vmatpush1.bf16.msra.mxu0 %v6045
        %6067 = vmatprep.subr.bf16.mxu0 0
        %6068 = vmatpush1.bf16.msra.mxu0 %v6046
        %6069 = vmatprep.subr.bf16.mxu0 0
        %6070 = vmatpush1.bf16.msra.mxu0 %v6047
        %6071 = vmatprep.subr.bf16.mxu0 0
        %6072 = vmatpush1.bf16.msra.mxu0 %v6048
        %6073 = vmatprep.subr.bf16.mxu0 0
        %6074 = vmatpush1.bf16.msra.mxu0 0
        %6075 = vmatprep.subr.bf16.mxu0 0
        %6076 = vmatpush1.bf16.msra.mxu0 0
        %6077 = vmatprep.subr.bf16.mxu0 0
        %6078 = vmatpush1.bf16.msra.mxu0 0
        %6079 = vmatprep.subr.bf16.mxu0 0
        %6080 = vmatpush1.bf16.msra.mxu0 0
        %6081 = vmatprep.subr.bf16.mxu0 0
        %6082 = vmatpush1.bf16.msra.mxu0 0
        %6083 = vmatprep.subr.bf16.mxu0 0
        %6084 = vmatpush1.bf16.msra.mxu0 0
        %6085 = vmatprep.subr.bf16.mxu0 0
        %6086 = vmatpush1.bf16.msra.mxu0 0
        %6087 = vmatprep.subr.bf16.mxu0 0
        %6088 = vmatpush1.bf16.msra.mxu0 0
        %6089 = vmatprep.mubr.bf16.mxu0 0
        %6090 = vmatmul.mubr.bf16.gmra.mrb[0].mxu0 %v5974
        %v6091 = vpop.f32.mrb[0].mxu0
        %v6092 = vadd.f32 0.0, %v6091
        %v6093 = vpop.f32.mrb[0].mxu0
        %v6094 = vpop.f32.mrb[0].mxu0
        %v6095 = vadd.f32 0.0, %v6094
        %v6096 = vpop.f32.mrb[0].mxu0
        %6097 = vmatprep.mubr.bf16.mxu0 0
        %6098 = vmatmul.mubr.bf16.gmra.mrb[0].mxu0 %v5975
        %v6099 = vpop.f32.mrb[0].mxu0
        %v6100 = vadd.f32 0.0, %v6099
        %v6101 = vpop.f32.mrb[0].mxu0
        %v6102 = vpop.f32.mrb[0].mxu0
        %v6103 = vadd.f32 0.0, %v6102
        %v6104 = vpop.f32.mrb[0].mxu0
        %6105 = vmatprep.mubr.bf16.mxu0 0
        %6106 = vmatmul.mubr.bf16.gmra.mrb[0].mxu0 %v5976
        %v6107 = vpop.f32.mrb[0].mxu0
        %v6108 = vadd.f32 0.0, %v6107
        %v6109 = vpop.f32.mrb[0].mxu0
        %v6110 = vpop.f32.mrb[0].mxu0
        %v6111 = vadd.f32 0.0, %v6110
        %v6112 = vpop.f32.mrb[0].mxu0
        %6113 = vmatprep.mubr.bf16.mxu0 0
        %6114 = vmatmul.mubr.bf16.gmra.mrb[0].mxu0 %v5977
        %v6115 = vpop.f32.mrb[0].mxu0
        %v6116 = vadd.f32 0.0, %v6115
        %v6117 = vpop.f32.mrb[0].mxu0
        %v6118 = vpop.f32.mrb[0].mxu0
        %v6119 = vadd.f32 0.0, %v6118
        %v6120 = vpop.f32.mrb[0].mxu0
        %6121 = vmatprep.mubr.bf16.mxu0 0
        %6122 = vmatmul.mubr.bf16.gmra.mrb[0].mxu0 %v5978
        %v6123 = vpop.f32.mrb[0].mxu0
        %v6124 = vadd.f32 0.0, %v6123
        %v6125 = vpop.f32.mrb[0].mxu0
        %v6126 = vpop.f32.mrb[0].mxu0
        %v6127 = vadd.f32 0.0, %v6126
        %v6128 = vpop.f32.mrb[0].mxu0
        %6129 = vmatprep.mubr.bf16.mxu0 0
        %6130 = vmatmul.mubr.bf16.gmra.mrb[0].mxu0 %v5979
        %v6131 = vpop.f32.mrb[0].mxu0
        %v6132 = vadd.f32 0.0, %v6131
        %v6133 = vpop.f32.mrb[0].mxu0
        %v6134 = vpop.f32.mrb[0].mxu0
        %v6135 = vadd.f32 0.0, %v6134
        %v6136 = vpop.f32.mrb[0].mxu0
        %6137 = vmatprep.mubr.bf16.mxu0 0
        %6138 = vmatmul.mubr.bf16.gmra.mrb[0].mxu0 %v5980
        %v6139 = vpop.f32.mrb[0].mxu0
        %v6140 = vadd.f32 0.0, %v6139
        %v6141 = vpop.f32.mrb[0].mxu0
        %v6142 = vpop.f32.mrb[0].mxu0
        %v6143 = vadd.f32 0.0, %v6142
        %v6144 = vpop.f32.mrb[0].mxu0
        %6145 = vmatprep.mubr.bf16.mxu0 0
        %6146 = vmatmul.mubr.bf16.gmra.mrb[0].mxu0 %v5981
        %v6147 = vpop.f32.mrb[0].mxu0
        %v6148 = vadd.f32 0.0, %v6147
        %v6149 = vpop.f32.mrb[0].mxu0
        %v6150 = vpop.f32.mrb[0].mxu0
        %v6151 = vadd.f32 0.0, %v6150
        %v6152 = vpop.f32.mrb[0].mxu0
        %6153 = vmatprep.mubr.bf16.mxu0 0
        %6154 = vmatmul.mubr.bf16.gmra.mrb[0].mxu0 %v5982
        %v6155 = vpop.f32.mrb[0].mxu0
        %v6156 = vadd.f32 0.0, %v6155
        %v6157 = vpop.f32.mrb[0].mxu0
        %v6158 = vpop.f32.mrb[0].mxu0
        %v6159 = vadd.f32 0.0, %v6158
        %v6160 = vpop.f32.mrb[0].mxu0
        %6161 = vmatprep.mubr.bf16.mxu0 0
        %6162 = vmatmul.mubr.bf16.gmra.mrb[0].mxu0 %v5983
        %v6163 = vpop.f32.mrb[0].mxu0
        %v6164 = vadd.f32 0.0, %v6163
        %v6165 = vpop.f32.mrb[0].mxu0
        %v6166 = vpop.f32.mrb[0].mxu0
        %v6167 = vadd.f32 0.0, %v6166
        %v6168 = vpop.f32.mrb[0].mxu0
        %6169 = vmatprep.mubr.bf16.mxu0 0
        %6170 = vmatmul.mubr.bf16.gmra.mrb[0].mxu0 %v5984
        %v6171 = vpop.f32.mrb[0].mxu0
        %v6172 = vadd.f32 0.0, %v6171
        %v6173 = vpop.f32.mrb[0].mxu0
        %v6174 = vpop.f32.mrb[0].mxu0
        %v6175 = vadd.f32 0.0, %v6174
        %v6176 = vpop.f32.mrb[0].mxu0
        %6177 = vmatprep.mubr.bf16.mxu0 0
        %6178 = vmatmul.mubr.bf16.gmra.mrb[0].mxu0 %v5985
        %v6179 = vpop.f32.mrb[0].mxu0
        %v6180 = vadd.f32 0.0, %v6179
        %v6181 = vpop.f32.mrb[0].mxu0
        %v6182 = vpop.f32.mrb[0].mxu0
        %v6183 = vadd.f32 0.0, %v6182
        %v6184 = vpop.f32.mrb[0].mxu0
        %6185 = vmatprep.mubr.bf16.mxu0 0
        %6186 = vmatmul.mubr.bf16.gmra.mrb[0].mxu0 %v5986
        %v6187 = vpop.f32.mrb[0].mxu0
        %v6188 = vadd.f32 0.0, %v6187
        %v6189 = vpop.f32.mrb[0].mxu0
        %v6190 = vpop.f32.mrb[0].mxu0
        %v6191 = vadd.f32 0.0, %v6190
        %v6192 = vpop.f32.mrb[0].mxu0
        %6193 = vmatprep.mubr.bf16.mxu0 0
        %6194 = vmatmul.mubr.bf16.gmra.mrb[0].mxu0 %v5987
        %v6195 = vpop.f32.mrb[0].mxu0
        %v6196 = vadd.f32 0.0, %v6195
        %v6197 = vpop.f32.mrb[0].mxu0
        %v6198 = vpop.f32.mrb[0].mxu0
        %v6199 = vadd.f32 0.0, %v6198
        %v6200 = vpop.f32.mrb[0].mxu0
        %6201 = vmatprep.mubr.bf16.mxu0 0
        %6202 = vmatmul.mubr.bf16.gmra.mrb[0].mxu0 %v5988
        %v6203 = vpop.f32.mrb[0].mxu0
        %v6204 = vadd.f32 0.0, %v6203
        %v6205 = vpop.f32.mrb[0].mxu0
        %v6206 = vpop.f32.mrb[0].mxu0
        %v6207 = vadd.f32 0.0, %v6206
        %v6208 = vpop.f32.mrb[0].mxu0
        %6209 = vmatprep.mubr.bf16.mxu0 0
        %6210 = vmatmul.mubr.bf16.gmra.mrb[0].mxu0 %v5989
        %v6211 = vpop.f32.mrb[0].mxu0
        %v6212 = vadd.f32 0.0, %v6211
        %v6213 = vpop.f32.mrb[0].mxu0
        %v6214 = vpop.f32.mrb[0].mxu0
        %v6215 = vadd.f32 0.0, %v6214
        %v6216 = vpop.f32.mrb[0].mxu0
        %6217 = vmatprep.mubr.bf16.mxu0 0
        %6218 = vmatmul.mubr.bf16.gmra.mrb[0].mxu0 %v5990
        %v6219 = vpop.f32.mrb[0].mxu0
        %v6220 = vadd.f32 0.0, %v6219
        %v6221 = vpop.f32.mrb[0].mxu0
        %v6222 = vpop.f32.mrb[0].mxu0
        %v6223 = vadd.f32 0.0, %v6222
        %v6224 = vpop.f32.mrb[0].mxu0
        %6225 = vmatprep.mubr.bf16.mxu0 0
        %6226 = vmatmul.mubr.bf16.gmra.mrb[0].mxu0 %v5991
        %v6227 = vpop.f32.mrb[0].mxu0
        %v6228 = vadd.f32 0.0, %v6227
        %v6229 = vpop.f32.mrb[0].mxu0
        %v6230 = vpop.f32.mrb[0].mxu0
        %v6231 = vadd.f32 0.0, %v6230
        %v6232 = vpop.f32.mrb[0].mxu0
        %6233 = vdwg.mxu0
        %v6234 = vadd.f32 %v5902, %v6092
        %v6235 = vadd.f32 %v5903, %v6095
        %v6236 = vadd.f32 %v5904, %v6100
        %v6237 = vadd.f32 %v5905, %v6103
        %v6238 = vadd.f32 %v5906, %v6108
        %v6239 = vadd.f32 %v5907, %v6111
        %v6240 = vadd.f32 %v5908, %v6116
        %v6241 = vadd.f32 %v5909, %v6119
        %v6242 = vadd.f32 %v5910, %v6124
        %v6243 = vadd.f32 %v5911, %v6127
        %v6244 = vadd.f32 %v5912, %v6132
        %v6245 = vadd.f32 %v5913, %v6135
        %v6246 = vadd.f32 %v5914, %v6140
        %v6247 = vadd.f32 %v5915, %v6143
        %v6248 = vadd.f32 %v5916, %v6148
        %v6249 = vadd.f32 %v5917, %v6151
        %v6250 = vadd.f32 %v5918, %v6156
        %v6251 = vadd.f32 %v5919, %v6159
        %v6252 = vadd.f32 %v5920, %v6164
        %v6253 = vadd.f32 %v5921, %v6167
        %v6254 = vadd.f32 %v5922, %v6172
        %v6255 = vadd.f32 %v5923, %v6175
        %v6256 = vadd.f32 %v5924, %v6180
        %v6257 = vadd.f32 %v5925, %v6183
        %v6258 = vadd.f32 %v5926, %v6188
        %v6259 = vadd.f32 %v5927, %v6191
        %v6260 = vadd.f32 %v5928, %v6196
        %v6261 = vadd.f32 %v5929, %v6199
        %v6262 = vadd.f32 %v5930, %v6204
        %v6263 = vadd.f32 %v5931, %v6207
        %v6264 = vadd.f32 %v5932, %v6212
        %v6265 = vadd.f32 %v5933, %v6215
        %v6266 = vadd.f32 %v5934, %v6220
        %v6267 = vadd.f32 %v5935, %v6223
        %v6268 = vadd.f32 %v5936, %v6228
        %v6269 = vadd.f32 %v5937, %v6231
        %v6270 = vld [vmem:[#allocation2 + $0x2b] sm:$0xff]
        %v6271 = vld [vmem:[#allocation2 + $0x33] sm:$0xff]
        %v6272 = vld [vmem:[#allocation2 + $0x3b] sm:$0xff]
        %v6273 = vld [vmem:[#allocation2 + $0x43] sm:$0xff]
        %v6274 = vld [vmem:[#allocation2 + $0x4b] sm:$0xff]
        %v6275 = vld [vmem:[#allocation2 + $0x53] sm:$0xff]
        %v6276 = vld [vmem:[#allocation2 + $0x5b] sm:$0xff]
        %v6277 = vld [vmem:[#allocation2 + $0x63] sm:$0xff]
        %v6278 = vld [vmem:[#allocation2 + $0x6b] sm:$0xff]
        %v6279 = vld [vmem:[#allocation2 + $0x73] sm:$0xff]
        %v6280 = vld [vmem:[#allocation2 + $0x7b] sm:$0xff]
        %v6281 = vld [vmem:[#allocation2 + $0x83] sm:$0xff]
        %v6282 = vld [vmem:[#allocation2 + $0x8b] sm:$0xff]
        %v6283 = vld [vmem:[#allocation2 + $0x93] sm:$0xff]
        %v6284 = vld [vmem:[#allocation2 + $0x9b] sm:$0xff]
        %v6285 = vld [vmem:[#allocation2 + $0xa3] sm:$0xff]
        %v6286 = vld [vmem:[#allocation2 + $0xab] sm:$0xff]
        %v6287 = vld [vmem:[#allocation2 + $0xb3] sm:$0xff]
        %v6288 = vld [vmem:[#allocation2 + $0xbb] sm:$0xff]
        %v6289 = vld [vmem:[#allocation2 + $0xc3] sm:$0xff]
        %v6290 = vld [vmem:[#allocation2 + $0xcb] sm:$0xff]
        %v6291 = vld [vmem:[#allocation2 + $0xd3] sm:$0xff]
        %v6292 = vld [vmem:[#allocation2 + $0xdb] sm:$0xff]
        %v6293 = vld [vmem:[#allocation2 + $0xe3] sm:$0xff]
        %v6294 = vld [vmem:[#allocation2 + $0xeb] sm:$0xff]
        %v6295 = vld [vmem:[#allocation2 + $0xf3] sm:$0xff]
        %v6296 = vld [vmem:[#allocation2 + $0xfb] sm:$0xff]
        %v6297 = vld [vmem:[#allocation2 + $0x103] sm:$0xff]
        %v6298 = vld [vmem:[#allocation2 + $0x10b] sm:$0xff]
        %v6299 = vld [vmem:[#allocation2 + $0x113] sm:$0xff]
        %v6300 = vld [vmem:[#allocation2 + $0x11b] sm:$0xff]
        %v6301 = vld [vmem:[#allocation2 + $0x123] sm:$0xff]
        %v6302 = vld [vmem:[#allocation2 + $0x12b] sm:$0xff]
        %v6303 = vld [vmem:[#allocation2 + $0x133] sm:$0xff]
        %v6304 = vld [vmem:[#allocation2 + $0x13b] sm:$0xff]
        %v6305 = vld [vmem:[#allocation2 + $0x143] sm:$0xff]
        %v6306 = vpack.c.bf16 %v6271, %v6270
        %v6307 = vpack.c.bf16 %v6273, %v6272
        %v6308 = vpack.c.bf16 %v6275, %v6274
        %v6309 = vpack.c.bf16 %v6277, %v6276
        %v6310 = vpack.c.bf16 %v6279, %v6278
        %v6311 = vpack.c.bf16 %v6281, %v6280
        %v6312 = vpack.c.bf16 %v6283, %v6282
        %v6313 = vpack.c.bf16 %v6285, %v6284
        %v6314 = vpack.c.bf16 %v6287, %v6286
        %v6315 = vpack.c.bf16 %v6289, %v6288
        %v6316 = vpack.c.bf16 %v6291, %v6290
        %v6317 = vpack.c.bf16 %v6293, %v6292
        %v6318 = vpack.c.bf16 %v6295, %v6294
        %v6319 = vpack.c.bf16 %v6297, %v6296
        %v6320 = vpack.c.bf16 %v6299, %v6298
        %v6321 = vpack.c.bf16 %v6301, %v6300
        %v6322 = vpack.c.bf16 %v6303, %v6302
        %v6323 = vpack.c.bf16 %v6305, %v6304
        %s6324 = scalar_lea.vmem %s3, 512
        %v6325 = vld [vmem:[%s6324] sm:$0xf]
        %v6326 = vld [vmem:[%s6324 + $0x4] sm:$0xf]
        %v6327 = vld [vmem:[%s6324 + $0x8] sm:$0xf]
        %v6328 = vld [vmem:[%s6324 + $0xc] sm:$0xf]
        %v6329 = vld [vmem:[%s6324 + $0x10] sm:$0xf]
        %v6330 = vld [vmem:[%s6324 + $0x14] sm:$0xf]
        %v6331 = vld [vmem:[%s6324 + $0x18] sm:$0xf]
        %v6332 = vld [vmem:[%s6324 + $0x1c] sm:$0xf]
        %v6333 = vld [vmem:[%s6324 + $0x20] sm:$0xf]
        %v6334 = vld [vmem:[%s6324 + $0x24] sm:$0xf]
        %v6335 = vld [vmem:[%s6324 + $0x28] sm:$0xf]
        %v6336 = vld [vmem:[%s6324 + $0x2c] sm:$0xf]
        %v6337 = vld [vmem:[%s6324 + $0x30] sm:$0xf]
        %v6338 = vld [vmem:[%s6324 + $0x34] sm:$0xf]
        %v6339 = vld [vmem:[%s6324 + $0x38] sm:$0xf]
        %v6340 = vld [vmem:[%s6324 + $0x3c] sm:$0xf]
        %v6357 = vunpack.c.l.b16 %v6325
        %v6358 = vunpack.c.l.b16 %v6326
        %v6359 = vunpack.c.l.b16 %v6327
        %v6360 = vunpack.c.l.b16 %v6328
        %v6361 = vunpack.c.l.b16 %v6329
        %v6362 = vunpack.c.l.b16 %v6330
        %v6363 = vunpack.c.l.b16 %v6331
        %v6364 = vunpack.c.l.b16 %v6332
        %v6365 = vunpack.c.l.b16 %v6333
        %v6366 = vunpack.c.l.b16 %v6334
        %v6367 = vunpack.c.l.b16 %v6335
        %v6368 = vunpack.c.l.b16 %v6336
        %v6369 = vunpack.c.l.b16 %v6337
        %v6370 = vunpack.c.l.b16 %v6338
        %v6371 = vunpack.c.l.b16 %v6339
        %v6372 = vunpack.c.l.b16 %v6340
        %v6373 = vpack.c.b16 %v6358, %v6357
        %v6374 = vpack.c.b16 %v6360, %v6359
        %v6375 = vpack.c.b16 %v6362, %v6361
        %v6376 = vpack.c.b16 %v6364, %v6363
        %v6377 = vpack.c.b16 %v6366, %v6365
        %v6378 = vpack.c.b16 %v6368, %v6367
        %v6379 = vpack.c.b16 %v6370, %v6369
        %v6380 = vpack.c.b16 %v6372, %v6371
        %6389 = vmatprep.subr.bf16.mxu0 0
        %6390 = vmatpush1.bf16.msra.mxu0 %v6373
        %6391 = vmatprep.subr.bf16.mxu0 0
        %6392 = vmatpush1.bf16.msra.mxu0 %v6374
        %6393 = vmatprep.subr.bf16.mxu0 0
        %6394 = vmatpush1.bf16.msra.mxu0 %v6375
        %6395 = vmatprep.subr.bf16.mxu0 0
        %6396 = vmatpush1.bf16.msra.mxu0 %v6376
        %6397 = vmatprep.subr.bf16.mxu0 0
        %6398 = vmatpush1.bf16.msra.mxu0 %v6377
        %6399 = vmatprep.subr.bf16.mxu0 0
        %6400 = vmatpush1.bf16.msra.mxu0 %v6378
        %6401 = vmatprep.subr.bf16.mxu0 0
        %6402 = vmatpush1.bf16.msra.mxu0 %v6379
        %6403 = vmatprep.subr.bf16.mxu0 0
        %6404 = vmatpush1.bf16.msra.mxu0 %v6380
        %6405 = vmatprep.subr.bf16.mxu0 0
        %6406 = vmatpush1.bf16.msra.mxu0 0
        %6407 = vmatprep.subr.bf16.mxu0 0
        %6408 = vmatpush1.bf16.msra.mxu0 0
        %6409 = vmatprep.subr.bf16.mxu0 0
        %6410 = vmatpush1.bf16.msra.mxu0 0
        %6411 = vmatprep.subr.bf16.mxu0 0
        %6412 = vmatpush1.bf16.msra.mxu0 0
        %6413 = vmatprep.subr.bf16.mxu0 0
        %6414 = vmatpush1.bf16.msra.mxu0 0
        %6415 = vmatprep.subr.bf16.mxu0 0
        %6416 = vmatpush1.bf16.msra.mxu0 0
        %6417 = vmatprep.subr.bf16.mxu0 0
        %6418 = vmatpush1.bf16.msra.mxu0 0
        %6419 = vmatprep.subr.bf16.mxu0 0
        %6420 = vmatpush1.bf16.msra.mxu0 0
        %6421 = vmatprep.mubr.bf16.mxu0 0
        %6422 = vmatmul.mubr.bf16.gmra.mrb[0].mxu0 %v6306
        %v6423 = vpop.f32.mrb[0].mxu0
        %v6424 = vadd.f32 0.0, %v6423
        %v6425 = vpop.f32.mrb[0].mxu0
        %v6426 = vpop.f32.mrb[0].mxu0
        %v6427 = vadd.f32 0.0, %v6426
        %v6428 = vpop.f32.mrb[0].mxu0
        %6429 = vmatprep.mubr.bf16.mxu0 0
        %6430 = vmatmul.mubr.bf16.gmra.mrb[0].mxu0 %v6307
        %v6431 = vpop.f32.mrb[0].mxu0
        %v6432 = vadd.f32 0.0, %v6431
        %v6433 = vpop.f32.mrb[0].mxu0
        %v6434 = vpop.f32.mrb[0].mxu0
        %v6435 = vadd.f32 0.0, %v6434
        %v6436 = vpop.f32.mrb[0].mxu0
        %6437 = vmatprep.mubr.bf16.mxu0 0
        %6438 = vmatmul.mubr.bf16.gmra.mrb[0].mxu0 %v6308
        %v6439 = vpop.f32.mrb[0].mxu0
        %v6440 = vadd.f32 0.0, %v6439
        %v6441 = vpop.f32.mrb[0].mxu0
        %v6442 = vpop.f32.mrb[0].mxu0
        %v6443 = vadd.f32 0.0, %v6442
        %v6444 = vpop.f32.mrb[0].mxu0
        %6445 = vmatprep.mubr.bf16.mxu0 0
        %6446 = vmatmul.mubr.bf16.gmra.mrb[0].mxu0 %v6309
        %v6447 = vpop.f32.mrb[0].mxu0
        %v6448 = vadd.f32 0.0, %v6447
        %v6449 = vpop.f32.mrb[0].mxu0
        %v6450 = vpop.f32.mrb[0].mxu0
        %v6451 = vadd.f32 0.0, %v6450
        %v6452 = vpop.f32.mrb[0].mxu0
        %6453 = vmatprep.mubr.bf16.mxu0 0
        %6454 = vmatmul.mubr.bf16.gmra.mrb[0].mxu0 %v6310
        %v6455 = vpop.f32.mrb[0].mxu0
        %v6456 = vadd.f32 0.0, %v6455
        %v6457 = vpop.f32.mrb[0].mxu0
        %v6458 = vpop.f32.mrb[0].mxu0
        %v6459 = vadd.f32 0.0, %v6458
        %v6460 = vpop.f32.mrb[0].mxu0
        %6461 = vmatprep.mubr.bf16.mxu0 0
        %6462 = vmatmul.mubr.bf16.gmra.mrb[0].mxu0 %v6311
        %v6463 = vpop.f32.mrb[0].mxu0
        %v6464 = vadd.f32 0.0, %v6463
        %v6465 = vpop.f32.mrb[0].mxu0
        %v6466 = vpop.f32.mrb[0].mxu0
        %v6467 = vadd.f32 0.0, %v6466
        %v6468 = vpop.f32.mrb[0].mxu0
        %6469 = vmatprep.mubr.bf16.mxu0 0
        %6470 = vmatmul.mubr.bf16.gmra.mrb[0].mxu0 %v6312
        %v6471 = vpop.f32.mrb[0].mxu0
        %v6472 = vadd.f32 0.0, %v6471
        %v6473 = vpop.f32.mrb[0].mxu0
        %v6474 = vpop.f32.mrb[0].mxu0
        %v6475 = vadd.f32 0.0, %v6474
        %v6476 = vpop.f32.mrb[0].mxu0
        %6477 = vmatprep.mubr.bf16.mxu0 0
        %6478 = vmatmul.mubr.bf16.gmra.mrb[0].mxu0 %v6313
        %v6479 = vpop.f32.mrb[0].mxu0
        %v6480 = vadd.f32 0.0, %v6479
        %v6481 = vpop.f32.mrb[0].mxu0
        %v6482 = vpop.f32.mrb[0].mxu0
        %v6483 = vadd.f32 0.0, %v6482
        %v6484 = vpop.f32.mrb[0].mxu0
        %6485 = vmatprep.mubr.bf16.mxu0 0
        %6486 = vmatmul.mubr.bf16.gmra.mrb[0].mxu0 %v6314
        %v6487 = vpop.f32.mrb[0].mxu0
        %v6488 = vadd.f32 0.0, %v6487
        %v6489 = vpop.f32.mrb[0].mxu0
        %v6490 = vpop.f32.mrb[0].mxu0
        %v6491 = vadd.f32 0.0, %v6490
        %v6492 = vpop.f32.mrb[0].mxu0
        %6493 = vmatprep.mubr.bf16.mxu0 0
        %6494 = vmatmul.mubr.bf16.gmra.mrb[0].mxu0 %v6315
        %v6495 = vpop.f32.mrb[0].mxu0
        %v6496 = vadd.f32 0.0, %v6495
        %v6497 = vpop.f32.mrb[0].mxu0
        %v6498 = vpop.f32.mrb[0].mxu0
        %v6499 = vadd.f32 0.0, %v6498
        %v6500 = vpop.f32.mrb[0].mxu0
        %6501 = vmatprep.mubr.bf16.mxu0 0
        %6502 = vmatmul.mubr.bf16.gmra.mrb[0].mxu0 %v6316
        %v6503 = vpop.f32.mrb[0].mxu0
        %v6504 = vadd.f32 0.0, %v6503
        %v6505 = vpop.f32.mrb[0].mxu0
        %v6506 = vpop.f32.mrb[0].mxu0
        %v6507 = vadd.f32 0.0, %v6506
        %v6508 = vpop.f32.mrb[0].mxu0
        %6509 = vmatprep.mubr.bf16.mxu0 0
        %6510 = vmatmul.mubr.bf16.gmra.mrb[0].mxu0 %v6317
        %v6511 = vpop.f32.mrb[0].mxu0
        %v6512 = vadd.f32 0.0, %v6511
        %v6513 = vpop.f32.mrb[0].mxu0
        %v6514 = vpop.f32.mrb[0].mxu0
        %v6515 = vadd.f32 0.0, %v6514
        %v6516 = vpop.f32.mrb[0].mxu0
        %6517 = vmatprep.mubr.bf16.mxu0 0
        %6518 = vmatmul.mubr.bf16.gmra.mrb[0].mxu0 %v6318
        %v6519 = vpop.f32.mrb[0].mxu0
        %v6520 = vadd.f32 0.0, %v6519
        %v6521 = vpop.f32.mrb[0].mxu0
        %v6522 = vpop.f32.mrb[0].mxu0
        %v6523 = vadd.f32 0.0, %v6522
        %v6524 = vpop.f32.mrb[0].mxu0
        %6525 = vmatprep.mubr.bf16.mxu0 0
        %6526 = vmatmul.mubr.bf16.gmra.mrb[0].mxu0 %v6319
        %v6527 = vpop.f32.mrb[0].mxu0
        %v6528 = vadd.f32 0.0, %v6527
        %v6529 = vpop.f32.mrb[0].mxu0
        %v6530 = vpop.f32.mrb[0].mxu0
        %v6531 = vadd.f32 0.0, %v6530
        %v6532 = vpop.f32.mrb[0].mxu0
        %6533 = vmatprep.mubr.bf16.mxu0 0
        %6534 = vmatmul.mubr.bf16.gmra.mrb[0].mxu0 %v6320
        %v6535 = vpop.f32.mrb[0].mxu0
        %v6536 = vadd.f32 0.0, %v6535
        %v6537 = vpop.f32.mrb[0].mxu0
        %v6538 = vpop.f32.mrb[0].mxu0
        %v6539 = vadd.f32 0.0, %v6538
        %v6540 = vpop.f32.mrb[0].mxu0
        %6541 = vmatprep.mubr.bf16.mxu0 0
        %6542 = vmatmul.mubr.bf16.gmra.mrb[0].mxu0 %v6321
        %v6543 = vpop.f32.mrb[0].mxu0
        %v6544 = vadd.f32 0.0, %v6543
        %v6545 = vpop.f32.mrb[0].mxu0
        %v6546 = vpop.f32.mrb[0].mxu0
        %v6547 = vadd.f32 0.0, %v6546
        %v6548 = vpop.f32.mrb[0].mxu0
        %6549 = vmatprep.mubr.bf16.mxu0 0
        %6550 = vmatmul.mubr.bf16.gmra.mrb[0].mxu0 %v6322
        %v6551 = vpop.f32.mrb[0].mxu0
        %v6552 = vadd.f32 0.0, %v6551
        %v6553 = vpop.f32.mrb[0].mxu0
        %v6554 = vpop.f32.mrb[0].mxu0
        %v6555 = vadd.f32 0.0, %v6554
        %v6556 = vpop.f32.mrb[0].mxu0
        %6557 = vmatprep.mubr.bf16.mxu0 0
        %6558 = vmatmul.mubr.bf16.gmra.mrb[0].mxu0 %v6323
        %v6559 = vpop.f32.mrb[0].mxu0
        %v6560 = vadd.f32 0.0, %v6559
        %v6561 = vpop.f32.mrb[0].mxu0
        %v6562 = vpop.f32.mrb[0].mxu0
        %v6563 = vadd.f32 0.0, %v6562
        %v6564 = vpop.f32.mrb[0].mxu0
        %6565 = vdwg.mxu0
        %v6566 = vadd.f32 %v6234, %v6424
        %v6567 = vadd.f32 %v6235, %v6427
        %v6568 = vadd.f32 %v6236, %v6432
        %v6569 = vadd.f32 %v6237, %v6435
        %v6570 = vadd.f32 %v6238, %v6440
        %v6571 = vadd.f32 %v6239, %v6443
        %v6572 = vadd.f32 %v6240, %v6448
        %v6573 = vadd.f32 %v6241, %v6451
        %v6574 = vadd.f32 %v6242, %v6456
        %v6575 = vadd.f32 %v6243, %v6459
        %v6576 = vadd.f32 %v6244, %v6464
        %v6577 = vadd.f32 %v6245, %v6467
        %v6578 = vadd.f32 %v6246, %v6472
        %v6579 = vadd.f32 %v6247, %v6475
        %v6580 = vadd.f32 %v6248, %v6480
        %v6581 = vadd.f32 %v6249, %v6483
        %v6582 = vadd.f32 %v6250, %v6488
        %v6583 = vadd.f32 %v6251, %v6491
        %v6584 = vadd.f32 %v6252, %v6496
        %v6585 = vadd.f32 %v6253, %v6499
        %v6586 = vadd.f32 %v6254, %v6504
        %v6587 = vadd.f32 %v6255, %v6507
        %v6588 = vadd.f32 %v6256, %v6512
        %v6589 = vadd.f32 %v6257, %v6515
        %v6590 = vadd.f32 %v6258, %v6520
        %v6591 = vadd.f32 %v6259, %v6523
        %v6592 = vadd.f32 %v6260, %v6528
        %v6593 = vadd.f32 %v6261, %v6531
        %v6594 = vadd.f32 %v6262, %v6536
        %v6595 = vadd.f32 %v6263, %v6539
        %v6596 = vadd.f32 %v6264, %v6544
        %v6597 = vadd.f32 %v6265, %v6547
        %v6598 = vadd.f32 %v6266, %v6552
        %v6599 = vadd.f32 %v6267, %v6555
        %v6600 = vadd.f32 %v6268, %v6560
        %v6601 = vadd.f32 %v6269, %v6563
        %v6602 = vld [vmem:[%s4] sm:$0x1]
        %v6604 = vlaneseq
        %v6605 = vshrl.u32 %v6604, 7
        %v6606 = vsub.s32 0, %v6605
        %v6607 = vrot.slane %v6602, %v6606
        %v6609 = vadd.f32 %v6566, %v6607
        %v6610 = vadd.f32 %v6567, %v6607
        %v6611 = vadd.f32 %v6568, %v6607
        %v6612 = vadd.f32 %v6569, %v6607
        %v6613 = vadd.f32 %v6570, %v6607
        %v6614 = vadd.f32 %v6571, %v6607
        %v6615 = vadd.f32 %v6572, %v6607
        %v6616 = vadd.f32 %v6573, %v6607
        %v6617 = vadd.f32 %v6574, %v6607
        %v6618 = vadd.f32 %v6575, %v6607
        %v6619 = vadd.f32 %v6576, %v6607
        %v6620 = vadd.f32 %v6577, %v6607
        %v6621 = vadd.f32 %v6578, %v6607
        %v6622 = vadd.f32 %v6579, %v6607
        %v6623 = vadd.f32 %v6580, %v6607
        %v6624 = vadd.f32 %v6581, %v6607
        %v6625 = vadd.f32 %v6582, %v6607
        %v6626 = vadd.f32 %v6583, %v6607
        %v6627 = vadd.f32 %v6584, %v6607
        %v6628 = vadd.f32 %v6585, %v6607
        %v6629 = vadd.f32 %v6586, %v6607
        %v6630 = vadd.f32 %v6587, %v6607
        %v6631 = vadd.f32 %v6588, %v6607
        %v6632 = vadd.f32 %v6589, %v6607
        %v6633 = vadd.f32 %v6590, %v6607
        %v6634 = vadd.f32 %v6591, %v6607
        %v6635 = vadd.f32 %v6592, %v6607
        %v6636 = vadd.f32 %v6593, %v6607
        %v6637 = vadd.f32 %v6594, %v6607
        %v6638 = vadd.f32 %v6595, %v6607
        %v6639 = vadd.f32 %v6596, %v6607
        %v6640 = vadd.f32 %v6597, %v6607
        %v6641 = vadd.f32 %v6598, %v6607
        %v6642 = vadd.f32 %v6599, %v6607
        %v6643 = vadd.f32 %v6600, %v6607
        %v6644 = vadd.f32 %v6601, %v6607
        %v6645 = vmax.f32 %v6609, 0.0
        %v6646 = vmax.f32 %v6610, 0.0
        %v6647 = vmax.f32 %v6611, 0.0
        %v6648 = vmax.f32 %v6612, 0.0
        %v6649 = vmax.f32 %v6613, 0.0
        %v6650 = vmax.f32 %v6614, 0.0
        %v6651 = vmax.f32 %v6615, 0.0
        %v6652 = vmax.f32 %v6616, 0.0
        %v6653 = vmax.f32 %v6617, 0.0
        %v6654 = vmax.f32 %v6618, 0.0
        %v6655 = vmax.f32 %v6619, 0.0
        %v6656 = vmax.f32 %v6620, 0.0
        %v6657 = vmax.f32 %v6621, 0.0
        %v6658 = vmax.f32 %v6622, 0.0
        %v6659 = vmax.f32 %v6623, 0.0
        %v6660 = vmax.f32 %v6624, 0.0
        %v6661 = vmax.f32 %v6625, 0.0
        %v6662 = vmax.f32 %v6626, 0.0
        %v6663 = vmax.f32 %v6627, 0.0
        %v6664 = vmax.f32 %v6628, 0.0
        %v6665 = vmax.f32 %v6629, 0.0
        %v6666 = vmax.f32 %v6630, 0.0
        %v6667 = vmax.f32 %v6631, 0.0
        %v6668 = vmax.f32 %v6632, 0.0
        %v6669 = vmax.f32 %v6633, 0.0
        %v6670 = vmax.f32 %v6634, 0.0
        %v6671 = vmax.f32 %v6635, 0.0
        %v6672 = vmax.f32 %v6636, 0.0
        %v6673 = vmax.f32 %v6637, 0.0
        %v6674 = vmax.f32 %v6638, 0.0
        %v6675 = vmax.f32 %v6639, 0.0
        %v6676 = vmax.f32 %v6640, 0.0
        %v6677 = vmax.f32 %v6641, 0.0
        %v6678 = vmax.f32 %v6642, 0.0
        %v6679 = vmax.f32 %v6643, 0.0
        %v6680 = vmax.f32 %v6644, 0.0
        %v6681 = vmul.f32 %v6645, %v3402
        %v6682 = vmul.f32 %v6646, %v3407
        %v6683 = vmul.f32 %v6647, %v3412
        %v6684 = vmul.f32 %v6648, %v3417
        %v6685 = vmul.f32 %v6649, %v3422
        %v6686 = vmul.f32 %v6650, %v3427
        %v6687 = vmul.f32 %v6651, %v3432
        %v6688 = vmul.f32 %v6652, %v3437
        %v6689 = vmul.f32 %v6653, %v3442
        %v6690 = vmul.f32 %v6654, %v3447
        %v6691 = vmul.f32 %v6655, %v3452
        %v6692 = vmul.f32 %v6656, %v3457
        %v6693 = vmul.f32 %v6657, %v3462
        %v6694 = vmul.f32 %v6658, %v3467
        %v6695 = vmul.f32 %v6659, %v3472
        %v6696 = vmul.f32 %v6660, %v3477
        %v6697 = vmul.f32 %v6661, %v3482
        %v6698 = vmul.f32 %v6662, %v3487
        %v6699 = vmul.f32 %v6663, %v3492
        %v6700 = vmul.f32 %v6664, %v3497
        %v6701 = vmul.f32 %v6665, %v3502
        %v6702 = vmul.f32 %v6666, %v3507
        %v6703 = vmul.f32 %v6667, %v3512
        %v6704 = vmul.f32 %v6668, %v3517
        %v6705 = vmul.f32 %v6669, %v3522
        %v6706 = vmul.f32 %v6670, %v3527
        %v6707 = vmul.f32 %v6671, %v3532
        %v6708 = vmul.f32 %v6672, %v3537
        %v6709 = vmul.f32 %v6673, %v3542
        %v6710 = vmul.f32 %v6674, %v3547
        %v6711 = vmul.f32 %v6675, %v3552
        %v6712 = vmul.f32 %v6676, %v3557
        %v6713 = vmul.f32 %v6677, %v3562
        %v6714 = vmul.f32 %v6678, %v3567
        %v6715 = vmul.f32 %v6679, %v3572
        %v6716 = vmul.f32 %v6680, %v3577
        %v6717 = vadd.f32 %v6681, %v6682
        %v6718 = vadd.f32 %v6717, %v6683
        %v6719 = vadd.f32 %v6718, %v6684
        %v6720 = vadd.f32 %v6719, %v6685
        %v6721 = vadd.f32 %v6720, %v6686
        %v6722 = vadd.f32 %v6721, %v6687
        %v6723 = vadd.f32 %v6722, %v6688
        %v6724 = vadd.f32 %v6723, %v6689
        %v6725 = vadd.f32 %v6724, %v6690
        %v6726 = vadd.f32 %v6725, %v6691
        %v6727 = vadd.f32 %v6726, %v6692
        %v6728 = vadd.f32 %v6727, %v6693
        %v6729 = vadd.f32 %v6728, %v6694
        %v6730 = vadd.f32 %v6729, %v6695
        %v6731 = vadd.f32 %v6730, %v6696
        %v6732 = vadd.f32 %v6731, %v6697
        %v6733 = vadd.f32 %v6732, %v6698
        %v6734 = vadd.f32 %v6733, %v6699
        %v6735 = vadd.f32 %v6734, %v6700
        %v6736 = vadd.f32 %v6735, %v6701
        %v6737 = vadd.f32 %v6736, %v6702
        %v6738 = vadd.f32 %v6737, %v6703
        %v6739 = vadd.f32 %v6738, %v6704
        %v6740 = vadd.f32 %v6739, %v6705
        %v6741 = vadd.f32 %v6740, %v6706
        %v6742 = vadd.f32 %v6741, %v6707
        %v6743 = vadd.f32 %v6742, %v6708
        %v6744 = vadd.f32 %v6743, %v6709
        %v6745 = vadd.f32 %v6744, %v6710
        %v6746 = vadd.f32 %v6745, %v6711
        %v6747 = vadd.f32 %v6746, %v6712
        %v6748 = vadd.f32 %v6747, %v6713
        %v6749 = vadd.f32 %v6748, %v6714
        %v6750 = vadd.f32 %v6749, %v6715
        %v6751 = vadd.f32 %v6750, %v6716
        %v6752 = vrot.slane %v6751, 4
        %v6753 = vadd.f32 %v6751, %v6752
        %v6754 = vrot.slane %v6753, 2
        %v6755 = vadd.f32 %v6753, %v6754
        %v6756 = vrot.slane %v6755, 1
        %v6757 = vadd.f32 %v6755, %v6756
        %v6758 = vmul.f32 %v6757, 0.00390625
        %6759 = vst [vmem:[%s359] sm:$0x1] %v6758
        %v6760 = vld [vmem:[%s5] sm:$0xff]
        %v6761 = vld [vmem:[%s5 + $0x8] sm:$0xff]
        %v6762 = vld [vmem:[%s5 + $0x10] sm:$0xff]
        %v6763 = vld [vmem:[%s5 + $0x18] sm:$0xff]
        %v6764 = vld [vmem:[%s5 + $0x20] sm:$0xff]
        %v6765 = vld [vmem:[%s5 + $0x28] sm:$0xff]
        %v6766 = vld [vmem:[%s5 + $0x30] sm:$0xff]
        %v6767 = vld [vmem:[%s5 + $0x38] sm:$0xff]
        %v6768 = vld [vmem:[%s5 + $0x40] sm:$0xff]
        %v6769 = vld [vmem:[%s5 + $0x48] sm:$0xff]
        %v6770 = vld [vmem:[%s5 + $0x50] sm:$0xff]
        %v6771 = vld [vmem:[%s5 + $0x58] sm:$0xff]
        %v6772 = vld [vmem:[%s5 + $0x60] sm:$0xff]
        %v6773 = vld [vmem:[%s5 + $0x68] sm:$0xff]
        %v6774 = vld [vmem:[%s5 + $0x70] sm:$0xff]
        %v6775 = vld [vmem:[%s5 + $0x78] sm:$0xff]
        %v6776 = vld [vmem:[%s6] sm:$0x1]
        %6777 = vmatprep.subr.mxu0 0.0
        %6778 = vmatpush1.msra.mxu0 %v6760
        %6779 = vmatprep.subr.mxu0 0.0
        %6780 = vmatpush1.msra.mxu0 %v6761
        %6781 = vmatprep.subr.mxu0 0.0
        %6782 = vmatpush1.msra.mxu0 %v6762
        %6783 = vmatprep.subr.mxu0 0.0
        %6784 = vmatpush1.msra.mxu0 %v6763
        %6785 = vmatprep.subr.mxu0 0.0
        %6786 = vmatpush1.msra.mxu0 %v6764
        %6787 = vmatprep.subr.mxu0 0.0
        %6788 = vmatpush1.msra.mxu0 %v6765
        %6789 = vmatprep.subr.mxu0 0.0
        %6790 = vmatpush1.msra.mxu0 %v6766
        %6791 = vmatprep.subr.mxu0 0.0
        %6792 = vmatpush1.msra.mxu0 %v6767
        %6793 = vmatprep.subr.mxu0 0.0
        %6794 = vmatpush1.msra.mxu0 %v6768
        %6795 = vmatprep.subr.mxu0 0.0
        %6796 = vmatpush1.msra.mxu0 %v6769
        %6797 = vmatprep.subr.mxu0 0.0
        %6798 = vmatpush1.msra.mxu0 %v6770
        %6799 = vmatprep.subr.mxu0 0.0
        %6800 = vmatpush1.msra.mxu0 %v6771
        %6801 = vmatprep.subr.mxu0 0.0
        %6802 = vmatpush1.msra.mxu0 %v6772
        %6803 = vmatprep.subr.mxu0 0.0
        %6804 = vmatpush1.msra.mxu0 %v6773
        %6805 = vmatprep.subr.mxu0 0.0
        %6806 = vmatpush1.msra.mxu0 %v6774
        %6807 = vmatprep.subr.mxu0 0.0
        %6808 = vmatpush1.msra.mxu0 %v6775
        %6809 = vmatprep.subr.mxu0 0.0
        %6810 = vmatpush1.msra.mxu0 0.0
        %6811 = vmatprep.subr.mxu0 0.0
        %6812 = vmatpush1.msra.mxu0 0.0
        %6813 = vmatprep.subr.mxu0 0.0
        %6814 = vmatpush1.msra.mxu0 0.0
        %6815 = vmatprep.subr.mxu0 0.0
        %6816 = vmatpush1.msra.mxu0 0.0
        %6817 = vmatprep.subr.mxu0 0.0
        %6818 = vmatpush1.msra.mxu0 0.0
        %6819 = vmatprep.subr.mxu0 0.0
        %6820 = vmatpush1.msra.mxu0 0.0
        %6821 = vmatprep.subr.mxu0 0.0
        %6822 = vmatpush1.msra.mxu0 0.0
        %6823 = vmatprep.subr.mxu0 0.0
        %6824 = vmatpush1.msra.mxu0 0.0
        %6825 = vmatprep.subr.mxu0 0.0
        %6826 = vmatpush1.msra.mxu0 0.0
        %6827 = vmatprep.subr.mxu0 0.0
        %6828 = vmatpush1.msra.mxu0 0.0
        %6829 = vmatprep.subr.mxu0 0.0
        %6830 = vmatpush1.msra.mxu0 0.0
        %6831 = vmatprep.subr.mxu0 0.0
        %6832 = vmatpush1.msra.mxu0 0.0
        %6833 = vmatprep.subr.mxu0 0.0
        %6834 = vmatpush1.msra.mxu0 0.0
        %6835 = vmatprep.subr.mxu0 0.0
        %6836 = vmatpush1.msra.mxu0 0.0
        %6837 = vmatprep.subr.mxu0 0.0
        %6838 = vmatpush1.msra.mxu0 0.0
        %6839 = vmatprep.subr.mxu0 0.0
        %6840 = vmatpush1.msra.mxu0 0.0
        %6841 = vmatprep.mubr.f32.mxu0 0.0
        %6842 = vmatmul.mubr.f32.gmra.mrb[0].mxu0 %v6758
        %v6843 = vpop.f32.mrb[0].mxu0
        %v6844 = vadd.f32 %v6776, %v6843
        %v6845 = vpop.f32.mrb[0].mxu0
        %6846 = vdwg.mxu0
        %6847 = vst [vmem:[%s377] sm:$0x1] %v6844
        %p6848 = scmp.lt.s32.totalorder %s25, 1
        %s6849 = scalar_select %p6848, %s25, 1
        %s6850 = smul.addr %s6849, 36
        %s6851 = smul.addr %s6850, 8
        %s6852 = scalar_lea.vmem %s8, %s6851
        %s6853 = sand.u32 %s232, 1
        %s6854 = scalar_lea.sflag [#allocation4], %s6853
        %s6855 = sand.u32 %s232, 1
        %s6856 = scalar_lea.vmem [#allocation3], %s6855
        %p6857 = scmp.lt.s32.totalorder %s25, 1
        %s6858 = scalar_select %p6857, %s25, 1
        %s6859 = scalar_lea.vmem %s10, %s6858
        // Predicated region
        $region53: #{adaptive_net_forward.1} parent=51 // pred_check
          %p6860 = pneg %p216
        $region54: #{adaptive_net_forward.1} parent=51 // pred_check_branch
          %6862 = sbr.rel (%p6860) target = $region56
        $region55: #{adaptive_net_forward.1} parent=51 // pred_region
          _
        $region56: #{adaptive_net_forward.1} parent=51 // pred_fallthru
          _
        // Predicated region
        $region57: #{adaptive_net_forward.1} parent=51 // pred_check
          %p6863 = pneg %p242
        $region58: #{adaptive_net_forward.1} parent=51 // pred_check_branch
          %6865 = sbr.rel (%p6863) target = $region60
        $region59: #{adaptive_net_forward.1} parent=51 // pred_region
          %s6867 = ssub.s32 16, 16
          %6868 = vsyncadd %s6854, %s6867
          %s6869 = smul.addr %s25, 16
          %s6870 = scalar_lea.hbm %s9, %s6869
          %s6872 = sshll.u32 %s6856, 4
          %s6873 = int_to_ptr.vmem [resolvable:$true] %s6872
          %6875 = dma.vmem_to_hbm [thread:$0]  %s6873, 16, %s6870, %s6854
        $region60: #{adaptive_net_forward.1} parent=51 // pred_fallthru
          _
        // Predicated region
        $region61: #{adaptive_net_forward.1} parent=51 // pred_check
          %p6876 = pneg %p268
        $region62: #{adaptive_net_forward.1} parent=51 // pred_check_branch
          %6878 = sbr.rel (%p6876) target = $region64
        $region63: #{adaptive_net_forward.1} parent=51 // pred_region
          _
        $region64: #{adaptive_net_forward.1} parent=51 // pred_fallthru
          _
      $region52: #{adaptive_net_forward.1} parent=5 // pred_fallthru
        _
      %p6879 = scmp.le.s32.totalorder 2, %s20
      // Predicated region
      $region65: #{adaptive_net_forward.1} parent=5 // pred_check
        %p6880 = pneg %p6879
      $region66: #{adaptive_net_forward.1} parent=5 // pred_check_branch
        %6882 = sbr.rel (%p6880) target = $region68
      $region67: #{adaptive_net_forward.1} parent=5 // pred_region
        %s6883 = ssub.s32 %s20, 2
        // Predicated region
        $region69: #{adaptive_net_forward.1} parent=67 // pred_check
          %p6884 = pneg %p222
        $region70: #{adaptive_net_forward.1} parent=67 // pred_check_branch
          %6886 = sbr.rel (%p6884) target = $region72
        $region71: #{adaptive_net_forward.1} parent=67 // pred_region
          %p6887 = scmp.lt.s32.totalorder %s26, 1
          %s6888 = scalar_select %p6887, %s26, 1
          %s6889 = smul.addr %s6888, 36
          %s6890 = smul.addr %s6889, 8
          %s6891 = scalar_lea.vmem %s8, %s6890
        $region72: #{adaptive_net_forward.1} parent=67 // pred_fallthru
          _
        // Predicated region
        $region73: #{adaptive_net_forward.1} parent=67 // pred_check
          %p6892 = pneg %p248
        $region74: #{adaptive_net_forward.1} parent=67 // pred_check_branch
          %6894 = sbr.rel (%p6892) target = $region76
        $region75: #{adaptive_net_forward.1} parent=67 // pred_region
          %s6895 = sand.u32 %s233, 1
          %s6896 = scalar_lea.sflag [#allocation4], %s6895
          %s6897 = sand.u32 %s233, 1
          %s6898 = scalar_lea.vmem [#allocation3], %s6897
          %6899 = dma.done %s6896, 16
        $region76: #{adaptive_net_forward.1} parent=67 // pred_fallthru
          _
        // Predicated region
        $region77: #{adaptive_net_forward.1} parent=67 // pred_check
          %p6900 = pneg %p274
        $region78: #{adaptive_net_forward.1} parent=67 // pred_check_branch
          %6902 = sbr.rel (%p6900) target = $region80
        $region79: #{adaptive_net_forward.1} parent=67 // pred_region
          %p6903 = scmp.lt.s32.totalorder %s26, 1
          %s6904 = scalar_select %p6903, %s26, 1
          %s6905 = scalar_lea.vmem %s10, %s6904
        $region80: #{adaptive_net_forward.1} parent=67 // pred_fallthru
          _
      $region68: #{adaptive_net_forward.1} parent=5 // pred_fallthru
        _
    $region6: #{adaptive_net_forward.1} parent=1 // loop_footer
      %s24 = sadd.s32 1, %s20
    $region7: #{adaptive_net_forward.1} parent=1 // loop_footer_branch
      %19 = sbr.rel target = $region3
    $region8: #{adaptive_net_forward.1} parent=1 // loop_exit
      _
    %6906 = vsyncpa [#allocation4], 1
    %s6907 = scalar_lea.sflag [#allocation4], 1
    %6908 = vsyncpa %s6907, 1

</llo_original>
